<compile_context>
chip_gen: v7x
topology: tpu7x:2x2x1
jax: 0.10.0
libtpu: 0.0.40
codegen_flags: <defaults>
</compile_context>

<pallas_src>
import functools
import math

import jax
import jax.numpy as jnp
from jax.experimental import pallas as pl
from jax.experimental.pallas import tpu as pltpu


# Icosahedron directions from the module (21 vectors, stored row-major).
_DIRS = [
    0.8506508, 0, 0.5257311,
    0.809017, 0.5, 0.309017,
    0.5257311, 0.8506508, 0,
    1, 0, 0,
    0.809017, 0.5, -0.309017,
    0.8506508, 0, -0.5257311,
    0.309017, 0.809017, -0.5,
    0, 0.5257311, -0.8506508,
    0.5, 0.309017, -0.809017,
    0, 1, 0,
    -0.5257311, 0.8506508, 0,
    -0.309017, 0.809017, -0.5,
    0, 0.5257311, 0.8506508,
    -0.309017, 0.809017, 0.5,
    0.309017, 0.809017, 0.5,
    0.5, 0.309017, 0.809017,
    0.5, -0.309017, 0.809017,
    0, 0, 1,
    -0.5, 0.309017, 0.809017,
    -0.809017, 0.5, 0.309017,
    -0.809017, 0.5, -0.309017,
]


def _posenc_kernel(x_ref, w_ref, o_ref, *, scale, in_ch):
    # x_ref: (TM, in_ch+1) rows = [x, 1];  w_ref: (in_ch+1, 294);  o_ref: (TM, 297)
    x4 = x_ref[...].astype(jnp.float32)

    # First `in_ch` output channels are the scaled points (PyTorch: tensor*scale).
    o_ref[:, :in_ch] = (x4[:, :in_ch] * scale).astype(o_ref.dtype)

    # Single lane-dense matmul gives BOTH trig phases at once:
    #   cols [0,147)   = scaled @ (dirs (x) freqs)                  (= xb)
    #   cols [147,294) = xb + pi/2   (phase row driven by the ones column)
    # scale and the (exact power-of-two) frequency bands are folded into w in
    # the wrapper.  HIGHEST precision keeps the tiny K=4 contraction true-f32.
    xb2 = jnp.dot(x4, w_ref[...],
                  preferred_element_type=jnp.float32,
                  precision=jax.lax.Precision.HIGHEST)               # (TM, 294)

    # One sin over the whole 294-wide stream; store straight into the output.
    o_ref[:, in_ch:] = jnp.sin(xb2).astype(o_ref.dtype)


def positional_encoding(tensor, *, min_deg=0, max_deg=6, scale=0.1,
                        transform=None, block_rows=1024):
    """PostionalEncoding.forward for an arbitrary (..., 3) input."""
    in_ch = tensor.shape[-1]
    assert in_ch == 3, "module uses 3-D points"
    n_freqs = max_deg - min_deg + 1
    dirs = jnp.asarray(_DIRS, jnp.float32).reshape(-1, in_ch).T           # (3, 21)
    freqs = 2.0 ** jnp.linspace(min_deg, max_deg, n_freqs,
                                dtype=jnp.float32)                         # (7,)
    n_dirs = dirs.shape[1]
    half_dim = n_dirs * n_freqs                                            # 147
    emb_dim = 2 * half_dim + in_ch                                         # 297

    # xb weights with the power-of-two bands folded in (bit-exact fold):
    #   w_xb[c, d*7+f] = dirs[c, d] * 2**f   ->   xb = scaled @ w_xb
    w_xb = (dirs[:, :, None] * freqs[None, None, :]).reshape(in_ch, half_dim)
    # Fused weight: scale folded into the point rows; the last row is the
    # [0]*147 + [pi/2]*147 phase, driven by an appended ones column.
    w_pts = jnp.concatenate([w_xb, w_xb], axis=1) * jnp.float32(scale)     # (3, 294)
    phase = jnp.concatenate(
        [jnp.zeros((1, half_dim), jnp.float32),
         jnp.full((1, half_dim), 0.5 * math.pi, jnp.float32)], axis=1)     # (1, 294)
    w = jnp.concatenate([w_pts, phase], axis=0)                            # (4, 294)

    lead = tensor.shape[:-1]
    out_dtype = tensor.dtype
    x = tensor.reshape(-1, in_ch).astype(jnp.float32)
    if transform is not None:
        # scale_input: rigid transform before scaling (cheap affine prework).
        tf = jnp.asarray(transform, jnp.float32)
        x = x @ tf[:3, :3].T + tf[:3, 3]
    p = x.shape[0]
    # Ones column drives the pi/2 phase row of w.
    x4 = jnp.concatenate([x, jnp.ones((p, 1), jnp.float32)], axis=1)       # (p, 4)

    # Tile size: big enough to amortize the ~0.35 us per-step overhead, but
    # capped so the parallel grid keeps >= ~4 steps (v7x megacore) and a
    # multiple of 8 rows.  Double-buffered (tm, 297) f32 output at tm=1024 is
    # ~2.4 MB -> comfortably under v5e's 16 MiB scoped-VMEM default.
    tm = max(8, min(int(block_rows), ((-(-p // 4) + 7) // 8) * 8))
    grid = (pl.cdiv(p, tm),)   # partial last block handled by Pallas

    itemsize = jnp.dtype(out_dtype).itemsize
    kernel = functools.partial(_posenc_kernel, scale=float(scale), in_ch=in_ch)
    out = pl.pallas_call(
        kernel,
        out_shape=jax.ShapeDtypeStruct((p, emb_dim), out_dtype),
        grid=grid,
        in_specs=[
            pl.BlockSpec((tm, in_ch + 1), lambda i: (i, 0)),
            pl.BlockSpec((in_ch + 1, 2 * half_dim), lambda i: (0, 0)),
        ],
        out_specs=pl.BlockSpec((tm, emb_dim), lambda i: (i, 0)),
        compiler_params=pltpu.CompilerParams(
            dimension_semantics=("parallel",)),
        cost_estimate=pl.CostEstimate(
            flops=2 * p * (in_ch + 1) * 2 * half_dim,
            transcendentals=p * 2 * half_dim,
            bytes_accessed=p * ((in_ch + 1) * 4 + emb_dim * itemsize)),
    )(x4, w)
    return out.reshape(*lead, emb_dim)


def _reference(tensor, *, min_deg=0, max_deg=6, scale=0.1, transform=None):
    """Pure-JAX mirror of the PyTorch forward (true-f32 matmul)."""
    dirs = jnp.asarray(_DIRS, jnp.float32).reshape(-1, 3).T
    n_freqs = max_deg - min_deg + 1
    freqs = 2.0 ** jnp.linspace(min_deg, max_deg, n_freqs, dtype=tensor.dtype)
    t = tensor
    if transform is not None:
        tf = jnp.asarray(transform, tensor.dtype)
        shp = t.shape
        t = (t.reshape(-1, 3) @ tf[:3, :3].T + tf[:3, 3]).reshape(shp)
    t = t * scale
    # HIGHEST precision so the reference reflects true-f32 (PyTorch) semantics
    # rather than the TPU default reduced-precision matmul pass.
    proj = jnp.matmul(t, dirs, precision=jax.lax.Precision.HIGHEST)
    xb = (proj[..., None] * freqs).reshape(*proj.shape[:-1], -1)
    emb = jnp.sin(jnp.concatenate([xb, xb + 0.5 * jnp.pi], axis=-1))
    return jnp.concatenate([t, emb], axis=-1)


if __name__ == "__main__":
    key = jax.random.PRNGKey(0)
    tensor = jax.random.normal(key, (2, 256, 3), jnp.float32)   # (batch, points, 3)

    fwd = jax.jit(positional_encoding)
    out = jax.block_until_ready(fwd(tensor))

    assert out.shape == (2, 256, 297), out.shape
    assert out.dtype == tensor.dtype
    assert bool(jnp.all(jnp.isfinite(out)))

    ref = _reference(tensor)
    err = float(jnp.max(jnp.abs(out - ref)))
    assert bool(jnp.allclose(out, ref, atol=1e-4, rtol=1e-4)), f"max abs err {err}"

    print("KERNEL_OK")
</pallas_src>

<mosaic_0001>
module attributes {stable_mosaic.version = 11 : i64} {
  func.func @_posenc_kernel(%arg0: i32, %arg1: memref<128x4xf32, #tpu.memory_space<vmem>>, %arg2: memref<4x294xf32, #tpu.memory_space<vmem>>, %arg3: memref<128x297xf32, #tpu.memory_space<vmem>>) attributes {dimension_semantics = [#tpu.dimension_semantics<parallel>], iteration_bounds = array<i64: 4>, scalar_prefetch = 0 : i64, scratch_operands = 0 : i64, tpu.core_type = #tpu.core_type<tc>, window_params = [{transform_indices = @transform_0, window_bounds = array<i64: 128, 4>}, {pipeline_mode = #tpu.pipeline_mode<synchronous>, transform_indices = @transform_1, window_bounds = array<i64: 4, 294>}, {transform_indices = @transform_2, window_bounds = array<i64: 128, 297>}]} {
    %c0 = arith.constant 0 : index
    %c0_0 = arith.constant 0 : index
    %0 = vector.load %arg1[%c0, %c0_0] : memref<128x4xf32, #tpu.memory_space<vmem>>, vector<128x4xf32>
    %1 = vector.extract_strided_slice %0 {offsets = [0, 0], sizes = [128, 3], strides = [1, 1]} : vector<128x4xf32> to vector<128x3xf32>
    %cst = arith.constant 1.000000e-01 : f32
    %2 = vector.broadcast %cst : f32 to vector<128x3xf32>
    %3 = arith.mulf %1, %2 : vector<128x3xf32>
    %c0_1 = arith.constant 0 : index
    %c0_2 = arith.constant 0 : index
    %4 = vector.load %arg3[%c0_1, %c0_2] : memref<128x297xf32, #tpu.memory_space<vmem>>, vector<128x3xf32>
    tpu.vector_store %arg3[%c0_1, %c0_2], %3 {strides = array<i32>} : memref<128x297xf32, #tpu.memory_space<vmem>>, vector<128x3xf32>,
    %c0_3 = arith.constant 0 : index
    %c0_4 = arith.constant 0 : index
    %5 = vector.load %arg2[%c0_3, %c0_4] : memref<4x294xf32, #tpu.memory_space<vmem>>, vector<4x294xf32>
    %cst_5 = arith.constant dense<0.000000e+00> : vector<128x294xf32>
    %6 = tpu.matmul %0, %5, %cst_5 {dimension_numbers = #tpu.dot_dimension_numbers<[1], [0], [0], [1], [0, 0, 1, 1], [], []>, precision = #tpu.contract_precision<fp32>} : vector<128x4xf32>, vector<4x294xf32>, vector<128x294xf32> -> vector<128x294xf32>
    %7 = math.sin %6 : vector<128x294xf32>
    %c0_6 = arith.constant 0 : index
    %c3 = arith.constant 3 : index
    %8 = vector.load %arg3[%c0_6, %c3] : memref<128x297xf32, #tpu.memory_space<vmem>>, vector<128x294xf32>
    tpu.vector_store %arg3[%c0_6, %c3], %7 {strides = array<i32>} : memref<128x297xf32, #tpu.memory_space<vmem>>, vector<128x294xf32>,
    return
  }
  func.func @transform_0(%arg0: i32) -> (i32, i32) {
    %c0_i32 = arith.constant 0 : i32
    %c0_i32_0 = arith.constant 0 : i32
    return %arg0, %c0_i32 : i32, i32
  }
  func.func @transform_1(%arg0: i32) -> (i32, i32) {
    %c0_i32 = arith.constant 0 : i32
    %c0_i32_0 = arith.constant 0 : i32
    %c0_i32_1 = arith.constant 0 : i32
    return %c0_i32, %c0_i32_0 : i32, i32
  }
  func.func @transform_2(%arg0: i32) -> (i32, i32) {
    %c0_i32 = arith.constant 0 : i32
    %c0_i32_0 = arith.constant 0 : i32
    return %arg0, %c0_i32 : i32, i32
  }
}

</mosaic_0001>

<llo_original>
// kernel: positional_encoding.1
$region0: #{positional_encoding.1}
  #allocation0 [shape = 'u32[]', space=smem, size = 0x4, offset = 0x4, fixed_abs, tag = 'smem constant byte address 0x4 - core index']
  #allocation1 [shape = 'u32[144,128]{1,0:T(1,128)}', space=vmem, size = 0x12000, scoped, tag = 'internal scratch']
  %s0 = inlined_call_operand.vmem [shape: f32[512,4], index: 0, kind: input, shape index: {}]
  %s1 = inlined_call_operand.vmem [shape: f32[4,294], index: 1, kind: input, shape index: {}]
  %s2 = inlined_call_operand.vmem [shape: f32[512,297], index: 2, kind: output, shape index: {}]
  %s3 = sld [smem:[#allocation0]]
  $region41: #{positional_encoding.1} parent=0
    _
  %s5 = ssub.s32 1, %s3
  %s6 = scalar_select 0, %s5, %s3
  loop: start=0, step=1, limit=6
  $region2: #{positional_encoding.1} parent=0 // loop_pre_header
    _
  $region3: #{positional_encoding.1} parent=0 // loop_header
    %s8 = sphi 0, %s12
    %p9 = scmp.ge.s32.totalorder %s8, 6
    %s18 = sphi 0, %s20
    %s21 = sphi 0, %s18
    %s22 = sphi 0, %s21
    %s38 = sphi 0, %s22
    %s42 = sphi 0, %s42
    %s44 = sphi 0, %s42
    %s45 = sphi 0, %s44
    %s59 = sphi 0, %s45
    %s65 = sphi 0, %s67
    %s68 = sphi 0, %s65
    %s69 = sphi 0, %s68
    %s85 = sphi 0, %s69
  $region4: #{positional_encoding.1} parent=0 // loop_header_branch
    %11 = sbr.rel (%p9) target = $region8
  $region5: #{positional_encoding.1} parent=0 // loop_body
    %s13 = ssub.s32 %s8, 1
    %s14 = ssub.s32 %s8, 2
    %s15 = sadd.s32 %s8, 1
    %s16 = ssub.s32 %s8, %s15
    %p17 = scmp.eq.s32.totalorder %s16, 0
    %s19 = sadd.s32 %s18, 1
    %s20 = scalar_select %p17, %s18, %s19
    %p23 = pneg %p17
    %p24 = scmp.eq.s32.totalorder %s8, 3
    %p25 = por %p23, %p24
    %p26 = scmp.ne.s32.totalorder %s18, %s21
    %p27 = scmp.eq.s32.totalorder %s8, 0
    %p28 = por %p26, %p27
    %p29 = scmp.ne.s32.totalorder %s18, %s21
    %p30 = scmp.eq.s32.totalorder %s13, 3
    %p31 = por %p29, %p30
    %p32 = scmp.ne.s32.totalorder %s21, %s22
    %p33 = scmp.eq.s32.totalorder %s13, 0
    %p34 = por %p32, %p33
    %p35 = scmp.ne.s32.totalorder %s21, %s22
    %p36 = scmp.eq.s32.totalorder %s14, 3
    %p37 = por %p35, %p36
    %p39 = scmp.ne.s32.totalorder %s22, %s38
    %p40 = scmp.eq.s32.totalorder %s14, 0
    %p41 = por %p39, %p40
    %s43 = sadd.s32 %s42, 1
    %p46 = scmp.eq.s32.totalorder %s8, 3
    %p47 = scmp.ne.s32.totalorder %s42, %s44
    %p48 = scmp.eq.s32.totalorder %s8, 0
    %p49 = por %p47, %p48
    %p50 = scmp.ne.s32.totalorder %s42, %s44
    %p51 = scmp.eq.s32.totalorder %s13, 3
    %p52 = por %p50, %p51
    %p53 = scmp.ne.s32.totalorder %s44, %s45
    %p54 = scmp.eq.s32.totalorder %s13, 0
    %p55 = por %p53, %p54
    %p56 = scmp.ne.s32.totalorder %s44, %s45
    %p57 = scmp.eq.s32.totalorder %s14, 3
    %p58 = por %p56, %p57
    %p60 = scmp.ne.s32.totalorder %s45, %s59
    %p61 = scmp.eq.s32.totalorder %s14, 0
    %p62 = por %p60, %p61
    %s63 = ssub.s32 %s8, %s15
    %p64 = scmp.eq.s32.totalorder %s63, 0
    %s66 = sadd.s32 %s65, 1
    %s67 = scalar_select %p64, %s65, %s66
    %p70 = pneg %p64
    %p71 = scmp.eq.s32.totalorder %s8, 3
    %p72 = por %p70, %p71
    %p73 = scmp.ne.s32.totalorder %s65, %s68
    %p74 = scmp.eq.s32.totalorder %s8, 0
    %p75 = por %p73, %p74
    %p76 = scmp.ne.s32.totalorder %s65, %s68
    %p77 = scmp.eq.s32.totalorder %s13, 3
    %p78 = por %p76, %p77
    %p79 = scmp.ne.s32.totalorder %s68, %s69
    %p80 = scmp.eq.s32.totalorder %s13, 0
    %p81 = por %p79, %p80
    %p82 = scmp.ne.s32.totalorder %s68, %s69
    %p83 = scmp.eq.s32.totalorder %s14, 3
    %p84 = por %p82, %p83
    %p86 = scmp.ne.s32.totalorder %s69, %s85
    %p87 = scmp.eq.s32.totalorder %s14, 0
    %p88 = por %p86, %p87
    %p89 = scmp.le.s32.totalorder 1, %s8
    %p90 = scmp.lt.s32.totalorder %s8, 5
    %p91 = pnand %p89, %p90
    %p92 = pneg %p91
    // Predicated region
    $region9: #{positional_encoding.1} parent=5 // pred_check
      _
    $region10: #{positional_encoding.1} parent=5 // pred_check_branch
      %94 = sbr.rel (%p91) target = $region12
    $region11: #{positional_encoding.1} parent=5 // pred_region
      %s95 = ssub.s32 %s8, 1
      // Predicated region
      $region13: #{positional_encoding.1} parent=11 // pred_check
        %p96 = pneg %p55
      $region14: #{positional_encoding.1} parent=11 // pred_check_branch
        %98 = sbr.rel (%p96) target = $region16
      $region15: #{positional_encoding.1} parent=11 // pred_region
        _
      $region16: #{positional_encoding.1} parent=11 // pred_fallthru
        _
    $region12: #{positional_encoding.1} parent=5 // pred_fallthru
      _
    %p99 = scmp.lt.s32.totalorder %s8, 4
    // Predicated region
    $region17: #{positional_encoding.1} parent=5 // pred_check
      %p100 = pneg %p99
    $region18: #{positional_encoding.1} parent=5 // pred_check_branch
      %102 = sbr.rel (%p100) target = $region20
    $region19: #{positional_encoding.1} parent=5 // pred_region
      // Predicated region
      $region21: #{positional_encoding.1} parent=19 // pred_check
        %p103 = pneg %p28
      $region22: #{positional_encoding.1} parent=19 // pred_check_branch
        %105 = sbr.rel (%p103) target = $region24
      $region23: #{positional_encoding.1} parent=19 // pred_region
        %s106 = smul.u32 16, %s8
        %p107 = scmp.lt.s32.totalorder %s106, 63
        %s108 = scalar_select %p107, %s106, 63
        %s109 = smul.addr %s108, 8
        %s110 = scalar_lea.vmem %s0, %s109
        %s111 = smul.u32 16, %s8
      $region24: #{positional_encoding.1} parent=19 // pred_fallthru
        _
    $region20: #{positional_encoding.1} parent=5 // pred_fallthru
      _
    %p112 = scmp.le.s32.totalorder 1, %s8
    %p113 = scmp.lt.s32.totalorder %s8, 5
    %p114 = pnand %p112, %p113
    %p115 = pneg %p114
    // Predicated region
    $region25: #{positional_encoding.1} parent=5 // pred_check
      _
    $region26: #{positional_encoding.1} parent=5 // pred_check_branch
      %117 = sbr.rel (%p114) target = $region28
    $region27: #{positional_encoding.1} parent=5 // pred_region
      %s118 = ssub.s32 %s8, 1
      %s119 = smul.u32 16, %s13
      %p120 = scmp.lt.s32.totalorder %s119, 63
      %s121 = scalar_select %p120, %s119, 63
      %s122 = smul.addr %s121, 8
      %s123 = scalar_lea.vmem %s0, %s122
      %p124 = pneg %p34
      %p125 = pneg %p31
      %p126 = pneg %p55
      %p127 = pneg %p52
      %p128 = pneg %p81
      %p129 = pneg %p78
      %s130 = smul.u32 16, %s13
      %p131 = scmp.lt.s32.totalorder %s130, 63
      %s132 = scalar_select %p131, %s130, 63
      %s133 = smul.addr %s132, 3
      %s134 = smul.addr %s133, 8
      %s135 = scalar_lea.vmem %s2, %s134
      %s136 = smul.u32 16, %s13
      %p137 = scmp.lt.s32.totalorder %s136, 63
      %s138 = scalar_select %p137, %s136, 63
      %s139 = smul.addr %s138, 8
      %s140 = scalar_lea.vmem %s0, %s139
      %s141 = smul.u32 16, %s13
      %s142 = smul.u32 16, %s13
      %p143 = scmp.lt.s32.totalorder %s142, 63
      %s144 = scalar_select %p143, %s142, 63
      %s145 = smul.addr %s144, 3
      %s146 = smul.addr %s145, 8
      %s147 = scalar_lea.vmem %s2, %s146
      %s148 = smul.u32 16, %s13
      %v149 = vld [vmem:[%s140] sm:$0xff]
      %v150 = vld [vmem:[%s140 + $0x8] sm:$0xff]
      %v151 = vld [vmem:[%s140 + $0x10] sm:$0xff]
      %v152 = vld [vmem:[%s140 + $0x18] sm:$0xff]
      %v153 = vld [vmem:[%s140 + $0x20] sm:$0xff]
      %v154 = vld [vmem:[%s140 + $0x28] sm:$0xff]
      %v155 = vld [vmem:[%s140 + $0x30] sm:$0xff]
      %v156 = vld [vmem:[%s140 + $0x38] sm:$0xff]
      %v157 = vld [vmem:[%s140 + $0x40] sm:$0xff]
      %v158 = vld [vmem:[%s140 + $0x48] sm:$0xff]
      %v159 = vld [vmem:[%s140 + $0x50] sm:$0xff]
      %v160 = vld [vmem:[%s140 + $0x58] sm:$0xff]
      %v161 = vld [vmem:[%s140 + $0x60] sm:$0xff]
      %v162 = vld [vmem:[%s140 + $0x68] sm:$0xff]
      %v163 = vld [vmem:[%s140 + $0x70] sm:$0xff]
      %v164 = vld [vmem:[%s140 + $0x78] sm:$0xff]
      %v165 = vmul.f32 %v149, 0.1
      %v166 = vmul.f32 %v150, 0.1
      %v167 = vmul.f32 %v151, 0.1
      %v168 = vmul.f32 %v152, 0.1
      %v169 = vmul.f32 %v153, 0.1
      %v170 = vmul.f32 %v154, 0.1
      %v171 = vmul.f32 %v155, 0.1
      %v172 = vmul.f32 %v156, 0.1
      %v173 = vmul.f32 %v157, 0.1
      %v174 = vmul.f32 %v158, 0.1
      %v175 = vmul.f32 %v159, 0.1
      %v176 = vmul.f32 %v160, 0.1
      %v177 = vmul.f32 %v161, 0.1
      %v178 = vmul.f32 %v162, 0.1
      %v179 = vmul.f32 %v163, 0.1
      %v180 = vmul.f32 %v164, 0.1
      %vm181 = vcmask 23552
      %182 = vst.msk [vmem:[%s147] sm:$0xff] %vm181, %v165
      %183 = vst.msk [vmem:[%s147 + $0x18] sm:$0xff] %vm181, %v166
      %184 = vst.msk [vmem:[%s147 + $0x30] sm:$0xff] %vm181, %v167
      %185 = vst.msk [vmem:[%s147 + $0x48] sm:$0xff] %vm181, %v168
      %186 = vst.msk [vmem:[%s147 + $0x60] sm:$0xff] %vm181, %v169
      %187 = vst.msk [vmem:[%s147 + $0x78] sm:$0xff] %vm181, %v170
      %188 = vst.msk [vmem:[%s147 + $0x90] sm:$0xff] %vm181, %v171
      %189 = vst.msk [vmem:[%s147 + $0xa8] sm:$0xff] %vm181, %v172
      %190 = vst.msk [vmem:[%s147 + $0xc0] sm:$0xff] %vm181, %v173
      %191 = vst.msk [vmem:[%s147 + $0xd8] sm:$0xff] %vm181, %v174
      %192 = vst.msk [vmem:[%s147 + $0xf0] sm:$0xff] %vm181, %v175
      %193 = vst.msk [vmem:[%s147 + $0x108] sm:$0xff] %vm181, %v176
      %194 = vst.msk [vmem:[%s147 + $0x120] sm:$0xff] %vm181, %v177
      %195 = vst.msk [vmem:[%s147 + $0x138] sm:$0xff] %vm181, %v178
      %196 = vst.msk [vmem:[%s147 + $0x150] sm:$0xff] %vm181, %v179
      %197 = vst.msk [vmem:[%s147 + $0x168] sm:$0xff] %vm181, %v180
      %v198 = vld [vmem:[%s1] sm:$0xff]
      %v199 = vld [vmem:[%s1 + $0x8] sm:$0xf]
      %v202 = vcombine.high %v198, %v198
      %vm203 = vcmask 31744
      %v205 = vsel %vm203, %v149, 0
      %v208 = vsel %vm203, %v150, 0
      %v211 = vsel %vm203, %v151, 0
      %v214 = vsel %vm203, %v152, 0
      %v217 = vsel %vm203, %v153, 0
      %v220 = vsel %vm203, %v154, 0
      %v223 = vsel %vm203, %v155, 0
      %v226 = vsel %vm203, %v156, 0
      %v229 = vsel %vm203, %v157, 0
      %v232 = vsel %vm203, %v158, 0
      %v235 = vsel %vm203, %v159, 0
      %v238 = vsel %vm203, %v160, 0
      %v241 = vsel %vm203, %v161, 0
      %v244 = vsel %vm203, %v162, 0
      %v247 = vsel %vm203, %v163, 0
      %v250 = vsel %vm203, %v164, 0
      %vm252 = vcmask 1043456
      %v253 = vsel %vm252, %v198, 0
      %v255 = vsel %vm252, %v202, 0
      %v257 = vsel %vm252, %v199, 0
      %v259 = vand.u32 %v255, 4294901760
      %260 = vmatprep.subr.mxu0 %v259
      %v261 = vand.u32 %v253, 4294901760
      %262 = vmatpush1.msra.mxu0 %v261
      %263 = vmatprep.subr.mxu0 0.0
      %264 = vmatpush1.msra.mxu0 0.0
      %265 = vmatprep.subr.mxu0 0.0
      %266 = vmatpush1.msra.mxu0 0.0
      %267 = vmatprep.subr.mxu0 0.0
      %268 = vmatpush1.msra.mxu0 0.0
      %269 = vmatprep.subr.mxu0 0.0
      %270 = vmatpush1.msra.mxu0 0.0
      %271 = vmatprep.subr.mxu0 0.0
      %272 = vmatpush1.msra.mxu0 0.0
      %273 = vmatprep.subr.mxu0 0.0
      %274 = vmatpush1.msra.mxu0 0.0
      %275 = vmatprep.subr.mxu0 0.0
      %276 = vmatpush1.msra.mxu0 0.0
      %277 = vmatprep.subr.mxu0 0.0
      %278 = vmatpush1.msra.mxu0 0.0
      %279 = vmatprep.subr.mxu0 0.0
      %280 = vmatpush1.msra.mxu0 0.0
      %281 = vmatprep.subr.mxu0 0.0
      %282 = vmatpush1.msra.mxu0 0.0
      %283 = vmatprep.subr.mxu0 0.0
      %284 = vmatpush1.msra.mxu0 0.0
      %285 = vmatprep.subr.mxu0 0.0
      %286 = vmatpush1.msra.mxu0 0.0
      %287 = vmatprep.subr.mxu0 0.0
      %288 = vmatpush1.msra.mxu0 0.0
      %289 = vmatprep.subr.mxu0 0.0
      %290 = vmatpush1.msra.mxu0 0.0
      %291 = vmatprep.subr.mxu0 0.0
      %292 = vmatpush1.msra.mxu0 0.0
      %293 = vmatprep.subr.mxu0 0.0
      %294 = vmatpush1.msra.mxu0 0.0
      %295 = vmatprep.subr.mxu0 0.0
      %296 = vmatpush1.msra.mxu0 0.0
      %297 = vmatprep.subr.mxu0 0.0
      %298 = vmatpush1.msra.mxu0 0.0
      %299 = vmatprep.subr.mxu0 0.0
      %300 = vmatpush1.msra.mxu0 0.0
      %301 = vmatprep.subr.mxu0 0.0
      %302 = vmatpush1.msra.mxu0 0.0
      %303 = vmatprep.subr.mxu0 0.0
      %304 = vmatpush1.msra.mxu0 0.0
      %305 = vmatprep.subr.mxu0 0.0
      %306 = vmatpush1.msra.mxu0 0.0
      %307 = vmatprep.subr.mxu0 0.0
      %308 = vmatpush1.msra.mxu0 0.0
      %309 = vmatprep.subr.mxu0 0.0
      %310 = vmatpush1.msra.mxu0 0.0
      %311 = vmatprep.subr.mxu0 0.0
      %312 = vmatpush1.msra.mxu0 0.0
      %313 = vmatprep.subr.mxu0 0.0
      %314 = vmatpush1.msra.mxu0 0.0
      %315 = vmatprep.subr.mxu0 0.0
      %316 = vmatpush1.msra.mxu0 0.0
      %317 = vmatprep.subr.mxu0 0.0
      %318 = vmatpush1.msra.mxu0 0.0
      %319 = vmatprep.subr.mxu0 0.0
      %320 = vmatpush1.msra.mxu0 0.0
      %321 = vmatprep.subr.mxu0 0.0
      %322 = vmatpush1.msra.mxu0 0.0
      %323 = vmatprep.subr.mxu0 0.0
      %324 = vmatpush1.msra.mxu0 0.0
      %325 = vmatprep.mubr.f32.mxu0 0.0
      %v326 = vand.u32 %v205, 4294901760
      %v327 = vsub.f32 %v205, %v326
      %v328 = vand.u32 %v327, 4294901760
      %v329 = vsub.f32 %v327, %v328
      %v330 = vand.u32 %v329, 4294901760
      %331 = vmatmul.mubr.f32.gmra.mrb[0].mxu0 %v330
      %v332 = vpop.f32.mrb[0].mxu0
      %v333 = vadd.f32 0.0, %v332
      %v334 = vpop.f32.mrb[0].mxu0
      %v335 = vadd.f32 0.0, %v334
      %336 = vmatprep.mubr.f32.mxu0 0.0
      %v337 = vand.u32 %v208, 4294901760
      %v338 = vsub.f32 %v208, %v337
      %v339 = vand.u32 %v338, 4294901760
      %v340 = vsub.f32 %v338, %v339
      %v341 = vand.u32 %v340, 4294901760
      %342 = vmatmul.mubr.f32.gmra.mrb[0].mxu0 %v341
      %v343 = vpop.f32.mrb[0].mxu0
      %v344 = vadd.f32 0.0, %v343
      %v345 = vpop.f32.mrb[0].mxu0
      %v346 = vadd.f32 0.0, %v345
      %347 = vmatprep.mubr.f32.mxu0 0.0
      %v348 = vand.u32 %v211, 4294901760
      %v349 = vsub.f32 %v211, %v348
      %v350 = vand.u32 %v349, 4294901760
      %v351 = vsub.f32 %v349, %v350
      %v352 = vand.u32 %v351, 4294901760
      %353 = vmatmul.mubr.f32.gmra.mrb[0].mxu0 %v352
      %v354 = vpop.f32.mrb[0].mxu0
      %v355 = vadd.f32 0.0, %v354
      %v356 = vpop.f32.mrb[0].mxu0
      %v357 = vadd.f32 0.0, %v356
      %358 = vmatprep.mubr.f32.mxu0 0.0
      %v359 = vand.u32 %v214, 4294901760
      %v360 = vsub.f32 %v214, %v359
      %v361 = vand.u32 %v360, 4294901760
      %v362 = vsub.f32 %v360, %v361
      %v363 = vand.u32 %v362, 4294901760
      %364 = vmatmul.mubr.f32.gmra.mrb[0].mxu0 %v363
      %v365 = vpop.f32.mrb[0].mxu0
      %v366 = vadd.f32 0.0, %v365
      %v367 = vpop.f32.mrb[0].mxu0
      %v368 = vadd.f32 0.0, %v367
      %369 = vmatprep.mubr.f32.mxu0 0.0
      %v370 = vand.u32 %v217, 4294901760
      %v371 = vsub.f32 %v217, %v370
      %v372 = vand.u32 %v371, 4294901760
      %v373 = vsub.f32 %v371, %v372
      %v374 = vand.u32 %v373, 4294901760
      %375 = vmatmul.mubr.f32.gmra.mrb[0].mxu0 %v374
      %v376 = vpop.f32.mrb[0].mxu0
      %v377 = vadd.f32 0.0, %v376
      %v378 = vpop.f32.mrb[0].mxu0
      %v379 = vadd.f32 0.0, %v378
      %380 = vmatprep.mubr.f32.mxu0 0.0
      %v381 = vand.u32 %v220, 4294901760
      %v382 = vsub.f32 %v220, %v381
      %v383 = vand.u32 %v382, 4294901760
      %v384 = vsub.f32 %v382, %v383
      %v385 = vand.u32 %v384, 4294901760
      %386 = vmatmul.mubr.f32.gmra.mrb[0].mxu0 %v385
      %v387 = vpop.f32.mrb[0].mxu0
      %v388 = vadd.f32 0.0, %v387
      %v389 = vpop.f32.mrb[0].mxu0
      %v390 = vadd.f32 0.0, %v389
      %391 = vmatprep.mubr.f32.mxu0 0.0
      %v392 = vand.u32 %v223, 4294901760
      %v393 = vsub.f32 %v223, %v392
      %v394 = vand.u32 %v393, 4294901760
      %v395 = vsub.f32 %v393, %v394
      %v396 = vand.u32 %v395, 4294901760
      %397 = vmatmul.mubr.f32.gmra.mrb[0].mxu0 %v396
      %v398 = vpop.f32.mrb[0].mxu0
      %v399 = vadd.f32 0.0, %v398
      %v400 = vpop.f32.mrb[0].mxu0
      %v401 = vadd.f32 0.0, %v400
      %402 = vmatprep.mubr.f32.mxu0 0.0
      %v403 = vand.u32 %v226, 4294901760
      %v404 = vsub.f32 %v226, %v403
      %v405 = vand.u32 %v404, 4294901760
      %v406 = vsub.f32 %v404, %v405
      %v407 = vand.u32 %v406, 4294901760
      %408 = vmatmul.mubr.f32.gmra.mrb[0].mxu0 %v407
      %v409 = vpop.f32.mrb[0].mxu0
      %v410 = vadd.f32 0.0, %v409
      %v411 = vpop.f32.mrb[0].mxu0
      %v412 = vadd.f32 0.0, %v411
      %413 = vmatprep.mubr.f32.mxu0 0.0
      %v414 = vand.u32 %v229, 4294901760
      %v415 = vsub.f32 %v229, %v414
      %v416 = vand.u32 %v415, 4294901760
      %v417 = vsub.f32 %v415, %v416
      %v418 = vand.u32 %v417, 4294901760
      %419 = vmatmul.mubr.f32.gmra.mrb[0].mxu0 %v418
      %v420 = vpop.f32.mrb[0].mxu0
      %v421 = vadd.f32 0.0, %v420
      %v422 = vpop.f32.mrb[0].mxu0
      %v423 = vadd.f32 0.0, %v422
      %424 = vmatprep.mubr.f32.mxu0 0.0
      %v425 = vand.u32 %v232, 4294901760
      %v426 = vsub.f32 %v232, %v425
      %v427 = vand.u32 %v426, 4294901760
      %v428 = vsub.f32 %v426, %v427
      %v429 = vand.u32 %v428, 4294901760
      %430 = vmatmul.mubr.f32.gmra.mrb[0].mxu0 %v429
      %v431 = vpop.f32.mrb[0].mxu0
      %v432 = vadd.f32 0.0, %v431
      %v433 = vpop.f32.mrb[0].mxu0
      %v434 = vadd.f32 0.0, %v433
      %435 = vmatprep.mubr.f32.mxu0 0.0
      %v436 = vand.u32 %v235, 4294901760
      %v437 = vsub.f32 %v235, %v436
      %v438 = vand.u32 %v437, 4294901760
      %v439 = vsub.f32 %v437, %v438
      %v440 = vand.u32 %v439, 4294901760
      %441 = vmatmul.mubr.f32.gmra.mrb[0].mxu0 %v440
      %v442 = vpop.f32.mrb[0].mxu0
      %v443 = vadd.f32 0.0, %v442
      %v444 = vpop.f32.mrb[0].mxu0
      %v445 = vadd.f32 0.0, %v444
      %446 = vmatprep.mubr.f32.mxu0 0.0
      %v447 = vand.u32 %v238, 4294901760
      %v448 = vsub.f32 %v238, %v447
      %v449 = vand.u32 %v448, 4294901760
      %v450 = vsub.f32 %v448, %v449
      %v451 = vand.u32 %v450, 4294901760
      %452 = vmatmul.mubr.f32.gmra.mrb[0].mxu0 %v451
      %v453 = vpop.f32.mrb[0].mxu0
      %v454 = vadd.f32 0.0, %v453
      %v455 = vpop.f32.mrb[0].mxu0
      %v456 = vadd.f32 0.0, %v455
      %457 = vmatprep.mubr.f32.mxu0 0.0
      %v458 = vand.u32 %v241, 4294901760
      %v459 = vsub.f32 %v241, %v458
      %v460 = vand.u32 %v459, 4294901760
      %v461 = vsub.f32 %v459, %v460
      %v462 = vand.u32 %v461, 4294901760
      %463 = vmatmul.mubr.f32.gmra.mrb[0].mxu0 %v462
      %v464 = vpop.f32.mrb[0].mxu0
      %v465 = vadd.f32 0.0, %v464
      %v466 = vpop.f32.mrb[0].mxu0
      %v467 = vadd.f32 0.0, %v466
      %468 = vmatprep.mubr.f32.mxu0 0.0
      %v469 = vand.u32 %v244, 4294901760
      %v470 = vsub.f32 %v244, %v469
      %v471 = vand.u32 %v470, 4294901760
      %v472 = vsub.f32 %v470, %v471
      %v473 = vand.u32 %v472, 4294901760
      %474 = vmatmul.mubr.f32.gmra.mrb[0].mxu0 %v473
      %v475 = vpop.f32.mrb[0].mxu0
      %v476 = vadd.f32 0.0, %v475
      %v477 = vpop.f32.mrb[0].mxu0
      %v478 = vadd.f32 0.0, %v477
      %479 = vmatprep.mubr.f32.mxu0 0.0
      %v480 = vand.u32 %v247, 4294901760
      %v481 = vsub.f32 %v247, %v480
      %v482 = vand.u32 %v481, 4294901760
      %v483 = vsub.f32 %v481, %v482
      %v484 = vand.u32 %v483, 4294901760
      %485 = vmatmul.mubr.f32.gmra.mrb[0].mxu0 %v484
      %v486 = vpop.f32.mrb[0].mxu0
      %v487 = vadd.f32 0.0, %v486
      %v488 = vpop.f32.mrb[0].mxu0
      %v489 = vadd.f32 0.0, %v488
      %490 = vmatprep.mubr.f32.mxu0 0.0
      %v491 = vand.u32 %v250, 4294901760
      %v492 = vsub.f32 %v250, %v491
      %v493 = vand.u32 %v492, 4294901760
      %v494 = vsub.f32 %v492, %v493
      %v495 = vand.u32 %v494, 4294901760
      %496 = vmatmul.mubr.f32.gmra.mrb[0].mxu0 %v495
      %v497 = vpop.f32.mrb[0].mxu0
      %v498 = vadd.f32 0.0, %v497
      %v499 = vpop.f32.mrb[0].mxu0
      %v500 = vadd.f32 0.0, %v499
      %501 = vdwg.mxu0
      %v502 = vand.u32 %v255, 4294901760
      %v503 = vsub.f32 %v255, %v502
      %v504 = vand.u32 %v503, 4294901760
      %v505 = vsub.f32 %v503, %v504
      %v506 = vand.u32 %v505, 4294901760
      %507 = vmatprep.subr.mxu0 %v506
      %v508 = vand.u32 %v253, 4294901760
      %v509 = vsub.f32 %v253, %v508
      %v510 = vand.u32 %v509, 4294901760
      %v511 = vsub.f32 %v509, %v510
      %v512 = vand.u32 %v511, 4294901760
      %513 = vmatpush1.msra.mxu0 %v512
      %514 = vmatprep.subr.mxu0 0.0
      %515 = vmatpush1.msra.mxu0 0.0
      %516 = vmatprep.subr.mxu0 0.0
      %517 = vmatpush1.msra.mxu0 0.0
      %518 = vmatprep.subr.mxu0 0.0
      %519 = vmatpush1.msra.mxu0 0.0
      %520 = vmatprep.subr.mxu0 0.0
      %521 = vmatpush1.msra.mxu0 0.0
      %522 = vmatprep.subr.mxu0 0.0
      %523 = vmatpush1.msra.mxu0 0.0
      %524 = vmatprep.subr.mxu0 0.0
      %525 = vmatpush1.msra.mxu0 0.0
      %526 = vmatprep.subr.mxu0 0.0
      %527 = vmatpush1.msra.mxu0 0.0
      %528 = vmatprep.subr.mxu0 0.0
      %529 = vmatpush1.msra.mxu0 0.0
      %530 = vmatprep.subr.mxu0 0.0
      %531 = vmatpush1.msra.mxu0 0.0
      %532 = vmatprep.subr.mxu0 0.0
      %533 = vmatpush1.msra.mxu0 0.0
      %534 = vmatprep.subr.mxu0 0.0
      %535 = vmatpush1.msra.mxu0 0.0
      %536 = vmatprep.subr.mxu0 0.0
      %537 = vmatpush1.msra.mxu0 0.0
      %538 = vmatprep.subr.mxu0 0.0
      %539 = vmatpush1.msra.mxu0 0.0
      %540 = vmatprep.subr.mxu0 0.0
      %541 = vmatpush1.msra.mxu0 0.0
      %542 = vmatprep.subr.mxu0 0.0
      %543 = vmatpush1.msra.mxu0 0.0
      %544 = vmatprep.subr.mxu0 0.0
      %545 = vmatpush1.msra.mxu0 0.0
      %546 = vmatprep.subr.mxu0 0.0
      %547 = vmatpush1.msra.mxu0 0.0
      %548 = vmatprep.subr.mxu0 0.0
      %549 = vmatpush1.msra.mxu0 0.0
      %550 = vmatprep.subr.mxu0 0.0
      %551 = vmatpush1.msra.mxu0 0.0
      %552 = vmatprep.subr.mxu0 0.0
      %553 = vmatpush1.msra.mxu0 0.0
      %554 = vmatprep.subr.mxu0 0.0
      %555 = vmatpush1.msra.mxu0 0.0
      %556 = vmatprep.subr.mxu0 0.0
      %557 = vmatpush1.msra.mxu0 0.0
      %558 = vmatprep.subr.mxu0 0.0
      %559 = vmatpush1.msra.mxu0 0.0
      %560 = vmatprep.subr.mxu0 0.0
      %561 = vmatpush1.msra.mxu0 0.0
      %562 = vmatprep.subr.mxu0 0.0
      %563 = vmatpush1.msra.mxu0 0.0
      %564 = vmatprep.subr.mxu0 0.0
      %565 = vmatpush1.msra.mxu0 0.0
      %566 = vmatprep.subr.mxu0 0.0
      %567 = vmatpush1.msra.mxu0 0.0
      %568 = vmatprep.subr.mxu0 0.0
      %569 = vmatpush1.msra.mxu0 0.0
      %570 = vmatprep.subr.mxu0 0.0
      %571 = vmatpush1.msra.mxu0 0.0
      %572 = vmatprep.subr.mxu0 0.0
      %573 = vmatpush1.msra.mxu0 0.0
      %574 = vmatprep.subr.mxu0 0.0
      %575 = vmatpush1.msra.mxu0 0.0
      %576 = vmatprep.mubr.f32.mxu0 0.0
      %v577 = vand.u32 %v205, 4294901760
      %578 = vmatmul.mubr.f32.gmra.mrb[0].mxu0 %v577
      %v579 = vpop.f32.mrb[0].mxu0
      %v580 = vadd.f32 %v333, %v579
      %v581 = vpop.f32.mrb[0].mxu0
      %v582 = vadd.f32 %v335, %v581
      %583 = vmatprep.mubr.f32.mxu0 0.0
      %v584 = vand.u32 %v208, 4294901760
      %585 = vmatmul.mubr.f32.gmra.mrb[0].mxu0 %v584
      %v586 = vpop.f32.mrb[0].mxu0
      %v587 = vadd.f32 %v344, %v586
      %v588 = vpop.f32.mrb[0].mxu0
      %v589 = vadd.f32 %v346, %v588
      %590 = vmatprep.mubr.f32.mxu0 0.0
      %v591 = vand.u32 %v211, 4294901760
      %592 = vmatmul.mubr.f32.gmra.mrb[0].mxu0 %v591
      %v593 = vpop.f32.mrb[0].mxu0
      %v594 = vadd.f32 %v355, %v593
      %v595 = vpop.f32.mrb[0].mxu0
      %v596 = vadd.f32 %v357, %v595
      %597 = vmatprep.mubr.f32.mxu0 0.0
      %v598 = vand.u32 %v214, 4294901760
      %599 = vmatmul.mubr.f32.gmra.mrb[0].mxu0 %v598
      %v600 = vpop.f32.mrb[0].mxu0
      %v601 = vadd.f32 %v366, %v600
      %v602 = vpop.f32.mrb[0].mxu0
      %v603 = vadd.f32 %v368, %v602
      %604 = vmatprep.mubr.f32.mxu0 0.0
      %v605 = vand.u32 %v217, 4294901760
      %606 = vmatmul.mubr.f32.gmra.mrb[0].mxu0 %v605
      %v607 = vpop.f32.mrb[0].mxu0
      %v608 = vadd.f32 %v377, %v607
      %v609 = vpop.f32.mrb[0].mxu0
      %v610 = vadd.f32 %v379, %v609
      %611 = vmatprep.mubr.f32.mxu0 0.0
      %v612 = vand.u32 %v220, 4294901760
      %613 = vmatmul.mubr.f32.gmra.mrb[0].mxu0 %v612
      %v614 = vpop.f32.mrb[0].mxu0
      %v615 = vadd.f32 %v388, %v614
      %v616 = vpop.f32.mrb[0].mxu0
      %v617 = vadd.f32 %v390, %v616
      %618 = vmatprep.mubr.f32.mxu0 0.0
      %v619 = vand.u32 %v223, 4294901760
      %620 = vmatmul.mubr.f32.gmra.mrb[0].mxu0 %v619
      %v621 = vpop.f32.mrb[0].mxu0
      %v622 = vadd.f32 %v399, %v621
      %v623 = vpop.f32.mrb[0].mxu0
      %v624 = vadd.f32 %v401, %v623
      %625 = vmatprep.mubr.f32.mxu0 0.0
      %v626 = vand.u32 %v226, 4294901760
      %627 = vmatmul.mubr.f32.gmra.mrb[0].mxu0 %v626
      %v628 = vpop.f32.mrb[0].mxu0
      %v629 = vadd.f32 %v410, %v628
      %v630 = vpop.f32.mrb[0].mxu0
      %v631 = vadd.f32 %v412, %v630
      %632 = vmatprep.mubr.f32.mxu0 0.0
      %v633 = vand.u32 %v229, 4294901760
      %634 = vmatmul.mubr.f32.gmra.mrb[0].mxu0 %v633
      %v635 = vpop.f32.mrb[0].mxu0
      %v636 = vadd.f32 %v421, %v635
      %v637 = vpop.f32.mrb[0].mxu0
      %v638 = vadd.f32 %v423, %v637
      %639 = vmatprep.mubr.f32.mxu0 0.0
      %v640 = vand.u32 %v232, 4294901760
      %641 = vmatmul.mubr.f32.gmra.mrb[0].mxu0 %v640
      %v642 = vpop.f32.mrb[0].mxu0
      %v643 = vadd.f32 %v432, %v642
      %v644 = vpop.f32.mrb[0].mxu0
      %v645 = vadd.f32 %v434, %v644
      %646 = vmatprep.mubr.f32.mxu0 0.0
      %v647 = vand.u32 %v235, 4294901760
      %648 = vmatmul.mubr.f32.gmra.mrb[0].mxu0 %v647
      %v649 = vpop.f32.mrb[0].mxu0
      %v650 = vadd.f32 %v443, %v649
      %v651 = vpop.f32.mrb[0].mxu0
      %v652 = vadd.f32 %v445, %v651
      %653 = vmatprep.mubr.f32.mxu0 0.0
      %v654 = vand.u32 %v238, 4294901760
      %655 = vmatmul.mubr.f32.gmra.mrb[0].mxu0 %v654
      %v656 = vpop.f32.mrb[0].mxu0
      %v657 = vadd.f32 %v454, %v656
      %v658 = vpop.f32.mrb[0].mxu0
      %v659 = vadd.f32 %v456, %v658
      %660 = vmatprep.mubr.f32.mxu0 0.0
      %v661 = vand.u32 %v241, 4294901760
      %662 = vmatmul.mubr.f32.gmra.mrb[0].mxu0 %v661
      %v663 = vpop.f32.mrb[0].mxu0
      %v664 = vadd.f32 %v465, %v663
      %v665 = vpop.f32.mrb[0].mxu0
      %v666 = vadd.f32 %v467, %v665
      %667 = vmatprep.mubr.f32.mxu0 0.0
      %v668 = vand.u32 %v244, 4294901760
      %669 = vmatmul.mubr.f32.gmra.mrb[0].mxu0 %v668
      %v670 = vpop.f32.mrb[0].mxu0
      %v671 = vadd.f32 %v476, %v670
      %v672 = vpop.f32.mrb[0].mxu0
      %v673 = vadd.f32 %v478, %v672
      %674 = vmatprep.mubr.f32.mxu0 0.0
      %v675 = vand.u32 %v247, 4294901760
      %676 = vmatmul.mubr.f32.gmra.mrb[0].mxu0 %v675
      %v677 = vpop.f32.mrb[0].mxu0
      %v678 = vadd.f32 %v487, %v677
      %v679 = vpop.f32.mrb[0].mxu0
      %v680 = vadd.f32 %v489, %v679
      %681 = vmatprep.mubr.f32.mxu0 0.0
      %v682 = vand.u32 %v250, 4294901760
      %683 = vmatmul.mubr.f32.gmra.mrb[0].mxu0 %v682
      %v684 = vpop.f32.mrb[0].mxu0
      %v685 = vadd.f32 %v498, %v684
      %v686 = vpop.f32.mrb[0].mxu0
      %v687 = vadd.f32 %v500, %v686
      %688 = vdwg.mxu0
      %v689 = vand.u32 %v255, 4294901760
      %v690 = vsub.f32 %v255, %v689
      %691 = vmatprep.subr.mxu0 %v690
      %v692 = vand.u32 %v253, 4294901760
      %v693 = vsub.f32 %v253, %v692
      %694 = vmatpush1.msra.mxu0 %v693
      %695 = vmatprep.subr.mxu0 0.0
      %696 = vmatpush1.msra.mxu0 0.0
      %697 = vmatprep.subr.mxu0 0.0
      %698 = vmatpush1.msra.mxu0 0.0
      %699 = vmatprep.subr.mxu0 0.0
      %700 = vmatpush1.msra.mxu0 0.0
      %701 = vmatprep.subr.mxu0 0.0
      %702 = vmatpush1.msra.mxu0 0.0
      %703 = vmatprep.subr.mxu0 0.0
      %704 = vmatpush1.msra.mxu0 0.0
      %705 = vmatprep.subr.mxu0 0.0
      %706 = vmatpush1.msra.mxu0 0.0
      %707 = vmatprep.subr.mxu0 0.0
      %708 = vmatpush1.msra.mxu0 0.0
      %709 = vmatprep.subr.mxu0 0.0
      %710 = vmatpush1.msra.mxu0 0.0
      %711 = vmatprep.subr.mxu0 0.0
      %712 = vmatpush1.msra.mxu0 0.0
      %713 = vmatprep.subr.mxu0 0.0
      %714 = vmatpush1.msra.mxu0 0.0
      %715 = vmatprep.subr.mxu0 0.0
      %716 = vmatpush1.msra.mxu0 0.0
      %717 = vmatprep.subr.mxu0 0.0
      %718 = vmatpush1.msra.mxu0 0.0
      %719 = vmatprep.subr.mxu0 0.0
      %720 = vmatpush1.msra.mxu0 0.0
      %721 = vmatprep.subr.mxu0 0.0
      %722 = vmatpush1.msra.mxu0 0.0
      %723 = vmatprep.subr.mxu0 0.0
      %724 = vmatpush1.msra.mxu0 0.0
      %725 = vmatprep.subr.mxu0 0.0
      %726 = vmatpush1.msra.mxu0 0.0
      %727 = vmatprep.subr.mxu0 0.0
      %728 = vmatpush1.msra.mxu0 0.0
      %729 = vmatprep.subr.mxu0 0.0
      %730 = vmatpush1.msra.mxu0 0.0
      %731 = vmatprep.subr.mxu0 0.0
      %732 = vmatpush1.msra.mxu0 0.0
      %733 = vmatprep.subr.mxu0 0.0
      %734 = vmatpush1.msra.mxu0 0.0
      %735 = vmatprep.subr.mxu0 0.0
      %736 = vmatpush1.msra.mxu0 0.0
      %737 = vmatprep.subr.mxu0 0.0
      %738 = vmatpush1.msra.mxu0 0.0
      %739 = vmatprep.subr.mxu0 0.0
      %740 = vmatpush1.msra.mxu0 0.0
      %741 = vmatprep.subr.mxu0 0.0
      %742 = vmatpush1.msra.mxu0 0.0
      %743 = vmatprep.subr.mxu0 0.0
      %744 = vmatpush1.msra.mxu0 0.0
      %745 = vmatprep.subr.mxu0 0.0
      %746 = vmatpush1.msra.mxu0 0.0
      %747 = vmatprep.subr.mxu0 0.0
      %748 = vmatpush1.msra.mxu0 0.0
      %749 = vmatprep.subr.mxu0 0.0
      %750 = vmatpush1.msra.mxu0 0.0
      %751 = vmatprep.subr.mxu0 0.0
      %752 = vmatpush1.msra.mxu0 0.0
      %753 = vmatprep.subr.mxu0 0.0
      %754 = vmatpush1.msra.mxu0 0.0
      %755 = vmatprep.subr.mxu0 0.0
      %756 = vmatpush1.msra.mxu0 0.0
      %757 = vmatprep.mubr.f32.mxu0 0.0
      %v758 = vand.u32 %v205, 4294901760
      %v759 = vsub.f32 %v205, %v758
      %760 = vmatmul.mubr.f32.gmra.mrb[0].mxu0 %v759
      %v761 = vpop.f32.mrb[0].mxu0
      %v762 = vadd.f32 %v580, %v761
      %v763 = vpop.f32.mrb[0].mxu0
      %v764 = vadd.f32 %v582, %v763
      %765 = vmatprep.mubr.f32.mxu0 0.0
      %v766 = vand.u32 %v208, 4294901760
      %v767 = vsub.f32 %v208, %v766
      %768 = vmatmul.mubr.f32.gmra.mrb[0].mxu0 %v767
      %v769 = vpop.f32.mrb[0].mxu0
      %v770 = vadd.f32 %v587, %v769
      %v771 = vpop.f32.mrb[0].mxu0
      %v772 = vadd.f32 %v589, %v771
      %773 = vmatprep.mubr.f32.mxu0 0.0
      %v774 = vand.u32 %v211, 4294901760
      %v775 = vsub.f32 %v211, %v774
      %776 = vmatmul.mubr.f32.gmra.mrb[0].mxu0 %v775
      %v777 = vpop.f32.mrb[0].mxu0
      %v778 = vadd.f32 %v594, %v777
      %v779 = vpop.f32.mrb[0].mxu0
      %v780 = vadd.f32 %v596, %v779
      %781 = vmatprep.mubr.f32.mxu0 0.0
      %v782 = vand.u32 %v214, 4294901760
      %v783 = vsub.f32 %v214, %v782
      %784 = vmatmul.mubr.f32.gmra.mrb[0].mxu0 %v783
      %v785 = vpop.f32.mrb[0].mxu0
      %v786 = vadd.f32 %v601, %v785
      %v787 = vpop.f32.mrb[0].mxu0
      %v788 = vadd.f32 %v603, %v787
      %789 = vmatprep.mubr.f32.mxu0 0.0
      %v790 = vand.u32 %v217, 4294901760
      %v791 = vsub.f32 %v217, %v790
      %792 = vmatmul.mubr.f32.gmra.mrb[0].mxu0 %v791
      %v793 = vpop.f32.mrb[0].mxu0
      %v794 = vadd.f32 %v608, %v793
      %v795 = vpop.f32.mrb[0].mxu0
      %v796 = vadd.f32 %v610, %v795
      %797 = vmatprep.mubr.f32.mxu0 0.0
      %v798 = vand.u32 %v220, 4294901760
      %v799 = vsub.f32 %v220, %v798
      %800 = vmatmul.mubr.f32.gmra.mrb[0].mxu0 %v799
      %v801 = vpop.f32.mrb[0].mxu0
      %v802 = vadd.f32 %v615, %v801
      %v803 = vpop.f32.mrb[0].mxu0
      %v804 = vadd.f32 %v617, %v803
      %805 = vmatprep.mubr.f32.mxu0 0.0
      %v806 = vand.u32 %v223, 4294901760
      %v807 = vsub.f32 %v223, %v806
      %808 = vmatmul.mubr.f32.gmra.mrb[0].mxu0 %v807
      %v809 = vpop.f32.mrb[0].mxu0
      %v810 = vadd.f32 %v622, %v809
      %v811 = vpop.f32.mrb[0].mxu0
      %v812 = vadd.f32 %v624, %v811
      %813 = vmatprep.mubr.f32.mxu0 0.0
      %v814 = vand.u32 %v226, 4294901760
      %v815 = vsub.f32 %v226, %v814
      %816 = vmatmul.mubr.f32.gmra.mrb[0].mxu0 %v815
      %v817 = vpop.f32.mrb[0].mxu0
      %v818 = vadd.f32 %v629, %v817
      %v819 = vpop.f32.mrb[0].mxu0
      %v820 = vadd.f32 %v631, %v819
      %821 = vmatprep.mubr.f32.mxu0 0.0
      %v822 = vand.u32 %v229, 4294901760
      %v823 = vsub.f32 %v229, %v822
      %824 = vmatmul.mubr.f32.gmra.mrb[0].mxu0 %v823
      %v825 = vpop.f32.mrb[0].mxu0
      %v826 = vadd.f32 %v636, %v825
      %v827 = vpop.f32.mrb[0].mxu0
      %v828 = vadd.f32 %v638, %v827
      %829 = vmatprep.mubr.f32.mxu0 0.0
      %v830 = vand.u32 %v232, 4294901760
      %v831 = vsub.f32 %v232, %v830
      %832 = vmatmul.mubr.f32.gmra.mrb[0].mxu0 %v831
      %v833 = vpop.f32.mrb[0].mxu0
      %v834 = vadd.f32 %v643, %v833
      %v835 = vpop.f32.mrb[0].mxu0
      %v836 = vadd.f32 %v645, %v835
      %837 = vmatprep.mubr.f32.mxu0 0.0
      %v838 = vand.u32 %v235, 4294901760
      %v839 = vsub.f32 %v235, %v838
      %840 = vmatmul.mubr.f32.gmra.mrb[0].mxu0 %v839
      %v841 = vpop.f32.mrb[0].mxu0
      %v842 = vadd.f32 %v650, %v841
      %v843 = vpop.f32.mrb[0].mxu0
      %v844 = vadd.f32 %v652, %v843
      %845 = vmatprep.mubr.f32.mxu0 0.0
      %v846 = vand.u32 %v238, 4294901760
      %v847 = vsub.f32 %v238, %v846
      %848 = vmatmul.mubr.f32.gmra.mrb[0].mxu0 %v847
      %v849 = vpop.f32.mrb[0].mxu0
      %v850 = vadd.f32 %v657, %v849
      %v851 = vpop.f32.mrb[0].mxu0
      %v852 = vadd.f32 %v659, %v851
      %853 = vmatprep.mubr.f32.mxu0 0.0
      %v854 = vand.u32 %v241, 4294901760
      %v855 = vsub.f32 %v241, %v854
      %856 = vmatmul.mubr.f32.gmra.mrb[0].mxu0 %v855
      %v857 = vpop.f32.mrb[0].mxu0
      %v858 = vadd.f32 %v664, %v857
      %v859 = vpop.f32.mrb[0].mxu0
      %v860 = vadd.f32 %v666, %v859
      %861 = vmatprep.mubr.f32.mxu0 0.0
      %v862 = vand.u32 %v244, 4294901760
      %v863 = vsub.f32 %v244, %v862
      %864 = vmatmul.mubr.f32.gmra.mrb[0].mxu0 %v863
      %v865 = vpop.f32.mrb[0].mxu0
      %v866 = vadd.f32 %v671, %v865
      %v867 = vpop.f32.mrb[0].mxu0
      %v868 = vadd.f32 %v673, %v867
      %869 = vmatprep.mubr.f32.mxu0 0.0
      %v870 = vand.u32 %v247, 4294901760
      %v871 = vsub.f32 %v247, %v870
      %872 = vmatmul.mubr.f32.gmra.mrb[0].mxu0 %v871
      %v873 = vpop.f32.mrb[0].mxu0
      %v874 = vadd.f32 %v678, %v873
      %v875 = vpop.f32.mrb[0].mxu0
      %v876 = vadd.f32 %v680, %v875
      %877 = vmatprep.mubr.f32.mxu0 0.0
      %v878 = vand.u32 %v250, 4294901760
      %v879 = vsub.f32 %v250, %v878
      %880 = vmatmul.mubr.f32.gmra.mrb[0].mxu0 %v879
      %v881 = vpop.f32.mrb[0].mxu0
      %v882 = vadd.f32 %v685, %v881
      %v883 = vpop.f32.mrb[0].mxu0
      %v884 = vadd.f32 %v687, %v883
      %885 = vdwg.mxu0
      %v886 = vand.u32 %v255, 4294901760
      %887 = vmatprep.subr.mxu0 %v886
      %v888 = vand.u32 %v253, 4294901760
      %889 = vmatpush1.msra.mxu0 %v888
      %890 = vmatprep.subr.mxu0 0.0
      %891 = vmatpush1.msra.mxu0 0.0
      %892 = vmatprep.subr.mxu0 0.0
      %893 = vmatpush1.msra.mxu0 0.0
      %894 = vmatprep.subr.mxu0 0.0
      %895 = vmatpush1.msra.mxu0 0.0
      %896 = vmatprep.subr.mxu0 0.0
      %897 = vmatpush1.msra.mxu0 0.0
      %898 = vmatprep.subr.mxu0 0.0
      %899 = vmatpush1.msra.mxu0 0.0
      %900 = vmatprep.subr.mxu0 0.0
      %901 = vmatpush1.msra.mxu0 0.0
      %902 = vmatprep.subr.mxu0 0.0
      %903 = vmatpush1.msra.mxu0 0.0
      %904 = vmatprep.subr.mxu0 0.0
      %905 = vmatpush1.msra.mxu0 0.0
      %906 = vmatprep.subr.mxu0 0.0
      %907 = vmatpush1.msra.mxu0 0.0
      %908 = vmatprep.subr.mxu0 0.0
      %909 = vmatpush1.msra.mxu0 0.0
      %910 = vmatprep.subr.mxu0 0.0
      %911 = vmatpush1.msra.mxu0 0.0
      %912 = vmatprep.subr.mxu0 0.0
      %913 = vmatpush1.msra.mxu0 0.0
      %914 = vmatprep.subr.mxu0 0.0
      %915 = vmatpush1.msra.mxu0 0.0
      %916 = vmatprep.subr.mxu0 0.0
      %917 = vmatpush1.msra.mxu0 0.0
      %918 = vmatprep.subr.mxu0 0.0
      %919 = vmatpush1.msra.mxu0 0.0
      %920 = vmatprep.subr.mxu0 0.0
      %921 = vmatpush1.msra.mxu0 0.0
      %922 = vmatprep.subr.mxu0 0.0
      %923 = vmatpush1.msra.mxu0 0.0
      %924 = vmatprep.subr.mxu0 0.0
      %925 = vmatpush1.msra.mxu0 0.0
      %926 = vmatprep.subr.mxu0 0.0
      %927 = vmatpush1.msra.mxu0 0.0
      %928 = vmatprep.subr.mxu0 0.0
      %929 = vmatpush1.msra.mxu0 0.0
      %930 = vmatprep.subr.mxu0 0.0
      %931 = vmatpush1.msra.mxu0 0.0
      %932 = vmatprep.subr.mxu0 0.0
      %933 = vmatpush1.msra.mxu0 0.0
      %934 = vmatprep.subr.mxu0 0.0
      %935 = vmatpush1.msra.mxu0 0.0
      %936 = vmatprep.subr.mxu0 0.0
      %937 = vmatpush1.msra.mxu0 0.0
      %938 = vmatprep.subr.mxu0 0.0
      %939 = vmatpush1.msra.mxu0 0.0
      %940 = vmatprep.subr.mxu0 0.0
      %941 = vmatpush1.msra.mxu0 0.0
      %942 = vmatprep.subr.mxu0 0.0
      %943 = vmatpush1.msra.mxu0 0.0
      %944 = vmatprep.subr.mxu0 0.0
      %945 = vmatpush1.msra.mxu0 0.0
      %946 = vmatprep.subr.mxu0 0.0
      %947 = vmatpush1.msra.mxu0 0.0
      %948 = vmatprep.subr.mxu0 0.0
      %949 = vmatpush1.msra.mxu0 0.0
      %950 = vmatprep.subr.mxu0 0.0
      %951 = vmatpush1.msra.mxu0 0.0
      %952 = vmatprep.mubr.f32.mxu0 0.0
      %v953 = vand.u32 %v205, 4294901760
      %v954 = vsub.f32 %v205, %v953
      %v955 = vand.u32 %v954, 4294901760
      %956 = vmatmul.mubr.f32.gmra.mrb[0].mxu0 %v955
      %v957 = vpop.f32.mrb[0].mxu0
      %v958 = vadd.f32 %v762, %v957
      %v959 = vpop.f32.mrb[0].mxu0
      %v960 = vadd.f32 %v764, %v959
      %961 = vmatprep.mubr.f32.mxu0 0.0
      %v962 = vand.u32 %v208, 4294901760
      %v963 = vsub.f32 %v208, %v962
      %v964 = vand.u32 %v963, 4294901760
      %965 = vmatmul.mubr.f32.gmra.mrb[0].mxu0 %v964
      %v966 = vpop.f32.mrb[0].mxu0
      %v967 = vadd.f32 %v770, %v966
      %v968 = vpop.f32.mrb[0].mxu0
      %v969 = vadd.f32 %v772, %v968
      %970 = vmatprep.mubr.f32.mxu0 0.0
      %v971 = vand.u32 %v211, 4294901760
      %v972 = vsub.f32 %v211, %v971
      %v973 = vand.u32 %v972, 4294901760
      %974 = vmatmul.mubr.f32.gmra.mrb[0].mxu0 %v973
      %v975 = vpop.f32.mrb[0].mxu0
      %v976 = vadd.f32 %v778, %v975
      %v977 = vpop.f32.mrb[0].mxu0
      %v978 = vadd.f32 %v780, %v977
      %979 = vmatprep.mubr.f32.mxu0 0.0
      %v980 = vand.u32 %v214, 4294901760
      %v981 = vsub.f32 %v214, %v980
      %v982 = vand.u32 %v981, 4294901760
      %983 = vmatmul.mubr.f32.gmra.mrb[0].mxu0 %v982
      %v984 = vpop.f32.mrb[0].mxu0
      %v985 = vadd.f32 %v786, %v984
      %v986 = vpop.f32.mrb[0].mxu0
      %v987 = vadd.f32 %v788, %v986
      %988 = vmatprep.mubr.f32.mxu0 0.0
      %v989 = vand.u32 %v217, 4294901760
      %v990 = vsub.f32 %v217, %v989
      %v991 = vand.u32 %v990, 4294901760
      %992 = vmatmul.mubr.f32.gmra.mrb[0].mxu0 %v991
      %v993 = vpop.f32.mrb[0].mxu0
      %v994 = vadd.f32 %v794, %v993
      %v995 = vpop.f32.mrb[0].mxu0
      %v996 = vadd.f32 %v796, %v995
      %997 = vmatprep.mubr.f32.mxu0 0.0
      %v998 = vand.u32 %v220, 4294901760
      %v999 = vsub.f32 %v220, %v998
      %v1000 = vand.u32 %v999, 4294901760
      %1001 = vmatmul.mubr.f32.gmra.mrb[0].mxu0 %v1000
      %v1002 = vpop.f32.mrb[0].mxu0
      %v1003 = vadd.f32 %v802, %v1002
      %v1004 = vpop.f32.mrb[0].mxu0
      %v1005 = vadd.f32 %v804, %v1004
      %1006 = vmatprep.mubr.f32.mxu0 0.0
      %v1007 = vand.u32 %v223, 4294901760
      %v1008 = vsub.f32 %v223, %v1007
      %v1009 = vand.u32 %v1008, 4294901760
      %1010 = vmatmul.mubr.f32.gmra.mrb[0].mxu0 %v1009
      %v1011 = vpop.f32.mrb[0].mxu0
      %v1012 = vadd.f32 %v810, %v1011
      %v1013 = vpop.f32.mrb[0].mxu0
      %v1014 = vadd.f32 %v812, %v1013
      %1015 = vmatprep.mubr.f32.mxu0 0.0
      %v1016 = vand.u32 %v226, 4294901760
      %v1017 = vsub.f32 %v226, %v1016
      %v1018 = vand.u32 %v1017, 4294901760
      %1019 = vmatmul.mubr.f32.gmra.mrb[0].mxu0 %v1018
      %v1020 = vpop.f32.mrb[0].mxu0
      %v1021 = vadd.f32 %v818, %v1020
      %v1022 = vpop.f32.mrb[0].mxu0
      %v1023 = vadd.f32 %v820, %v1022
      %1024 = vmatprep.mubr.f32.mxu0 0.0
      %v1025 = vand.u32 %v229, 4294901760
      %v1026 = vsub.f32 %v229, %v1025
      %v1027 = vand.u32 %v1026, 4294901760
      %1028 = vmatmul.mubr.f32.gmra.mrb[0].mxu0 %v1027
      %v1029 = vpop.f32.mrb[0].mxu0
      %v1030 = vadd.f32 %v826, %v1029
      %v1031 = vpop.f32.mrb[0].mxu0
      %v1032 = vadd.f32 %v828, %v1031
      %1033 = vmatprep.mubr.f32.mxu0 0.0
      %v1034 = vand.u32 %v232, 4294901760
      %v1035 = vsub.f32 %v232, %v1034
      %v1036 = vand.u32 %v1035, 4294901760
      %1037 = vmatmul.mubr.f32.gmra.mrb[0].mxu0 %v1036
      %v1038 = vpop.f32.mrb[0].mxu0
      %v1039 = vadd.f32 %v834, %v1038
      %v1040 = vpop.f32.mrb[0].mxu0
      %v1041 = vadd.f32 %v836, %v1040
      %1042 = vmatprep.mubr.f32.mxu0 0.0
      %v1043 = vand.u32 %v235, 4294901760
      %v1044 = vsub.f32 %v235, %v1043
      %v1045 = vand.u32 %v1044, 4294901760
      %1046 = vmatmul.mubr.f32.gmra.mrb[0].mxu0 %v1045
      %v1047 = vpop.f32.mrb[0].mxu0
      %v1048 = vadd.f32 %v842, %v1047
      %v1049 = vpop.f32.mrb[0].mxu0
      %v1050 = vadd.f32 %v844, %v1049
      %1051 = vmatprep.mubr.f32.mxu0 0.0
      %v1052 = vand.u32 %v238, 4294901760
      %v1053 = vsub.f32 %v238, %v1052
      %v1054 = vand.u32 %v1053, 4294901760
      %1055 = vmatmul.mubr.f32.gmra.mrb[0].mxu0 %v1054
      %v1056 = vpop.f32.mrb[0].mxu0
      %v1057 = vadd.f32 %v850, %v1056
      %v1058 = vpop.f32.mrb[0].mxu0
      %v1059 = vadd.f32 %v852, %v1058
      %1060 = vmatprep.mubr.f32.mxu0 0.0
      %v1061 = vand.u32 %v241, 4294901760
      %v1062 = vsub.f32 %v241, %v1061
      %v1063 = vand.u32 %v1062, 4294901760
      %1064 = vmatmul.mubr.f32.gmra.mrb[0].mxu0 %v1063
      %v1065 = vpop.f32.mrb[0].mxu0
      %v1066 = vadd.f32 %v858, %v1065
      %v1067 = vpop.f32.mrb[0].mxu0
      %v1068 = vadd.f32 %v860, %v1067
      %1069 = vmatprep.mubr.f32.mxu0 0.0
      %v1070 = vand.u32 %v244, 4294901760
      %v1071 = vsub.f32 %v244, %v1070
      %v1072 = vand.u32 %v1071, 4294901760
      %1073 = vmatmul.mubr.f32.gmra.mrb[0].mxu0 %v1072
      %v1074 = vpop.f32.mrb[0].mxu0
      %v1075 = vadd.f32 %v866, %v1074
      %v1076 = vpop.f32.mrb[0].mxu0
      %v1077 = vadd.f32 %v868, %v1076
      %1078 = vmatprep.mubr.f32.mxu0 0.0
      %v1079 = vand.u32 %v247, 4294901760
      %v1080 = vsub.f32 %v247, %v1079
      %v1081 = vand.u32 %v1080, 4294901760
      %1082 = vmatmul.mubr.f32.gmra.mrb[0].mxu0 %v1081
      %v1083 = vpop.f32.mrb[0].mxu0
      %v1084 = vadd.f32 %v874, %v1083
      %v1085 = vpop.f32.mrb[0].mxu0
      %v1086 = vadd.f32 %v876, %v1085
      %1087 = vmatprep.mubr.f32.mxu0 0.0
      %v1088 = vand.u32 %v250, 4294901760
      %v1089 = vsub.f32 %v250, %v1088
      %v1090 = vand.u32 %v1089, 4294901760
      %1091 = vmatmul.mubr.f32.gmra.mrb[0].mxu0 %v1090
      %v1092 = vpop.f32.mrb[0].mxu0
      %v1093 = vadd.f32 %v882, %v1092
      %v1094 = vpop.f32.mrb[0].mxu0
      %v1095 = vadd.f32 %v884, %v1094
      %1096 = vdwg.mxu0
      %v1097 = vand.u32 %v255, 4294901760
      %v1098 = vsub.f32 %v255, %v1097
      %v1099 = vand.u32 %v1098, 4294901760
      %1100 = vmatprep.subr.mxu0 %v1099
      %v1101 = vand.u32 %v253, 4294901760
      %v1102 = vsub.f32 %v253, %v1101
      %v1103 = vand.u32 %v1102, 4294901760
      %1104 = vmatpush1.msra.mxu0 %v1103
      %1105 = vmatprep.subr.mxu0 0.0
      %1106 = vmatpush1.msra.mxu0 0.0
      %1107 = vmatprep.subr.mxu0 0.0
      %1108 = vmatpush1.msra.mxu0 0.0
      %1109 = vmatprep.subr.mxu0 0.0
      %1110 = vmatpush1.msra.mxu0 0.0
      %1111 = vmatprep.subr.mxu0 0.0
      %1112 = vmatpush1.msra.mxu0 0.0
      %1113 = vmatprep.subr.mxu0 0.0
      %1114 = vmatpush1.msra.mxu0 0.0
      %1115 = vmatprep.subr.mxu0 0.0
      %1116 = vmatpush1.msra.mxu0 0.0
      %1117 = vmatprep.subr.mxu0 0.0
      %1118 = vmatpush1.msra.mxu0 0.0
      %1119 = vmatprep.subr.mxu0 0.0
      %1120 = vmatpush1.msra.mxu0 0.0
      %1121 = vmatprep.subr.mxu0 0.0
      %1122 = vmatpush1.msra.mxu0 0.0
      %1123 = vmatprep.subr.mxu0 0.0
      %1124 = vmatpush1.msra.mxu0 0.0
      %1125 = vmatprep.subr.mxu0 0.0
      %1126 = vmatpush1.msra.mxu0 0.0
      %1127 = vmatprep.subr.mxu0 0.0
      %1128 = vmatpush1.msra.mxu0 0.0
      %1129 = vmatprep.subr.mxu0 0.0
      %1130 = vmatpush1.msra.mxu0 0.0
      %1131 = vmatprep.subr.mxu0 0.0
      %1132 = vmatpush1.msra.mxu0 0.0
      %1133 = vmatprep.subr.mxu0 0.0
      %1134 = vmatpush1.msra.mxu0 0.0
      %1135 = vmatprep.subr.mxu0 0.0
      %1136 = vmatpush1.msra.mxu0 0.0
      %1137 = vmatprep.subr.mxu0 0.0
      %1138 = vmatpush1.msra.mxu0 0.0
      %1139 = vmatprep.subr.mxu0 0.0
      %1140 = vmatpush1.msra.mxu0 0.0
      %1141 = vmatprep.subr.mxu0 0.0
      %1142 = vmatpush1.msra.mxu0 0.0
      %1143 = vmatprep.subr.mxu0 0.0
      %1144 = vmatpush1.msra.mxu0 0.0
      %1145 = vmatprep.subr.mxu0 0.0
      %1146 = vmatpush1.msra.mxu0 0.0
      %1147 = vmatprep.subr.mxu0 0.0
      %1148 = vmatpush1.msra.mxu0 0.0
      %1149 = vmatprep.subr.mxu0 0.0
      %1150 = vmatpush1.msra.mxu0 0.0
      %1151 = vmatprep.subr.mxu0 0.0
      %1152 = vmatpush1.msra.mxu0 0.0
      %1153 = vmatprep.subr.mxu0 0.0
      %1154 = vmatpush1.msra.mxu0 0.0
      %1155 = vmatprep.subr.mxu0 0.0
      %1156 = vmatpush1.msra.mxu0 0.0
      %1157 = vmatprep.subr.mxu0 0.0
      %1158 = vmatpush1.msra.mxu0 0.0
      %1159 = vmatprep.subr.mxu0 0.0
      %1160 = vmatpush1.msra.mxu0 0.0
      %1161 = vmatprep.subr.mxu0 0.0
      %1162 = vmatpush1.msra.mxu0 0.0
      %1163 = vmatprep.subr.mxu0 0.0
      %1164 = vmatpush1.msra.mxu0 0.0
      %1165 = vmatprep.subr.mxu0 0.0
      %1166 = vmatpush1.msra.mxu0 0.0
      %1167 = vmatprep.mubr.f32.mxu0 0.0
      %v1168 = vand.u32 %v205, 4294901760
      %1169 = vmatmul.mubr.f32.gmra.mrb[0].mxu0 %v1168
      %v1170 = vpop.f32.mrb[0].mxu0
      %v1171 = vadd.f32 %v958, %v1170
      %v1172 = vpop.f32.mrb[0].mxu0
      %v1173 = vadd.f32 %v960, %v1172
      %1174 = vmatprep.mubr.f32.mxu0 0.0
      %v1175 = vand.u32 %v208, 4294901760
      %1176 = vmatmul.mubr.f32.gmra.mrb[0].mxu0 %v1175
      %v1177 = vpop.f32.mrb[0].mxu0
      %v1178 = vadd.f32 %v967, %v1177
      %v1179 = vpop.f32.mrb[0].mxu0
      %v1180 = vadd.f32 %v969, %v1179
      %1181 = vmatprep.mubr.f32.mxu0 0.0
      %v1182 = vand.u32 %v211, 4294901760
      %1183 = vmatmul.mubr.f32.gmra.mrb[0].mxu0 %v1182
      %v1184 = vpop.f32.mrb[0].mxu0
      %v1185 = vadd.f32 %v976, %v1184
      %v1186 = vpop.f32.mrb[0].mxu0
      %v1187 = vadd.f32 %v978, %v1186
      %1188 = vmatprep.mubr.f32.mxu0 0.0
      %v1189 = vand.u32 %v214, 4294901760
      %1190 = vmatmul.mubr.f32.gmra.mrb[0].mxu0 %v1189
      %v1191 = vpop.f32.mrb[0].mxu0
      %v1192 = vadd.f32 %v985, %v1191
      %v1193 = vpop.f32.mrb[0].mxu0
      %v1194 = vadd.f32 %v987, %v1193
      %1195 = vmatprep.mubr.f32.mxu0 0.0
      %v1196 = vand.u32 %v217, 4294901760
      %1197 = vmatmul.mubr.f32.gmra.mrb[0].mxu0 %v1196
      %v1198 = vpop.f32.mrb[0].mxu0
      %v1199 = vadd.f32 %v994, %v1198
      %v1200 = vpop.f32.mrb[0].mxu0
      %v1201 = vadd.f32 %v996, %v1200
      %1202 = vmatprep.mubr.f32.mxu0 0.0
      %v1203 = vand.u32 %v220, 4294901760
      %1204 = vmatmul.mubr.f32.gmra.mrb[0].mxu0 %v1203
      %v1205 = vpop.f32.mrb[0].mxu0
      %v1206 = vadd.f32 %v1003, %v1205
      %v1207 = vpop.f32.mrb[0].mxu0
      %v1208 = vadd.f32 %v1005, %v1207
      %1209 = vmatprep.mubr.f32.mxu0 0.0
      %v1210 = vand.u32 %v223, 4294901760
      %1211 = vmatmul.mubr.f32.gmra.mrb[0].mxu0 %v1210
      %v1212 = vpop.f32.mrb[0].mxu0
      %v1213 = vadd.f32 %v1012, %v1212
      %v1214 = vpop.f32.mrb[0].mxu0
      %v1215 = vadd.f32 %v1014, %v1214
      %1216 = vmatprep.mubr.f32.mxu0 0.0
      %v1217 = vand.u32 %v226, 4294901760
      %1218 = vmatmul.mubr.f32.gmra.mrb[0].mxu0 %v1217
      %v1219 = vpop.f32.mrb[0].mxu0
      %v1220 = vadd.f32 %v1021, %v1219
      %v1221 = vpop.f32.mrb[0].mxu0
      %v1222 = vadd.f32 %v1023, %v1221
      %1223 = vmatprep.mubr.f32.mxu0 0.0
      %v1224 = vand.u32 %v229, 4294901760
      %1225 = vmatmul.mubr.f32.gmra.mrb[0].mxu0 %v1224
      %v1226 = vpop.f32.mrb[0].mxu0
      %v1227 = vadd.f32 %v1030, %v1226
      %v1228 = vpop.f32.mrb[0].mxu0
      %v1229 = vadd.f32 %v1032, %v1228
      %1230 = vmatprep.mubr.f32.mxu0 0.0
      %v1231 = vand.u32 %v232, 4294901760
      %1232 = vmatmul.mubr.f32.gmra.mrb[0].mxu0 %v1231
      %v1233 = vpop.f32.mrb[0].mxu0
      %v1234 = vadd.f32 %v1039, %v1233
      %v1235 = vpop.f32.mrb[0].mxu0
      %v1236 = vadd.f32 %v1041, %v1235
      %1237 = vmatprep.mubr.f32.mxu0 0.0
      %v1238 = vand.u32 %v235, 4294901760
      %1239 = vmatmul.mubr.f32.gmra.mrb[0].mxu0 %v1238
      %v1240 = vpop.f32.mrb[0].mxu0
      %v1241 = vadd.f32 %v1048, %v1240
      %v1242 = vpop.f32.mrb[0].mxu0
      %v1243 = vadd.f32 %v1050, %v1242
      %1244 = vmatprep.mubr.f32.mxu0 0.0
      %v1245 = vand.u32 %v238, 4294901760
      %1246 = vmatmul.mubr.f32.gmra.mrb[0].mxu0 %v1245
      %v1247 = vpop.f32.mrb[0].mxu0
      %v1248 = vadd.f32 %v1057, %v1247
      %v1249 = vpop.f32.mrb[0].mxu0
      %v1250 = vadd.f32 %v1059, %v1249
      %1251 = vmatprep.mubr.f32.mxu0 0.0
      %v1252 = vand.u32 %v241, 4294901760
      %1253 = vmatmul.mubr.f32.gmra.mrb[0].mxu0 %v1252
      %v1254 = vpop.f32.mrb[0].mxu0
      %v1255 = vadd.f32 %v1066, %v1254
      %v1256 = vpop.f32.mrb[0].mxu0
      %v1257 = vadd.f32 %v1068, %v1256
      %1258 = vmatprep.mubr.f32.mxu0 0.0
      %v1259 = vand.u32 %v244, 4294901760
      %1260 = vmatmul.mubr.f32.gmra.mrb[0].mxu0 %v1259
      %v1261 = vpop.f32.mrb[0].mxu0
      %v1262 = vadd.f32 %v1075, %v1261
      %v1263 = vpop.f32.mrb[0].mxu0
      %v1264 = vadd.f32 %v1077, %v1263
      %1265 = vmatprep.mubr.f32.mxu0 0.0
      %v1266 = vand.u32 %v247, 4294901760
      %1267 = vmatmul.mubr.f32.gmra.mrb[0].mxu0 %v1266
      %v1268 = vpop.f32.mrb[0].mxu0
      %v1269 = vadd.f32 %v1084, %v1268
      %v1270 = vpop.f32.mrb[0].mxu0
      %v1271 = vadd.f32 %v1086, %v1270
      %1272 = vmatprep.mubr.f32.mxu0 0.0
      %v1273 = vand.u32 %v250, 4294901760
      %1274 = vmatmul.mubr.f32.gmra.mrb[0].mxu0 %v1273
      %v1275 = vpop.f32.mrb[0].mxu0
      %v1276 = vadd.f32 %v1093, %v1275
      %v1277 = vpop.f32.mrb[0].mxu0
      %v1278 = vadd.f32 %v1095, %v1277
      %1279 = vdwg.mxu0
      %v1280 = vand.u32 %v255, 4294901760
      %1281 = vmatprep.subr.mxu0 %v1280
      %v1282 = vand.u32 %v253, 4294901760
      %1283 = vmatpush1.msra.mxu0 %v1282
      %1284 = vmatprep.subr.mxu0 0.0
      %1285 = vmatpush1.msra.mxu0 0.0
      %1286 = vmatprep.subr.mxu0 0.0
      %1287 = vmatpush1.msra.mxu0 0.0
      %1288 = vmatprep.subr.mxu0 0.0
      %1289 = vmatpush1.msra.mxu0 0.0
      %1290 = vmatprep.subr.mxu0 0.0
      %1291 = vmatpush1.msra.mxu0 0.0
      %1292 = vmatprep.subr.mxu0 0.0
      %1293 = vmatpush1.msra.mxu0 0.0
      %1294 = vmatprep.subr.mxu0 0.0
      %1295 = vmatpush1.msra.mxu0 0.0
      %1296 = vmatprep.subr.mxu0 0.0
      %1297 = vmatpush1.msra.mxu0 0.0
      %1298 = vmatprep.subr.mxu0 0.0
      %1299 = vmatpush1.msra.mxu0 0.0
      %1300 = vmatprep.subr.mxu0 0.0
      %1301 = vmatpush1.msra.mxu0 0.0
      %1302 = vmatprep.subr.mxu0 0.0
      %1303 = vmatpush1.msra.mxu0 0.0
      %1304 = vmatprep.subr.mxu0 0.0
      %1305 = vmatpush1.msra.mxu0 0.0
      %1306 = vmatprep.subr.mxu0 0.0
      %1307 = vmatpush1.msra.mxu0 0.0
      %1308 = vmatprep.subr.mxu0 0.0
      %1309 = vmatpush1.msra.mxu0 0.0
      %1310 = vmatprep.subr.mxu0 0.0
      %1311 = vmatpush1.msra.mxu0 0.0
      %1312 = vmatprep.subr.mxu0 0.0
      %1313 = vmatpush1.msra.mxu0 0.0
      %1314 = vmatprep.subr.mxu0 0.0
      %1315 = vmatpush1.msra.mxu0 0.0
      %1316 = vmatprep.subr.mxu0 0.0
      %1317 = vmatpush1.msra.mxu0 0.0
      %1318 = vmatprep.subr.mxu0 0.0
      %1319 = vmatpush1.msra.mxu0 0.0
      %1320 = vmatprep.subr.mxu0 0.0
      %1321 = vmatpush1.msra.mxu0 0.0
      %1322 = vmatprep.subr.mxu0 0.0
      %1323 = vmatpush1.msra.mxu0 0.0
      %1324 = vmatprep.subr.mxu0 0.0
      %1325 = vmatpush1.msra.mxu0 0.0
      %1326 = vmatprep.subr.mxu0 0.0
      %1327 = vmatpush1.msra.mxu0 0.0
      %1328 = vmatprep.subr.mxu0 0.0
      %1329 = vmatpush1.msra.mxu0 0.0
      %1330 = vmatprep.subr.mxu0 0.0
      %1331 = vmatpush1.msra.mxu0 0.0
      %1332 = vmatprep.subr.mxu0 0.0
      %1333 = vmatpush1.msra.mxu0 0.0
      %1334 = vmatprep.subr.mxu0 0.0
      %1335 = vmatpush1.msra.mxu0 0.0
      %1336 = vmatprep.subr.mxu0 0.0
      %1337 = vmatpush1.msra.mxu0 0.0
      %1338 = vmatprep.subr.mxu0 0.0
      %1339 = vmatpush1.msra.mxu0 0.0
      %1340 = vmatprep.subr.mxu0 0.0
      %1341 = vmatpush1.msra.mxu0 0.0
      %1342 = vmatprep.subr.mxu0 0.0
      %1343 = vmatpush1.msra.mxu0 0.0
      %1344 = vmatprep.subr.mxu0 0.0
      %1345 = vmatpush1.msra.mxu0 0.0
      %1346 = vmatprep.mubr.f32.mxu0 0.0
      %v1347 = vand.u32 %v205, 4294901760
      %1348 = vmatmul.mubr.f32.gmra.mrb[0].mxu0 %v1347
      %v1349 = vpop.f32.mrb[0].mxu0
      %v1350 = vadd.f32 %v1171, %v1349
      %v1351 = vpop.f32.mrb[0].mxu0
      %v1352 = vadd.f32 %v1173, %v1351
      %1353 = vmatprep.mubr.f32.mxu0 0.0
      %v1354 = vand.u32 %v208, 4294901760
      %1355 = vmatmul.mubr.f32.gmra.mrb[0].mxu0 %v1354
      %v1356 = vpop.f32.mrb[0].mxu0
      %v1357 = vadd.f32 %v1178, %v1356
      %v1358 = vpop.f32.mrb[0].mxu0
      %v1359 = vadd.f32 %v1180, %v1358
      %1360 = vmatprep.mubr.f32.mxu0 0.0
      %v1361 = vand.u32 %v211, 4294901760
      %1362 = vmatmul.mubr.f32.gmra.mrb[0].mxu0 %v1361
      %v1363 = vpop.f32.mrb[0].mxu0
      %v1364 = vadd.f32 %v1185, %v1363
      %v1365 = vpop.f32.mrb[0].mxu0
      %v1366 = vadd.f32 %v1187, %v1365
      %1367 = vmatprep.mubr.f32.mxu0 0.0
      %v1368 = vand.u32 %v214, 4294901760
      %1369 = vmatmul.mubr.f32.gmra.mrb[0].mxu0 %v1368
      %v1370 = vpop.f32.mrb[0].mxu0
      %v1371 = vadd.f32 %v1192, %v1370
      %v1372 = vpop.f32.mrb[0].mxu0
      %v1373 = vadd.f32 %v1194, %v1372
      %1374 = vmatprep.mubr.f32.mxu0 0.0
      %v1375 = vand.u32 %v217, 4294901760
      %1376 = vmatmul.mubr.f32.gmra.mrb[0].mxu0 %v1375
      %v1377 = vpop.f32.mrb[0].mxu0
      %v1378 = vadd.f32 %v1199, %v1377
      %v1379 = vpop.f32.mrb[0].mxu0
      %v1380 = vadd.f32 %v1201, %v1379
      %1381 = vmatprep.mubr.f32.mxu0 0.0
      %v1382 = vand.u32 %v220, 4294901760
      %1383 = vmatmul.mubr.f32.gmra.mrb[0].mxu0 %v1382
      %v1384 = vpop.f32.mrb[0].mxu0
      %v1385 = vadd.f32 %v1206, %v1384
      %v1386 = vpop.f32.mrb[0].mxu0
      %v1387 = vadd.f32 %v1208, %v1386
      %1388 = vmatprep.mubr.f32.mxu0 0.0
      %v1389 = vand.u32 %v223, 4294901760
      %1390 = vmatmul.mubr.f32.gmra.mrb[0].mxu0 %v1389
      %v1391 = vpop.f32.mrb[0].mxu0
      %v1392 = vadd.f32 %v1213, %v1391
      %v1393 = vpop.f32.mrb[0].mxu0
      %v1394 = vadd.f32 %v1215, %v1393
      %1395 = vmatprep.mubr.f32.mxu0 0.0
      %v1396 = vand.u32 %v226, 4294901760
      %1397 = vmatmul.mubr.f32.gmra.mrb[0].mxu0 %v1396
      %v1398 = vpop.f32.mrb[0].mxu0
      %v1399 = vadd.f32 %v1220, %v1398
      %v1400 = vpop.f32.mrb[0].mxu0
      %v1401 = vadd.f32 %v1222, %v1400
      %1402 = vmatprep.mubr.f32.mxu0 0.0
      %v1403 = vand.u32 %v229, 4294901760
      %1404 = vmatmul.mubr.f32.gmra.mrb[0].mxu0 %v1403
      %v1405 = vpop.f32.mrb[0].mxu0
      %v1406 = vadd.f32 %v1227, %v1405
      %v1407 = vpop.f32.mrb[0].mxu0
      %v1408 = vadd.f32 %v1229, %v1407
      %1409 = vmatprep.mubr.f32.mxu0 0.0
      %v1410 = vand.u32 %v232, 4294901760
      %1411 = vmatmul.mubr.f32.gmra.mrb[0].mxu0 %v1410
      %v1412 = vpop.f32.mrb[0].mxu0
      %v1413 = vadd.f32 %v1234, %v1412
      %v1414 = vpop.f32.mrb[0].mxu0
      %v1415 = vadd.f32 %v1236, %v1414
      %1416 = vmatprep.mubr.f32.mxu0 0.0
      %v1417 = vand.u32 %v235, 4294901760
      %1418 = vmatmul.mubr.f32.gmra.mrb[0].mxu0 %v1417
      %v1419 = vpop.f32.mrb[0].mxu0
      %v1420 = vadd.f32 %v1241, %v1419
      %v1421 = vpop.f32.mrb[0].mxu0
      %v1422 = vadd.f32 %v1243, %v1421
      %1423 = vmatprep.mubr.f32.mxu0 0.0
      %v1424 = vand.u32 %v238, 4294901760
      %1425 = vmatmul.mubr.f32.gmra.mrb[0].mxu0 %v1424
      %v1426 = vpop.f32.mrb[0].mxu0
      %v1427 = vadd.f32 %v1248, %v1426
      %v1428 = vpop.f32.mrb[0].mxu0
      %v1429 = vadd.f32 %v1250, %v1428
      %1430 = vmatprep.mubr.f32.mxu0 0.0
      %v1431 = vand.u32 %v241, 4294901760
      %1432 = vmatmul.mubr.f32.gmra.mrb[0].mxu0 %v1431
      %v1433 = vpop.f32.mrb[0].mxu0
      %v1434 = vadd.f32 %v1255, %v1433
      %v1435 = vpop.f32.mrb[0].mxu0
      %v1436 = vadd.f32 %v1257, %v1435
      %1437 = vmatprep.mubr.f32.mxu0 0.0
      %v1438 = vand.u32 %v244, 4294901760
      %1439 = vmatmul.mubr.f32.gmra.mrb[0].mxu0 %v1438
      %v1440 = vpop.f32.mrb[0].mxu0
      %v1441 = vadd.f32 %v1262, %v1440
      %v1442 = vpop.f32.mrb[0].mxu0
      %v1443 = vadd.f32 %v1264, %v1442
      %1444 = vmatprep.mubr.f32.mxu0 0.0
      %v1445 = vand.u32 %v247, 4294901760
      %1446 = vmatmul.mubr.f32.gmra.mrb[0].mxu0 %v1445
      %v1447 = vpop.f32.mrb[0].mxu0
      %v1448 = vadd.f32 %v1269, %v1447
      %v1449 = vpop.f32.mrb[0].mxu0
      %v1450 = vadd.f32 %v1271, %v1449
      %1451 = vmatprep.mubr.f32.mxu0 0.0
      %v1452 = vand.u32 %v250, 4294901760
      %1453 = vmatmul.mubr.f32.gmra.mrb[0].mxu0 %v1452
      %v1454 = vpop.f32.mrb[0].mxu0
      %v1455 = vadd.f32 %v1276, %v1454
      %v1456 = vpop.f32.mrb[0].mxu0
      %v1457 = vadd.f32 %v1278, %v1456
      %1458 = vdwg.mxu0
      %1459 = vmatprep.subr.mxu0 0.0
      %v1460 = vand.u32 %v257, 4294901760
      %1461 = vmatpush1.msra.mxu0 %v1460
      %1462 = vmatprep.subr.mxu0 0.0
      %1463 = vmatpush1.msra.mxu0 0.0
      %1464 = vmatprep.subr.mxu0 0.0
      %1465 = vmatpush1.msra.mxu0 0.0
      %1466 = vmatprep.subr.mxu0 0.0
      %1467 = vmatpush1.msra.mxu0 0.0
      %1468 = vmatprep.subr.mxu0 0.0
      %1469 = vmatpush1.msra.mxu0 0.0
      %1470 = vmatprep.subr.mxu0 0.0
      %1471 = vmatpush1.msra.mxu0 0.0
      %1472 = vmatprep.subr.mxu0 0.0
      %1473 = vmatpush1.msra.mxu0 0.0
      %1474 = vmatprep.subr.mxu0 0.0
      %1475 = vmatpush1.msra.mxu0 0.0
      %1476 = vmatprep.subr.mxu0 0.0
      %1477 = vmatpush1.msra.mxu0 0.0
      %1478 = vmatprep.subr.mxu0 0.0
      %1479 = vmatpush1.msra.mxu0 0.0
      %1480 = vmatprep.subr.mxu0 0.0
      %1481 = vmatpush1.msra.mxu0 0.0
      %1482 = vmatprep.subr.mxu0 0.0
      %1483 = vmatpush1.msra.mxu0 0.0
      %1484 = vmatprep.subr.mxu0 0.0
      %1485 = vmatpush1.msra.mxu0 0.0
      %1486 = vmatprep.subr.mxu0 0.0
      %1487 = vmatpush1.msra.mxu0 0.0
      %1488 = vmatprep.subr.mxu0 0.0
      %1489 = vmatpush1.msra.mxu0 0.0
      %1490 = vmatprep.subr.mxu0 0.0
      %1491 = vmatpush1.msra.mxu0 0.0
      %1492 = vmatprep.subr.mxu0 0.0
      %1493 = vmatpush1.msra.mxu0 0.0
      %1494 = vmatprep.subr.mxu0 0.0
      %1495 = vmatpush1.msra.mxu0 0.0
      %1496 = vmatprep.subr.mxu0 0.0
      %1497 = vmatpush1.msra.mxu0 0.0
      %1498 = vmatprep.subr.mxu0 0.0
      %1499 = vmatpush1.msra.mxu0 0.0
      %1500 = vmatprep.subr.mxu0 0.0
      %1501 = vmatpush1.msra.mxu0 0.0
      %1502 = vmatprep.subr.mxu0 0.0
      %1503 = vmatpush1.msra.mxu0 0.0
      %1504 = vmatprep.subr.mxu0 0.0
      %1505 = vmatpush1.msra.mxu0 0.0
      %1506 = vmatprep.subr.mxu0 0.0
      %1507 = vmatpush1.msra.mxu0 0.0
      %1508 = vmatprep.subr.mxu0 0.0
      %1509 = vmatpush1.msra.mxu0 0.0
      %1510 = vmatprep.subr.mxu0 0.0
      %1511 = vmatpush1.msra.mxu0 0.0
      %1512 = vmatprep.subr.mxu0 0.0
      %1513 = vmatpush1.msra.mxu0 0.0
      %1514 = vmatprep.subr.mxu0 0.0
      %1515 = vmatpush1.msra.mxu0 0.0
      %1516 = vmatprep.subr.mxu0 0.0
      %1517 = vmatpush1.msra.mxu0 0.0
      %1518 = vmatprep.subr.mxu0 0.0
      %1519 = vmatpush1.msra.mxu0 0.0
      %1520 = vmatprep.subr.mxu0 0.0
      %1521 = vmatpush1.msra.mxu0 0.0
      %1522 = vmatprep.subr.mxu0 0.0
      %1523 = vmatpush1.msra.mxu0 0.0
      %1524 = vmatprep.mubr.f32.mxu0 0.0
      %v1525 = vand.u32 %v205, 4294901760
      %v1526 = vsub.f32 %v205, %v1525
      %v1527 = vand.u32 %v1526, 4294901760
      %v1528 = vsub.f32 %v1526, %v1527
      %v1529 = vand.u32 %v1528, 4294901760
      %1530 = vmatmul.mubr.f32.gmra.mrb[0].mxu0 %v1529
      %v1531 = vpop.f32.mrb[0].mxu0
      %v1532 = vadd.f32 0.0, %v1531
      %v1533 = vpop.f32.mrb[0].mxu0
      %1534 = vmatprep.mubr.f32.mxu0 0.0
      %v1535 = vand.u32 %v208, 4294901760
      %v1536 = vsub.f32 %v208, %v1535
      %v1537 = vand.u32 %v1536, 4294901760
      %v1538 = vsub.f32 %v1536, %v1537
      %v1539 = vand.u32 %v1538, 4294901760
      %1540 = vmatmul.mubr.f32.gmra.mrb[0].mxu0 %v1539
      %v1541 = vpop.f32.mrb[0].mxu0
      %v1542 = vadd.f32 0.0, %v1541
      %v1543 = vpop.f32.mrb[0].mxu0
      %1544 = vmatprep.mubr.f32.mxu0 0.0
      %v1545 = vand.u32 %v211, 4294901760
      %v1546 = vsub.f32 %v211, %v1545
      %v1547 = vand.u32 %v1546, 4294901760
      %v1548 = vsub.f32 %v1546, %v1547
      %v1549 = vand.u32 %v1548, 4294901760
      %1550 = vmatmul.mubr.f32.gmra.mrb[0].mxu0 %v1549
      %v1551 = vpop.f32.mrb[0].mxu0
      %v1552 = vadd.f32 0.0, %v1551
      %v1553 = vpop.f32.mrb[0].mxu0
      %1554 = vmatprep.mubr.f32.mxu0 0.0
      %v1555 = vand.u32 %v214, 4294901760
      %v1556 = vsub.f32 %v214, %v1555
      %v1557 = vand.u32 %v1556, 4294901760
      %v1558 = vsub.f32 %v1556, %v1557
      %v1559 = vand.u32 %v1558, 4294901760
      %1560 = vmatmul.mubr.f32.gmra.mrb[0].mxu0 %v1559
      %v1561 = vpop.f32.mrb[0].mxu0
      %v1562 = vadd.f32 0.0, %v1561
      %v1563 = vpop.f32.mrb[0].mxu0
      %1564 = vmatprep.mubr.f32.mxu0 0.0
      %v1565 = vand.u32 %v217, 4294901760
      %v1566 = vsub.f32 %v217, %v1565
      %v1567 = vand.u32 %v1566, 4294901760
      %v1568 = vsub.f32 %v1566, %v1567
      %v1569 = vand.u32 %v1568, 4294901760
      %1570 = vmatmul.mubr.f32.gmra.mrb[0].mxu0 %v1569
      %v1571 = vpop.f32.mrb[0].mxu0
      %v1572 = vadd.f32 0.0, %v1571
      %v1573 = vpop.f32.mrb[0].mxu0
      %1574 = vmatprep.mubr.f32.mxu0 0.0
      %v1575 = vand.u32 %v220, 4294901760
      %v1576 = vsub.f32 %v220, %v1575
      %v1577 = vand.u32 %v1576, 4294901760
      %v1578 = vsub.f32 %v1576, %v1577
      %v1579 = vand.u32 %v1578, 4294901760
      %1580 = vmatmul.mubr.f32.gmra.mrb[0].mxu0 %v1579
      %v1581 = vpop.f32.mrb[0].mxu0
      %v1582 = vadd.f32 0.0, %v1581
      %v1583 = vpop.f32.mrb[0].mxu0
      %1584 = vmatprep.mubr.f32.mxu0 0.0
      %v1585 = vand.u32 %v223, 4294901760
      %v1586 = vsub.f32 %v223, %v1585
      %v1587 = vand.u32 %v1586, 4294901760
      %v1588 = vsub.f32 %v1586, %v1587
      %v1589 = vand.u32 %v1588, 4294901760
      %1590 = vmatmul.mubr.f32.gmra.mrb[0].mxu0 %v1589
      %v1591 = vpop.f32.mrb[0].mxu0
      %v1592 = vadd.f32 0.0, %v1591
      %v1593 = vpop.f32.mrb[0].mxu0
      %1594 = vmatprep.mubr.f32.mxu0 0.0
      %v1595 = vand.u32 %v226, 4294901760
      %v1596 = vsub.f32 %v226, %v1595
      %v1597 = vand.u32 %v1596, 4294901760
      %v1598 = vsub.f32 %v1596, %v1597
      %v1599 = vand.u32 %v1598, 4294901760
      %1600 = vmatmul.mubr.f32.gmra.mrb[0].mxu0 %v1599
      %v1601 = vpop.f32.mrb[0].mxu0
      %v1602 = vadd.f32 0.0, %v1601
      %v1603 = vpop.f32.mrb[0].mxu0
      %1604 = vmatprep.mubr.f32.mxu0 0.0
      %v1605 = vand.u32 %v229, 4294901760
      %v1606 = vsub.f32 %v229, %v1605
      %v1607 = vand.u32 %v1606, 4294901760
      %v1608 = vsub.f32 %v1606, %v1607
      %v1609 = vand.u32 %v1608, 4294901760
      %1610 = vmatmul.mubr.f32.gmra.mrb[0].mxu0 %v1609
      %v1611 = vpop.f32.mrb[0].mxu0
      %v1612 = vadd.f32 0.0, %v1611
      %v1613 = vpop.f32.mrb[0].mxu0
      %1614 = vmatprep.mubr.f32.mxu0 0.0
      %v1615 = vand.u32 %v232, 4294901760
      %v1616 = vsub.f32 %v232, %v1615
      %v1617 = vand.u32 %v1616, 4294901760
      %v1618 = vsub.f32 %v1616, %v1617
      %v1619 = vand.u32 %v1618, 4294901760
      %1620 = vmatmul.mubr.f32.gmra.mrb[0].mxu0 %v1619
      %v1621 = vpop.f32.mrb[0].mxu0
      %v1622 = vadd.f32 0.0, %v1621
      %v1623 = vpop.f32.mrb[0].mxu0
      %1624 = vmatprep.mubr.f32.mxu0 0.0
      %v1625 = vand.u32 %v235, 4294901760
      %v1626 = vsub.f32 %v235, %v1625
      %v1627 = vand.u32 %v1626, 4294901760
      %v1628 = vsub.f32 %v1626, %v1627
      %v1629 = vand.u32 %v1628, 4294901760
      %1630 = vmatmul.mubr.f32.gmra.mrb[0].mxu0 %v1629
      %v1631 = vpop.f32.mrb[0].mxu0
      %v1632 = vadd.f32 0.0, %v1631
      %v1633 = vpop.f32.mrb[0].mxu0
      %1634 = vmatprep.mubr.f32.mxu0 0.0
      %v1635 = vand.u32 %v238, 4294901760
      %v1636 = vsub.f32 %v238, %v1635
      %v1637 = vand.u32 %v1636, 4294901760
      %v1638 = vsub.f32 %v1636, %v1637
      %v1639 = vand.u32 %v1638, 4294901760
      %1640 = vmatmul.mubr.f32.gmra.mrb[0].mxu0 %v1639
      %v1641 = vpop.f32.mrb[0].mxu0
      %v1642 = vadd.f32 0.0, %v1641
      %v1643 = vpop.f32.mrb[0].mxu0
      %1644 = vmatprep.mubr.f32.mxu0 0.0
      %v1645 = vand.u32 %v241, 4294901760
      %v1646 = vsub.f32 %v241, %v1645
      %v1647 = vand.u32 %v1646, 4294901760
      %v1648 = vsub.f32 %v1646, %v1647
      %v1649 = vand.u32 %v1648, 4294901760
      %1650 = vmatmul.mubr.f32.gmra.mrb[0].mxu0 %v1649
      %v1651 = vpop.f32.mrb[0].mxu0
      %v1652 = vadd.f32 0.0, %v1651
      %v1653 = vpop.f32.mrb[0].mxu0
      %1654 = vmatprep.mubr.f32.mxu0 0.0
      %v1655 = vand.u32 %v244, 4294901760
      %v1656 = vsub.f32 %v244, %v1655
      %v1657 = vand.u32 %v1656, 4294901760
      %v1658 = vsub.f32 %v1656, %v1657
      %v1659 = vand.u32 %v1658, 4294901760
      %1660 = vmatmul.mubr.f32.gmra.mrb[0].mxu0 %v1659
      %v1661 = vpop.f32.mrb[0].mxu0
      %v1662 = vadd.f32 0.0, %v1661
      %v1663 = vpop.f32.mrb[0].mxu0
      %1664 = vmatprep.mubr.f32.mxu0 0.0
      %v1665 = vand.u32 %v247, 4294901760
      %v1666 = vsub.f32 %v247, %v1665
      %v1667 = vand.u32 %v1666, 4294901760
      %v1668 = vsub.f32 %v1666, %v1667
      %v1669 = vand.u32 %v1668, 4294901760
      %1670 = vmatmul.mubr.f32.gmra.mrb[0].mxu0 %v1669
      %v1671 = vpop.f32.mrb[0].mxu0
      %v1672 = vadd.f32 0.0, %v1671
      %v1673 = vpop.f32.mrb[0].mxu0
      %1674 = vmatprep.mubr.f32.mxu0 0.0
      %v1675 = vand.u32 %v250, 4294901760
      %v1676 = vsub.f32 %v250, %v1675
      %v1677 = vand.u32 %v1676, 4294901760
      %v1678 = vsub.f32 %v1676, %v1677
      %v1679 = vand.u32 %v1678, 4294901760
      %1680 = vmatmul.mubr.f32.gmra.mrb[0].mxu0 %v1679
      %v1681 = vpop.f32.mrb[0].mxu0
      %v1682 = vadd.f32 0.0, %v1681
      %v1683 = vpop.f32.mrb[0].mxu0
      %1684 = vdwg.mxu0
      %1685 = vmatprep.subr.mxu0 0.0
      %v1686 = vand.u32 %v257, 4294901760
      %v1687 = vsub.f32 %v257, %v1686
      %v1688 = vand.u32 %v1687, 4294901760
      %v1689 = vsub.f32 %v1687, %v1688
      %v1690 = vand.u32 %v1689, 4294901760
      %1691 = vmatpush1.msra.mxu0 %v1690
      %1692 = vmatprep.subr.mxu0 0.0
      %1693 = vmatpush1.msra.mxu0 0.0
      %1694 = vmatprep.subr.mxu0 0.0
      %1695 = vmatpush1.msra.mxu0 0.0
      %1696 = vmatprep.subr.mxu0 0.0
      %1697 = vmatpush1.msra.mxu0 0.0
      %1698 = vmatprep.subr.mxu0 0.0
      %1699 = vmatpush1.msra.mxu0 0.0
      %1700 = vmatprep.subr.mxu0 0.0
      %1701 = vmatpush1.msra.mxu0 0.0
      %1702 = vmatprep.subr.mxu0 0.0
      %1703 = vmatpush1.msra.mxu0 0.0
      %1704 = vmatprep.subr.mxu0 0.0
      %1705 = vmatpush1.msra.mxu0 0.0
      %1706 = vmatprep.subr.mxu0 0.0
      %1707 = vmatpush1.msra.mxu0 0.0
      %1708 = vmatprep.subr.mxu0 0.0
      %1709 = vmatpush1.msra.mxu0 0.0
      %1710 = vmatprep.subr.mxu0 0.0
      %1711 = vmatpush1.msra.mxu0 0.0
      %1712 = vmatprep.subr.mxu0 0.0
      %1713 = vmatpush1.msra.mxu0 0.0
      %1714 = vmatprep.subr.mxu0 0.0
      %1715 = vmatpush1.msra.mxu0 0.0
      %1716 = vmatprep.subr.mxu0 0.0
      %1717 = vmatpush1.msra.mxu0 0.0
      %1718 = vmatprep.subr.mxu0 0.0
      %1719 = vmatpush1.msra.mxu0 0.0
      %1720 = vmatprep.subr.mxu0 0.0
      %1721 = vmatpush1.msra.mxu0 0.0
      %1722 = vmatprep.subr.mxu0 0.0
      %1723 = vmatpush1.msra.mxu0 0.0
      %1724 = vmatprep.subr.mxu0 0.0
      %1725 = vmatpush1.msra.mxu0 0.0
      %1726 = vmatprep.subr.mxu0 0.0
      %1727 = vmatpush1.msra.mxu0 0.0
      %1728 = vmatprep.subr.mxu0 0.0
      %1729 = vmatpush1.msra.mxu0 0.0
      %1730 = vmatprep.subr.mxu0 0.0
      %1731 = vmatpush1.msra.mxu0 0.0
      %1732 = vmatprep.subr.mxu0 0.0
      %1733 = vmatpush1.msra.mxu0 0.0
      %1734 = vmatprep.subr.mxu0 0.0
      %1735 = vmatpush1.msra.mxu0 0.0
      %1736 = vmatprep.subr.mxu0 0.0
      %1737 = vmatpush1.msra.mxu0 0.0
      %1738 = vmatprep.subr.mxu0 0.0
      %1739 = vmatpush1.msra.mxu0 0.0
      %1740 = vmatprep.subr.mxu0 0.0
      %1741 = vmatpush1.msra.mxu0 0.0
      %1742 = vmatprep.subr.mxu0 0.0
      %1743 = vmatpush1.msra.mxu0 0.0
      %1744 = vmatprep.subr.mxu0 0.0
      %1745 = vmatpush1.msra.mxu0 0.0
      %1746 = vmatprep.subr.mxu0 0.0
      %1747 = vmatpush1.msra.mxu0 0.0
      %1748 = vmatprep.subr.mxu0 0.0
      %1749 = vmatpush1.msra.mxu0 0.0
      %1750 = vmatprep.subr.mxu0 0.0
      %1751 = vmatpush1.msra.mxu0 0.0
      %1752 = vmatprep.subr.mxu0 0.0
      %1753 = vmatpush1.msra.mxu0 0.0
      %1754 = vmatprep.mubr.f32.mxu0 0.0
      %v1755 = vand.u32 %v205, 4294901760
      %1756 = vmatmul.mubr.f32.gmra.mrb[0].mxu0 %v1755
      %v1757 = vpop.f32.mrb[0].mxu0
      %v1758 = vadd.f32 %v1532, %v1757
      %v1759 = vpop.f32.mrb[0].mxu0
      %1760 = vmatprep.mubr.f32.mxu0 0.0
      %v1761 = vand.u32 %v208, 4294901760
      %1762 = vmatmul.mubr.f32.gmra.mrb[0].mxu0 %v1761
      %v1763 = vpop.f32.mrb[0].mxu0
      %v1764 = vadd.f32 %v1542, %v1763
      %v1765 = vpop.f32.mrb[0].mxu0
      %1766 = vmatprep.mubr.f32.mxu0 0.0
      %v1767 = vand.u32 %v211, 4294901760
      %1768 = vmatmul.mubr.f32.gmra.mrb[0].mxu0 %v1767
      %v1769 = vpop.f32.mrb[0].mxu0
      %v1770 = vadd.f32 %v1552, %v1769
      %v1771 = vpop.f32.mrb[0].mxu0
      %1772 = vmatprep.mubr.f32.mxu0 0.0
      %v1773 = vand.u32 %v214, 4294901760
      %1774 = vmatmul.mubr.f32.gmra.mrb[0].mxu0 %v1773
      %v1775 = vpop.f32.mrb[0].mxu0
      %v1776 = vadd.f32 %v1562, %v1775
      %v1777 = vpop.f32.mrb[0].mxu0
      %1778 = vmatprep.mubr.f32.mxu0 0.0
      %v1779 = vand.u32 %v217, 4294901760
      %1780 = vmatmul.mubr.f32.gmra.mrb[0].mxu0 %v1779
      %v1781 = vpop.f32.mrb[0].mxu0
      %v1782 = vadd.f32 %v1572, %v1781
      %v1783 = vpop.f32.mrb[0].mxu0
      %1784 = vmatprep.mubr.f32.mxu0 0.0
      %v1785 = vand.u32 %v220, 4294901760
      %1786 = vmatmul.mubr.f32.gmra.mrb[0].mxu0 %v1785
      %v1787 = vpop.f32.mrb[0].mxu0
      %v1788 = vadd.f32 %v1582, %v1787
      %v1789 = vpop.f32.mrb[0].mxu0
      %1790 = vmatprep.mubr.f32.mxu0 0.0
      %v1791 = vand.u32 %v223, 4294901760
      %1792 = vmatmul.mubr.f32.gmra.mrb[0].mxu0 %v1791
      %v1793 = vpop.f32.mrb[0].mxu0
      %v1794 = vadd.f32 %v1592, %v1793
      %v1795 = vpop.f32.mrb[0].mxu0
      %1796 = vmatprep.mubr.f32.mxu0 0.0
      %v1797 = vand.u32 %v226, 4294901760
      %1798 = vmatmul.mubr.f32.gmra.mrb[0].mxu0 %v1797
      %v1799 = vpop.f32.mrb[0].mxu0
      %v1800 = vadd.f32 %v1602, %v1799
      %v1801 = vpop.f32.mrb[0].mxu0
      %1802 = vmatprep.mubr.f32.mxu0 0.0
      %v1803 = vand.u32 %v229, 4294901760
      %1804 = vmatmul.mubr.f32.gmra.mrb[0].mxu0 %v1803
      %v1805 = vpop.f32.mrb[0].mxu0
      %v1806 = vadd.f32 %v1612, %v1805
      %v1807 = vpop.f32.mrb[0].mxu0
      %1808 = vmatprep.mubr.f32.mxu0 0.0
      %v1809 = vand.u32 %v232, 4294901760
      %1810 = vmatmul.mubr.f32.gmra.mrb[0].mxu0 %v1809
      %v1811 = vpop.f32.mrb[0].mxu0
      %v1812 = vadd.f32 %v1622, %v1811
      %v1813 = vpop.f32.mrb[0].mxu0
      %1814 = vmatprep.mubr.f32.mxu0 0.0
      %v1815 = vand.u32 %v235, 4294901760
      %1816 = vmatmul.mubr.f32.gmra.mrb[0].mxu0 %v1815
      %v1817 = vpop.f32.mrb[0].mxu0
      %v1818 = vadd.f32 %v1632, %v1817
      %v1819 = vpop.f32.mrb[0].mxu0
      %1820 = vmatprep.mubr.f32.mxu0 0.0
      %v1821 = vand.u32 %v238, 4294901760
      %1822 = vmatmul.mubr.f32.gmra.mrb[0].mxu0 %v1821
      %v1823 = vpop.f32.mrb[0].mxu0
      %v1824 = vadd.f32 %v1642, %v1823
      %v1825 = vpop.f32.mrb[0].mxu0
      %1826 = vmatprep.mubr.f32.mxu0 0.0
      %v1827 = vand.u32 %v241, 4294901760
      %1828 = vmatmul.mubr.f32.gmra.mrb[0].mxu0 %v1827
      %v1829 = vpop.f32.mrb[0].mxu0
      %v1830 = vadd.f32 %v1652, %v1829
      %v1831 = vpop.f32.mrb[0].mxu0
      %1832 = vmatprep.mubr.f32.mxu0 0.0
      %v1833 = vand.u32 %v244, 4294901760
      %1834 = vmatmul.mubr.f32.gmra.mrb[0].mxu0 %v1833
      %v1835 = vpop.f32.mrb[0].mxu0
      %v1836 = vadd.f32 %v1662, %v1835
      %v1837 = vpop.f32.mrb[0].mxu0
      %1838 = vmatprep.mubr.f32.mxu0 0.0
      %v1839 = vand.u32 %v247, 4294901760
      %1840 = vmatmul.mubr.f32.gmra.mrb[0].mxu0 %v1839
      %v1841 = vpop.f32.mrb[0].mxu0
      %v1842 = vadd.f32 %v1672, %v1841
      %v1843 = vpop.f32.mrb[0].mxu0
      %1844 = vmatprep.mubr.f32.mxu0 0.0
      %v1845 = vand.u32 %v250, 4294901760
      %1846 = vmatmul.mubr.f32.gmra.mrb[0].mxu0 %v1845
      %v1847 = vpop.f32.mrb[0].mxu0
      %v1848 = vadd.f32 %v1682, %v1847
      %v1849 = vpop.f32.mrb[0].mxu0
      %1850 = vdwg.mxu0
      %1851 = vmatprep.subr.mxu0 0.0
      %v1852 = vand.u32 %v257, 4294901760
      %v1853 = vsub.f32 %v257, %v1852
      %1854 = vmatpush1.msra.mxu0 %v1853
      %1855 = vmatprep.subr.mxu0 0.0
      %1856 = vmatpush1.msra.mxu0 0.0
      %1857 = vmatprep.subr.mxu0 0.0
      %1858 = vmatpush1.msra.mxu0 0.0
      %1859 = vmatprep.subr.mxu0 0.0
      %1860 = vmatpush1.msra.mxu0 0.0
      %1861 = vmatprep.subr.mxu0 0.0
      %1862 = vmatpush1.msra.mxu0 0.0
      %1863 = vmatprep.subr.mxu0 0.0
      %1864 = vmatpush1.msra.mxu0 0.0
      %1865 = vmatprep.subr.mxu0 0.0
      %1866 = vmatpush1.msra.mxu0 0.0
      %1867 = vmatprep.subr.mxu0 0.0
      %1868 = vmatpush1.msra.mxu0 0.0
      %1869 = vmatprep.subr.mxu0 0.0
      %1870 = vmatpush1.msra.mxu0 0.0
      %1871 = vmatprep.subr.mxu0 0.0
      %1872 = vmatpush1.msra.mxu0 0.0
      %1873 = vmatprep.subr.mxu0 0.0
      %1874 = vmatpush1.msra.mxu0 0.0
      %1875 = vmatprep.subr.mxu0 0.0
      %1876 = vmatpush1.msra.mxu0 0.0
      %1877 = vmatprep.subr.mxu0 0.0
      %1878 = vmatpush1.msra.mxu0 0.0
      %1879 = vmatprep.subr.mxu0 0.0
      %1880 = vmatpush1.msra.mxu0 0.0
      %1881 = vmatprep.subr.mxu0 0.0
      %1882 = vmatpush1.msra.mxu0 0.0
      %1883 = vmatprep.subr.mxu0 0.0
      %1884 = vmatpush1.msra.mxu0 0.0
      %1885 = vmatprep.subr.mxu0 0.0
      %1886 = vmatpush1.msra.mxu0 0.0
      %1887 = vmatprep.subr.mxu0 0.0
      %1888 = vmatpush1.msra.mxu0 0.0
      %1889 = vmatprep.subr.mxu0 0.0
      %1890 = vmatpush1.msra.mxu0 0.0
      %1891 = vmatprep.subr.mxu0 0.0
      %1892 = vmatpush1.msra.mxu0 0.0
      %1893 = vmatprep.subr.mxu0 0.0
      %1894 = vmatpush1.msra.mxu0 0.0
      %1895 = vmatprep.subr.mxu0 0.0
      %1896 = vmatpush1.msra.mxu0 0.0
      %1897 = vmatprep.subr.mxu0 0.0
      %1898 = vmatpush1.msra.mxu0 0.0
      %1899 = vmatprep.subr.mxu0 0.0
      %1900 = vmatpush1.msra.mxu0 0.0
      %1901 = vmatprep.subr.mxu0 0.0
      %1902 = vmatpush1.msra.mxu0 0.0
      %1903 = vmatprep.subr.mxu0 0.0
      %1904 = vmatpush1.msra.mxu0 0.0
      %1905 = vmatprep.subr.mxu0 0.0
      %1906 = vmatpush1.msra.mxu0 0.0
      %1907 = vmatprep.subr.mxu0 0.0
      %1908 = vmatpush1.msra.mxu0 0.0
      %1909 = vmatprep.subr.mxu0 0.0
      %1910 = vmatpush1.msra.mxu0 0.0
      %1911 = vmatprep.subr.mxu0 0.0
      %1912 = vmatpush1.msra.mxu0 0.0
      %1913 = vmatprep.subr.mxu0 0.0
      %1914 = vmatpush1.msra.mxu0 0.0
      %1915 = vmatprep.subr.mxu0 0.0
      %1916 = vmatpush1.msra.mxu0 0.0
      %1917 = vmatprep.mubr.f32.mxu0 0.0
      %v1918 = vand.u32 %v205, 4294901760
      %v1919 = vsub.f32 %v205, %v1918
      %1920 = vmatmul.mubr.f32.gmra.mrb[0].mxu0 %v1919
      %v1921 = vpop.f32.mrb[0].mxu0
      %v1922 = vadd.f32 %v1758, %v1921
      %v1923 = vpop.f32.mrb[0].mxu0
      %1924 = vmatprep.mubr.f32.mxu0 0.0
      %v1925 = vand.u32 %v208, 4294901760
      %v1926 = vsub.f32 %v208, %v1925
      %1927 = vmatmul.mubr.f32.gmra.mrb[0].mxu0 %v1926
      %v1928 = vpop.f32.mrb[0].mxu0
      %v1929 = vadd.f32 %v1764, %v1928
      %v1930 = vpop.f32.mrb[0].mxu0
      %1931 = vmatprep.mubr.f32.mxu0 0.0
      %v1932 = vand.u32 %v211, 4294901760
      %v1933 = vsub.f32 %v211, %v1932
      %1934 = vmatmul.mubr.f32.gmra.mrb[0].mxu0 %v1933
      %v1935 = vpop.f32.mrb[0].mxu0
      %v1936 = vadd.f32 %v1770, %v1935
      %v1937 = vpop.f32.mrb[0].mxu0
      %1938 = vmatprep.mubr.f32.mxu0 0.0
      %v1939 = vand.u32 %v214, 4294901760
      %v1940 = vsub.f32 %v214, %v1939
      %1941 = vmatmul.mubr.f32.gmra.mrb[0].mxu0 %v1940
      %v1942 = vpop.f32.mrb[0].mxu0
      %v1943 = vadd.f32 %v1776, %v1942
      %v1944 = vpop.f32.mrb[0].mxu0
      %1945 = vmatprep.mubr.f32.mxu0 0.0
      %v1946 = vand.u32 %v217, 4294901760
      %v1947 = vsub.f32 %v217, %v1946
      %1948 = vmatmul.mubr.f32.gmra.mrb[0].mxu0 %v1947
      %v1949 = vpop.f32.mrb[0].mxu0
      %v1950 = vadd.f32 %v1782, %v1949
      %v1951 = vpop.f32.mrb[0].mxu0
      %1952 = vmatprep.mubr.f32.mxu0 0.0
      %v1953 = vand.u32 %v220, 4294901760
      %v1954 = vsub.f32 %v220, %v1953
      %1955 = vmatmul.mubr.f32.gmra.mrb[0].mxu0 %v1954
      %v1956 = vpop.f32.mrb[0].mxu0
      %v1957 = vadd.f32 %v1788, %v1956
      %v1958 = vpop.f32.mrb[0].mxu0
      %1959 = vmatprep.mubr.f32.mxu0 0.0
      %v1960 = vand.u32 %v223, 4294901760
      %v1961 = vsub.f32 %v223, %v1960
      %1962 = vmatmul.mubr.f32.gmra.mrb[0].mxu0 %v1961
      %v1963 = vpop.f32.mrb[0].mxu0
      %v1964 = vadd.f32 %v1794, %v1963
      %v1965 = vpop.f32.mrb[0].mxu0
      %1966 = vmatprep.mubr.f32.mxu0 0.0
      %v1967 = vand.u32 %v226, 4294901760
      %v1968 = vsub.f32 %v226, %v1967
      %1969 = vmatmul.mubr.f32.gmra.mrb[0].mxu0 %v1968
      %v1970 = vpop.f32.mrb[0].mxu0
      %v1971 = vadd.f32 %v1800, %v1970
      %v1972 = vpop.f32.mrb[0].mxu0
      %1973 = vmatprep.mubr.f32.mxu0 0.0
      %v1974 = vand.u32 %v229, 4294901760
      %v1975 = vsub.f32 %v229, %v1974
      %1976 = vmatmul.mubr.f32.gmra.mrb[0].mxu0 %v1975
      %v1977 = vpop.f32.mrb[0].mxu0
      %v1978 = vadd.f32 %v1806, %v1977
      %v1979 = vpop.f32.mrb[0].mxu0
      %1980 = vmatprep.mubr.f32.mxu0 0.0
      %v1981 = vand.u32 %v232, 4294901760
      %v1982 = vsub.f32 %v232, %v1981
      %1983 = vmatmul.mubr.f32.gmra.mrb[0].mxu0 %v1982
      %v1984 = vpop.f32.mrb[0].mxu0
      %v1985 = vadd.f32 %v1812, %v1984
      %v1986 = vpop.f32.mrb[0].mxu0
      %1987 = vmatprep.mubr.f32.mxu0 0.0
      %v1988 = vand.u32 %v235, 4294901760
      %v1989 = vsub.f32 %v235, %v1988
      %1990 = vmatmul.mubr.f32.gmra.mrb[0].mxu0 %v1989
      %v1991 = vpop.f32.mrb[0].mxu0
      %v1992 = vadd.f32 %v1818, %v1991
      %v1993 = vpop.f32.mrb[0].mxu0
      %1994 = vmatprep.mubr.f32.mxu0 0.0
      %v1995 = vand.u32 %v238, 4294901760
      %v1996 = vsub.f32 %v238, %v1995
      %1997 = vmatmul.mubr.f32.gmra.mrb[0].mxu0 %v1996
      %v1998 = vpop.f32.mrb[0].mxu0
      %v1999 = vadd.f32 %v1824, %v1998
      %v2000 = vpop.f32.mrb[0].mxu0
      %2001 = vmatprep.mubr.f32.mxu0 0.0
      %v2002 = vand.u32 %v241, 4294901760
      %v2003 = vsub.f32 %v241, %v2002
      %2004 = vmatmul.mubr.f32.gmra.mrb[0].mxu0 %v2003
      %v2005 = vpop.f32.mrb[0].mxu0
      %v2006 = vadd.f32 %v1830, %v2005
      %v2007 = vpop.f32.mrb[0].mxu0
      %2008 = vmatprep.mubr.f32.mxu0 0.0
      %v2009 = vand.u32 %v244, 4294901760
      %v2010 = vsub.f32 %v244, %v2009
      %2011 = vmatmul.mubr.f32.gmra.mrb[0].mxu0 %v2010
      %v2012 = vpop.f32.mrb[0].mxu0
      %v2013 = vadd.f32 %v1836, %v2012
      %v2014 = vpop.f32.mrb[0].mxu0
      %2015 = vmatprep.mubr.f32.mxu0 0.0
      %v2016 = vand.u32 %v247, 4294901760
      %v2017 = vsub.f32 %v247, %v2016
      %2018 = vmatmul.mubr.f32.gmra.mrb[0].mxu0 %v2017
      %v2019 = vpop.f32.mrb[0].mxu0
      %v2020 = vadd.f32 %v1842, %v2019
      %v2021 = vpop.f32.mrb[0].mxu0
      %2022 = vmatprep.mubr.f32.mxu0 0.0
      %v2023 = vand.u32 %v250, 4294901760
      %v2024 = vsub.f32 %v250, %v2023
      %2025 = vmatmul.mubr.f32.gmra.mrb[0].mxu0 %v2024
      %v2026 = vpop.f32.mrb[0].mxu0
      %v2027 = vadd.f32 %v1848, %v2026
      %v2028 = vpop.f32.mrb[0].mxu0
      %2029 = vdwg.mxu0
      %2030 = vmatprep.subr.mxu0 0.0
      %v2031 = vand.u32 %v257, 4294901760
      %2032 = vmatpush1.msra.mxu0 %v2031
      %2033 = vmatprep.subr.mxu0 0.0
      %2034 = vmatpush1.msra.mxu0 0.0
      %2035 = vmatprep.subr.mxu0 0.0
      %2036 = vmatpush1.msra.mxu0 0.0
      %2037 = vmatprep.subr.mxu0 0.0
      %2038 = vmatpush1.msra.mxu0 0.0
      %2039 = vmatprep.subr.mxu0 0.0
      %2040 = vmatpush1.msra.mxu0 0.0
      %2041 = vmatprep.subr.mxu0 0.0
      %2042 = vmatpush1.msra.mxu0 0.0
      %2043 = vmatprep.subr.mxu0 0.0
      %2044 = vmatpush1.msra.mxu0 0.0
      %2045 = vmatprep.subr.mxu0 0.0
      %2046 = vmatpush1.msra.mxu0 0.0
      %2047 = vmatprep.subr.mxu0 0.0
      %2048 = vmatpush1.msra.mxu0 0.0
      %2049 = vmatprep.subr.mxu0 0.0
      %2050 = vmatpush1.msra.mxu0 0.0
      %2051 = vmatprep.subr.mxu0 0.0
      %2052 = vmatpush1.msra.mxu0 0.0
      %2053 = vmatprep.subr.mxu0 0.0
      %2054 = vmatpush1.msra.mxu0 0.0
      %2055 = vmatprep.subr.mxu0 0.0
      %2056 = vmatpush1.msra.mxu0 0.0
      %2057 = vmatprep.subr.mxu0 0.0
      %2058 = vmatpush1.msra.mxu0 0.0
      %2059 = vmatprep.subr.mxu0 0.0
      %2060 = vmatpush1.msra.mxu0 0.0
      %2061 = vmatprep.subr.mxu0 0.0
      %2062 = vmatpush1.msra.mxu0 0.0
      %2063 = vmatprep.subr.mxu0 0.0
      %2064 = vmatpush1.msra.mxu0 0.0
      %2065 = vmatprep.subr.mxu0 0.0
      %2066 = vmatpush1.msra.mxu0 0.0
      %2067 = vmatprep.subr.mxu0 0.0
      %2068 = vmatpush1.msra.mxu0 0.0
      %2069 = vmatprep.subr.mxu0 0.0
      %2070 = vmatpush1.msra.mxu0 0.0
      %2071 = vmatprep.subr.mxu0 0.0
      %2072 = vmatpush1.msra.mxu0 0.0
      %2073 = vmatprep.subr.mxu0 0.0
      %2074 = vmatpush1.msra.mxu0 0.0
      %2075 = vmatprep.subr.mxu0 0.0
      %2076 = vmatpush1.msra.mxu0 0.0
      %2077 = vmatprep.subr.mxu0 0.0
      %2078 = vmatpush1.msra.mxu0 0.0
      %2079 = vmatprep.subr.mxu0 0.0
      %2080 = vmatpush1.msra.mxu0 0.0
      %2081 = vmatprep.subr.mxu0 0.0
      %2082 = vmatpush1.msra.mxu0 0.0
      %2083 = vmatprep.subr.mxu0 0.0
      %2084 = vmatpush1.msra.mxu0 0.0
      %2085 = vmatprep.subr.mxu0 0.0
      %2086 = vmatpush1.msra.mxu0 0.0
      %2087 = vmatprep.subr.mxu0 0.0
      %2088 = vmatpush1.msra.mxu0 0.0
      %2089 = vmatprep.subr.mxu0 0.0
      %2090 = vmatpush1.msra.mxu0 0.0
      %2091 = vmatprep.subr.mxu0 0.0
      %2092 = vmatpush1.msra.mxu0 0.0
      %2093 = vmatprep.subr.mxu0 0.0
      %2094 = vmatpush1.msra.mxu0 0.0
      %2095 = vmatprep.mubr.f32.mxu0 0.0
      %v2096 = vand.u32 %v205, 4294901760
      %v2097 = vsub.f32 %v205, %v2096
      %v2098 = vand.u32 %v2097, 4294901760
      %2099 = vmatmul.mubr.f32.gmra.mrb[0].mxu0 %v2098
      %v2100 = vpop.f32.mrb[0].mxu0
      %v2101 = vadd.f32 %v1922, %v2100
      %v2102 = vpop.f32.mrb[0].mxu0
      %2103 = vmatprep.mubr.f32.mxu0 0.0
      %v2104 = vand.u32 %v208, 4294901760
      %v2105 = vsub.f32 %v208, %v2104
      %v2106 = vand.u32 %v2105, 4294901760
      %2107 = vmatmul.mubr.f32.gmra.mrb[0].mxu0 %v2106
      %v2108 = vpop.f32.mrb[0].mxu0
      %v2109 = vadd.f32 %v1929, %v2108
      %v2110 = vpop.f32.mrb[0].mxu0
      %2111 = vmatprep.mubr.f32.mxu0 0.0
      %v2112 = vand.u32 %v211, 4294901760
      %v2113 = vsub.f32 %v211, %v2112
      %v2114 = vand.u32 %v2113, 4294901760
      %2115 = vmatmul.mubr.f32.gmra.mrb[0].mxu0 %v2114
      %v2116 = vpop.f32.mrb[0].mxu0
      %v2117 = vadd.f32 %v1936, %v2116
      %v2118 = vpop.f32.mrb[0].mxu0
      %2119 = vmatprep.mubr.f32.mxu0 0.0
      %v2120 = vand.u32 %v214, 4294901760
      %v2121 = vsub.f32 %v214, %v2120
      %v2122 = vand.u32 %v2121, 4294901760
      %2123 = vmatmul.mubr.f32.gmra.mrb[0].mxu0 %v2122
      %v2124 = vpop.f32.mrb[0].mxu0
      %v2125 = vadd.f32 %v1943, %v2124
      %v2126 = vpop.f32.mrb[0].mxu0
      %2127 = vmatprep.mubr.f32.mxu0 0.0
      %v2128 = vand.u32 %v217, 4294901760
      %v2129 = vsub.f32 %v217, %v2128
      %v2130 = vand.u32 %v2129, 4294901760
      %2131 = vmatmul.mubr.f32.gmra.mrb[0].mxu0 %v2130
      %v2132 = vpop.f32.mrb[0].mxu0
      %v2133 = vadd.f32 %v1950, %v2132
      %v2134 = vpop.f32.mrb[0].mxu0
      %2135 = vmatprep.mubr.f32.mxu0 0.0
      %v2136 = vand.u32 %v220, 4294901760
      %v2137 = vsub.f32 %v220, %v2136
      %v2138 = vand.u32 %v2137, 4294901760
      %2139 = vmatmul.mubr.f32.gmra.mrb[0].mxu0 %v2138
      %v2140 = vpop.f32.mrb[0].mxu0
      %v2141 = vadd.f32 %v1957, %v2140
      %v2142 = vpop.f32.mrb[0].mxu0
      %2143 = vmatprep.mubr.f32.mxu0 0.0
      %v2144 = vand.u32 %v223, 4294901760
      %v2145 = vsub.f32 %v223, %v2144
      %v2146 = vand.u32 %v2145, 4294901760
      %2147 = vmatmul.mubr.f32.gmra.mrb[0].mxu0 %v2146
      %v2148 = vpop.f32.mrb[0].mxu0
      %v2149 = vadd.f32 %v1964, %v2148
      %v2150 = vpop.f32.mrb[0].mxu0
      %2151 = vmatprep.mubr.f32.mxu0 0.0
      %v2152 = vand.u32 %v226, 4294901760
      %v2153 = vsub.f32 %v226, %v2152
      %v2154 = vand.u32 %v2153, 4294901760
      %2155 = vmatmul.mubr.f32.gmra.mrb[0].mxu0 %v2154
      %v2156 = vpop.f32.mrb[0].mxu0
      %v2157 = vadd.f32 %v1971, %v2156
      %v2158 = vpop.f32.mrb[0].mxu0
      %2159 = vmatprep.mubr.f32.mxu0 0.0
      %v2160 = vand.u32 %v229, 4294901760
      %v2161 = vsub.f32 %v229, %v2160
      %v2162 = vand.u32 %v2161, 4294901760
      %2163 = vmatmul.mubr.f32.gmra.mrb[0].mxu0 %v2162
      %v2164 = vpop.f32.mrb[0].mxu0
      %v2165 = vadd.f32 %v1978, %v2164
      %v2166 = vpop.f32.mrb[0].mxu0
      %2167 = vmatprep.mubr.f32.mxu0 0.0
      %v2168 = vand.u32 %v232, 4294901760
      %v2169 = vsub.f32 %v232, %v2168
      %v2170 = vand.u32 %v2169, 4294901760
      %2171 = vmatmul.mubr.f32.gmra.mrb[0].mxu0 %v2170
      %v2172 = vpop.f32.mrb[0].mxu0
      %v2173 = vadd.f32 %v1985, %v2172
      %v2174 = vpop.f32.mrb[0].mxu0
      %2175 = vmatprep.mubr.f32.mxu0 0.0
      %v2176 = vand.u32 %v235, 4294901760
      %v2177 = vsub.f32 %v235, %v2176
      %v2178 = vand.u32 %v2177, 4294901760
      %2179 = vmatmul.mubr.f32.gmra.mrb[0].mxu0 %v2178
      %v2180 = vpop.f32.mrb[0].mxu0
      %v2181 = vadd.f32 %v1992, %v2180
      %v2182 = vpop.f32.mrb[0].mxu0
      %2183 = vmatprep.mubr.f32.mxu0 0.0
      %v2184 = vand.u32 %v238, 4294901760
      %v2185 = vsub.f32 %v238, %v2184
      %v2186 = vand.u32 %v2185, 4294901760
      %2187 = vmatmul.mubr.f32.gmra.mrb[0].mxu0 %v2186
      %v2188 = vpop.f32.mrb[0].mxu0
      %v2189 = vadd.f32 %v1999, %v2188
      %v2190 = vpop.f32.mrb[0].mxu0
      %2191 = vmatprep.mubr.f32.mxu0 0.0
      %v2192 = vand.u32 %v241, 4294901760
      %v2193 = vsub.f32 %v241, %v2192
      %v2194 = vand.u32 %v2193, 4294901760
      %2195 = vmatmul.mubr.f32.gmra.mrb[0].mxu0 %v2194
      %v2196 = vpop.f32.mrb[0].mxu0
      %v2197 = vadd.f32 %v2006, %v2196
      %v2198 = vpop.f32.mrb[0].mxu0
      %2199 = vmatprep.mubr.f32.mxu0 0.0
      %v2200 = vand.u32 %v244, 4294901760
      %v2201 = vsub.f32 %v244, %v2200
      %v2202 = vand.u32 %v2201, 4294901760
      %2203 = vmatmul.mubr.f32.gmra.mrb[0].mxu0 %v2202
      %v2204 = vpop.f32.mrb[0].mxu0
      %v2205 = vadd.f32 %v2013, %v2204
      %v2206 = vpop.f32.mrb[0].mxu0
      %2207 = vmatprep.mubr.f32.mxu0 0.0
      %v2208 = vand.u32 %v247, 4294901760
      %v2209 = vsub.f32 %v247, %v2208
      %v2210 = vand.u32 %v2209, 4294901760
      %2211 = vmatmul.mubr.f32.gmra.mrb[0].mxu0 %v2210
      %v2212 = vpop.f32.mrb[0].mxu0
      %v2213 = vadd.f32 %v2020, %v2212
      %v2214 = vpop.f32.mrb[0].mxu0
      %2215 = vmatprep.mubr.f32.mxu0 0.0
      %v2216 = vand.u32 %v250, 4294901760
      %v2217 = vsub.f32 %v250, %v2216
      %v2218 = vand.u32 %v2217, 4294901760
      %2219 = vmatmul.mubr.f32.gmra.mrb[0].mxu0 %v2218
      %v2220 = vpop.f32.mrb[0].mxu0
      %v2221 = vadd.f32 %v2027, %v2220
      %v2222 = vpop.f32.mrb[0].mxu0
      %2223 = vdwg.mxu0
      %2224 = vmatprep.subr.mxu0 0.0
      %v2225 = vand.u32 %v257, 4294901760
      %v2226 = vsub.f32 %v257, %v2225
      %v2227 = vand.u32 %v2226, 4294901760
      %2228 = vmatpush1.msra.mxu0 %v2227
      %2229 = vmatprep.subr.mxu0 0.0
      %2230 = vmatpush1.msra.mxu0 0.0
      %2231 = vmatprep.subr.mxu0 0.0
      %2232 = vmatpush1.msra.mxu0 0.0
      %2233 = vmatprep.subr.mxu0 0.0
      %2234 = vmatpush1.msra.mxu0 0.0
      %2235 = vmatprep.subr.mxu0 0.0
      %2236 = vmatpush1.msra.mxu0 0.0
      %2237 = vmatprep.subr.mxu0 0.0
      %2238 = vmatpush1.msra.mxu0 0.0
      %2239 = vmatprep.subr.mxu0 0.0
      %2240 = vmatpush1.msra.mxu0 0.0
      %2241 = vmatprep.subr.mxu0 0.0
      %2242 = vmatpush1.msra.mxu0 0.0
      %2243 = vmatprep.subr.mxu0 0.0
      %2244 = vmatpush1.msra.mxu0 0.0
      %2245 = vmatprep.subr.mxu0 0.0
      %2246 = vmatpush1.msra.mxu0 0.0
      %2247 = vmatprep.subr.mxu0 0.0
      %2248 = vmatpush1.msra.mxu0 0.0
      %2249 = vmatprep.subr.mxu0 0.0
      %2250 = vmatpush1.msra.mxu0 0.0
      %2251 = vmatprep.subr.mxu0 0.0
      %2252 = vmatpush1.msra.mxu0 0.0
      %2253 = vmatprep.subr.mxu0 0.0
      %2254 = vmatpush1.msra.mxu0 0.0
      %2255 = vmatprep.subr.mxu0 0.0
      %2256 = vmatpush1.msra.mxu0 0.0
      %2257 = vmatprep.subr.mxu0 0.0
      %2258 = vmatpush1.msra.mxu0 0.0
      %2259 = vmatprep.subr.mxu0 0.0
      %2260 = vmatpush1.msra.mxu0 0.0
      %2261 = vmatprep.subr.mxu0 0.0
      %2262 = vmatpush1.msra.mxu0 0.0
      %2263 = vmatprep.subr.mxu0 0.0
      %2264 = vmatpush1.msra.mxu0 0.0
      %2265 = vmatprep.subr.mxu0 0.0
      %2266 = vmatpush1.msra.mxu0 0.0
      %2267 = vmatprep.subr.mxu0 0.0
      %2268 = vmatpush1.msra.mxu0 0.0
      %2269 = vmatprep.subr.mxu0 0.0
      %2270 = vmatpush1.msra.mxu0 0.0
      %2271 = vmatprep.subr.mxu0 0.0
      %2272 = vmatpush1.msra.mxu0 0.0
      %2273 = vmatprep.subr.mxu0 0.0
      %2274 = vmatpush1.msra.mxu0 0.0
      %2275 = vmatprep.subr.mxu0 0.0
      %2276 = vmatpush1.msra.mxu0 0.0
      %2277 = vmatprep.subr.mxu0 0.0
      %2278 = vmatpush1.msra.mxu0 0.0
      %2279 = vmatprep.subr.mxu0 0.0
      %2280 = vmatpush1.msra.mxu0 0.0
      %2281 = vmatprep.subr.mxu0 0.0
      %2282 = vmatpush1.msra.mxu0 0.0
      %2283 = vmatprep.subr.mxu0 0.0
      %2284 = vmatpush1.msra.mxu0 0.0
      %2285 = vmatprep.subr.mxu0 0.0
      %2286 = vmatpush1.msra.mxu0 0.0
      %2287 = vmatprep.subr.mxu0 0.0
      %2288 = vmatpush1.msra.mxu0 0.0
      %2289 = vmatprep.subr.mxu0 0.0
      %2290 = vmatpush1.msra.mxu0 0.0
      %2291 = vmatprep.mubr.f32.mxu0 0.0
      %v2292 = vand.u32 %v205, 4294901760
      %2293 = vmatmul.mubr.f32.gmra.mrb[0].mxu0 %v2292
      %v2294 = vpop.f32.mrb[0].mxu0
      %v2295 = vadd.f32 %v2101, %v2294
      %v2296 = vpop.f32.mrb[0].mxu0
      %2297 = vmatprep.mubr.f32.mxu0 0.0
      %v2298 = vand.u32 %v208, 4294901760
      %2299 = vmatmul.mubr.f32.gmra.mrb[0].mxu0 %v2298
      %v2300 = vpop.f32.mrb[0].mxu0
      %v2301 = vadd.f32 %v2109, %v2300
      %v2302 = vpop.f32.mrb[0].mxu0
      %2303 = vmatprep.mubr.f32.mxu0 0.0
      %v2304 = vand.u32 %v211, 4294901760
      %2305 = vmatmul.mubr.f32.gmra.mrb[0].mxu0 %v2304
      %v2306 = vpop.f32.mrb[0].mxu0
      %v2307 = vadd.f32 %v2117, %v2306
      %v2308 = vpop.f32.mrb[0].mxu0
      %2309 = vmatprep.mubr.f32.mxu0 0.0
      %v2310 = vand.u32 %v214, 4294901760
      %2311 = vmatmul.mubr.f32.gmra.mrb[0].mxu0 %v2310
      %v2312 = vpop.f32.mrb[0].mxu0
      %v2313 = vadd.f32 %v2125, %v2312
      %v2314 = vpop.f32.mrb[0].mxu0
      %2315 = vmatprep.mubr.f32.mxu0 0.0
      %v2316 = vand.u32 %v217, 4294901760
      %2317 = vmatmul.mubr.f32.gmra.mrb[0].mxu0 %v2316
      %v2318 = vpop.f32.mrb[0].mxu0
      %v2319 = vadd.f32 %v2133, %v2318
      %v2320 = vpop.f32.mrb[0].mxu0
      %2321 = vmatprep.mubr.f32.mxu0 0.0
      %v2322 = vand.u32 %v220, 4294901760
      %2323 = vmatmul.mubr.f32.gmra.mrb[0].mxu0 %v2322
      %v2324 = vpop.f32.mrb[0].mxu0
      %v2325 = vadd.f32 %v2141, %v2324
      %v2326 = vpop.f32.mrb[0].mxu0
      %2327 = vmatprep.mubr.f32.mxu0 0.0
      %v2328 = vand.u32 %v223, 4294901760
      %2329 = vmatmul.mubr.f32.gmra.mrb[0].mxu0 %v2328
      %v2330 = vpop.f32.mrb[0].mxu0
      %v2331 = vadd.f32 %v2149, %v2330
      %v2332 = vpop.f32.mrb[0].mxu0
      %2333 = vmatprep.mubr.f32.mxu0 0.0
      %v2334 = vand.u32 %v226, 4294901760
      %2335 = vmatmul.mubr.f32.gmra.mrb[0].mxu0 %v2334
      %v2336 = vpop.f32.mrb[0].mxu0
      %v2337 = vadd.f32 %v2157, %v2336
      %v2338 = vpop.f32.mrb[0].mxu0
      %2339 = vmatprep.mubr.f32.mxu0 0.0
      %v2340 = vand.u32 %v229, 4294901760
      %2341 = vmatmul.mubr.f32.gmra.mrb[0].mxu0 %v2340
      %v2342 = vpop.f32.mrb[0].mxu0
      %v2343 = vadd.f32 %v2165, %v2342
      %v2344 = vpop.f32.mrb[0].mxu0
      %2345 = vmatprep.mubr.f32.mxu0 0.0
      %v2346 = vand.u32 %v232, 4294901760
      %2347 = vmatmul.mubr.f32.gmra.mrb[0].mxu0 %v2346
      %v2348 = vpop.f32.mrb[0].mxu0
      %v2349 = vadd.f32 %v2173, %v2348
      %v2350 = vpop.f32.mrb[0].mxu0
      %2351 = vmatprep.mubr.f32.mxu0 0.0
      %v2352 = vand.u32 %v235, 4294901760
      %2353 = vmatmul.mubr.f32.gmra.mrb[0].mxu0 %v2352
      %v2354 = vpop.f32.mrb[0].mxu0
      %v2355 = vadd.f32 %v2181, %v2354
      %v2356 = vpop.f32.mrb[0].mxu0
      %2357 = vmatprep.mubr.f32.mxu0 0.0
      %v2358 = vand.u32 %v238, 4294901760
      %2359 = vmatmul.mubr.f32.gmra.mrb[0].mxu0 %v2358
      %v2360 = vpop.f32.mrb[0].mxu0
      %v2361 = vadd.f32 %v2189, %v2360
      %v2362 = vpop.f32.mrb[0].mxu0
      %2363 = vmatprep.mubr.f32.mxu0 0.0
      %v2364 = vand.u32 %v241, 4294901760
      %2365 = vmatmul.mubr.f32.gmra.mrb[0].mxu0 %v2364
      %v2366 = vpop.f32.mrb[0].mxu0
      %v2367 = vadd.f32 %v2197, %v2366
      %v2368 = vpop.f32.mrb[0].mxu0
      %2369 = vmatprep.mubr.f32.mxu0 0.0
      %v2370 = vand.u32 %v244, 4294901760
      %2371 = vmatmul.mubr.f32.gmra.mrb[0].mxu0 %v2370
      %v2372 = vpop.f32.mrb[0].mxu0
      %v2373 = vadd.f32 %v2205, %v2372
      %v2374 = vpop.f32.mrb[0].mxu0
      %2375 = vmatprep.mubr.f32.mxu0 0.0
      %v2376 = vand.u32 %v247, 4294901760
      %2377 = vmatmul.mubr.f32.gmra.mrb[0].mxu0 %v2376
      %v2378 = vpop.f32.mrb[0].mxu0
      %v2379 = vadd.f32 %v2213, %v2378
      %v2380 = vpop.f32.mrb[0].mxu0
      %2381 = vmatprep.mubr.f32.mxu0 0.0
      %v2382 = vand.u32 %v250, 4294901760
      %2383 = vmatmul.mubr.f32.gmra.mrb[0].mxu0 %v2382
      %v2384 = vpop.f32.mrb[0].mxu0
      %v2385 = vadd.f32 %v2221, %v2384
      %v2386 = vpop.f32.mrb[0].mxu0
      %2387 = vdwg.mxu0
      %2388 = vmatprep.subr.mxu0 0.0
      %v2389 = vand.u32 %v257, 4294901760
      %2390 = vmatpush1.msra.mxu0 %v2389
      %2391 = vmatprep.subr.mxu0 0.0
      %2392 = vmatpush1.msra.mxu0 0.0
      %2393 = vmatprep.subr.mxu0 0.0
      %2394 = vmatpush1.msra.mxu0 0.0
      %2395 = vmatprep.subr.mxu0 0.0
      %2396 = vmatpush1.msra.mxu0 0.0
      %2397 = vmatprep.subr.mxu0 0.0
      %2398 = vmatpush1.msra.mxu0 0.0
      %2399 = vmatprep.subr.mxu0 0.0
      %2400 = vmatpush1.msra.mxu0 0.0
      %2401 = vmatprep.subr.mxu0 0.0
      %2402 = vmatpush1.msra.mxu0 0.0
      %2403 = vmatprep.subr.mxu0 0.0
      %2404 = vmatpush1.msra.mxu0 0.0
      %2405 = vmatprep.subr.mxu0 0.0
      %2406 = vmatpush1.msra.mxu0 0.0
      %2407 = vmatprep.subr.mxu0 0.0
      %2408 = vmatpush1.msra.mxu0 0.0
      %2409 = vmatprep.subr.mxu0 0.0
      %2410 = vmatpush1.msra.mxu0 0.0
      %2411 = vmatprep.subr.mxu0 0.0
      %2412 = vmatpush1.msra.mxu0 0.0
      %2413 = vmatprep.subr.mxu0 0.0
      %2414 = vmatpush1.msra.mxu0 0.0
      %2415 = vmatprep.subr.mxu0 0.0
      %2416 = vmatpush1.msra.mxu0 0.0
      %2417 = vmatprep.subr.mxu0 0.0
      %2418 = vmatpush1.msra.mxu0 0.0
      %2419 = vmatprep.subr.mxu0 0.0
      %2420 = vmatpush1.msra.mxu0 0.0
      %2421 = vmatprep.subr.mxu0 0.0
      %2422 = vmatpush1.msra.mxu0 0.0
      %2423 = vmatprep.subr.mxu0 0.0
      %2424 = vmatpush1.msra.mxu0 0.0
      %2425 = vmatprep.subr.mxu0 0.0
      %2426 = vmatpush1.msra.mxu0 0.0
      %2427 = vmatprep.subr.mxu0 0.0
      %2428 = vmatpush1.msra.mxu0 0.0
      %2429 = vmatprep.subr.mxu0 0.0
      %2430 = vmatpush1.msra.mxu0 0.0
      %2431 = vmatprep.subr.mxu0 0.0
      %2432 = vmatpush1.msra.mxu0 0.0
      %2433 = vmatprep.subr.mxu0 0.0
      %2434 = vmatpush1.msra.mxu0 0.0
      %2435 = vmatprep.subr.mxu0 0.0
      %2436 = vmatpush1.msra.mxu0 0.0
      %2437 = vmatprep.subr.mxu0 0.0
      %2438 = vmatpush1.msra.mxu0 0.0
      %2439 = vmatprep.subr.mxu0 0.0
      %2440 = vmatpush1.msra.mxu0 0.0
      %2441 = vmatprep.subr.mxu0 0.0
      %2442 = vmatpush1.msra.mxu0 0.0
      %2443 = vmatprep.subr.mxu0 0.0
      %2444 = vmatpush1.msra.mxu0 0.0
      %2445 = vmatprep.subr.mxu0 0.0
      %2446 = vmatpush1.msra.mxu0 0.0
      %2447 = vmatprep.subr.mxu0 0.0
      %2448 = vmatpush1.msra.mxu0 0.0
      %2449 = vmatprep.subr.mxu0 0.0
      %2450 = vmatpush1.msra.mxu0 0.0
      %2451 = vmatprep.subr.mxu0 0.0
      %2452 = vmatpush1.msra.mxu0 0.0
      %2453 = vmatprep.mubr.f32.mxu0 0.0
      %v2454 = vand.u32 %v205, 4294901760
      %2455 = vmatmul.mubr.f32.gmra.mrb[0].mxu0 %v2454
      %v2456 = vpop.f32.mrb[0].mxu0
      %v2457 = vadd.f32 %v2295, %v2456
      %v2458 = vpop.f32.mrb[0].mxu0
      %2459 = vmatprep.mubr.f32.mxu0 0.0
      %v2460 = vand.u32 %v208, 4294901760
      %2461 = vmatmul.mubr.f32.gmra.mrb[0].mxu0 %v2460
      %v2462 = vpop.f32.mrb[0].mxu0
      %v2463 = vadd.f32 %v2301, %v2462
      %v2464 = vpop.f32.mrb[0].mxu0
      %2465 = vmatprep.mubr.f32.mxu0 0.0
      %v2466 = vand.u32 %v211, 4294901760
      %2467 = vmatmul.mubr.f32.gmra.mrb[0].mxu0 %v2466
      %v2468 = vpop.f32.mrb[0].mxu0
      %v2469 = vadd.f32 %v2307, %v2468
      %v2470 = vpop.f32.mrb[0].mxu0
      %2471 = vmatprep.mubr.f32.mxu0 0.0
      %v2472 = vand.u32 %v214, 4294901760
      %2473 = vmatmul.mubr.f32.gmra.mrb[0].mxu0 %v2472
      %v2474 = vpop.f32.mrb[0].mxu0
      %v2475 = vadd.f32 %v2313, %v2474
      %v2476 = vpop.f32.mrb[0].mxu0
      %2477 = vmatprep.mubr.f32.mxu0 0.0
      %v2478 = vand.u32 %v217, 4294901760
      %2479 = vmatmul.mubr.f32.gmra.mrb[0].mxu0 %v2478
      %v2480 = vpop.f32.mrb[0].mxu0
      %v2481 = vadd.f32 %v2319, %v2480
      %v2482 = vpop.f32.mrb[0].mxu0
      %2483 = vmatprep.mubr.f32.mxu0 0.0
      %v2484 = vand.u32 %v220, 4294901760
      %2485 = vmatmul.mubr.f32.gmra.mrb[0].mxu0 %v2484
      %v2486 = vpop.f32.mrb[0].mxu0
      %v2487 = vadd.f32 %v2325, %v2486
      %v2488 = vpop.f32.mrb[0].mxu0
      %2489 = vmatprep.mubr.f32.mxu0 0.0
      %v2490 = vand.u32 %v223, 4294901760
      %2491 = vmatmul.mubr.f32.gmra.mrb[0].mxu0 %v2490
      %v2492 = vpop.f32.mrb[0].mxu0
      %v2493 = vadd.f32 %v2331, %v2492
      %v2494 = vpop.f32.mrb[0].mxu0
      %2495 = vmatprep.mubr.f32.mxu0 0.0
      %v2496 = vand.u32 %v226, 4294901760
      %2497 = vmatmul.mubr.f32.gmra.mrb[0].mxu0 %v2496
      %v2498 = vpop.f32.mrb[0].mxu0
      %v2499 = vadd.f32 %v2337, %v2498
      %v2500 = vpop.f32.mrb[0].mxu0
      %2501 = vmatprep.mubr.f32.mxu0 0.0
      %v2502 = vand.u32 %v229, 4294901760
      %2503 = vmatmul.mubr.f32.gmra.mrb[0].mxu0 %v2502
      %v2504 = vpop.f32.mrb[0].mxu0
      %v2505 = vadd.f32 %v2343, %v2504
      %v2506 = vpop.f32.mrb[0].mxu0
      %2507 = vmatprep.mubr.f32.mxu0 0.0
      %v2508 = vand.u32 %v232, 4294901760
      %2509 = vmatmul.mubr.f32.gmra.mrb[0].mxu0 %v2508
      %v2510 = vpop.f32.mrb[0].mxu0
      %v2511 = vadd.f32 %v2349, %v2510
      %v2512 = vpop.f32.mrb[0].mxu0
      %2513 = vmatprep.mubr.f32.mxu0 0.0
      %v2514 = vand.u32 %v235, 4294901760
      %2515 = vmatmul.mubr.f32.gmra.mrb[0].mxu0 %v2514
      %v2516 = vpop.f32.mrb[0].mxu0
      %v2517 = vadd.f32 %v2355, %v2516
      %v2518 = vpop.f32.mrb[0].mxu0
      %2519 = vmatprep.mubr.f32.mxu0 0.0
      %v2520 = vand.u32 %v238, 4294901760
      %2521 = vmatmul.mubr.f32.gmra.mrb[0].mxu0 %v2520
      %v2522 = vpop.f32.mrb[0].mxu0
      %v2523 = vadd.f32 %v2361, %v2522
      %v2524 = vpop.f32.mrb[0].mxu0
      %2525 = vmatprep.mubr.f32.mxu0 0.0
      %v2526 = vand.u32 %v241, 4294901760
      %2527 = vmatmul.mubr.f32.gmra.mrb[0].mxu0 %v2526
      %v2528 = vpop.f32.mrb[0].mxu0
      %v2529 = vadd.f32 %v2367, %v2528
      %v2530 = vpop.f32.mrb[0].mxu0
      %2531 = vmatprep.mubr.f32.mxu0 0.0
      %v2532 = vand.u32 %v244, 4294901760
      %2533 = vmatmul.mubr.f32.gmra.mrb[0].mxu0 %v2532
      %v2534 = vpop.f32.mrb[0].mxu0
      %v2535 = vadd.f32 %v2373, %v2534
      %v2536 = vpop.f32.mrb[0].mxu0
      %2537 = vmatprep.mubr.f32.mxu0 0.0
      %v2538 = vand.u32 %v247, 4294901760
      %2539 = vmatmul.mubr.f32.gmra.mrb[0].mxu0 %v2538
      %v2540 = vpop.f32.mrb[0].mxu0
      %v2541 = vadd.f32 %v2379, %v2540
      %v2542 = vpop.f32.mrb[0].mxu0
      %2543 = vmatprep.mubr.f32.mxu0 0.0
      %v2544 = vand.u32 %v250, 4294901760
      %2545 = vmatmul.mubr.f32.gmra.mrb[0].mxu0 %v2544
      %v2546 = vpop.f32.mrb[0].mxu0
      %v2547 = vadd.f32 %v2385, %v2546
      %v2548 = vpop.f32.mrb[0].mxu0
      %2549 = vdwg.mxu0
      %v2550 = vand.u32 2147483647, %v1350
      %vm2551 = vcmp.le.f32.partialorder %v2550, 0.7853982
      %vm2552 = vcmp.lt.s32.totalorder %v1350, 0
      %v2553 = vand.u32 %v1350, 2139095040
      %v2554 = vshrl.u32 %v2553, 23
      %v2555 = vsub.s32 %v2554, 127
      %v2556 = vand.u32 2147483647, %v1350
      %v2557 = vand.u32 %v2556, 8388607
      %v2558 = vor.u32 %v2557, 8388608
      %v2559 = vsub.s32 0, %v2558
      %v2560 = vadd.s32 %v2555, 1
      %vm2561 = vcmp.gt.s32.totalorder %v2560, 0
      %v2562 = vsel %vm2561, %v2560, 0
      %v2563 = vshrl.u32 %v2562, 5
      %v2564 = vand.u32 %v2562, 31
      %v2565 = vsub.s32 32, %v2564
      %v2566 = vshrl.u32 683565275, %v2565
      %v2567 = vshll.u32 683565275, %v2564
      %v2568 = vshrl.u32 2475754826, %v2565
      %v2569 = vor.u32 %v2567, %v2568
      %v2570 = vshll.u32 2475754826, %v2564
      %v2571 = vshrl.u32 2131351028, %v2565
      %v2572 = vor.u32 %v2570, %v2571
      %v2573 = vshll.u32 2131351028, %v2564
      %v2574 = vshrl.u32 2102212464, %v2565
      %v2575 = vor.u32 %v2573, %v2574
      %v2576 = vshll.u32 2102212464, %v2564
      %v2577 = vshrl.u32 920167782, %v2565
      %v2578 = vor.u32 %v2576, %v2577
      %v2579 = vshll.u32 920167782, %v2564
      %v2580 = vshrl.u32 1326507024, %v2565
      %v2581 = vor.u32 %v2579, %v2580
      %vm2582 = vcmp.lt.s32.totalorder %v2563, 1
      %vm2583 = vcmp.lt.s32.totalorder %v2563, 2
      %vm2584 = vcmp.lt.s32.totalorder %v2563, 3
      %vm2585 = vcmp.lt.s32.totalorder %v2563, 4
      %v2586 = vsel %vm2582, %v2566, %v2569
      %v2587 = vsel %vm2585, %v2575, 2102212464
      %v2588 = vsel %vm2584, %v2572, %v2587
      %v2589 = vsel %vm2583, %v2586, %v2588
      %v2590 = vsel %vm2582, %v2569, %v2572
      %v2591 = vsel %vm2585, %v2578, 920167782
      %v2592 = vsel %vm2584, %v2575, %v2591
      %v2593 = vsel %vm2583, %v2590, %v2592
      %v2594 = vsel %vm2582, %v2572, %v2575
      %v2595 = vsel %vm2585, %v2581, 1326507024
      %v2596 = vsel %vm2584, %v2578, %v2595
      %v2597 = vsel %vm2583, %v2594, %v2596
      %v2598 = vshll.u32 %v2558, 8
      %v2599 = vmul.u32.u64.compose %v2598, %v2597
      %v2600 = vextract.low.u32 %v2599
      %v2601 = vextract.high.u32 %v2599
      %v2602 = vmul.u32.u64.compose %v2598, %v2593
      %v2603 = vextract.low.u32 %v2602
      %v2604 = vextract.high.u32 %v2602
      %v2605 = vmul.u32 %v2598, %v2589
      %v2606 = vadd.s32 %v2601, %v2603
      %vm2607 = vc.u32 %v2601, %v2603
      %v2608 = vadd.s32 %v2604, 1
      %v2609 = vsel %vm2607, %v2608, %v2604
      %v2610 = vadd.s32 %v2605, %v2609
      %v2611 = vadd.s32 %v2610, 536870912
      %v2612 = vshrl.u32 %v2611, 30
      %v2613 = vshll.u32 %v2612, 30
      %v2614 = vsub.s32 %v2610, %v2613
      %vm2615 = vcmp.lt.s32.totalorder %v2614, 0
      %v2616 = vsub.s32 0, %v2614
      %v2617 = vsel %vm2615, %v2616, %v2614
      %v2618 = vclz %v2617
      %v2619 = vsub.s32 %v2618, 2
      %vm2620 = vcmp.gt.s32.totalorder 0, %v2619
      %v2621 = vsel %vm2620, 0, %v2619
      %v2622 = vsub.s32 32, %v2621
      %v2623 = vshll.u32 %v2614, %v2621
      %v2624 = vshrl.u32 %v2606, %v2622
      %v2625 = vor.u32 %v2623, %v2624
      %v2626 = vsub.s32 4294967266, %v2621
      %v2627 = vadd.s32 %v2626, 127
      %v2628 = vshll.u32 %v2627, 23
      %v2629 = vor.u32 4788187, %v2628
      %v2630 = vand.u32 2147483647, %v2629
      %v2632 = vcvt.s32.f32 %v2625
      %v2633 = vmul.f32 %v2632, %v2630
      %v2634 = vxor.u32 %v2633, 2147483648
      %v2635 = vsel %vm2552, %v2634, %v2633
      %v2636 = vsub.s32 4, %v2612
      %v2637 = vsel %vm2552, %v2636, %v2612
      %v2638 = vsel %vm2551, %v1350, %v2635
      %v2639 = vsel %vm2551, 0, %v2637
      %v2640 = vcosq.f32.pop %v2638
      %v2641 = vsinq.f32.pop %v2638
      %vm2642 = vweird.f32 %v1350
      %v2643 = vadd.s32 %v2639, 3
      %v2644 = vand.u32 %v2643, 3
      %vm2645 = vcmp.lt.s32.totalorder %v2644, 2
      %vm2646 = vcmp.eq.s32.totalorder %v2644, 0
      %v2647 = vxor.u32 %v2641, 2147483648
      %v2648 = vsel %vm2646, %v2640, %v2647
      %vm2649 = vcmp.eq.s32.totalorder %v2644, 2
      %v2650 = vxor.u32 %v2640, 2147483648
      %v2651 = vsel %vm2649, %v2650, %v2641
      %v2652 = vsel %vm2645, %v2648, %v2651
      %v2653 = vsel %vm2642, nan, %v2652
      %v2654 = vand.u32 2147483647, %v1352
      %vm2655 = vcmp.le.f32.partialorder %v2654, 0.7853982
      %vm2656 = vcmp.lt.s32.totalorder %v1352, 0
      %v2657 = vand.u32 %v1352, 2139095040
      %v2658 = vshrl.u32 %v2657, 23
      %v2659 = vsub.s32 %v2658, 127
      %v2660 = vand.u32 2147483647, %v1352
      %v2661 = vand.u32 %v2660, 8388607
      %v2662 = vor.u32 %v2661, 8388608
      %v2663 = vsub.s32 0, %v2662
      %v2664 = vadd.s32 %v2659, 1
      %vm2665 = vcmp.gt.s32.totalorder %v2664, 0
      %v2666 = vsel %vm2665, %v2664, 0
      %v2667 = vshrl.u32 %v2666, 5
      %v2668 = vand.u32 %v2666, 31
      %v2669 = vsub.s32 32, %v2668
      %v2670 = vshrl.u32 683565275, %v2669
      %v2671 = vshll.u32 683565275, %v2668
      %v2672 = vshrl.u32 2475754826, %v2669
      %v2673 = vor.u32 %v2671, %v2672
      %v2674 = vshll.u32 2475754826, %v2668
      %v2675 = vshrl.u32 2131351028, %v2669
      %v2676 = vor.u32 %v2674, %v2675
      %v2677 = vshll.u32 2131351028, %v2668
      %v2678 = vshrl.u32 2102212464, %v2669
      %v2679 = vor.u32 %v2677, %v2678
      %v2680 = vshll.u32 2102212464, %v2668
      %v2681 = vshrl.u32 920167782, %v2669
      %v2682 = vor.u32 %v2680, %v2681
      %v2683 = vshll.u32 920167782, %v2668
      %v2684 = vshrl.u32 1326507024, %v2669
      %v2685 = vor.u32 %v2683, %v2684
      %vm2686 = vcmp.lt.s32.totalorder %v2667, 1
      %vm2687 = vcmp.lt.s32.totalorder %v2667, 2
      %vm2688 = vcmp.lt.s32.totalorder %v2667, 3
      %vm2689 = vcmp.lt.s32.totalorder %v2667, 4
      %v2690 = vsel %vm2686, %v2670, %v2673
      %v2691 = vsel %vm2689, %v2679, 2102212464
      %v2692 = vsel %vm2688, %v2676, %v2691
      %v2693 = vsel %vm2687, %v2690, %v2692
      %v2694 = vsel %vm2686, %v2673, %v2676
      %v2695 = vsel %vm2689, %v2682, 920167782
      %v2696 = vsel %vm2688, %v2679, %v2695
      %v2697 = vsel %vm2687, %v2694, %v2696
      %v2698 = vsel %vm2686, %v2676, %v2679
      %v2699 = vsel %vm2689, %v2685, 1326507024
      %v2700 = vsel %vm2688, %v2682, %v2699
      %v2701 = vsel %vm2687, %v2698, %v2700
      %v2702 = vshll.u32 %v2662, 8
      %v2703 = vmul.u32.u64.compose %v2702, %v2701
      %v2704 = vextract.low.u32 %v2703
      %v2705 = vextract.high.u32 %v2703
      %v2706 = vmul.u32.u64.compose %v2702, %v2697
      %v2707 = vextract.low.u32 %v2706
      %v2708 = vextract.high.u32 %v2706
      %v2709 = vmul.u32 %v2702, %v2693
      %v2710 = vadd.s32 %v2705, %v2707
      %vm2711 = vc.u32 %v2705, %v2707
      %v2712 = vadd.s32 %v2708, 1
      %v2713 = vsel %vm2711, %v2712, %v2708
      %v2714 = vadd.s32 %v2709, %v2713
      %v2715 = vadd.s32 %v2714, 536870912
      %v2716 = vshrl.u32 %v2715, 30
      %v2717 = vshll.u32 %v2716, 30
      %v2718 = vsub.s32 %v2714, %v2717
      %vm2719 = vcmp.lt.s32.totalorder %v2718, 0
      %v2720 = vsub.s32 0, %v2718
      %v2721 = vsel %vm2719, %v2720, %v2718
      %v2722 = vclz %v2721
      %v2723 = vsub.s32 %v2722, 2
      %vm2724 = vcmp.gt.s32.totalorder 0, %v2723
      %v2725 = vsel %vm2724, 0, %v2723
      %v2726 = vsub.s32 32, %v2725
      %v2727 = vshll.u32 %v2718, %v2725
      %v2728 = vshrl.u32 %v2710, %v2726
      %v2729 = vor.u32 %v2727, %v2728
      %v2730 = vsub.s32 4294967266, %v2725
      %v2731 = vadd.s32 %v2730, 127
      %v2732 = vshll.u32 %v2731, 23
      %v2733 = vor.u32 4788187, %v2732
      %v2734 = vand.u32 2147483647, %v2733
      %v2736 = vcvt.s32.f32 %v2729
      %v2737 = vmul.f32 %v2736, %v2734
      %v2738 = vxor.u32 %v2737, 2147483648
      %v2739 = vsel %vm2656, %v2738, %v2737
      %v2740 = vsub.s32 4, %v2716
      %v2741 = vsel %vm2656, %v2740, %v2716
      %v2742 = vsel %vm2655, %v1352, %v2739
      %v2743 = vsel %vm2655, 0, %v2741
      %v2744 = vcosq.f32.pop %v2742
      %v2745 = vsinq.f32.pop %v2742
      %vm2746 = vweird.f32 %v1352
      %v2747 = vadd.s32 %v2743, 3
      %v2748 = vand.u32 %v2747, 3
      %vm2749 = vcmp.lt.s32.totalorder %v2748, 2
      %vm2750 = vcmp.eq.s32.totalorder %v2748, 0
      %v2751 = vxor.u32 %v2745, 2147483648
      %v2752 = vsel %vm2750, %v2744, %v2751
      %vm2753 = vcmp.eq.s32.totalorder %v2748, 2
      %v2754 = vxor.u32 %v2744, 2147483648
      %v2755 = vsel %vm2753, %v2754, %v2745
      %v2756 = vsel %vm2749, %v2752, %v2755
      %v2757 = vsel %vm2746, nan, %v2756
      %v2758 = vand.u32 2147483647, %v2457
      %vm2759 = vcmp.le.f32.partialorder %v2758, 0.7853982
      %vm2760 = vcmp.lt.s32.totalorder %v2457, 0
      %v2761 = vand.u32 %v2457, 2139095040
      %v2762 = vshrl.u32 %v2761, 23
      %v2763 = vsub.s32 %v2762, 127
      %v2764 = vand.u32 2147483647, %v2457
      %v2765 = vand.u32 %v2764, 8388607
      %v2766 = vor.u32 %v2765, 8388608
      %v2767 = vsub.s32 0, %v2766
      %v2768 = vadd.s32 %v2763, 1
      %vm2769 = vcmp.gt.s32.totalorder %v2768, 0
      %v2770 = vsel %vm2769, %v2768, 0
      %v2771 = vshrl.u32 %v2770, 5
      %v2772 = vand.u32 %v2770, 31
      %v2773 = vsub.s32 32, %v2772
      %v2774 = vshrl.u32 683565275, %v2773
      %v2775 = vshll.u32 683565275, %v2772
      %v2776 = vshrl.u32 2475754826, %v2773
      %v2777 = vor.u32 %v2775, %v2776
      %v2778 = vshll.u32 2475754826, %v2772
      %v2779 = vshrl.u32 2131351028, %v2773
      %v2780 = vor.u32 %v2778, %v2779
      %v2781 = vshll.u32 2131351028, %v2772
      %v2782 = vshrl.u32 2102212464, %v2773
      %v2783 = vor.u32 %v2781, %v2782
      %v2784 = vshll.u32 2102212464, %v2772
      %v2785 = vshrl.u32 920167782, %v2773
      %v2786 = vor.u32 %v2784, %v2785
      %v2787 = vshll.u32 920167782, %v2772
      %v2788 = vshrl.u32 1326507024, %v2773
      %v2789 = vor.u32 %v2787, %v2788
      %vm2790 = vcmp.lt.s32.totalorder %v2771, 1
      %vm2791 = vcmp.lt.s32.totalorder %v2771, 2
      %vm2792 = vcmp.lt.s32.totalorder %v2771, 3
      %vm2793 = vcmp.lt.s32.totalorder %v2771, 4
      %v2794 = vsel %vm2790, %v2774, %v2777
      %v2795 = vsel %vm2793, %v2783, 2102212464
      %v2796 = vsel %vm2792, %v2780, %v2795
      %v2797 = vsel %vm2791, %v2794, %v2796
      %v2798 = vsel %vm2790, %v2777, %v2780
      %v2799 = vsel %vm2793, %v2786, 920167782
      %v2800 = vsel %vm2792, %v2783, %v2799
      %v2801 = vsel %vm2791, %v2798, %v2800
      %v2802 = vsel %vm2790, %v2780, %v2783
      %v2803 = vsel %vm2793, %v2789, 1326507024
      %v2804 = vsel %vm2792, %v2786, %v2803
      %v2805 = vsel %vm2791, %v2802, %v2804
      %v2806 = vshll.u32 %v2766, 8
      %v2807 = vmul.u32.u64.compose %v2806, %v2805
      %v2808 = vextract.low.u32 %v2807
      %v2809 = vextract.high.u32 %v2807
      %v2810 = vmul.u32.u64.compose %v2806, %v2801
      %v2811 = vextract.low.u32 %v2810
      %v2812 = vextract.high.u32 %v2810
      %v2813 = vmul.u32 %v2806, %v2797
      %v2814 = vadd.s32 %v2809, %v2811
      %vm2815 = vc.u32 %v2809, %v2811
      %v2816 = vadd.s32 %v2812, 1
      %v2817 = vsel %vm2815, %v2816, %v2812
      %v2818 = vadd.s32 %v2813, %v2817
      %v2819 = vadd.s32 %v2818, 536870912
      %v2820 = vshrl.u32 %v2819, 30
      %v2821 = vshll.u32 %v2820, 30
      %v2822 = vsub.s32 %v2818, %v2821
      %vm2823 = vcmp.lt.s32.totalorder %v2822, 0
      %v2824 = vsub.s32 0, %v2822
      %v2825 = vsel %vm2823, %v2824, %v2822
      %v2826 = vclz %v2825
      %v2827 = vsub.s32 %v2826, 2
      %vm2828 = vcmp.gt.s32.totalorder 0, %v2827
      %v2829 = vsel %vm2828, 0, %v2827
      %v2830 = vsub.s32 32, %v2829
      %v2831 = vshll.u32 %v2822, %v2829
      %v2832 = vshrl.u32 %v2814, %v2830
      %v2833 = vor.u32 %v2831, %v2832
      %v2834 = vsub.s32 4294967266, %v2829
      %v2835 = vadd.s32 %v2834, 127
      %v2836 = vshll.u32 %v2835, 23
      %v2837 = vor.u32 4788187, %v2836
      %v2838 = vand.u32 2147483647, %v2837
      %v2840 = vcvt.s32.f32 %v2833
      %v2841 = vmul.f32 %v2840, %v2838
      %v2842 = vxor.u32 %v2841, 2147483648
      %v2843 = vsel %vm2760, %v2842, %v2841
      %v2844 = vsub.s32 4, %v2820
      %v2845 = vsel %vm2760, %v2844, %v2820
      %v2846 = vsel %vm2759, %v2457, %v2843
      %v2847 = vsel %vm2759, 0, %v2845
      %v2848 = vcosq.f32.pop %v2846
      %v2849 = vsinq.f32.pop %v2846
      %vm2850 = vweird.f32 %v2457
      %v2851 = vadd.s32 %v2847, 3
      %v2852 = vand.u32 %v2851, 3
      %vm2853 = vcmp.lt.s32.totalorder %v2852, 2
      %vm2854 = vcmp.eq.s32.totalorder %v2852, 0
      %v2855 = vxor.u32 %v2849, 2147483648
      %v2856 = vsel %vm2854, %v2848, %v2855
      %vm2857 = vcmp.eq.s32.totalorder %v2852, 2
      %v2858 = vxor.u32 %v2848, 2147483648
      %v2859 = vsel %vm2857, %v2858, %v2849
      %v2860 = vsel %vm2853, %v2856, %v2859
      %v2861 = vsel %vm2850, nan, %v2860
      %v2862 = vand.u32 2147483647, %v1357
      %vm2863 = vcmp.le.f32.partialorder %v2862, 0.7853982
      %vm2864 = vcmp.lt.s32.totalorder %v1357, 0
      %v2865 = vand.u32 %v1357, 2139095040
      %v2866 = vshrl.u32 %v2865, 23
      %v2867 = vsub.s32 %v2866, 127
      %v2868 = vand.u32 2147483647, %v1357
      %v2869 = vand.u32 %v2868, 8388607
      %v2870 = vor.u32 %v2869, 8388608
      %v2871 = vsub.s32 0, %v2870
      %v2872 = vadd.s32 %v2867, 1
      %vm2873 = vcmp.gt.s32.totalorder %v2872, 0
      %v2874 = vsel %vm2873, %v2872, 0
      %v2875 = vshrl.u32 %v2874, 5
      %v2876 = vand.u32 %v2874, 31
      %v2877 = vsub.s32 32, %v2876
      %v2878 = vshrl.u32 683565275, %v2877
      %v2879 = vshll.u32 683565275, %v2876
      %v2880 = vshrl.u32 2475754826, %v2877
      %v2881 = vor.u32 %v2879, %v2880
      %v2882 = vshll.u32 2475754826, %v2876
      %v2883 = vshrl.u32 2131351028, %v2877
      %v2884 = vor.u32 %v2882, %v2883
      %v2885 = vshll.u32 2131351028, %v2876
      %v2886 = vshrl.u32 2102212464, %v2877
      %v2887 = vor.u32 %v2885, %v2886
      %v2888 = vshll.u32 2102212464, %v2876
      %v2889 = vshrl.u32 920167782, %v2877
      %v2890 = vor.u32 %v2888, %v2889
      %v2891 = vshll.u32 920167782, %v2876
      %v2892 = vshrl.u32 1326507024, %v2877
      %v2893 = vor.u32 %v2891, %v2892
      %vm2894 = vcmp.lt.s32.totalorder %v2875, 1
      %vm2895 = vcmp.lt.s32.totalorder %v2875, 2
      %vm2896 = vcmp.lt.s32.totalorder %v2875, 3
      %vm2897 = vcmp.lt.s32.totalorder %v2875, 4
      %v2898 = vsel %vm2894, %v2878, %v2881
      %v2899 = vsel %vm2897, %v2887, 2102212464
      %v2900 = vsel %vm2896, %v2884, %v2899
      %v2901 = vsel %vm2895, %v2898, %v2900
      %v2902 = vsel %vm2894, %v2881, %v2884
      %v2903 = vsel %vm2897, %v2890, 920167782
      %v2904 = vsel %vm2896, %v2887, %v2903
      %v2905 = vsel %vm2895, %v2902, %v2904
      %v2906 = vsel %vm2894, %v2884, %v2887
      %v2907 = vsel %vm2897, %v2893, 1326507024
      %v2908 = vsel %vm2896, %v2890, %v2907
      %v2909 = vsel %vm2895, %v2906, %v2908
      %v2910 = vshll.u32 %v2870, 8
      %v2911 = vmul.u32.u64.compose %v2910, %v2909
      %v2912 = vextract.low.u32 %v2911
      %v2913 = vextract.high.u32 %v2911
      %v2914 = vmul.u32.u64.compose %v2910, %v2905
      %v2915 = vextract.low.u32 %v2914
      %v2916 = vextract.high.u32 %v2914
      %v2917 = vmul.u32 %v2910, %v2901
      %v2918 = vadd.s32 %v2913, %v2915
      %vm2919 = vc.u32 %v2913, %v2915
      %v2920 = vadd.s32 %v2916, 1
      %v2921 = vsel %vm2919, %v2920, %v2916
      %v2922 = vadd.s32 %v2917, %v2921
      %v2923 = vadd.s32 %v2922, 536870912
      %v2924 = vshrl.u32 %v2923, 30
      %v2925 = vshll.u32 %v2924, 30
      %v2926 = vsub.s32 %v2922, %v2925
      %vm2927 = vcmp.lt.s32.totalorder %v2926, 0
      %v2928 = vsub.s32 0, %v2926
      %v2929 = vsel %vm2927, %v2928, %v2926
      %v2930 = vclz %v2929
      %v2931 = vsub.s32 %v2930, 2
      %vm2932 = vcmp.gt.s32.totalorder 0, %v2931
      %v2933 = vsel %vm2932, 0, %v2931
      %v2934 = vsub.s32 32, %v2933
      %v2935 = vshll.u32 %v2926, %v2933
      %v2936 = vshrl.u32 %v2918, %v2934
      %v2937 = vor.u32 %v2935, %v2936
      %v2938 = vsub.s32 4294967266, %v2933
      %v2939 = vadd.s32 %v2938, 127
      %v2940 = vshll.u32 %v2939, 23
      %v2941 = vor.u32 4788187, %v2940
      %v2942 = vand.u32 2147483647, %v2941
      %v2944 = vcvt.s32.f32 %v2937
      %v2945 = vmul.f32 %v2944, %v2942
      %v2946 = vxor.u32 %v2945, 2147483648
      %v2947 = vsel %vm2864, %v2946, %v2945
      %v2948 = vsub.s32 4, %v2924
      %v2949 = vsel %vm2864, %v2948, %v2924
      %v2950 = vsel %vm2863, %v1357, %v2947
      %v2951 = vsel %vm2863, 0, %v2949
      %v2952 = vcosq.f32.pop %v2950
      %v2953 = vsinq.f32.pop %v2950
      %vm2954 = vweird.f32 %v1357
      %v2955 = vadd.s32 %v2951, 3
      %v2956 = vand.u32 %v2955, 3
      %vm2957 = vcmp.lt.s32.totalorder %v2956, 2
      %vm2958 = vcmp.eq.s32.totalorder %v2956, 0
      %v2959 = vxor.u32 %v2953, 2147483648
      %v2960 = vsel %vm2958, %v2952, %v2959
      %vm2961 = vcmp.eq.s32.totalorder %v2956, 2
      %v2962 = vxor.u32 %v2952, 2147483648
      %v2963 = vsel %vm2961, %v2962, %v2953
      %v2964 = vsel %vm2957, %v2960, %v2963
      %v2965 = vsel %vm2954, nan, %v2964
      %v2966 = vand.u32 2147483647, %v1359
      %vm2967 = vcmp.le.f32.partialorder %v2966, 0.7853982
      %vm2968 = vcmp.lt.s32.totalorder %v1359, 0
      %v2969 = vand.u32 %v1359, 2139095040
      %v2970 = vshrl.u32 %v2969, 23
      %v2971 = vsub.s32 %v2970, 127
      %v2972 = vand.u32 2147483647, %v1359
      %v2973 = vand.u32 %v2972, 8388607
      %v2974 = vor.u32 %v2973, 8388608
      %v2975 = vsub.s32 0, %v2974
      %v2976 = vadd.s32 %v2971, 1
      %vm2977 = vcmp.gt.s32.totalorder %v2976, 0
      %v2978 = vsel %vm2977, %v2976, 0
      %v2979 = vshrl.u32 %v2978, 5
      %v2980 = vand.u32 %v2978, 31
      %v2981 = vsub.s32 32, %v2980
      %v2982 = vshrl.u32 683565275, %v2981
      %v2983 = vshll.u32 683565275, %v2980
      %v2984 = vshrl.u32 2475754826, %v2981
      %v2985 = vor.u32 %v2983, %v2984
      %v2986 = vshll.u32 2475754826, %v2980
      %v2987 = vshrl.u32 2131351028, %v2981
      %v2988 = vor.u32 %v2986, %v2987
      %v2989 = vshll.u32 2131351028, %v2980
      %v2990 = vshrl.u32 2102212464, %v2981
      %v2991 = vor.u32 %v2989, %v2990
      %v2992 = vshll.u32 2102212464, %v2980
      %v2993 = vshrl.u32 920167782, %v2981
      %v2994 = vor.u32 %v2992, %v2993
      %v2995 = vshll.u32 920167782, %v2980
      %v2996 = vshrl.u32 1326507024, %v2981
      %v2997 = vor.u32 %v2995, %v2996
      %vm2998 = vcmp.lt.s32.totalorder %v2979, 1
      %vm2999 = vcmp.lt.s32.totalorder %v2979, 2
      %vm3000 = vcmp.lt.s32.totalorder %v2979, 3
      %vm3001 = vcmp.lt.s32.totalorder %v2979, 4
      %v3002 = vsel %vm2998, %v2982, %v2985
      %v3003 = vsel %vm3001, %v2991, 2102212464
      %v3004 = vsel %vm3000, %v2988, %v3003
      %v3005 = vsel %vm2999, %v3002, %v3004
      %v3006 = vsel %vm2998, %v2985, %v2988
      %v3007 = vsel %vm3001, %v2994, 920167782
      %v3008 = vsel %vm3000, %v2991, %v3007
      %v3009 = vsel %vm2999, %v3006, %v3008
      %v3010 = vsel %vm2998, %v2988, %v2991
      %v3011 = vsel %vm3001, %v2997, 1326507024
      %v3012 = vsel %vm3000, %v2994, %v3011
      %v3013 = vsel %vm2999, %v3010, %v3012
      %v3014 = vshll.u32 %v2974, 8
      %v3015 = vmul.u32.u64.compose %v3014, %v3013
      %v3016 = vextract.low.u32 %v3015
      %v3017 = vextract.high.u32 %v3015
      %v3018 = vmul.u32.u64.compose %v3014, %v3009
      %v3019 = vextract.low.u32 %v3018
      %v3020 = vextract.high.u32 %v3018
      %v3021 = vmul.u32 %v3014, %v3005
      %v3022 = vadd.s32 %v3017, %v3019
      %vm3023 = vc.u32 %v3017, %v3019
      %v3024 = vadd.s32 %v3020, 1
      %v3025 = vsel %vm3023, %v3024, %v3020
      %v3026 = vadd.s32 %v3021, %v3025
      %v3027 = vadd.s32 %v3026, 536870912
      %v3028 = vshrl.u32 %v3027, 30
      %v3029 = vshll.u32 %v3028, 30
      %v3030 = vsub.s32 %v3026, %v3029
      %vm3031 = vcmp.lt.s32.totalorder %v3030, 0
      %v3032 = vsub.s32 0, %v3030
      %v3033 = vsel %vm3031, %v3032, %v3030
      %v3034 = vclz %v3033
      %v3035 = vsub.s32 %v3034, 2
      %vm3036 = vcmp.gt.s32.totalorder 0, %v3035
      %v3037 = vsel %vm3036, 0, %v3035
      %v3038 = vsub.s32 32, %v3037
      %v3039 = vshll.u32 %v3030, %v3037
      %v3040 = vshrl.u32 %v3022, %v3038
      %v3041 = vor.u32 %v3039, %v3040
      %v3042 = vsub.s32 4294967266, %v3037
      %v3043 = vadd.s32 %v3042, 127
      %v3044 = vshll.u32 %v3043, 23
      %v3045 = vor.u32 4788187, %v3044
      %v3046 = vand.u32 2147483647, %v3045
      %v3048 = vcvt.s32.f32 %v3041
      %v3049 = vmul.f32 %v3048, %v3046
      %v3050 = vxor.u32 %v3049, 2147483648
      %v3051 = vsel %vm2968, %v3050, %v3049
      %v3052 = vsub.s32 4, %v3028
      %v3053 = vsel %vm2968, %v3052, %v3028
      %v3054 = vsel %vm2967, %v1359, %v3051
      %v3055 = vsel %vm2967, 0, %v3053
      %v3056 = vcosq.f32.pop %v3054
      %v3057 = vsinq.f32.pop %v3054
      %vm3058 = vweird.f32 %v1359
      %v3059 = vadd.s32 %v3055, 3
      %v3060 = vand.u32 %v3059, 3
      %vm3061 = vcmp.lt.s32.totalorder %v3060, 2
      %vm3062 = vcmp.eq.s32.totalorder %v3060, 0
      %v3063 = vxor.u32 %v3057, 2147483648
      %v3064 = vsel %vm3062, %v3056, %v3063
      %vm3065 = vcmp.eq.s32.totalorder %v3060, 2
      %v3066 = vxor.u32 %v3056, 2147483648
      %v3067 = vsel %vm3065, %v3066, %v3057
      %v3068 = vsel %vm3061, %v3064, %v3067
      %v3069 = vsel %vm3058, nan, %v3068
      %v3070 = vand.u32 2147483647, %v2463
      %vm3071 = vcmp.le.f32.partialorder %v3070, 0.7853982
      %vm3072 = vcmp.lt.s32.totalorder %v2463, 0
      %v3073 = vand.u32 %v2463, 2139095040
      %v3074 = vshrl.u32 %v3073, 23
      %v3075 = vsub.s32 %v3074, 127
      %v3076 = vand.u32 2147483647, %v2463
      %v3077 = vand.u32 %v3076, 8388607
      %v3078 = vor.u32 %v3077, 8388608
      %v3079 = vsub.s32 0, %v3078
      %v3080 = vadd.s32 %v3075, 1
      %vm3081 = vcmp.gt.s32.totalorder %v3080, 0
      %v3082 = vsel %vm3081, %v3080, 0
      %v3083 = vshrl.u32 %v3082, 5
      %v3084 = vand.u32 %v3082, 31
      %v3085 = vsub.s32 32, %v3084
      %v3086 = vshrl.u32 683565275, %v3085
      %v3087 = vshll.u32 683565275, %v3084
      %v3088 = vshrl.u32 2475754826, %v3085
      %v3089 = vor.u32 %v3087, %v3088
      %v3090 = vshll.u32 2475754826, %v3084
      %v3091 = vshrl.u32 2131351028, %v3085
      %v3092 = vor.u32 %v3090, %v3091
      %v3093 = vshll.u32 2131351028, %v3084
      %v3094 = vshrl.u32 2102212464, %v3085
      %v3095 = vor.u32 %v3093, %v3094
      %v3096 = vshll.u32 2102212464, %v3084
      %v3097 = vshrl.u32 920167782, %v3085
      %v3098 = vor.u32 %v3096, %v3097
      %v3099 = vshll.u32 920167782, %v3084
      %v3100 = vshrl.u32 1326507024, %v3085
      %v3101 = vor.u32 %v3099, %v3100
      %vm3102 = vcmp.lt.s32.totalorder %v3083, 1
      %vm3103 = vcmp.lt.s32.totalorder %v3083, 2
      %vm3104 = vcmp.lt.s32.totalorder %v3083, 3
      %vm3105 = vcmp.lt.s32.totalorder %v3083, 4
      %v3106 = vsel %vm3102, %v3086, %v3089
      %v3107 = vsel %vm3105, %v3095, 2102212464
      %v3108 = vsel %vm3104, %v3092, %v3107
      %v3109 = vsel %vm3103, %v3106, %v3108
      %v3110 = vsel %vm3102, %v3089, %v3092
      %v3111 = vsel %vm3105, %v3098, 920167782
      %v3112 = vsel %vm3104, %v3095, %v3111
      %v3113 = vsel %vm3103, %v3110, %v3112
      %v3114 = vsel %vm3102, %v3092, %v3095
      %v3115 = vsel %vm3105, %v3101, 1326507024
      %v3116 = vsel %vm3104, %v3098, %v3115
      %v3117 = vsel %vm3103, %v3114, %v3116
      %v3118 = vshll.u32 %v3078, 8
      %v3119 = vmul.u32.u64.compose %v3118, %v3117
      %v3120 = vextract.low.u32 %v3119
      %v3121 = vextract.high.u32 %v3119
      %v3122 = vmul.u32.u64.compose %v3118, %v3113
      %v3123 = vextract.low.u32 %v3122
      %v3124 = vextract.high.u32 %v3122
      %v3125 = vmul.u32 %v3118, %v3109
      %v3126 = vadd.s32 %v3121, %v3123
      %vm3127 = vc.u32 %v3121, %v3123
      %v3128 = vadd.s32 %v3124, 1
      %v3129 = vsel %vm3127, %v3128, %v3124
      %v3130 = vadd.s32 %v3125, %v3129
      %v3131 = vadd.s32 %v3130, 536870912
      %v3132 = vshrl.u32 %v3131, 30
      %v3133 = vshll.u32 %v3132, 30
      %v3134 = vsub.s32 %v3130, %v3133
      %vm3135 = vcmp.lt.s32.totalorder %v3134, 0
      %v3136 = vsub.s32 0, %v3134
      %v3137 = vsel %vm3135, %v3136, %v3134
      %v3138 = vclz %v3137
      %v3139 = vsub.s32 %v3138, 2
      %vm3140 = vcmp.gt.s32.totalorder 0, %v3139
      %v3141 = vsel %vm3140, 0, %v3139
      %v3142 = vsub.s32 32, %v3141
      %v3143 = vshll.u32 %v3134, %v3141
      %v3144 = vshrl.u32 %v3126, %v3142
      %v3145 = vor.u32 %v3143, %v3144
      %v3146 = vsub.s32 4294967266, %v3141
      %v3147 = vadd.s32 %v3146, 127
      %v3148 = vshll.u32 %v3147, 23
      %v3149 = vor.u32 4788187, %v3148
      %v3150 = vand.u32 2147483647, %v3149
      %v3152 = vcvt.s32.f32 %v3145
      %v3153 = vmul.f32 %v3152, %v3150
      %v3154 = vxor.u32 %v3153, 2147483648
      %v3155 = vsel %vm3072, %v3154, %v3153
      %v3156 = vsub.s32 4, %v3132
      %v3157 = vsel %vm3072, %v3156, %v3132
      %v3158 = vsel %vm3071, %v2463, %v3155
      %v3159 = vsel %vm3071, 0, %v3157
      %v3160 = vcosq.f32.pop %v3158
      %v3161 = vsinq.f32.pop %v3158
      %vm3162 = vweird.f32 %v2463
      %v3163 = vadd.s32 %v3159, 3
      %v3164 = vand.u32 %v3163, 3
      %vm3165 = vcmp.lt.s32.totalorder %v3164, 2
      %vm3166 = vcmp.eq.s32.totalorder %v3164, 0
      %v3167 = vxor.u32 %v3161, 2147483648
      %v3168 = vsel %vm3166, %v3160, %v3167
      %vm3169 = vcmp.eq.s32.totalorder %v3164, 2
      %v3170 = vxor.u32 %v3160, 2147483648
      %v3171 = vsel %vm3169, %v3170, %v3161
      %v3172 = vsel %vm3165, %v3168, %v3171
      %v3173 = vsel %vm3162, nan, %v3172
      %v3174 = vand.u32 2147483647, %v1364
      %vm3175 = vcmp.le.f32.partialorder %v3174, 0.7853982
      %vm3176 = vcmp.lt.s32.totalorder %v1364, 0
      %v3177 = vand.u32 %v1364, 2139095040
      %v3178 = vshrl.u32 %v3177, 23
      %v3179 = vsub.s32 %v3178, 127
      %v3180 = vand.u32 2147483647, %v1364
      %v3181 = vand.u32 %v3180, 8388607
      %v3182 = vor.u32 %v3181, 8388608
      %v3183 = vsub.s32 0, %v3182
      %v3184 = vadd.s32 %v3179, 1
      %vm3185 = vcmp.gt.s32.totalorder %v3184, 0
      %v3186 = vsel %vm3185, %v3184, 0
      %v3187 = vshrl.u32 %v3186, 5
      %v3188 = vand.u32 %v3186, 31
      %v3189 = vsub.s32 32, %v3188
      %v3190 = vshrl.u32 683565275, %v3189
      %v3191 = vshll.u32 683565275, %v3188
      %v3192 = vshrl.u32 2475754826, %v3189
      %v3193 = vor.u32 %v3191, %v3192
      %v3194 = vshll.u32 2475754826, %v3188
      %v3195 = vshrl.u32 2131351028, %v3189
      %v3196 = vor.u32 %v3194, %v3195
      %v3197 = vshll.u32 2131351028, %v3188
      %v3198 = vshrl.u32 2102212464, %v3189
      %v3199 = vor.u32 %v3197, %v3198
      %v3200 = vshll.u32 2102212464, %v3188
      %v3201 = vshrl.u32 920167782, %v3189
      %v3202 = vor.u32 %v3200, %v3201
      %v3203 = vshll.u32 920167782, %v3188
      %v3204 = vshrl.u32 1326507024, %v3189
      %v3205 = vor.u32 %v3203, %v3204
      %vm3206 = vcmp.lt.s32.totalorder %v3187, 1
      %vm3207 = vcmp.lt.s32.totalorder %v3187, 2
      %vm3208 = vcmp.lt.s32.totalorder %v3187, 3
      %vm3209 = vcmp.lt.s32.totalorder %v3187, 4
      %v3210 = vsel %vm3206, %v3190, %v3193
      %v3211 = vsel %vm3209, %v3199, 2102212464
      %v3212 = vsel %vm3208, %v3196, %v3211
      %v3213 = vsel %vm3207, %v3210, %v3212
      %v3214 = vsel %vm3206, %v3193, %v3196
      %v3215 = vsel %vm3209, %v3202, 920167782
      %v3216 = vsel %vm3208, %v3199, %v3215
      %v3217 = vsel %vm3207, %v3214, %v3216
      %v3218 = vsel %vm3206, %v3196, %v3199
      %v3219 = vsel %vm3209, %v3205, 1326507024
      %v3220 = vsel %vm3208, %v3202, %v3219
      %v3221 = vsel %vm3207, %v3218, %v3220
      %v3222 = vshll.u32 %v3182, 8
      %v3223 = vmul.u32.u64.compose %v3222, %v3221
      %v3224 = vextract.low.u32 %v3223
      %v3225 = vextract.high.u32 %v3223
      %v3226 = vmul.u32.u64.compose %v3222, %v3217
      %v3227 = vextract.low.u32 %v3226
      %v3228 = vextract.high.u32 %v3226
      %v3229 = vmul.u32 %v3222, %v3213
      %v3230 = vadd.s32 %v3225, %v3227
      %vm3231 = vc.u32 %v3225, %v3227
      %v3232 = vadd.s32 %v3228, 1
      %v3233 = vsel %vm3231, %v3232, %v3228
      %v3234 = vadd.s32 %v3229, %v3233
      %v3235 = vadd.s32 %v3234, 536870912
      %v3236 = vshrl.u32 %v3235, 30
      %v3237 = vshll.u32 %v3236, 30
      %v3238 = vsub.s32 %v3234, %v3237
      %vm3239 = vcmp.lt.s32.totalorder %v3238, 0
      %v3240 = vsub.s32 0, %v3238
      %v3241 = vsel %vm3239, %v3240, %v3238
      %v3242 = vclz %v3241
      %v3243 = vsub.s32 %v3242, 2
      %vm3244 = vcmp.gt.s32.totalorder 0, %v3243
      %v3245 = vsel %vm3244, 0, %v3243
      %v3246 = vsub.s32 32, %v3245
      %v3247 = vshll.u32 %v3238, %v3245
      %v3248 = vshrl.u32 %v3230, %v3246
      %v3249 = vor.u32 %v3247, %v3248
      %v3250 = vsub.s32 4294967266, %v3245
      %v3251 = vadd.s32 %v3250, 127
      %v3252 = vshll.u32 %v3251, 23
      %v3253 = vor.u32 4788187, %v3252
      %v3254 = vand.u32 2147483647, %v3253
      %v3256 = vcvt.s32.f32 %v3249
      %v3257 = vmul.f32 %v3256, %v3254
      %v3258 = vxor.u32 %v3257, 2147483648
      %v3259 = vsel %vm3176, %v3258, %v3257
      %v3260 = vsub.s32 4, %v3236
      %v3261 = vsel %vm3176, %v3260, %v3236
      %v3262 = vsel %vm3175, %v1364, %v3259
      %v3263 = vsel %vm3175, 0, %v3261
      %v3264 = vcosq.f32.pop %v3262
      %v3265 = vsinq.f32.pop %v3262
      %vm3266 = vweird.f32 %v1364
      %v3267 = vadd.s32 %v3263, 3
      %v3268 = vand.u32 %v3267, 3
      %vm3269 = vcmp.lt.s32.totalorder %v3268, 2
      %vm3270 = vcmp.eq.s32.totalorder %v3268, 0
      %v3271 = vxor.u32 %v3265, 2147483648
      %v3272 = vsel %vm3270, %v3264, %v3271
      %vm3273 = vcmp.eq.s32.totalorder %v3268, 2
      %v3274 = vxor.u32 %v3264, 2147483648
      %v3275 = vsel %vm3273, %v3274, %v3265
      %v3276 = vsel %vm3269, %v3272, %v3275
      %v3277 = vsel %vm3266, nan, %v3276
      %v3278 = vand.u32 2147483647, %v1366
      %vm3279 = vcmp.le.f32.partialorder %v3278, 0.7853982
      %vm3280 = vcmp.lt.s32.totalorder %v1366, 0
      %v3281 = vand.u32 %v1366, 2139095040
      %v3282 = vshrl.u32 %v3281, 23
      %v3283 = vsub.s32 %v3282, 127
      %v3284 = vand.u32 2147483647, %v1366
      %v3285 = vand.u32 %v3284, 8388607
      %v3286 = vor.u32 %v3285, 8388608
      %v3287 = vsub.s32 0, %v3286
      %v3288 = vadd.s32 %v3283, 1
      %vm3289 = vcmp.gt.s32.totalorder %v3288, 0
      %v3290 = vsel %vm3289, %v3288, 0
      %v3291 = vshrl.u32 %v3290, 5
      %v3292 = vand.u32 %v3290, 31
      %v3293 = vsub.s32 32, %v3292
      %v3294 = vshrl.u32 683565275, %v3293
      %v3295 = vshll.u32 683565275, %v3292
      %v3296 = vshrl.u32 2475754826, %v3293
      %v3297 = vor.u32 %v3295, %v3296
      %v3298 = vshll.u32 2475754826, %v3292
      %v3299 = vshrl.u32 2131351028, %v3293
      %v3300 = vor.u32 %v3298, %v3299
      %v3301 = vshll.u32 2131351028, %v3292
      %v3302 = vshrl.u32 2102212464, %v3293
      %v3303 = vor.u32 %v3301, %v3302
      %v3304 = vshll.u32 2102212464, %v3292
      %v3305 = vshrl.u32 920167782, %v3293
      %v3306 = vor.u32 %v3304, %v3305
      %v3307 = vshll.u32 920167782, %v3292
      %v3308 = vshrl.u32 1326507024, %v3293
      %v3309 = vor.u32 %v3307, %v3308
      %vm3310 = vcmp.lt.s32.totalorder %v3291, 1
      %vm3311 = vcmp.lt.s32.totalorder %v3291, 2
      %vm3312 = vcmp.lt.s32.totalorder %v3291, 3
      %vm3313 = vcmp.lt.s32.totalorder %v3291, 4
      %v3314 = vsel %vm3310, %v3294, %v3297
      %v3315 = vsel %vm3313, %v3303, 2102212464
      %v3316 = vsel %vm3312, %v3300, %v3315
      %v3317 = vsel %vm3311, %v3314, %v3316
      %v3318 = vsel %vm3310, %v3297, %v3300
      %v3319 = vsel %vm3313, %v3306, 920167782
      %v3320 = vsel %vm3312, %v3303, %v3319
      %v3321 = vsel %vm3311, %v3318, %v3320
      %v3322 = vsel %vm3310, %v3300, %v3303
      %v3323 = vsel %vm3313, %v3309, 1326507024
      %v3324 = vsel %vm3312, %v3306, %v3323
      %v3325 = vsel %vm3311, %v3322, %v3324
      %v3326 = vshll.u32 %v3286, 8
      %v3327 = vmul.u32.u64.compose %v3326, %v3325
      %v3328 = vextract.low.u32 %v3327
      %v3329 = vextract.high.u32 %v3327
      %v3330 = vmul.u32.u64.compose %v3326, %v3321
      %v3331 = vextract.low.u32 %v3330
      %v3332 = vextract.high.u32 %v3330
      %v3333 = vmul.u32 %v3326, %v3317
      %v3334 = vadd.s32 %v3329, %v3331
      %vm3335 = vc.u32 %v3329, %v3331
      %v3336 = vadd.s32 %v3332, 1
      %v3337 = vsel %vm3335, %v3336, %v3332
      %v3338 = vadd.s32 %v3333, %v3337
      %v3339 = vadd.s32 %v3338, 536870912
      %v3340 = vshrl.u32 %v3339, 30
      %v3341 = vshll.u32 %v3340, 30
      %v3342 = vsub.s32 %v3338, %v3341
      %vm3343 = vcmp.lt.s32.totalorder %v3342, 0
      %v3344 = vsub.s32 0, %v3342
      %v3345 = vsel %vm3343, %v3344, %v3342
      %v3346 = vclz %v3345
      %v3347 = vsub.s32 %v3346, 2
      %vm3348 = vcmp.gt.s32.totalorder 0, %v3347
      %v3349 = vsel %vm3348, 0, %v3347
      %v3350 = vsub.s32 32, %v3349
      %v3351 = vshll.u32 %v3342, %v3349
      %v3352 = vshrl.u32 %v3334, %v3350
      %v3353 = vor.u32 %v3351, %v3352
      %v3354 = vsub.s32 4294967266, %v3349
      %v3355 = vadd.s32 %v3354, 127
      %v3356 = vshll.u32 %v3355, 23
      %v3357 = vor.u32 4788187, %v3356
      %v3358 = vand.u32 2147483647, %v3357
      %v3360 = vcvt.s32.f32 %v3353
      %v3361 = vmul.f32 %v3360, %v3358
      %v3362 = vxor.u32 %v3361, 2147483648
      %v3363 = vsel %vm3280, %v3362, %v3361
      %v3364 = vsub.s32 4, %v3340
      %v3365 = vsel %vm3280, %v3364, %v3340
      %v3366 = vsel %vm3279, %v1366, %v3363
      %v3367 = vsel %vm3279, 0, %v3365
      %v3368 = vcosq.f32.pop %v3366
      %v3369 = vsinq.f32.pop %v3366
      %vm3370 = vweird.f32 %v1366
      %v3371 = vadd.s32 %v3367, 3
      %v3372 = vand.u32 %v3371, 3
      %vm3373 = vcmp.lt.s32.totalorder %v3372, 2
      %vm3374 = vcmp.eq.s32.totalorder %v3372, 0
      %v3375 = vxor.u32 %v3369, 2147483648
      %v3376 = vsel %vm3374, %v3368, %v3375
      %vm3377 = vcmp.eq.s32.totalorder %v3372, 2
      %v3378 = vxor.u32 %v3368, 2147483648
      %v3379 = vsel %vm3377, %v3378, %v3369
      %v3380 = vsel %vm3373, %v3376, %v3379
      %v3381 = vsel %vm3370, nan, %v3380
      %v3382 = vand.u32 2147483647, %v2469
      %vm3383 = vcmp.le.f32.partialorder %v3382, 0.7853982
      %vm3384 = vcmp.lt.s32.totalorder %v2469, 0
      %v3385 = vand.u32 %v2469, 2139095040
      %v3386 = vshrl.u32 %v3385, 23
      %v3387 = vsub.s32 %v3386, 127
      %v3388 = vand.u32 2147483647, %v2469
      %v3389 = vand.u32 %v3388, 8388607
      %v3390 = vor.u32 %v3389, 8388608
      %v3391 = vsub.s32 0, %v3390
      %v3392 = vadd.s32 %v3387, 1
      %vm3393 = vcmp.gt.s32.totalorder %v3392, 0
      %v3394 = vsel %vm3393, %v3392, 0
      %v3395 = vshrl.u32 %v3394, 5
      %v3396 = vand.u32 %v3394, 31
      %v3397 = vsub.s32 32, %v3396
      %v3398 = vshrl.u32 683565275, %v3397
      %v3399 = vshll.u32 683565275, %v3396
      %v3400 = vshrl.u32 2475754826, %v3397
      %v3401 = vor.u32 %v3399, %v3400
      %v3402 = vshll.u32 2475754826, %v3396
      %v3403 = vshrl.u32 2131351028, %v3397
      %v3404 = vor.u32 %v3402, %v3403
      %v3405 = vshll.u32 2131351028, %v3396
      %v3406 = vshrl.u32 2102212464, %v3397
      %v3407 = vor.u32 %v3405, %v3406
      %v3408 = vshll.u32 2102212464, %v3396
      %v3409 = vshrl.u32 920167782, %v3397
      %v3410 = vor.u32 %v3408, %v3409
      %v3411 = vshll.u32 920167782, %v3396
      %v3412 = vshrl.u32 1326507024, %v3397
      %v3413 = vor.u32 %v3411, %v3412
      %vm3414 = vcmp.lt.s32.totalorder %v3395, 1
      %vm3415 = vcmp.lt.s32.totalorder %v3395, 2
      %vm3416 = vcmp.lt.s32.totalorder %v3395, 3
      %vm3417 = vcmp.lt.s32.totalorder %v3395, 4
      %v3418 = vsel %vm3414, %v3398, %v3401
      %v3419 = vsel %vm3417, %v3407, 2102212464
      %v3420 = vsel %vm3416, %v3404, %v3419
      %v3421 = vsel %vm3415, %v3418, %v3420
      %v3422 = vsel %vm3414, %v3401, %v3404
      %v3423 = vsel %vm3417, %v3410, 920167782
      %v3424 = vsel %vm3416, %v3407, %v3423
      %v3425 = vsel %vm3415, %v3422, %v3424
      %v3426 = vsel %vm3414, %v3404, %v3407
      %v3427 = vsel %vm3417, %v3413, 1326507024
      %v3428 = vsel %vm3416, %v3410, %v3427
      %v3429 = vsel %vm3415, %v3426, %v3428
      %v3430 = vshll.u32 %v3390, 8
      %v3431 = vmul.u32.u64.compose %v3430, %v3429
      %v3432 = vextract.low.u32 %v3431
      %v3433 = vextract.high.u32 %v3431
      %v3434 = vmul.u32.u64.compose %v3430, %v3425
      %v3435 = vextract.low.u32 %v3434
      %v3436 = vextract.high.u32 %v3434
      %v3437 = vmul.u32 %v3430, %v3421
      %v3438 = vadd.s32 %v3433, %v3435
      %vm3439 = vc.u32 %v3433, %v3435
      %v3440 = vadd.s32 %v3436, 1
      %v3441 = vsel %vm3439, %v3440, %v3436
      %v3442 = vadd.s32 %v3437, %v3441
      %v3443 = vadd.s32 %v3442, 536870912
      %v3444 = vshrl.u32 %v3443, 30
      %v3445 = vshll.u32 %v3444, 30
      %v3446 = vsub.s32 %v3442, %v3445
      %vm3447 = vcmp.lt.s32.totalorder %v3446, 0
      %v3448 = vsub.s32 0, %v3446
      %v3449 = vsel %vm3447, %v3448, %v3446
      %v3450 = vclz %v3449
      %v3451 = vsub.s32 %v3450, 2
      %vm3452 = vcmp.gt.s32.totalorder 0, %v3451
      %v3453 = vsel %vm3452, 0, %v3451
      %v3454 = vsub.s32 32, %v3453
      %v3455 = vshll.u32 %v3446, %v3453
      %v3456 = vshrl.u32 %v3438, %v3454
      %v3457 = vor.u32 %v3455, %v3456
      %v3458 = vsub.s32 4294967266, %v3453
      %v3459 = vadd.s32 %v3458, 127
      %v3460 = vshll.u32 %v3459, 23
      %v3461 = vor.u32 4788187, %v3460
      %v3462 = vand.u32 2147483647, %v3461
      %v3464 = vcvt.s32.f32 %v3457
      %v3465 = vmul.f32 %v3464, %v3462
      %v3466 = vxor.u32 %v3465, 2147483648
      %v3467 = vsel %vm3384, %v3466, %v3465
      %v3468 = vsub.s32 4, %v3444
      %v3469 = vsel %vm3384, %v3468, %v3444
      %v3470 = vsel %vm3383, %v2469, %v3467
      %v3471 = vsel %vm3383, 0, %v3469
      %v3472 = vcosq.f32.pop %v3470
      %v3473 = vsinq.f32.pop %v3470
      %vm3474 = vweird.f32 %v2469
      %v3475 = vadd.s32 %v3471, 3
      %v3476 = vand.u32 %v3475, 3
      %vm3477 = vcmp.lt.s32.totalorder %v3476, 2
      %vm3478 = vcmp.eq.s32.totalorder %v3476, 0
      %v3479 = vxor.u32 %v3473, 2147483648
      %v3480 = vsel %vm3478, %v3472, %v3479
      %vm3481 = vcmp.eq.s32.totalorder %v3476, 2
      %v3482 = vxor.u32 %v3472, 2147483648
      %v3483 = vsel %vm3481, %v3482, %v3473
      %v3484 = vsel %vm3477, %v3480, %v3483
      %v3485 = vsel %vm3474, nan, %v3484
      %v3486 = vand.u32 2147483647, %v1371
      %vm3487 = vcmp.le.f32.partialorder %v3486, 0.7853982
      %vm3488 = vcmp.lt.s32.totalorder %v1371, 0
      %v3489 = vand.u32 %v1371, 2139095040
      %v3490 = vshrl.u32 %v3489, 23
      %v3491 = vsub.s32 %v3490, 127
      %v3492 = vand.u32 2147483647, %v1371
      %v3493 = vand.u32 %v3492, 8388607
      %v3494 = vor.u32 %v3493, 8388608
      %v3495 = vsub.s32 0, %v3494
      %v3496 = vadd.s32 %v3491, 1
      %vm3497 = vcmp.gt.s32.totalorder %v3496, 0
      %v3498 = vsel %vm3497, %v3496, 0
      %v3499 = vshrl.u32 %v3498, 5
      %v3500 = vand.u32 %v3498, 31
      %v3501 = vsub.s32 32, %v3500
      %v3502 = vshrl.u32 683565275, %v3501
      %v3503 = vshll.u32 683565275, %v3500
      %v3504 = vshrl.u32 2475754826, %v3501
      %v3505 = vor.u32 %v3503, %v3504
      %v3506 = vshll.u32 2475754826, %v3500
      %v3507 = vshrl.u32 2131351028, %v3501
      %v3508 = vor.u32 %v3506, %v3507
      %v3509 = vshll.u32 2131351028, %v3500
      %v3510 = vshrl.u32 2102212464, %v3501
      %v3511 = vor.u32 %v3509, %v3510
      %v3512 = vshll.u32 2102212464, %v3500
      %v3513 = vshrl.u32 920167782, %v3501
      %v3514 = vor.u32 %v3512, %v3513
      %v3515 = vshll.u32 920167782, %v3500
      %v3516 = vshrl.u32 1326507024, %v3501
      %v3517 = vor.u32 %v3515, %v3516
      %vm3518 = vcmp.lt.s32.totalorder %v3499, 1
      %vm3519 = vcmp.lt.s32.totalorder %v3499, 2
      %vm3520 = vcmp.lt.s32.totalorder %v3499, 3
      %vm3521 = vcmp.lt.s32.totalorder %v3499, 4
      %v3522 = vsel %vm3518, %v3502, %v3505
      %v3523 = vsel %vm3521, %v3511, 2102212464
      %v3524 = vsel %vm3520, %v3508, %v3523
      %v3525 = vsel %vm3519, %v3522, %v3524
      %v3526 = vsel %vm3518, %v3505, %v3508
      %v3527 = vsel %vm3521, %v3514, 920167782
      %v3528 = vsel %vm3520, %v3511, %v3527
      %v3529 = vsel %vm3519, %v3526, %v3528
      %v3530 = vsel %vm3518, %v3508, %v3511
      %v3531 = vsel %vm3521, %v3517, 1326507024
      %v3532 = vsel %vm3520, %v3514, %v3531
      %v3533 = vsel %vm3519, %v3530, %v3532
      %v3534 = vshll.u32 %v3494, 8
      %v3535 = vmul.u32.u64.compose %v3534, %v3533
      %v3536 = vextract.low.u32 %v3535
      %v3537 = vextract.high.u32 %v3535
      %v3538 = vmul.u32.u64.compose %v3534, %v3529
      %v3539 = vextract.low.u32 %v3538
      %v3540 = vextract.high.u32 %v3538
      %v3541 = vmul.u32 %v3534, %v3525
      %v3542 = vadd.s32 %v3537, %v3539
      %vm3543 = vc.u32 %v3537, %v3539
      %v3544 = vadd.s32 %v3540, 1
      %v3545 = vsel %vm3543, %v3544, %v3540
      %v3546 = vadd.s32 %v3541, %v3545
      %v3547 = vadd.s32 %v3546, 536870912
      %v3548 = vshrl.u32 %v3547, 30
      %v3549 = vshll.u32 %v3548, 30
      %v3550 = vsub.s32 %v3546, %v3549
      %vm3551 = vcmp.lt.s32.totalorder %v3550, 0
      %v3552 = vsub.s32 0, %v3550
      %v3553 = vsel %vm3551, %v3552, %v3550
      %v3554 = vclz %v3553
      %v3555 = vsub.s32 %v3554, 2
      %vm3556 = vcmp.gt.s32.totalorder 0, %v3555
      %v3557 = vsel %vm3556, 0, %v3555
      %v3558 = vsub.s32 32, %v3557
      %v3559 = vshll.u32 %v3550, %v3557
      %v3560 = vshrl.u32 %v3542, %v3558
      %v3561 = vor.u32 %v3559, %v3560
      %v3562 = vsub.s32 4294967266, %v3557
      %v3563 = vadd.s32 %v3562, 127
      %v3564 = vshll.u32 %v3563, 23
      %v3565 = vor.u32 4788187, %v3564
      %v3566 = vand.u32 2147483647, %v3565
      %v3568 = vcvt.s32.f32 %v3561
      %v3569 = vmul.f32 %v3568, %v3566
      %v3570 = vxor.u32 %v3569, 2147483648
      %v3571 = vsel %vm3488, %v3570, %v3569
      %v3572 = vsub.s32 4, %v3548
      %v3573 = vsel %vm3488, %v3572, %v3548
      %v3574 = vsel %vm3487, %v1371, %v3571
      %v3575 = vsel %vm3487, 0, %v3573
      %v3576 = vcosq.f32.pop %v3574
      %v3577 = vsinq.f32.pop %v3574
      %vm3578 = vweird.f32 %v1371
      %v3579 = vadd.s32 %v3575, 3
      %v3580 = vand.u32 %v3579, 3
      %vm3581 = vcmp.lt.s32.totalorder %v3580, 2
      %vm3582 = vcmp.eq.s32.totalorder %v3580, 0
      %v3583 = vxor.u32 %v3577, 2147483648
      %v3584 = vsel %vm3582, %v3576, %v3583
      %vm3585 = vcmp.eq.s32.totalorder %v3580, 2
      %v3586 = vxor.u32 %v3576, 2147483648
      %v3587 = vsel %vm3585, %v3586, %v3577
      %v3588 = vsel %vm3581, %v3584, %v3587
      %v3589 = vsel %vm3578, nan, %v3588
      %v3590 = vand.u32 2147483647, %v1373
      %vm3591 = vcmp.le.f32.partialorder %v3590, 0.7853982
      %vm3592 = vcmp.lt.s32.totalorder %v1373, 0
      %v3593 = vand.u32 %v1373, 2139095040
      %v3594 = vshrl.u32 %v3593, 23
      %v3595 = vsub.s32 %v3594, 127
      %v3596 = vand.u32 2147483647, %v1373
      %v3597 = vand.u32 %v3596, 8388607
      %v3598 = vor.u32 %v3597, 8388608
      %v3599 = vsub.s32 0, %v3598
      %v3600 = vadd.s32 %v3595, 1
      %vm3601 = vcmp.gt.s32.totalorder %v3600, 0
      %v3602 = vsel %vm3601, %v3600, 0
      %v3603 = vshrl.u32 %v3602, 5
      %v3604 = vand.u32 %v3602, 31
      %v3605 = vsub.s32 32, %v3604
      %v3606 = vshrl.u32 683565275, %v3605
      %v3607 = vshll.u32 683565275, %v3604
      %v3608 = vshrl.u32 2475754826, %v3605
      %v3609 = vor.u32 %v3607, %v3608
      %v3610 = vshll.u32 2475754826, %v3604
      %v3611 = vshrl.u32 2131351028, %v3605
      %v3612 = vor.u32 %v3610, %v3611
      %v3613 = vshll.u32 2131351028, %v3604
      %v3614 = vshrl.u32 2102212464, %v3605
      %v3615 = vor.u32 %v3613, %v3614
      %v3616 = vshll.u32 2102212464, %v3604
      %v3617 = vshrl.u32 920167782, %v3605
      %v3618 = vor.u32 %v3616, %v3617
      %v3619 = vshll.u32 920167782, %v3604
      %v3620 = vshrl.u32 1326507024, %v3605
      %v3621 = vor.u32 %v3619, %v3620
      %vm3622 = vcmp.lt.s32.totalorder %v3603, 1
      %vm3623 = vcmp.lt.s32.totalorder %v3603, 2
      %vm3624 = vcmp.lt.s32.totalorder %v3603, 3
      %vm3625 = vcmp.lt.s32.totalorder %v3603, 4
      %v3626 = vsel %vm3622, %v3606, %v3609
      %v3627 = vsel %vm3625, %v3615, 2102212464
      %v3628 = vsel %vm3624, %v3612, %v3627
      %v3629 = vsel %vm3623, %v3626, %v3628
      %v3630 = vsel %vm3622, %v3609, %v3612
      %v3631 = vsel %vm3625, %v3618, 920167782
      %v3632 = vsel %vm3624, %v3615, %v3631
      %v3633 = vsel %vm3623, %v3630, %v3632
      %v3634 = vsel %vm3622, %v3612, %v3615
      %v3635 = vsel %vm3625, %v3621, 1326507024
      %v3636 = vsel %vm3624, %v3618, %v3635
      %v3637 = vsel %vm3623, %v3634, %v3636
      %v3638 = vshll.u32 %v3598, 8
      %v3639 = vmul.u32.u64.compose %v3638, %v3637
      %v3640 = vextract.low.u32 %v3639
      %v3641 = vextract.high.u32 %v3639
      %v3642 = vmul.u32.u64.compose %v3638, %v3633
      %v3643 = vextract.low.u32 %v3642
      %v3644 = vextract.high.u32 %v3642
      %v3645 = vmul.u32 %v3638, %v3629
      %v3646 = vadd.s32 %v3641, %v3643
      %vm3647 = vc.u32 %v3641, %v3643
      %v3648 = vadd.s32 %v3644, 1
      %v3649 = vsel %vm3647, %v3648, %v3644
      %v3650 = vadd.s32 %v3645, %v3649
      %v3651 = vadd.s32 %v3650, 536870912
      %v3652 = vshrl.u32 %v3651, 30
      %v3653 = vshll.u32 %v3652, 30
      %v3654 = vsub.s32 %v3650, %v3653
      %vm3655 = vcmp.lt.s32.totalorder %v3654, 0
      %v3656 = vsub.s32 0, %v3654
      %v3657 = vsel %vm3655, %v3656, %v3654
      %v3658 = vclz %v3657
      %v3659 = vsub.s32 %v3658, 2
      %vm3660 = vcmp.gt.s32.totalorder 0, %v3659
      %v3661 = vsel %vm3660, 0, %v3659
      %v3662 = vsub.s32 32, %v3661
      %v3663 = vshll.u32 %v3654, %v3661
      %v3664 = vshrl.u32 %v3646, %v3662
      %v3665 = vor.u32 %v3663, %v3664
      %v3666 = vsub.s32 4294967266, %v3661
      %v3667 = vadd.s32 %v3666, 127
      %v3668 = vshll.u32 %v3667, 23
      %v3669 = vor.u32 4788187, %v3668
      %v3670 = vand.u32 2147483647, %v3669
      %v3672 = vcvt.s32.f32 %v3665
      %v3673 = vmul.f32 %v3672, %v3670
      %v3674 = vxor.u32 %v3673, 2147483648
      %v3675 = vsel %vm3592, %v3674, %v3673
      %v3676 = vsub.s32 4, %v3652
      %v3677 = vsel %vm3592, %v3676, %v3652
      %v3678 = vsel %vm3591, %v1373, %v3675
      %v3679 = vsel %vm3591, 0, %v3677
      %v3680 = vcosq.f32.pop %v3678
      %v3681 = vsinq.f32.pop %v3678
      %vm3682 = vweird.f32 %v1373
      %v3683 = vadd.s32 %v3679, 3
      %v3684 = vand.u32 %v3683, 3
      %vm3685 = vcmp.lt.s32.totalorder %v3684, 2
      %vm3686 = vcmp.eq.s32.totalorder %v3684, 0
      %v3687 = vxor.u32 %v3681, 2147483648
      %v3688 = vsel %vm3686, %v3680, %v3687
      %vm3689 = vcmp.eq.s32.totalorder %v3684, 2
      %v3690 = vxor.u32 %v3680, 2147483648
      %v3691 = vsel %vm3689, %v3690, %v3681
      %v3692 = vsel %vm3685, %v3688, %v3691
      %v3693 = vsel %vm3682, nan, %v3692
      %v3694 = vand.u32 2147483647, %v2475
      %vm3695 = vcmp.le.f32.partialorder %v3694, 0.7853982
      %vm3696 = vcmp.lt.s32.totalorder %v2475, 0
      %v3697 = vand.u32 %v2475, 2139095040
      %v3698 = vshrl.u32 %v3697, 23
      %v3699 = vsub.s32 %v3698, 127
      %v3700 = vand.u32 2147483647, %v2475
      %v3701 = vand.u32 %v3700, 8388607
      %v3702 = vor.u32 %v3701, 8388608
      %v3703 = vsub.s32 0, %v3702
      %v3704 = vadd.s32 %v3699, 1
      %vm3705 = vcmp.gt.s32.totalorder %v3704, 0
      %v3706 = vsel %vm3705, %v3704, 0
      %v3707 = vshrl.u32 %v3706, 5
      %v3708 = vand.u32 %v3706, 31
      %v3709 = vsub.s32 32, %v3708
      %v3710 = vshrl.u32 683565275, %v3709
      %v3711 = vshll.u32 683565275, %v3708
      %v3712 = vshrl.u32 2475754826, %v3709
      %v3713 = vor.u32 %v3711, %v3712
      %v3714 = vshll.u32 2475754826, %v3708
      %v3715 = vshrl.u32 2131351028, %v3709
      %v3716 = vor.u32 %v3714, %v3715
      %v3717 = vshll.u32 2131351028, %v3708
      %v3718 = vshrl.u32 2102212464, %v3709
      %v3719 = vor.u32 %v3717, %v3718
      %v3720 = vshll.u32 2102212464, %v3708
      %v3721 = vshrl.u32 920167782, %v3709
      %v3722 = vor.u32 %v3720, %v3721
      %v3723 = vshll.u32 920167782, %v3708
      %v3724 = vshrl.u32 1326507024, %v3709
      %v3725 = vor.u32 %v3723, %v3724
      %vm3726 = vcmp.lt.s32.totalorder %v3707, 1
      %vm3727 = vcmp.lt.s32.totalorder %v3707, 2
      %vm3728 = vcmp.lt.s32.totalorder %v3707, 3
      %vm3729 = vcmp.lt.s32.totalorder %v3707, 4
      %v3730 = vsel %vm3726, %v3710, %v3713
      %v3731 = vsel %vm3729, %v3719, 2102212464
      %v3732 = vsel %vm3728, %v3716, %v3731
      %v3733 = vsel %vm3727, %v3730, %v3732
      %v3734 = vsel %vm3726, %v3713, %v3716
      %v3735 = vsel %vm3729, %v3722, 920167782
      %v3736 = vsel %vm3728, %v3719, %v3735
      %v3737 = vsel %vm3727, %v3734, %v3736
      %v3738 = vsel %vm3726, %v3716, %v3719
      %v3739 = vsel %vm3729, %v3725, 1326507024
      %v3740 = vsel %vm3728, %v3722, %v3739
      %v3741 = vsel %vm3727, %v3738, %v3740
      %v3742 = vshll.u32 %v3702, 8
      %v3743 = vmul.u32.u64.compose %v3742, %v3741
      %v3744 = vextract.low.u32 %v3743
      %v3745 = vextract.high.u32 %v3743
      %v3746 = vmul.u32.u64.compose %v3742, %v3737
      %v3747 = vextract.low.u32 %v3746
      %v3748 = vextract.high.u32 %v3746
      %v3749 = vmul.u32 %v3742, %v3733
      %v3750 = vadd.s32 %v3745, %v3747
      %vm3751 = vc.u32 %v3745, %v3747
      %v3752 = vadd.s32 %v3748, 1
      %v3753 = vsel %vm3751, %v3752, %v3748
      %v3754 = vadd.s32 %v3749, %v3753
      %v3755 = vadd.s32 %v3754, 536870912
      %v3756 = vshrl.u32 %v3755, 30
      %v3757 = vshll.u32 %v3756, 30
      %v3758 = vsub.s32 %v3754, %v3757
      %vm3759 = vcmp.lt.s32.totalorder %v3758, 0
      %v3760 = vsub.s32 0, %v3758
      %v3761 = vsel %vm3759, %v3760, %v3758
      %v3762 = vclz %v3761
      %v3763 = vsub.s32 %v3762, 2
      %vm3764 = vcmp.gt.s32.totalorder 0, %v3763
      %v3765 = vsel %vm3764, 0, %v3763
      %v3766 = vsub.s32 32, %v3765
      %v3767 = vshll.u32 %v3758, %v3765
      %v3768 = vshrl.u32 %v3750, %v3766
      %v3769 = vor.u32 %v3767, %v3768
      %v3770 = vsub.s32 4294967266, %v3765
      %v3771 = vadd.s32 %v3770, 127
      %v3772 = vshll.u32 %v3771, 23
      %v3773 = vor.u32 4788187, %v3772
      %v3774 = vand.u32 2147483647, %v3773
      %v3776 = vcvt.s32.f32 %v3769
      %v3777 = vmul.f32 %v3776, %v3774
      %v3778 = vxor.u32 %v3777, 2147483648
      %v3779 = vsel %vm3696, %v3778, %v3777
      %v3780 = vsub.s32 4, %v3756
      %v3781 = vsel %vm3696, %v3780, %v3756
      %v3782 = vsel %vm3695, %v2475, %v3779
      %v3783 = vsel %vm3695, 0, %v3781
      %v3784 = vcosq.f32.pop %v3782
      %v3785 = vsinq.f32.pop %v3782
      %vm3786 = vweird.f32 %v2475
      %v3787 = vadd.s32 %v3783, 3
      %v3788 = vand.u32 %v3787, 3
      %vm3789 = vcmp.lt.s32.totalorder %v3788, 2
      %vm3790 = vcmp.eq.s32.totalorder %v3788, 0
      %v3791 = vxor.u32 %v3785, 2147483648
      %v3792 = vsel %vm3790, %v3784, %v3791
      %vm3793 = vcmp.eq.s32.totalorder %v3788, 2
      %v3794 = vxor.u32 %v3784, 2147483648
      %v3795 = vsel %vm3793, %v3794, %v3785
      %v3796 = vsel %vm3789, %v3792, %v3795
      %v3797 = vsel %vm3786, nan, %v3796
      %v3798 = vand.u32 2147483647, %v1378
      %vm3799 = vcmp.le.f32.partialorder %v3798, 0.7853982
      %vm3800 = vcmp.lt.s32.totalorder %v1378, 0
      %v3801 = vand.u32 %v1378, 2139095040
      %v3802 = vshrl.u32 %v3801, 23
      %v3803 = vsub.s32 %v3802, 127
      %v3804 = vand.u32 2147483647, %v1378
      %v3805 = vand.u32 %v3804, 8388607
      %v3806 = vor.u32 %v3805, 8388608
      %v3807 = vsub.s32 0, %v3806
      %v3808 = vadd.s32 %v3803, 1
      %vm3809 = vcmp.gt.s32.totalorder %v3808, 0
      %v3810 = vsel %vm3809, %v3808, 0
      %v3811 = vshrl.u32 %v3810, 5
      %v3812 = vand.u32 %v3810, 31
      %v3813 = vsub.s32 32, %v3812
      %v3814 = vshrl.u32 683565275, %v3813
      %v3815 = vshll.u32 683565275, %v3812
      %v3816 = vshrl.u32 2475754826, %v3813
      %v3817 = vor.u32 %v3815, %v3816
      %v3818 = vshll.u32 2475754826, %v3812
      %v3819 = vshrl.u32 2131351028, %v3813
      %v3820 = vor.u32 %v3818, %v3819
      %v3821 = vshll.u32 2131351028, %v3812
      %v3822 = vshrl.u32 2102212464, %v3813
      %v3823 = vor.u32 %v3821, %v3822
      %v3824 = vshll.u32 2102212464, %v3812
      %v3825 = vshrl.u32 920167782, %v3813
      %v3826 = vor.u32 %v3824, %v3825
      %v3827 = vshll.u32 920167782, %v3812
      %v3828 = vshrl.u32 1326507024, %v3813
      %v3829 = vor.u32 %v3827, %v3828
      %vm3830 = vcmp.lt.s32.totalorder %v3811, 1
      %vm3831 = vcmp.lt.s32.totalorder %v3811, 2
      %vm3832 = vcmp.lt.s32.totalorder %v3811, 3
      %vm3833 = vcmp.lt.s32.totalorder %v3811, 4
      %v3834 = vsel %vm3830, %v3814, %v3817
      %v3835 = vsel %vm3833, %v3823, 2102212464
      %v3836 = vsel %vm3832, %v3820, %v3835
      %v3837 = vsel %vm3831, %v3834, %v3836
      %v3838 = vsel %vm3830, %v3817, %v3820
      %v3839 = vsel %vm3833, %v3826, 920167782
      %v3840 = vsel %vm3832, %v3823, %v3839
      %v3841 = vsel %vm3831, %v3838, %v3840
      %v3842 = vsel %vm3830, %v3820, %v3823
      %v3843 = vsel %vm3833, %v3829, 1326507024
      %v3844 = vsel %vm3832, %v3826, %v3843
      %v3845 = vsel %vm3831, %v3842, %v3844
      %v3846 = vshll.u32 %v3806, 8
      %v3847 = vmul.u32.u64.compose %v3846, %v3845
      %v3848 = vextract.low.u32 %v3847
      %v3849 = vextract.high.u32 %v3847
      %v3850 = vmul.u32.u64.compose %v3846, %v3841
      %v3851 = vextract.low.u32 %v3850
      %v3852 = vextract.high.u32 %v3850
      %v3853 = vmul.u32 %v3846, %v3837
      %v3854 = vadd.s32 %v3849, %v3851
      %vm3855 = vc.u32 %v3849, %v3851
      %v3856 = vadd.s32 %v3852, 1
      %v3857 = vsel %vm3855, %v3856, %v3852
      %v3858 = vadd.s32 %v3853, %v3857
      %v3859 = vadd.s32 %v3858, 536870912
      %v3860 = vshrl.u32 %v3859, 30
      %v3861 = vshll.u32 %v3860, 30
      %v3862 = vsub.s32 %v3858, %v3861
      %vm3863 = vcmp.lt.s32.totalorder %v3862, 0
      %v3864 = vsub.s32 0, %v3862
      %v3865 = vsel %vm3863, %v3864, %v3862
      %v3866 = vclz %v3865
      %v3867 = vsub.s32 %v3866, 2
      %vm3868 = vcmp.gt.s32.totalorder 0, %v3867
      %v3869 = vsel %vm3868, 0, %v3867
      %v3870 = vsub.s32 32, %v3869
      %v3871 = vshll.u32 %v3862, %v3869
      %v3872 = vshrl.u32 %v3854, %v3870
      %v3873 = vor.u32 %v3871, %v3872
      %v3874 = vsub.s32 4294967266, %v3869
      %v3875 = vadd.s32 %v3874, 127
      %v3876 = vshll.u32 %v3875, 23
      %v3877 = vor.u32 4788187, %v3876
      %v3878 = vand.u32 2147483647, %v3877
      %v3880 = vcvt.s32.f32 %v3873
      %v3881 = vmul.f32 %v3880, %v3878
      %v3882 = vxor.u32 %v3881, 2147483648
      %v3883 = vsel %vm3800, %v3882, %v3881
      %v3884 = vsub.s32 4, %v3860
      %v3885 = vsel %vm3800, %v3884, %v3860
      %v3886 = vsel %vm3799, %v1378, %v3883
      %v3887 = vsel %vm3799, 0, %v3885
      %v3888 = vcosq.f32.pop %v3886
      %v3889 = vsinq.f32.pop %v3886
      %vm3890 = vweird.f32 %v1378
      %v3891 = vadd.s32 %v3887, 3
      %v3892 = vand.u32 %v3891, 3
      %vm3893 = vcmp.lt.s32.totalorder %v3892, 2
      %vm3894 = vcmp.eq.s32.totalorder %v3892, 0
      %v3895 = vxor.u32 %v3889, 2147483648
      %v3896 = vsel %vm3894, %v3888, %v3895
      %vm3897 = vcmp.eq.s32.totalorder %v3892, 2
      %v3898 = vxor.u32 %v3888, 2147483648
      %v3899 = vsel %vm3897, %v3898, %v3889
      %v3900 = vsel %vm3893, %v3896, %v3899
      %v3901 = vsel %vm3890, nan, %v3900
      %v3902 = vand.u32 2147483647, %v1380
      %vm3903 = vcmp.le.f32.partialorder %v3902, 0.7853982
      %vm3904 = vcmp.lt.s32.totalorder %v1380, 0
      %v3905 = vand.u32 %v1380, 2139095040
      %v3906 = vshrl.u32 %v3905, 23
      %v3907 = vsub.s32 %v3906, 127
      %v3908 = vand.u32 2147483647, %v1380
      %v3909 = vand.u32 %v3908, 8388607
      %v3910 = vor.u32 %v3909, 8388608
      %v3911 = vsub.s32 0, %v3910
      %v3912 = vadd.s32 %v3907, 1
      %vm3913 = vcmp.gt.s32.totalorder %v3912, 0
      %v3914 = vsel %vm3913, %v3912, 0
      %v3915 = vshrl.u32 %v3914, 5
      %v3916 = vand.u32 %v3914, 31
      %v3917 = vsub.s32 32, %v3916
      %v3918 = vshrl.u32 683565275, %v3917
      %v3919 = vshll.u32 683565275, %v3916
      %v3920 = vshrl.u32 2475754826, %v3917
      %v3921 = vor.u32 %v3919, %v3920
      %v3922 = vshll.u32 2475754826, %v3916
      %v3923 = vshrl.u32 2131351028, %v3917
      %v3924 = vor.u32 %v3922, %v3923
      %v3925 = vshll.u32 2131351028, %v3916
      %v3926 = vshrl.u32 2102212464, %v3917
      %v3927 = vor.u32 %v3925, %v3926
      %v3928 = vshll.u32 2102212464, %v3916
      %v3929 = vshrl.u32 920167782, %v3917
      %v3930 = vor.u32 %v3928, %v3929
      %v3931 = vshll.u32 920167782, %v3916
      %v3932 = vshrl.u32 1326507024, %v3917
      %v3933 = vor.u32 %v3931, %v3932
      %vm3934 = vcmp.lt.s32.totalorder %v3915, 1
      %vm3935 = vcmp.lt.s32.totalorder %v3915, 2
      %vm3936 = vcmp.lt.s32.totalorder %v3915, 3
      %vm3937 = vcmp.lt.s32.totalorder %v3915, 4
      %v3938 = vsel %vm3934, %v3918, %v3921
      %v3939 = vsel %vm3937, %v3927, 2102212464
      %v3940 = vsel %vm3936, %v3924, %v3939
      %v3941 = vsel %vm3935, %v3938, %v3940
      %v3942 = vsel %vm3934, %v3921, %v3924
      %v3943 = vsel %vm3937, %v3930, 920167782
      %v3944 = vsel %vm3936, %v3927, %v3943
      %v3945 = vsel %vm3935, %v3942, %v3944
      %v3946 = vsel %vm3934, %v3924, %v3927
      %v3947 = vsel %vm3937, %v3933, 1326507024
      %v3948 = vsel %vm3936, %v3930, %v3947
      %v3949 = vsel %vm3935, %v3946, %v3948
      %v3950 = vshll.u32 %v3910, 8
      %v3951 = vmul.u32.u64.compose %v3950, %v3949
      %v3952 = vextract.low.u32 %v3951
      %v3953 = vextract.high.u32 %v3951
      %v3954 = vmul.u32.u64.compose %v3950, %v3945
      %v3955 = vextract.low.u32 %v3954
      %v3956 = vextract.high.u32 %v3954
      %v3957 = vmul.u32 %v3950, %v3941
      %v3958 = vadd.s32 %v3953, %v3955
      %vm3959 = vc.u32 %v3953, %v3955
      %v3960 = vadd.s32 %v3956, 1
      %v3961 = vsel %vm3959, %v3960, %v3956
      %v3962 = vadd.s32 %v3957, %v3961
      %v3963 = vadd.s32 %v3962, 536870912
      %v3964 = vshrl.u32 %v3963, 30
      %v3965 = vshll.u32 %v3964, 30
      %v3966 = vsub.s32 %v3962, %v3965
      %vm3967 = vcmp.lt.s32.totalorder %v3966, 0
      %v3968 = vsub.s32 0, %v3966
      %v3969 = vsel %vm3967, %v3968, %v3966
      %v3970 = vclz %v3969
      %v3971 = vsub.s32 %v3970, 2
      %vm3972 = vcmp.gt.s32.totalorder 0, %v3971
      %v3973 = vsel %vm3972, 0, %v3971
      %v3974 = vsub.s32 32, %v3973
      %v3975 = vshll.u32 %v3966, %v3973
      %v3976 = vshrl.u32 %v3958, %v3974
      %v3977 = vor.u32 %v3975, %v3976
      %v3978 = vsub.s32 4294967266, %v3973
      %v3979 = vadd.s32 %v3978, 127
      %v3980 = vshll.u32 %v3979, 23
      %v3981 = vor.u32 4788187, %v3980
      %v3982 = vand.u32 2147483647, %v3981
      %v3984 = vcvt.s32.f32 %v3977
      %v3985 = vmul.f32 %v3984, %v3982
      %v3986 = vxor.u32 %v3985, 2147483648
      %v3987 = vsel %vm3904, %v3986, %v3985
      %v3988 = vsub.s32 4, %v3964
      %v3989 = vsel %vm3904, %v3988, %v3964
      %v3990 = vsel %vm3903, %v1380, %v3987
      %v3991 = vsel %vm3903, 0, %v3989
      %v3992 = vcosq.f32.pop %v3990
      %v3993 = vsinq.f32.pop %v3990
      %vm3994 = vweird.f32 %v1380
      %v3995 = vadd.s32 %v3991, 3
      %v3996 = vand.u32 %v3995, 3
      %vm3997 = vcmp.lt.s32.totalorder %v3996, 2
      %vm3998 = vcmp.eq.s32.totalorder %v3996, 0
      %v3999 = vxor.u32 %v3993, 2147483648
      %v4000 = vsel %vm3998, %v3992, %v3999
      %vm4001 = vcmp.eq.s32.totalorder %v3996, 2
      %v4002 = vxor.u32 %v3992, 2147483648
      %v4003 = vsel %vm4001, %v4002, %v3993
      %v4004 = vsel %vm3997, %v4000, %v4003
      %v4005 = vsel %vm3994, nan, %v4004
      %v4006 = vand.u32 2147483647, %v2481
      %vm4007 = vcmp.le.f32.partialorder %v4006, 0.7853982
      %vm4008 = vcmp.lt.s32.totalorder %v2481, 0
      %v4009 = vand.u32 %v2481, 2139095040
      %v4010 = vshrl.u32 %v4009, 23
      %v4011 = vsub.s32 %v4010, 127
      %v4012 = vand.u32 2147483647, %v2481
      %v4013 = vand.u32 %v4012, 8388607
      %v4014 = vor.u32 %v4013, 8388608
      %v4015 = vsub.s32 0, %v4014
      %v4016 = vadd.s32 %v4011, 1
      %vm4017 = vcmp.gt.s32.totalorder %v4016, 0
      %v4018 = vsel %vm4017, %v4016, 0
      %v4019 = vshrl.u32 %v4018, 5
      %v4020 = vand.u32 %v4018, 31
      %v4021 = vsub.s32 32, %v4020
      %v4022 = vshrl.u32 683565275, %v4021
      %v4023 = vshll.u32 683565275, %v4020
      %v4024 = vshrl.u32 2475754826, %v4021
      %v4025 = vor.u32 %v4023, %v4024
      %v4026 = vshll.u32 2475754826, %v4020
      %v4027 = vshrl.u32 2131351028, %v4021
      %v4028 = vor.u32 %v4026, %v4027
      %v4029 = vshll.u32 2131351028, %v4020
      %v4030 = vshrl.u32 2102212464, %v4021
      %v4031 = vor.u32 %v4029, %v4030
      %v4032 = vshll.u32 2102212464, %v4020
      %v4033 = vshrl.u32 920167782, %v4021
      %v4034 = vor.u32 %v4032, %v4033
      %v4035 = vshll.u32 920167782, %v4020
      %v4036 = vshrl.u32 1326507024, %v4021
      %v4037 = vor.u32 %v4035, %v4036
      %vm4038 = vcmp.lt.s32.totalorder %v4019, 1
      %vm4039 = vcmp.lt.s32.totalorder %v4019, 2
      %vm4040 = vcmp.lt.s32.totalorder %v4019, 3
      %vm4041 = vcmp.lt.s32.totalorder %v4019, 4
      %v4042 = vsel %vm4038, %v4022, %v4025
      %v4043 = vsel %vm4041, %v4031, 2102212464
      %v4044 = vsel %vm4040, %v4028, %v4043
      %v4045 = vsel %vm4039, %v4042, %v4044
      %v4046 = vsel %vm4038, %v4025, %v4028
      %v4047 = vsel %vm4041, %v4034, 920167782
      %v4048 = vsel %vm4040, %v4031, %v4047
      %v4049 = vsel %vm4039, %v4046, %v4048
      %v4050 = vsel %vm4038, %v4028, %v4031
      %v4051 = vsel %vm4041, %v4037, 1326507024
      %v4052 = vsel %vm4040, %v4034, %v4051
      %v4053 = vsel %vm4039, %v4050, %v4052
      %v4054 = vshll.u32 %v4014, 8
      %v4055 = vmul.u32.u64.compose %v4054, %v4053
      %v4056 = vextract.low.u32 %v4055
      %v4057 = vextract.high.u32 %v4055
      %v4058 = vmul.u32.u64.compose %v4054, %v4049
      %v4059 = vextract.low.u32 %v4058
      %v4060 = vextract.high.u32 %v4058
      %v4061 = vmul.u32 %v4054, %v4045
      %v4062 = vadd.s32 %v4057, %v4059
      %vm4063 = vc.u32 %v4057, %v4059
      %v4064 = vadd.s32 %v4060, 1
      %v4065 = vsel %vm4063, %v4064, %v4060
      %v4066 = vadd.s32 %v4061, %v4065
      %v4067 = vadd.s32 %v4066, 536870912
      %v4068 = vshrl.u32 %v4067, 30
      %v4069 = vshll.u32 %v4068, 30
      %v4070 = vsub.s32 %v4066, %v4069
      %vm4071 = vcmp.lt.s32.totalorder %v4070, 0
      %v4072 = vsub.s32 0, %v4070
      %v4073 = vsel %vm4071, %v4072, %v4070
      %v4074 = vclz %v4073
      %v4075 = vsub.s32 %v4074, 2
      %vm4076 = vcmp.gt.s32.totalorder 0, %v4075
      %v4077 = vsel %vm4076, 0, %v4075
      %v4078 = vsub.s32 32, %v4077
      %v4079 = vshll.u32 %v4070, %v4077
      %v4080 = vshrl.u32 %v4062, %v4078
      %v4081 = vor.u32 %v4079, %v4080
      %v4082 = vsub.s32 4294967266, %v4077
      %v4083 = vadd.s32 %v4082, 127
      %v4084 = vshll.u32 %v4083, 23
      %v4085 = vor.u32 4788187, %v4084
      %v4086 = vand.u32 2147483647, %v4085
      %v4088 = vcvt.s32.f32 %v4081
      %v4089 = vmul.f32 %v4088, %v4086
      %v4090 = vxor.u32 %v4089, 2147483648
      %v4091 = vsel %vm4008, %v4090, %v4089
      %v4092 = vsub.s32 4, %v4068
      %v4093 = vsel %vm4008, %v4092, %v4068
      %v4094 = vsel %vm4007, %v2481, %v4091
      %v4095 = vsel %vm4007, 0, %v4093
      %v4096 = vcosq.f32.pop %v4094
      %v4097 = vsinq.f32.pop %v4094
      %vm4098 = vweird.f32 %v2481
      %v4099 = vadd.s32 %v4095, 3
      %v4100 = vand.u32 %v4099, 3
      %vm4101 = vcmp.lt.s32.totalorder %v4100, 2
      %vm4102 = vcmp.eq.s32.totalorder %v4100, 0
      %v4103 = vxor.u32 %v4097, 2147483648
      %v4104 = vsel %vm4102, %v4096, %v4103
      %vm4105 = vcmp.eq.s32.totalorder %v4100, 2
      %v4106 = vxor.u32 %v4096, 2147483648
      %v4107 = vsel %vm4105, %v4106, %v4097
      %v4108 = vsel %vm4101, %v4104, %v4107
      %v4109 = vsel %vm4098, nan, %v4108
      %v4110 = vand.u32 2147483647, %v1385
      %vm4111 = vcmp.le.f32.partialorder %v4110, 0.7853982
      %vm4112 = vcmp.lt.s32.totalorder %v1385, 0
      %v4113 = vand.u32 %v1385, 2139095040
      %v4114 = vshrl.u32 %v4113, 23
      %v4115 = vsub.s32 %v4114, 127
      %v4116 = vand.u32 2147483647, %v1385
      %v4117 = vand.u32 %v4116, 8388607
      %v4118 = vor.u32 %v4117, 8388608
      %v4119 = vsub.s32 0, %v4118
      %v4120 = vadd.s32 %v4115, 1
      %vm4121 = vcmp.gt.s32.totalorder %v4120, 0
      %v4122 = vsel %vm4121, %v4120, 0
      %v4123 = vshrl.u32 %v4122, 5
      %v4124 = vand.u32 %v4122, 31
      %v4125 = vsub.s32 32, %v4124
      %v4126 = vshrl.u32 683565275, %v4125
      %v4127 = vshll.u32 683565275, %v4124
      %v4128 = vshrl.u32 2475754826, %v4125
      %v4129 = vor.u32 %v4127, %v4128
      %v4130 = vshll.u32 2475754826, %v4124
      %v4131 = vshrl.u32 2131351028, %v4125
      %v4132 = vor.u32 %v4130, %v4131
      %v4133 = vshll.u32 2131351028, %v4124
      %v4134 = vshrl.u32 2102212464, %v4125
      %v4135 = vor.u32 %v4133, %v4134
      %v4136 = vshll.u32 2102212464, %v4124
      %v4137 = vshrl.u32 920167782, %v4125
      %v4138 = vor.u32 %v4136, %v4137
      %v4139 = vshll.u32 920167782, %v4124
      %v4140 = vshrl.u32 1326507024, %v4125
      %v4141 = vor.u32 %v4139, %v4140
      %vm4142 = vcmp.lt.s32.totalorder %v4123, 1
      %vm4143 = vcmp.lt.s32.totalorder %v4123, 2
      %vm4144 = vcmp.lt.s32.totalorder %v4123, 3
      %vm4145 = vcmp.lt.s32.totalorder %v4123, 4
      %v4146 = vsel %vm4142, %v4126, %v4129
      %v4147 = vsel %vm4145, %v4135, 2102212464
      %v4148 = vsel %vm4144, %v4132, %v4147
      %v4149 = vsel %vm4143, %v4146, %v4148
      %v4150 = vsel %vm4142, %v4129, %v4132
      %v4151 = vsel %vm4145, %v4138, 920167782
      %v4152 = vsel %vm4144, %v4135, %v4151
      %v4153 = vsel %vm4143, %v4150, %v4152
      %v4154 = vsel %vm4142, %v4132, %v4135
      %v4155 = vsel %vm4145, %v4141, 1326507024
      %v4156 = vsel %vm4144, %v4138, %v4155
      %v4157 = vsel %vm4143, %v4154, %v4156
      %v4158 = vshll.u32 %v4118, 8
      %v4159 = vmul.u32.u64.compose %v4158, %v4157
      %v4160 = vextract.low.u32 %v4159
      %v4161 = vextract.high.u32 %v4159
      %v4162 = vmul.u32.u64.compose %v4158, %v4153
      %v4163 = vextract.low.u32 %v4162
      %v4164 = vextract.high.u32 %v4162
      %v4165 = vmul.u32 %v4158, %v4149
      %v4166 = vadd.s32 %v4161, %v4163
      %vm4167 = vc.u32 %v4161, %v4163
      %v4168 = vadd.s32 %v4164, 1
      %v4169 = vsel %vm4167, %v4168, %v4164
      %v4170 = vadd.s32 %v4165, %v4169
      %v4171 = vadd.s32 %v4170, 536870912
      %v4172 = vshrl.u32 %v4171, 30
      %v4173 = vshll.u32 %v4172, 30
      %v4174 = vsub.s32 %v4170, %v4173
      %vm4175 = vcmp.lt.s32.totalorder %v4174, 0
      %v4176 = vsub.s32 0, %v4174
      %v4177 = vsel %vm4175, %v4176, %v4174
      %v4178 = vclz %v4177
      %v4179 = vsub.s32 %v4178, 2
      %vm4180 = vcmp.gt.s32.totalorder 0, %v4179
      %v4181 = vsel %vm4180, 0, %v4179
      %v4182 = vsub.s32 32, %v4181
      %v4183 = vshll.u32 %v4174, %v4181
      %v4184 = vshrl.u32 %v4166, %v4182
      %v4185 = vor.u32 %v4183, %v4184
      %v4186 = vsub.s32 4294967266, %v4181
      %v4187 = vadd.s32 %v4186, 127
      %v4188 = vshll.u32 %v4187, 23
      %v4189 = vor.u32 4788187, %v4188
      %v4190 = vand.u32 2147483647, %v4189
      %v4192 = vcvt.s32.f32 %v4185
      %v4193 = vmul.f32 %v4192, %v4190
      %v4194 = vxor.u32 %v4193, 2147483648
      %v4195 = vsel %vm4112, %v4194, %v4193
      %v4196 = vsub.s32 4, %v4172
      %v4197 = vsel %vm4112, %v4196, %v4172
      %v4198 = vsel %vm4111, %v1385, %v4195
      %v4199 = vsel %vm4111, 0, %v4197
      %v4200 = vcosq.f32.pop %v4198
      %v4201 = vsinq.f32.pop %v4198
      %vm4202 = vweird.f32 %v1385
      %v4203 = vadd.s32 %v4199, 3
      %v4204 = vand.u32 %v4203, 3
      %vm4205 = vcmp.lt.s32.totalorder %v4204, 2
      %vm4206 = vcmp.eq.s32.totalorder %v4204, 0
      %v4207 = vxor.u32 %v4201, 2147483648
      %v4208 = vsel %vm4206, %v4200, %v4207
      %vm4209 = vcmp.eq.s32.totalorder %v4204, 2
      %v4210 = vxor.u32 %v4200, 2147483648
      %v4211 = vsel %vm4209, %v4210, %v4201
      %v4212 = vsel %vm4205, %v4208, %v4211
      %v4213 = vsel %vm4202, nan, %v4212
      %v4214 = vand.u32 2147483647, %v1387
      %vm4215 = vcmp.le.f32.partialorder %v4214, 0.7853982
      %vm4216 = vcmp.lt.s32.totalorder %v1387, 0
      %v4217 = vand.u32 %v1387, 2139095040
      %v4218 = vshrl.u32 %v4217, 23
      %v4219 = vsub.s32 %v4218, 127
      %v4220 = vand.u32 2147483647, %v1387
      %v4221 = vand.u32 %v4220, 8388607
      %v4222 = vor.u32 %v4221, 8388608
      %v4223 = vsub.s32 0, %v4222
      %v4224 = vadd.s32 %v4219, 1
      %vm4225 = vcmp.gt.s32.totalorder %v4224, 0
      %v4226 = vsel %vm4225, %v4224, 0
      %v4227 = vshrl.u32 %v4226, 5
      %v4228 = vand.u32 %v4226, 31
      %v4229 = vsub.s32 32, %v4228
      %v4230 = vshrl.u32 683565275, %v4229
      %v4231 = vshll.u32 683565275, %v4228
      %v4232 = vshrl.u32 2475754826, %v4229
      %v4233 = vor.u32 %v4231, %v4232
      %v4234 = vshll.u32 2475754826, %v4228
      %v4235 = vshrl.u32 2131351028, %v4229
      %v4236 = vor.u32 %v4234, %v4235
      %v4237 = vshll.u32 2131351028, %v4228
      %v4238 = vshrl.u32 2102212464, %v4229
      %v4239 = vor.u32 %v4237, %v4238
      %v4240 = vshll.u32 2102212464, %v4228
      %v4241 = vshrl.u32 920167782, %v4229
      %v4242 = vor.u32 %v4240, %v4241
      %v4243 = vshll.u32 920167782, %v4228
      %v4244 = vshrl.u32 1326507024, %v4229
      %v4245 = vor.u32 %v4243, %v4244
      %vm4246 = vcmp.lt.s32.totalorder %v4227, 1
      %vm4247 = vcmp.lt.s32.totalorder %v4227, 2
      %vm4248 = vcmp.lt.s32.totalorder %v4227, 3
      %vm4249 = vcmp.lt.s32.totalorder %v4227, 4
      %v4250 = vsel %vm4246, %v4230, %v4233
      %v4251 = vsel %vm4249, %v4239, 2102212464
      %v4252 = vsel %vm4248, %v4236, %v4251
      %v4253 = vsel %vm4247, %v4250, %v4252
      %v4254 = vsel %vm4246, %v4233, %v4236
      %v4255 = vsel %vm4249, %v4242, 920167782
      %v4256 = vsel %vm4248, %v4239, %v4255
      %v4257 = vsel %vm4247, %v4254, %v4256
      %v4258 = vsel %vm4246, %v4236, %v4239
      %v4259 = vsel %vm4249, %v4245, 1326507024
      %v4260 = vsel %vm4248, %v4242, %v4259
      %v4261 = vsel %vm4247, %v4258, %v4260
      %v4262 = vshll.u32 %v4222, 8
      %v4263 = vmul.u32.u64.compose %v4262, %v4261
      %v4264 = vextract.low.u32 %v4263
      %v4265 = vextract.high.u32 %v4263
      %v4266 = vmul.u32.u64.compose %v4262, %v4257
      %v4267 = vextract.low.u32 %v4266
      %v4268 = vextract.high.u32 %v4266
      %v4269 = vmul.u32 %v4262, %v4253
      %v4270 = vadd.s32 %v4265, %v4267
      %vm4271 = vc.u32 %v4265, %v4267
      %v4272 = vadd.s32 %v4268, 1
      %v4273 = vsel %vm4271, %v4272, %v4268
      %v4274 = vadd.s32 %v4269, %v4273
      %v4275 = vadd.s32 %v4274, 536870912
      %v4276 = vshrl.u32 %v4275, 30
      %v4277 = vshll.u32 %v4276, 30
      %v4278 = vsub.s32 %v4274, %v4277
      %vm4279 = vcmp.lt.s32.totalorder %v4278, 0
      %v4280 = vsub.s32 0, %v4278
      %v4281 = vsel %vm4279, %v4280, %v4278
      %v4282 = vclz %v4281
      %v4283 = vsub.s32 %v4282, 2
      %vm4284 = vcmp.gt.s32.totalorder 0, %v4283
      %v4285 = vsel %vm4284, 0, %v4283
      %v4286 = vsub.s32 32, %v4285
      %v4287 = vshll.u32 %v4278, %v4285
      %v4288 = vshrl.u32 %v4270, %v4286
      %v4289 = vor.u32 %v4287, %v4288
      %v4290 = vsub.s32 4294967266, %v4285
      %v4291 = vadd.s32 %v4290, 127
      %v4292 = vshll.u32 %v4291, 23
      %v4293 = vor.u32 4788187, %v4292
      %v4294 = vand.u32 2147483647, %v4293
      %v4296 = vcvt.s32.f32 %v4289
      %v4297 = vmul.f32 %v4296, %v4294
      %v4298 = vxor.u32 %v4297, 2147483648
      %v4299 = vsel %vm4216, %v4298, %v4297
      %v4300 = vsub.s32 4, %v4276
      %v4301 = vsel %vm4216, %v4300, %v4276
      %v4302 = vsel %vm4215, %v1387, %v4299
      %v4303 = vsel %vm4215, 0, %v4301
      %v4304 = vcosq.f32.pop %v4302
      %v4305 = vsinq.f32.pop %v4302
      %vm4306 = vweird.f32 %v1387
      %v4307 = vadd.s32 %v4303, 3
      %v4308 = vand.u32 %v4307, 3
      %vm4309 = vcmp.lt.s32.totalorder %v4308, 2
      %vm4310 = vcmp.eq.s32.totalorder %v4308, 0
      %v4311 = vxor.u32 %v4305, 2147483648
      %v4312 = vsel %vm4310, %v4304, %v4311
      %vm4313 = vcmp.eq.s32.totalorder %v4308, 2
      %v4314 = vxor.u32 %v4304, 2147483648
      %v4315 = vsel %vm4313, %v4314, %v4305
      %v4316 = vsel %vm4309, %v4312, %v4315
      %v4317 = vsel %vm4306, nan, %v4316
      %v4318 = vand.u32 2147483647, %v2487
      %vm4319 = vcmp.le.f32.partialorder %v4318, 0.7853982
      %vm4320 = vcmp.lt.s32.totalorder %v2487, 0
      %v4321 = vand.u32 %v2487, 2139095040
      %v4322 = vshrl.u32 %v4321, 23
      %v4323 = vsub.s32 %v4322, 127
      %v4324 = vand.u32 2147483647, %v2487
      %v4325 = vand.u32 %v4324, 8388607
      %v4326 = vor.u32 %v4325, 8388608
      %v4327 = vsub.s32 0, %v4326
      %v4328 = vadd.s32 %v4323, 1
      %vm4329 = vcmp.gt.s32.totalorder %v4328, 0
      %v4330 = vsel %vm4329, %v4328, 0
      %v4331 = vshrl.u32 %v4330, 5
      %v4332 = vand.u32 %v4330, 31
      %v4333 = vsub.s32 32, %v4332
      %v4334 = vshrl.u32 683565275, %v4333
      %v4335 = vshll.u32 683565275, %v4332
      %v4336 = vshrl.u32 2475754826, %v4333
      %v4337 = vor.u32 %v4335, %v4336
      %v4338 = vshll.u32 2475754826, %v4332
      %v4339 = vshrl.u32 2131351028, %v4333
      %v4340 = vor.u32 %v4338, %v4339
      %v4341 = vshll.u32 2131351028, %v4332
      %v4342 = vshrl.u32 2102212464, %v4333
      %v4343 = vor.u32 %v4341, %v4342
      %v4344 = vshll.u32 2102212464, %v4332
      %v4345 = vshrl.u32 920167782, %v4333
      %v4346 = vor.u32 %v4344, %v4345
      %v4347 = vshll.u32 920167782, %v4332
      %v4348 = vshrl.u32 1326507024, %v4333
      %v4349 = vor.u32 %v4347, %v4348
      %vm4350 = vcmp.lt.s32.totalorder %v4331, 1
      %vm4351 = vcmp.lt.s32.totalorder %v4331, 2
      %vm4352 = vcmp.lt.s32.totalorder %v4331, 3
      %vm4353 = vcmp.lt.s32.totalorder %v4331, 4
      %v4354 = vsel %vm4350, %v4334, %v4337
      %v4355 = vsel %vm4353, %v4343, 2102212464
      %v4356 = vsel %vm4352, %v4340, %v4355
      %v4357 = vsel %vm4351, %v4354, %v4356
      %v4358 = vsel %vm4350, %v4337, %v4340
      %v4359 = vsel %vm4353, %v4346, 920167782
      %v4360 = vsel %vm4352, %v4343, %v4359
      %v4361 = vsel %vm4351, %v4358, %v4360
      %v4362 = vsel %vm4350, %v4340, %v4343
      %v4363 = vsel %vm4353, %v4349, 1326507024
      %v4364 = vsel %vm4352, %v4346, %v4363
      %v4365 = vsel %vm4351, %v4362, %v4364
      %v4366 = vshll.u32 %v4326, 8
      %v4367 = vmul.u32.u64.compose %v4366, %v4365
      %v4368 = vextract.low.u32 %v4367
      %v4369 = vextract.high.u32 %v4367
      %v4370 = vmul.u32.u64.compose %v4366, %v4361
      %v4371 = vextract.low.u32 %v4370
      %v4372 = vextract.high.u32 %v4370
      %v4373 = vmul.u32 %v4366, %v4357
      %v4374 = vadd.s32 %v4369, %v4371
      %vm4375 = vc.u32 %v4369, %v4371
      %v4376 = vadd.s32 %v4372, 1
      %v4377 = vsel %vm4375, %v4376, %v4372
      %v4378 = vadd.s32 %v4373, %v4377
      %v4379 = vadd.s32 %v4378, 536870912
      %v4380 = vshrl.u32 %v4379, 30
      %v4381 = vshll.u32 %v4380, 30
      %v4382 = vsub.s32 %v4378, %v4381
      %vm4383 = vcmp.lt.s32.totalorder %v4382, 0
      %v4384 = vsub.s32 0, %v4382
      %v4385 = vsel %vm4383, %v4384, %v4382
      %v4386 = vclz %v4385
      %v4387 = vsub.s32 %v4386, 2
      %vm4388 = vcmp.gt.s32.totalorder 0, %v4387
      %v4389 = vsel %vm4388, 0, %v4387
      %v4390 = vsub.s32 32, %v4389
      %v4391 = vshll.u32 %v4382, %v4389
      %v4392 = vshrl.u32 %v4374, %v4390
      %v4393 = vor.u32 %v4391, %v4392
      %v4394 = vsub.s32 4294967266, %v4389
      %v4395 = vadd.s32 %v4394, 127
      %v4396 = vshll.u32 %v4395, 23
      %v4397 = vor.u32 4788187, %v4396
      %v4398 = vand.u32 2147483647, %v4397
      %v4400 = vcvt.s32.f32 %v4393
      %v4401 = vmul.f32 %v4400, %v4398
      %v4402 = vxor.u32 %v4401, 2147483648
      %v4403 = vsel %vm4320, %v4402, %v4401
      %v4404 = vsub.s32 4, %v4380
      %v4405 = vsel %vm4320, %v4404, %v4380
      %v4406 = vsel %vm4319, %v2487, %v4403
      %v4407 = vsel %vm4319, 0, %v4405
      %v4408 = vcosq.f32.pop %v4406
      %v4409 = vsinq.f32.pop %v4406
      %vm4410 = vweird.f32 %v2487
      %v4411 = vadd.s32 %v4407, 3
      %v4412 = vand.u32 %v4411, 3
      %vm4413 = vcmp.lt.s32.totalorder %v4412, 2
      %vm4414 = vcmp.eq.s32.totalorder %v4412, 0
      %v4415 = vxor.u32 %v4409, 2147483648
      %v4416 = vsel %vm4414, %v4408, %v4415
      %vm4417 = vcmp.eq.s32.totalorder %v4412, 2
      %v4418 = vxor.u32 %v4408, 2147483648
      %v4419 = vsel %vm4417, %v4418, %v4409
      %v4420 = vsel %vm4413, %v4416, %v4419
      %v4421 = vsel %vm4410, nan, %v4420
      %v4422 = vand.u32 2147483647, %v1392
      %vm4423 = vcmp.le.f32.partialorder %v4422, 0.7853982
      %vm4424 = vcmp.lt.s32.totalorder %v1392, 0
      %v4425 = vand.u32 %v1392, 2139095040
      %v4426 = vshrl.u32 %v4425, 23
      %v4427 = vsub.s32 %v4426, 127
      %v4428 = vand.u32 2147483647, %v1392
      %v4429 = vand.u32 %v4428, 8388607
      %v4430 = vor.u32 %v4429, 8388608
      %v4431 = vsub.s32 0, %v4430
      %v4432 = vadd.s32 %v4427, 1
      %vm4433 = vcmp.gt.s32.totalorder %v4432, 0
      %v4434 = vsel %vm4433, %v4432, 0
      %v4435 = vshrl.u32 %v4434, 5
      %v4436 = vand.u32 %v4434, 31
      %v4437 = vsub.s32 32, %v4436
      %v4438 = vshrl.u32 683565275, %v4437
      %v4439 = vshll.u32 683565275, %v4436
      %v4440 = vshrl.u32 2475754826, %v4437
      %v4441 = vor.u32 %v4439, %v4440
      %v4442 = vshll.u32 2475754826, %v4436
      %v4443 = vshrl.u32 2131351028, %v4437
      %v4444 = vor.u32 %v4442, %v4443
      %v4445 = vshll.u32 2131351028, %v4436
      %v4446 = vshrl.u32 2102212464, %v4437
      %v4447 = vor.u32 %v4445, %v4446
      %v4448 = vshll.u32 2102212464, %v4436
      %v4449 = vshrl.u32 920167782, %v4437
      %v4450 = vor.u32 %v4448, %v4449
      %v4451 = vshll.u32 920167782, %v4436
      %v4452 = vshrl.u32 1326507024, %v4437
      %v4453 = vor.u32 %v4451, %v4452
      %vm4454 = vcmp.lt.s32.totalorder %v4435, 1
      %vm4455 = vcmp.lt.s32.totalorder %v4435, 2
      %vm4456 = vcmp.lt.s32.totalorder %v4435, 3
      %vm4457 = vcmp.lt.s32.totalorder %v4435, 4
      %v4458 = vsel %vm4454, %v4438, %v4441
      %v4459 = vsel %vm4457, %v4447, 2102212464
      %v4460 = vsel %vm4456, %v4444, %v4459
      %v4461 = vsel %vm4455, %v4458, %v4460
      %v4462 = vsel %vm4454, %v4441, %v4444
      %v4463 = vsel %vm4457, %v4450, 920167782
      %v4464 = vsel %vm4456, %v4447, %v4463
      %v4465 = vsel %vm4455, %v4462, %v4464
      %v4466 = vsel %vm4454, %v4444, %v4447
      %v4467 = vsel %vm4457, %v4453, 1326507024
      %v4468 = vsel %vm4456, %v4450, %v4467
      %v4469 = vsel %vm4455, %v4466, %v4468
      %v4470 = vshll.u32 %v4430, 8
      %v4471 = vmul.u32.u64.compose %v4470, %v4469
      %v4472 = vextract.low.u32 %v4471
      %v4473 = vextract.high.u32 %v4471
      %v4474 = vmul.u32.u64.compose %v4470, %v4465
      %v4475 = vextract.low.u32 %v4474
      %v4476 = vextract.high.u32 %v4474
      %v4477 = vmul.u32 %v4470, %v4461
      %v4478 = vadd.s32 %v4473, %v4475
      %vm4479 = vc.u32 %v4473, %v4475
      %v4480 = vadd.s32 %v4476, 1
      %v4481 = vsel %vm4479, %v4480, %v4476
      %v4482 = vadd.s32 %v4477, %v4481
      %v4483 = vadd.s32 %v4482, 536870912
      %v4484 = vshrl.u32 %v4483, 30
      %v4485 = vshll.u32 %v4484, 30
      %v4486 = vsub.s32 %v4482, %v4485
      %vm4487 = vcmp.lt.s32.totalorder %v4486, 0
      %v4488 = vsub.s32 0, %v4486
      %v4489 = vsel %vm4487, %v4488, %v4486
      %v4490 = vclz %v4489
      %v4491 = vsub.s32 %v4490, 2
      %vm4492 = vcmp.gt.s32.totalorder 0, %v4491
      %v4493 = vsel %vm4492, 0, %v4491
      %v4494 = vsub.s32 32, %v4493
      %v4495 = vshll.u32 %v4486, %v4493
      %v4496 = vshrl.u32 %v4478, %v4494
      %v4497 = vor.u32 %v4495, %v4496
      %v4498 = vsub.s32 4294967266, %v4493
      %v4499 = vadd.s32 %v4498, 127
      %v4500 = vshll.u32 %v4499, 23
      %v4501 = vor.u32 4788187, %v4500
      %v4502 = vand.u32 2147483647, %v4501
      %v4504 = vcvt.s32.f32 %v4497
      %v4505 = vmul.f32 %v4504, %v4502
      %v4506 = vxor.u32 %v4505, 2147483648
      %v4507 = vsel %vm4424, %v4506, %v4505
      %v4508 = vsub.s32 4, %v4484
      %v4509 = vsel %vm4424, %v4508, %v4484
      %v4510 = vsel %vm4423, %v1392, %v4507
      %v4511 = vsel %vm4423, 0, %v4509
      %v4512 = vcosq.f32.pop %v4510
      %v4513 = vsinq.f32.pop %v4510
      %vm4514 = vweird.f32 %v1392
      %v4515 = vadd.s32 %v4511, 3
      %v4516 = vand.u32 %v4515, 3
      %vm4517 = vcmp.lt.s32.totalorder %v4516, 2
      %vm4518 = vcmp.eq.s32.totalorder %v4516, 0
      %v4519 = vxor.u32 %v4513, 2147483648
      %v4520 = vsel %vm4518, %v4512, %v4519
      %vm4521 = vcmp.eq.s32.totalorder %v4516, 2
      %v4522 = vxor.u32 %v4512, 2147483648
      %v4523 = vsel %vm4521, %v4522, %v4513
      %v4524 = vsel %vm4517, %v4520, %v4523
      %v4525 = vsel %vm4514, nan, %v4524
      %v4526 = vand.u32 2147483647, %v1394
      %vm4527 = vcmp.le.f32.partialorder %v4526, 0.7853982
      %vm4528 = vcmp.lt.s32.totalorder %v1394, 0
      %v4529 = vand.u32 %v1394, 2139095040
      %v4530 = vshrl.u32 %v4529, 23
      %v4531 = vsub.s32 %v4530, 127
      %v4532 = vand.u32 2147483647, %v1394
      %v4533 = vand.u32 %v4532, 8388607
      %v4534 = vor.u32 %v4533, 8388608
      %v4535 = vsub.s32 0, %v4534
      %v4536 = vadd.s32 %v4531, 1
      %vm4537 = vcmp.gt.s32.totalorder %v4536, 0
      %v4538 = vsel %vm4537, %v4536, 0
      %v4539 = vshrl.u32 %v4538, 5
      %v4540 = vand.u32 %v4538, 31
      %v4541 = vsub.s32 32, %v4540
      %v4542 = vshrl.u32 683565275, %v4541
      %v4543 = vshll.u32 683565275, %v4540
      %v4544 = vshrl.u32 2475754826, %v4541
      %v4545 = vor.u32 %v4543, %v4544
      %v4546 = vshll.u32 2475754826, %v4540
      %v4547 = vshrl.u32 2131351028, %v4541
      %v4548 = vor.u32 %v4546, %v4547
      %v4549 = vshll.u32 2131351028, %v4540
      %v4550 = vshrl.u32 2102212464, %v4541
      %v4551 = vor.u32 %v4549, %v4550
      %v4552 = vshll.u32 2102212464, %v4540
      %v4553 = vshrl.u32 920167782, %v4541
      %v4554 = vor.u32 %v4552, %v4553
      %v4555 = vshll.u32 920167782, %v4540
      %v4556 = vshrl.u32 1326507024, %v4541
      %v4557 = vor.u32 %v4555, %v4556
      %vm4558 = vcmp.lt.s32.totalorder %v4539, 1
      %vm4559 = vcmp.lt.s32.totalorder %v4539, 2
      %vm4560 = vcmp.lt.s32.totalorder %v4539, 3
      %vm4561 = vcmp.lt.s32.totalorder %v4539, 4
      %v4562 = vsel %vm4558, %v4542, %v4545
      %v4563 = vsel %vm4561, %v4551, 2102212464
      %v4564 = vsel %vm4560, %v4548, %v4563
      %v4565 = vsel %vm4559, %v4562, %v4564
      %v4566 = vsel %vm4558, %v4545, %v4548
      %v4567 = vsel %vm4561, %v4554, 920167782
      %v4568 = vsel %vm4560, %v4551, %v4567
      %v4569 = vsel %vm4559, %v4566, %v4568
      %v4570 = vsel %vm4558, %v4548, %v4551
      %v4571 = vsel %vm4561, %v4557, 1326507024
      %v4572 = vsel %vm4560, %v4554, %v4571
      %v4573 = vsel %vm4559, %v4570, %v4572
      %v4574 = vshll.u32 %v4534, 8
      %v4575 = vmul.u32.u64.compose %v4574, %v4573
      %v4576 = vextract.low.u32 %v4575
      %v4577 = vextract.high.u32 %v4575
      %v4578 = vmul.u32.u64.compose %v4574, %v4569
      %v4579 = vextract.low.u32 %v4578
      %v4580 = vextract.high.u32 %v4578
      %v4581 = vmul.u32 %v4574, %v4565
      %v4582 = vadd.s32 %v4577, %v4579
      %vm4583 = vc.u32 %v4577, %v4579
      %v4584 = vadd.s32 %v4580, 1
      %v4585 = vsel %vm4583, %v4584, %v4580
      %v4586 = vadd.s32 %v4581, %v4585
      %v4587 = vadd.s32 %v4586, 536870912
      %v4588 = vshrl.u32 %v4587, 30
      %v4589 = vshll.u32 %v4588, 30
      %v4590 = vsub.s32 %v4586, %v4589
      %vm4591 = vcmp.lt.s32.totalorder %v4590, 0
      %v4592 = vsub.s32 0, %v4590
      %v4593 = vsel %vm4591, %v4592, %v4590
      %v4594 = vclz %v4593
      %v4595 = vsub.s32 %v4594, 2
      %vm4596 = vcmp.gt.s32.totalorder 0, %v4595
      %v4597 = vsel %vm4596, 0, %v4595
      %v4598 = vsub.s32 32, %v4597
      %v4599 = vshll.u32 %v4590, %v4597
      %v4600 = vshrl.u32 %v4582, %v4598
      %v4601 = vor.u32 %v4599, %v4600
      %v4602 = vsub.s32 4294967266, %v4597
      %v4603 = vadd.s32 %v4602, 127
      %v4604 = vshll.u32 %v4603, 23
      %v4605 = vor.u32 4788187, %v4604
      %v4606 = vand.u32 2147483647, %v4605
      %v4608 = vcvt.s32.f32 %v4601
      %v4609 = vmul.f32 %v4608, %v4606
      %v4610 = vxor.u32 %v4609, 2147483648
      %v4611 = vsel %vm4528, %v4610, %v4609
      %v4612 = vsub.s32 4, %v4588
      %v4613 = vsel %vm4528, %v4612, %v4588
      %v4614 = vsel %vm4527, %v1394, %v4611
      %v4615 = vsel %vm4527, 0, %v4613
      %v4616 = vcosq.f32.pop %v4614
      %v4617 = vsinq.f32.pop %v4614
      %vm4618 = vweird.f32 %v1394
      %v4619 = vadd.s32 %v4615, 3
      %v4620 = vand.u32 %v4619, 3
      %vm4621 = vcmp.lt.s32.totalorder %v4620, 2
      %vm4622 = vcmp.eq.s32.totalorder %v4620, 0
      %v4623 = vxor.u32 %v4617, 2147483648
      %v4624 = vsel %vm4622, %v4616, %v4623
      %vm4625 = vcmp.eq.s32.totalorder %v4620, 2
      %v4626 = vxor.u32 %v4616, 2147483648
      %v4627 = vsel %vm4625, %v4626, %v4617
      %v4628 = vsel %vm4621, %v4624, %v4627
      %v4629 = vsel %vm4618, nan, %v4628
      %v4630 = vand.u32 2147483647, %v2493
      %vm4631 = vcmp.le.f32.partialorder %v4630, 0.7853982
      %vm4632 = vcmp.lt.s32.totalorder %v2493, 0
      %v4633 = vand.u32 %v2493, 2139095040
      %v4634 = vshrl.u32 %v4633, 23
      %v4635 = vsub.s32 %v4634, 127
      %v4636 = vand.u32 2147483647, %v2493
      %v4637 = vand.u32 %v4636, 8388607
      %v4638 = vor.u32 %v4637, 8388608
      %v4639 = vsub.s32 0, %v4638
      %v4640 = vadd.s32 %v4635, 1
      %vm4641 = vcmp.gt.s32.totalorder %v4640, 0
      %v4642 = vsel %vm4641, %v4640, 0
      %v4643 = vshrl.u32 %v4642, 5
      %v4644 = vand.u32 %v4642, 31
      %v4645 = vsub.s32 32, %v4644
      %v4646 = vshrl.u32 683565275, %v4645
      %v4647 = vshll.u32 683565275, %v4644
      %v4648 = vshrl.u32 2475754826, %v4645
      %v4649 = vor.u32 %v4647, %v4648
      %v4650 = vshll.u32 2475754826, %v4644
      %v4651 = vshrl.u32 2131351028, %v4645
      %v4652 = vor.u32 %v4650, %v4651
      %v4653 = vshll.u32 2131351028, %v4644
      %v4654 = vshrl.u32 2102212464, %v4645
      %v4655 = vor.u32 %v4653, %v4654
      %v4656 = vshll.u32 2102212464, %v4644
      %v4657 = vshrl.u32 920167782, %v4645
      %v4658 = vor.u32 %v4656, %v4657
      %v4659 = vshll.u32 920167782, %v4644
      %v4660 = vshrl.u32 1326507024, %v4645
      %v4661 = vor.u32 %v4659, %v4660
      %vm4662 = vcmp.lt.s32.totalorder %v4643, 1
      %vm4663 = vcmp.lt.s32.totalorder %v4643, 2
      %vm4664 = vcmp.lt.s32.totalorder %v4643, 3
      %vm4665 = vcmp.lt.s32.totalorder %v4643, 4
      %v4666 = vsel %vm4662, %v4646, %v4649
      %v4667 = vsel %vm4665, %v4655, 2102212464
      %v4668 = vsel %vm4664, %v4652, %v4667
      %v4669 = vsel %vm4663, %v4666, %v4668
      %v4670 = vsel %vm4662, %v4649, %v4652
      %v4671 = vsel %vm4665, %v4658, 920167782
      %v4672 = vsel %vm4664, %v4655, %v4671
      %v4673 = vsel %vm4663, %v4670, %v4672
      %v4674 = vsel %vm4662, %v4652, %v4655
      %v4675 = vsel %vm4665, %v4661, 1326507024
      %v4676 = vsel %vm4664, %v4658, %v4675
      %v4677 = vsel %vm4663, %v4674, %v4676
      %v4678 = vshll.u32 %v4638, 8
      %v4679 = vmul.u32.u64.compose %v4678, %v4677
      %v4680 = vextract.low.u32 %v4679
      %v4681 = vextract.high.u32 %v4679
      %v4682 = vmul.u32.u64.compose %v4678, %v4673
      %v4683 = vextract.low.u32 %v4682
      %v4684 = vextract.high.u32 %v4682
      %v4685 = vmul.u32 %v4678, %v4669
      %v4686 = vadd.s32 %v4681, %v4683
      %vm4687 = vc.u32 %v4681, %v4683
      %v4688 = vadd.s32 %v4684, 1
      %v4689 = vsel %vm4687, %v4688, %v4684
      %v4690 = vadd.s32 %v4685, %v4689
      %v4691 = vadd.s32 %v4690, 536870912
      %v4692 = vshrl.u32 %v4691, 30
      %v4693 = vshll.u32 %v4692, 30
      %v4694 = vsub.s32 %v4690, %v4693
      %vm4695 = vcmp.lt.s32.totalorder %v4694, 0
      %v4696 = vsub.s32 0, %v4694
      %v4697 = vsel %vm4695, %v4696, %v4694
      %v4698 = vclz %v4697
      %v4699 = vsub.s32 %v4698, 2
      %vm4700 = vcmp.gt.s32.totalorder 0, %v4699
      %v4701 = vsel %vm4700, 0, %v4699
      %v4702 = vsub.s32 32, %v4701
      %v4703 = vshll.u32 %v4694, %v4701
      %v4704 = vshrl.u32 %v4686, %v4702
      %v4705 = vor.u32 %v4703, %v4704
      %v4706 = vsub.s32 4294967266, %v4701
      %v4707 = vadd.s32 %v4706, 127
      %v4708 = vshll.u32 %v4707, 23
      %v4709 = vor.u32 4788187, %v4708
      %v4710 = vand.u32 2147483647, %v4709
      %v4712 = vcvt.s32.f32 %v4705
      %v4713 = vmul.f32 %v4712, %v4710
      %v4714 = vxor.u32 %v4713, 2147483648
      %v4715 = vsel %vm4632, %v4714, %v4713
      %v4716 = vsub.s32 4, %v4692
      %v4717 = vsel %vm4632, %v4716, %v4692
      %v4718 = vsel %vm4631, %v2493, %v4715
      %v4719 = vsel %vm4631, 0, %v4717
      %v4720 = vcosq.f32.pop %v4718
      %v4721 = vsinq.f32.pop %v4718
      %vm4722 = vweird.f32 %v2493
      %v4723 = vadd.s32 %v4719, 3
      %v4724 = vand.u32 %v4723, 3
      %vm4725 = vcmp.lt.s32.totalorder %v4724, 2
      %vm4726 = vcmp.eq.s32.totalorder %v4724, 0
      %v4727 = vxor.u32 %v4721, 2147483648
      %v4728 = vsel %vm4726, %v4720, %v4727
      %vm4729 = vcmp.eq.s32.totalorder %v4724, 2
      %v4730 = vxor.u32 %v4720, 2147483648
      %v4731 = vsel %vm4729, %v4730, %v4721
      %v4732 = vsel %vm4725, %v4728, %v4731
      %v4733 = vsel %vm4722, nan, %v4732
      %v4734 = vand.u32 2147483647, %v1399
      %vm4735 = vcmp.le.f32.partialorder %v4734, 0.7853982
      %vm4736 = vcmp.lt.s32.totalorder %v1399, 0
      %v4737 = vand.u32 %v1399, 2139095040
      %v4738 = vshrl.u32 %v4737, 23
      %v4739 = vsub.s32 %v4738, 127
      %v4740 = vand.u32 2147483647, %v1399
      %v4741 = vand.u32 %v4740, 8388607
      %v4742 = vor.u32 %v4741, 8388608
      %v4743 = vsub.s32 0, %v4742
      %v4744 = vadd.s32 %v4739, 1
      %vm4745 = vcmp.gt.s32.totalorder %v4744, 0
      %v4746 = vsel %vm4745, %v4744, 0
      %v4747 = vshrl.u32 %v4746, 5
      %v4748 = vand.u32 %v4746, 31
      %v4749 = vsub.s32 32, %v4748
      %v4750 = vshrl.u32 683565275, %v4749
      %v4751 = vshll.u32 683565275, %v4748
      %v4752 = vshrl.u32 2475754826, %v4749
      %v4753 = vor.u32 %v4751, %v4752
      %v4754 = vshll.u32 2475754826, %v4748
      %v4755 = vshrl.u32 2131351028, %v4749
      %v4756 = vor.u32 %v4754, %v4755
      %v4757 = vshll.u32 2131351028, %v4748
      %v4758 = vshrl.u32 2102212464, %v4749
      %v4759 = vor.u32 %v4757, %v4758
      %v4760 = vshll.u32 2102212464, %v4748
      %v4761 = vshrl.u32 920167782, %v4749
      %v4762 = vor.u32 %v4760, %v4761
      %v4763 = vshll.u32 920167782, %v4748
      %v4764 = vshrl.u32 1326507024, %v4749
      %v4765 = vor.u32 %v4763, %v4764
      %vm4766 = vcmp.lt.s32.totalorder %v4747, 1
      %vm4767 = vcmp.lt.s32.totalorder %v4747, 2
      %vm4768 = vcmp.lt.s32.totalorder %v4747, 3
      %vm4769 = vcmp.lt.s32.totalorder %v4747, 4
      %v4770 = vsel %vm4766, %v4750, %v4753
      %v4771 = vsel %vm4769, %v4759, 2102212464
      %v4772 = vsel %vm4768, %v4756, %v4771
      %v4773 = vsel %vm4767, %v4770, %v4772
      %v4774 = vsel %vm4766, %v4753, %v4756
      %v4775 = vsel %vm4769, %v4762, 920167782
      %v4776 = vsel %vm4768, %v4759, %v4775
      %v4777 = vsel %vm4767, %v4774, %v4776
      %v4778 = vsel %vm4766, %v4756, %v4759
      %v4779 = vsel %vm4769, %v4765, 1326507024
      %v4780 = vsel %vm4768, %v4762, %v4779
      %v4781 = vsel %vm4767, %v4778, %v4780
      %v4782 = vshll.u32 %v4742, 8
      %v4783 = vmul.u32.u64.compose %v4782, %v4781
      %v4784 = vextract.low.u32 %v4783
      %v4785 = vextract.high.u32 %v4783
      %v4786 = vmul.u32.u64.compose %v4782, %v4777
      %v4787 = vextract.low.u32 %v4786
      %v4788 = vextract.high.u32 %v4786
      %v4789 = vmul.u32 %v4782, %v4773
      %v4790 = vadd.s32 %v4785, %v4787
      %vm4791 = vc.u32 %v4785, %v4787
      %v4792 = vadd.s32 %v4788, 1
      %v4793 = vsel %vm4791, %v4792, %v4788
      %v4794 = vadd.s32 %v4789, %v4793
      %v4795 = vadd.s32 %v4794, 536870912
      %v4796 = vshrl.u32 %v4795, 30
      %v4797 = vshll.u32 %v4796, 30
      %v4798 = vsub.s32 %v4794, %v4797
      %vm4799 = vcmp.lt.s32.totalorder %v4798, 0
      %v4800 = vsub.s32 0, %v4798
      %v4801 = vsel %vm4799, %v4800, %v4798
      %v4802 = vclz %v4801
      %v4803 = vsub.s32 %v4802, 2
      %vm4804 = vcmp.gt.s32.totalorder 0, %v4803
      %v4805 = vsel %vm4804, 0, %v4803
      %v4806 = vsub.s32 32, %v4805
      %v4807 = vshll.u32 %v4798, %v4805
      %v4808 = vshrl.u32 %v4790, %v4806
      %v4809 = vor.u32 %v4807, %v4808
      %v4810 = vsub.s32 4294967266, %v4805
      %v4811 = vadd.s32 %v4810, 127
      %v4812 = vshll.u32 %v4811, 23
      %v4813 = vor.u32 4788187, %v4812
      %v4814 = vand.u32 2147483647, %v4813
      %v4816 = vcvt.s32.f32 %v4809
      %v4817 = vmul.f32 %v4816, %v4814
      %v4818 = vxor.u32 %v4817, 2147483648
      %v4819 = vsel %vm4736, %v4818, %v4817
      %v4820 = vsub.s32 4, %v4796
      %v4821 = vsel %vm4736, %v4820, %v4796
      %v4822 = vsel %vm4735, %v1399, %v4819
      %v4823 = vsel %vm4735, 0, %v4821
      %v4824 = vcosq.f32.pop %v4822
      %v4825 = vsinq.f32.pop %v4822
      %vm4826 = vweird.f32 %v1399
      %v4827 = vadd.s32 %v4823, 3
      %v4828 = vand.u32 %v4827, 3
      %vm4829 = vcmp.lt.s32.totalorder %v4828, 2
      %vm4830 = vcmp.eq.s32.totalorder %v4828, 0
      %v4831 = vxor.u32 %v4825, 2147483648
      %v4832 = vsel %vm4830, %v4824, %v4831
      %vm4833 = vcmp.eq.s32.totalorder %v4828, 2
      %v4834 = vxor.u32 %v4824, 2147483648
      %v4835 = vsel %vm4833, %v4834, %v4825
      %v4836 = vsel %vm4829, %v4832, %v4835
      %v4837 = vsel %vm4826, nan, %v4836
      %v4838 = vand.u32 2147483647, %v1401
      %vm4839 = vcmp.le.f32.partialorder %v4838, 0.7853982
      %vm4840 = vcmp.lt.s32.totalorder %v1401, 0
      %v4841 = vand.u32 %v1401, 2139095040
      %v4842 = vshrl.u32 %v4841, 23
      %v4843 = vsub.s32 %v4842, 127
      %v4844 = vand.u32 2147483647, %v1401
      %v4845 = vand.u32 %v4844, 8388607
      %v4846 = vor.u32 %v4845, 8388608
      %v4847 = vsub.s32 0, %v4846
      %v4848 = vadd.s32 %v4843, 1
      %vm4849 = vcmp.gt.s32.totalorder %v4848, 0
      %v4850 = vsel %vm4849, %v4848, 0
      %v4851 = vshrl.u32 %v4850, 5
      %v4852 = vand.u32 %v4850, 31
      %v4853 = vsub.s32 32, %v4852
      %v4854 = vshrl.u32 683565275, %v4853
      %v4855 = vshll.u32 683565275, %v4852
      %v4856 = vshrl.u32 2475754826, %v4853
      %v4857 = vor.u32 %v4855, %v4856
      %v4858 = vshll.u32 2475754826, %v4852
      %v4859 = vshrl.u32 2131351028, %v4853
      %v4860 = vor.u32 %v4858, %v4859
      %v4861 = vshll.u32 2131351028, %v4852
      %v4862 = vshrl.u32 2102212464, %v4853
      %v4863 = vor.u32 %v4861, %v4862
      %v4864 = vshll.u32 2102212464, %v4852
      %v4865 = vshrl.u32 920167782, %v4853
      %v4866 = vor.u32 %v4864, %v4865
      %v4867 = vshll.u32 920167782, %v4852
      %v4868 = vshrl.u32 1326507024, %v4853
      %v4869 = vor.u32 %v4867, %v4868
      %vm4870 = vcmp.lt.s32.totalorder %v4851, 1
      %vm4871 = vcmp.lt.s32.totalorder %v4851, 2
      %vm4872 = vcmp.lt.s32.totalorder %v4851, 3
      %vm4873 = vcmp.lt.s32.totalorder %v4851, 4
      %v4874 = vsel %vm4870, %v4854, %v4857
      %v4875 = vsel %vm4873, %v4863, 2102212464
      %v4876 = vsel %vm4872, %v4860, %v4875
      %v4877 = vsel %vm4871, %v4874, %v4876
      %v4878 = vsel %vm4870, %v4857, %v4860
      %v4879 = vsel %vm4873, %v4866, 920167782
      %v4880 = vsel %vm4872, %v4863, %v4879
      %v4881 = vsel %vm4871, %v4878, %v4880
      %v4882 = vsel %vm4870, %v4860, %v4863
      %v4883 = vsel %vm4873, %v4869, 1326507024
      %v4884 = vsel %vm4872, %v4866, %v4883
      %v4885 = vsel %vm4871, %v4882, %v4884
      %v4886 = vshll.u32 %v4846, 8
      %v4887 = vmul.u32.u64.compose %v4886, %v4885
      %v4888 = vextract.low.u32 %v4887
      %v4889 = vextract.high.u32 %v4887
      %v4890 = vmul.u32.u64.compose %v4886, %v4881
      %v4891 = vextract.low.u32 %v4890
      %v4892 = vextract.high.u32 %v4890
      %v4893 = vmul.u32 %v4886, %v4877
      %v4894 = vadd.s32 %v4889, %v4891
      %vm4895 = vc.u32 %v4889, %v4891
      %v4896 = vadd.s32 %v4892, 1
      %v4897 = vsel %vm4895, %v4896, %v4892
      %v4898 = vadd.s32 %v4893, %v4897
      %v4899 = vadd.s32 %v4898, 536870912
      %v4900 = vshrl.u32 %v4899, 30
      %v4901 = vshll.u32 %v4900, 30
      %v4902 = vsub.s32 %v4898, %v4901
      %vm4903 = vcmp.lt.s32.totalorder %v4902, 0
      %v4904 = vsub.s32 0, %v4902
      %v4905 = vsel %vm4903, %v4904, %v4902
      %v4906 = vclz %v4905
      %v4907 = vsub.s32 %v4906, 2
      %vm4908 = vcmp.gt.s32.totalorder 0, %v4907
      %v4909 = vsel %vm4908, 0, %v4907
      %v4910 = vsub.s32 32, %v4909
      %v4911 = vshll.u32 %v4902, %v4909
      %v4912 = vshrl.u32 %v4894, %v4910
      %v4913 = vor.u32 %v4911, %v4912
      %v4914 = vsub.s32 4294967266, %v4909
      %v4915 = vadd.s32 %v4914, 127
      %v4916 = vshll.u32 %v4915, 23
      %v4917 = vor.u32 4788187, %v4916
      %v4918 = vand.u32 2147483647, %v4917
      %v4920 = vcvt.s32.f32 %v4913
      %v4921 = vmul.f32 %v4920, %v4918
      %v4922 = vxor.u32 %v4921, 2147483648
      %v4923 = vsel %vm4840, %v4922, %v4921
      %v4924 = vsub.s32 4, %v4900
      %v4925 = vsel %vm4840, %v4924, %v4900
      %v4926 = vsel %vm4839, %v1401, %v4923
      %v4927 = vsel %vm4839, 0, %v4925
      %v4928 = vcosq.f32.pop %v4926
      %v4929 = vsinq.f32.pop %v4926
      %vm4930 = vweird.f32 %v1401
      %v4931 = vadd.s32 %v4927, 3
      %v4932 = vand.u32 %v4931, 3
      %vm4933 = vcmp.lt.s32.totalorder %v4932, 2
      %vm4934 = vcmp.eq.s32.totalorder %v4932, 0
      %v4935 = vxor.u32 %v4929, 2147483648
      %v4936 = vsel %vm4934, %v4928, %v4935
      %vm4937 = vcmp.eq.s32.totalorder %v4932, 2
      %v4938 = vxor.u32 %v4928, 2147483648
      %v4939 = vsel %vm4937, %v4938, %v4929
      %v4940 = vsel %vm4933, %v4936, %v4939
      %v4941 = vsel %vm4930, nan, %v4940
      %v4942 = vand.u32 2147483647, %v2499
      %vm4943 = vcmp.le.f32.partialorder %v4942, 0.7853982
      %vm4944 = vcmp.lt.s32.totalorder %v2499, 0
      %v4945 = vand.u32 %v2499, 2139095040
      %v4946 = vshrl.u32 %v4945, 23
      %v4947 = vsub.s32 %v4946, 127
      %v4948 = vand.u32 2147483647, %v2499
      %v4949 = vand.u32 %v4948, 8388607
      %v4950 = vor.u32 %v4949, 8388608
      %v4951 = vsub.s32 0, %v4950
      %v4952 = vadd.s32 %v4947, 1
      %vm4953 = vcmp.gt.s32.totalorder %v4952, 0
      %v4954 = vsel %vm4953, %v4952, 0
      %v4955 = vshrl.u32 %v4954, 5
      %v4956 = vand.u32 %v4954, 31
      %v4957 = vsub.s32 32, %v4956
      %v4958 = vshrl.u32 683565275, %v4957
      %v4959 = vshll.u32 683565275, %v4956
      %v4960 = vshrl.u32 2475754826, %v4957
      %v4961 = vor.u32 %v4959, %v4960
      %v4962 = vshll.u32 2475754826, %v4956
      %v4963 = vshrl.u32 2131351028, %v4957
      %v4964 = vor.u32 %v4962, %v4963
      %v4965 = vshll.u32 2131351028, %v4956
      %v4966 = vshrl.u32 2102212464, %v4957
      %v4967 = vor.u32 %v4965, %v4966
      %v4968 = vshll.u32 2102212464, %v4956
      %v4969 = vshrl.u32 920167782, %v4957
      %v4970 = vor.u32 %v4968, %v4969
      %v4971 = vshll.u32 920167782, %v4956
      %v4972 = vshrl.u32 1326507024, %v4957
      %v4973 = vor.u32 %v4971, %v4972
      %vm4974 = vcmp.lt.s32.totalorder %v4955, 1
      %vm4975 = vcmp.lt.s32.totalorder %v4955, 2
      %vm4976 = vcmp.lt.s32.totalorder %v4955, 3
      %vm4977 = vcmp.lt.s32.totalorder %v4955, 4
      %v4978 = vsel %vm4974, %v4958, %v4961
      %v4979 = vsel %vm4977, %v4967, 2102212464
      %v4980 = vsel %vm4976, %v4964, %v4979
      %v4981 = vsel %vm4975, %v4978, %v4980
      %v4982 = vsel %vm4974, %v4961, %v4964
      %v4983 = vsel %vm4977, %v4970, 920167782
      %v4984 = vsel %vm4976, %v4967, %v4983
      %v4985 = vsel %vm4975, %v4982, %v4984
      %v4986 = vsel %vm4974, %v4964, %v4967
      %v4987 = vsel %vm4977, %v4973, 1326507024
      %v4988 = vsel %vm4976, %v4970, %v4987
      %v4989 = vsel %vm4975, %v4986, %v4988
      %v4990 = vshll.u32 %v4950, 8
      %v4991 = vmul.u32.u64.compose %v4990, %v4989
      %v4992 = vextract.low.u32 %v4991
      %v4993 = vextract.high.u32 %v4991
      %v4994 = vmul.u32.u64.compose %v4990, %v4985
      %v4995 = vextract.low.u32 %v4994
      %v4996 = vextract.high.u32 %v4994
      %v4997 = vmul.u32 %v4990, %v4981
      %v4998 = vadd.s32 %v4993, %v4995
      %vm4999 = vc.u32 %v4993, %v4995
      %v5000 = vadd.s32 %v4996, 1
      %v5001 = vsel %vm4999, %v5000, %v4996
      %v5002 = vadd.s32 %v4997, %v5001
      %v5003 = vadd.s32 %v5002, 536870912
      %v5004 = vshrl.u32 %v5003, 30
      %v5005 = vshll.u32 %v5004, 30
      %v5006 = vsub.s32 %v5002, %v5005
      %vm5007 = vcmp.lt.s32.totalorder %v5006, 0
      %v5008 = vsub.s32 0, %v5006
      %v5009 = vsel %vm5007, %v5008, %v5006
      %v5010 = vclz %v5009
      %v5011 = vsub.s32 %v5010, 2
      %vm5012 = vcmp.gt.s32.totalorder 0, %v5011
      %v5013 = vsel %vm5012, 0, %v5011
      %v5014 = vsub.s32 32, %v5013
      %v5015 = vshll.u32 %v5006, %v5013
      %v5016 = vshrl.u32 %v4998, %v5014
      %v5017 = vor.u32 %v5015, %v5016
      %v5018 = vsub.s32 4294967266, %v5013
      %v5019 = vadd.s32 %v5018, 127
      %v5020 = vshll.u32 %v5019, 23
      %v5021 = vor.u32 4788187, %v5020
      %v5022 = vand.u32 2147483647, %v5021
      %v5024 = vcvt.s32.f32 %v5017
      %v5025 = vmul.f32 %v5024, %v5022
      %v5026 = vxor.u32 %v5025, 2147483648
      %v5027 = vsel %vm4944, %v5026, %v5025
      %v5028 = vsub.s32 4, %v5004
      %v5029 = vsel %vm4944, %v5028, %v5004
      %v5030 = vsel %vm4943, %v2499, %v5027
      %v5031 = vsel %vm4943, 0, %v5029
      %v5032 = vcosq.f32.pop %v5030
      %v5033 = vsinq.f32.pop %v5030
      %vm5034 = vweird.f32 %v2499
      %v5035 = vadd.s32 %v5031, 3
      %v5036 = vand.u32 %v5035, 3
      %vm5037 = vcmp.lt.s32.totalorder %v5036, 2
      %vm5038 = vcmp.eq.s32.totalorder %v5036, 0
      %v5039 = vxor.u32 %v5033, 2147483648
      %v5040 = vsel %vm5038, %v5032, %v5039
      %vm5041 = vcmp.eq.s32.totalorder %v5036, 2
      %v5042 = vxor.u32 %v5032, 2147483648
      %v5043 = vsel %vm5041, %v5042, %v5033
      %v5044 = vsel %vm5037, %v5040, %v5043
      %v5045 = vsel %vm5034, nan, %v5044
      %v5046 = vand.u32 2147483647, %v1406
      %vm5047 = vcmp.le.f32.partialorder %v5046, 0.7853982
      %vm5048 = vcmp.lt.s32.totalorder %v1406, 0
      %v5049 = vand.u32 %v1406, 2139095040
      %v5050 = vshrl.u32 %v5049, 23
      %v5051 = vsub.s32 %v5050, 127
      %v5052 = vand.u32 2147483647, %v1406
      %v5053 = vand.u32 %v5052, 8388607
      %v5054 = vor.u32 %v5053, 8388608
      %v5055 = vsub.s32 0, %v5054
      %v5056 = vadd.s32 %v5051, 1
      %vm5057 = vcmp.gt.s32.totalorder %v5056, 0
      %v5058 = vsel %vm5057, %v5056, 0
      %v5059 = vshrl.u32 %v5058, 5
      %v5060 = vand.u32 %v5058, 31
      %v5061 = vsub.s32 32, %v5060
      %v5062 = vshrl.u32 683565275, %v5061
      %v5063 = vshll.u32 683565275, %v5060
      %v5064 = vshrl.u32 2475754826, %v5061
      %v5065 = vor.u32 %v5063, %v5064
      %v5066 = vshll.u32 2475754826, %v5060
      %v5067 = vshrl.u32 2131351028, %v5061
      %v5068 = vor.u32 %v5066, %v5067
      %v5069 = vshll.u32 2131351028, %v5060
      %v5070 = vshrl.u32 2102212464, %v5061
      %v5071 = vor.u32 %v5069, %v5070
      %v5072 = vshll.u32 2102212464, %v5060
      %v5073 = vshrl.u32 920167782, %v5061
      %v5074 = vor.u32 %v5072, %v5073
      %v5075 = vshll.u32 920167782, %v5060
      %v5076 = vshrl.u32 1326507024, %v5061
      %v5077 = vor.u32 %v5075, %v5076
      %vm5078 = vcmp.lt.s32.totalorder %v5059, 1
      %vm5079 = vcmp.lt.s32.totalorder %v5059, 2
      %vm5080 = vcmp.lt.s32.totalorder %v5059, 3
      %vm5081 = vcmp.lt.s32.totalorder %v5059, 4
      %v5082 = vsel %vm5078, %v5062, %v5065
      %v5083 = vsel %vm5081, %v5071, 2102212464
      %v5084 = vsel %vm5080, %v5068, %v5083
      %v5085 = vsel %vm5079, %v5082, %v5084
      %v5086 = vsel %vm5078, %v5065, %v5068
      %v5087 = vsel %vm5081, %v5074, 920167782
      %v5088 = vsel %vm5080, %v5071, %v5087
      %v5089 = vsel %vm5079, %v5086, %v5088
      %v5090 = vsel %vm5078, %v5068, %v5071
      %v5091 = vsel %vm5081, %v5077, 1326507024
      %v5092 = vsel %vm5080, %v5074, %v5091
      %v5093 = vsel %vm5079, %v5090, %v5092
      %v5094 = vshll.u32 %v5054, 8
      %v5095 = vmul.u32.u64.compose %v5094, %v5093
      %v5096 = vextract.low.u32 %v5095
      %v5097 = vextract.high.u32 %v5095
      %v5098 = vmul.u32.u64.compose %v5094, %v5089
      %v5099 = vextract.low.u32 %v5098
      %v5100 = vextract.high.u32 %v5098
      %v5101 = vmul.u32 %v5094, %v5085
      %v5102 = vadd.s32 %v5097, %v5099
      %vm5103 = vc.u32 %v5097, %v5099
      %v5104 = vadd.s32 %v5100, 1
      %v5105 = vsel %vm5103, %v5104, %v5100
      %v5106 = vadd.s32 %v5101, %v5105
      %v5107 = vadd.s32 %v5106, 536870912
      %v5108 = vshrl.u32 %v5107, 30
      %v5109 = vshll.u32 %v5108, 30
      %v5110 = vsub.s32 %v5106, %v5109
      %vm5111 = vcmp.lt.s32.totalorder %v5110, 0
      %v5112 = vsub.s32 0, %v5110
      %v5113 = vsel %vm5111, %v5112, %v5110
      %v5114 = vclz %v5113
      %v5115 = vsub.s32 %v5114, 2
      %vm5116 = vcmp.gt.s32.totalorder 0, %v5115
      %v5117 = vsel %vm5116, 0, %v5115
      %v5118 = vsub.s32 32, %v5117
      %v5119 = vshll.u32 %v5110, %v5117
      %v5120 = vshrl.u32 %v5102, %v5118
      %v5121 = vor.u32 %v5119, %v5120
      %v5122 = vsub.s32 4294967266, %v5117
      %v5123 = vadd.s32 %v5122, 127
      %v5124 = vshll.u32 %v5123, 23
      %v5125 = vor.u32 4788187, %v5124
      %v5126 = vand.u32 2147483647, %v5125
      %v5128 = vcvt.s32.f32 %v5121
      %v5129 = vmul.f32 %v5128, %v5126
      %v5130 = vxor.u32 %v5129, 2147483648
      %v5131 = vsel %vm5048, %v5130, %v5129
      %v5132 = vsub.s32 4, %v5108
      %v5133 = vsel %vm5048, %v5132, %v5108
      %v5134 = vsel %vm5047, %v1406, %v5131
      %v5135 = vsel %vm5047, 0, %v5133
      %v5136 = vcosq.f32.pop %v5134
      %v5137 = vsinq.f32.pop %v5134
      %vm5138 = vweird.f32 %v1406
      %v5139 = vadd.s32 %v5135, 3
      %v5140 = vand.u32 %v5139, 3
      %vm5141 = vcmp.lt.s32.totalorder %v5140, 2
      %vm5142 = vcmp.eq.s32.totalorder %v5140, 0
      %v5143 = vxor.u32 %v5137, 2147483648
      %v5144 = vsel %vm5142, %v5136, %v5143
      %vm5145 = vcmp.eq.s32.totalorder %v5140, 2
      %v5146 = vxor.u32 %v5136, 2147483648
      %v5147 = vsel %vm5145, %v5146, %v5137
      %v5148 = vsel %vm5141, %v5144, %v5147
      %v5149 = vsel %vm5138, nan, %v5148
      %v5150 = vand.u32 2147483647, %v1408
      %vm5151 = vcmp.le.f32.partialorder %v5150, 0.7853982
      %vm5152 = vcmp.lt.s32.totalorder %v1408, 0
      %v5153 = vand.u32 %v1408, 2139095040
      %v5154 = vshrl.u32 %v5153, 23
      %v5155 = vsub.s32 %v5154, 127
      %v5156 = vand.u32 2147483647, %v1408
      %v5157 = vand.u32 %v5156, 8388607
      %v5158 = vor.u32 %v5157, 8388608
      %v5159 = vsub.s32 0, %v5158
      %v5160 = vadd.s32 %v5155, 1
      %vm5161 = vcmp.gt.s32.totalorder %v5160, 0
      %v5162 = vsel %vm5161, %v5160, 0
      %v5163 = vshrl.u32 %v5162, 5
      %v5164 = vand.u32 %v5162, 31
      %v5165 = vsub.s32 32, %v5164
      %v5166 = vshrl.u32 683565275, %v5165
      %v5167 = vshll.u32 683565275, %v5164
      %v5168 = vshrl.u32 2475754826, %v5165
      %v5169 = vor.u32 %v5167, %v5168
      %v5170 = vshll.u32 2475754826, %v5164
      %v5171 = vshrl.u32 2131351028, %v5165
      %v5172 = vor.u32 %v5170, %v5171
      %v5173 = vshll.u32 2131351028, %v5164
      %v5174 = vshrl.u32 2102212464, %v5165
      %v5175 = vor.u32 %v5173, %v5174
      %v5176 = vshll.u32 2102212464, %v5164
      %v5177 = vshrl.u32 920167782, %v5165
      %v5178 = vor.u32 %v5176, %v5177
      %v5179 = vshll.u32 920167782, %v5164
      %v5180 = vshrl.u32 1326507024, %v5165
      %v5181 = vor.u32 %v5179, %v5180
      %vm5182 = vcmp.lt.s32.totalorder %v5163, 1
      %vm5183 = vcmp.lt.s32.totalorder %v5163, 2
      %vm5184 = vcmp.lt.s32.totalorder %v5163, 3
      %vm5185 = vcmp.lt.s32.totalorder %v5163, 4
      %v5186 = vsel %vm5182, %v5166, %v5169
      %v5187 = vsel %vm5185, %v5175, 2102212464
      %v5188 = vsel %vm5184, %v5172, %v5187
      %v5189 = vsel %vm5183, %v5186, %v5188
      %v5190 = vsel %vm5182, %v5169, %v5172
      %v5191 = vsel %vm5185, %v5178, 920167782
      %v5192 = vsel %vm5184, %v5175, %v5191
      %v5193 = vsel %vm5183, %v5190, %v5192
      %v5194 = vsel %vm5182, %v5172, %v5175
      %v5195 = vsel %vm5185, %v5181, 1326507024
      %v5196 = vsel %vm5184, %v5178, %v5195
      %v5197 = vsel %vm5183, %v5194, %v5196
      %v5198 = vshll.u32 %v5158, 8
      %v5199 = vmul.u32.u64.compose %v5198, %v5197
      %v5200 = vextract.low.u32 %v5199
      %v5201 = vextract.high.u32 %v5199
      %v5202 = vmul.u32.u64.compose %v5198, %v5193
      %v5203 = vextract.low.u32 %v5202
      %v5204 = vextract.high.u32 %v5202
      %v5205 = vmul.u32 %v5198, %v5189
      %v5206 = vadd.s32 %v5201, %v5203
      %vm5207 = vc.u32 %v5201, %v5203
      %v5208 = vadd.s32 %v5204, 1
      %v5209 = vsel %vm5207, %v5208, %v5204
      %v5210 = vadd.s32 %v5205, %v5209
      %v5211 = vadd.s32 %v5210, 536870912
      %v5212 = vshrl.u32 %v5211, 30
      %v5213 = vshll.u32 %v5212, 30
      %v5214 = vsub.s32 %v5210, %v5213
      %vm5215 = vcmp.lt.s32.totalorder %v5214, 0
      %v5216 = vsub.s32 0, %v5214
      %v5217 = vsel %vm5215, %v5216, %v5214
      %v5218 = vclz %v5217
      %v5219 = vsub.s32 %v5218, 2
      %vm5220 = vcmp.gt.s32.totalorder 0, %v5219
      %v5221 = vsel %vm5220, 0, %v5219
      %v5222 = vsub.s32 32, %v5221
      %v5223 = vshll.u32 %v5214, %v5221
      %v5224 = vshrl.u32 %v5206, %v5222
      %v5225 = vor.u32 %v5223, %v5224
      %v5226 = vsub.s32 4294967266, %v5221
      %v5227 = vadd.s32 %v5226, 127
      %v5228 = vshll.u32 %v5227, 23
      %v5229 = vor.u32 4788187, %v5228
      %v5230 = vand.u32 2147483647, %v5229
      %v5232 = vcvt.s32.f32 %v5225
      %v5233 = vmul.f32 %v5232, %v5230
      %v5234 = vxor.u32 %v5233, 2147483648
      %v5235 = vsel %vm5152, %v5234, %v5233
      %v5236 = vsub.s32 4, %v5212
      %v5237 = vsel %vm5152, %v5236, %v5212
      %v5238 = vsel %vm5151, %v1408, %v5235
      %v5239 = vsel %vm5151, 0, %v5237
      %v5240 = vcosq.f32.pop %v5238
      %v5241 = vsinq.f32.pop %v5238
      %vm5242 = vweird.f32 %v1408
      %v5243 = vadd.s32 %v5239, 3
      %v5244 = vand.u32 %v5243, 3
      %vm5245 = vcmp.lt.s32.totalorder %v5244, 2
      %vm5246 = vcmp.eq.s32.totalorder %v5244, 0
      %v5247 = vxor.u32 %v5241, 2147483648
      %v5248 = vsel %vm5246, %v5240, %v5247
      %vm5249 = vcmp.eq.s32.totalorder %v5244, 2
      %v5250 = vxor.u32 %v5240, 2147483648
      %v5251 = vsel %vm5249, %v5250, %v5241
      %v5252 = vsel %vm5245, %v5248, %v5251
      %v5253 = vsel %vm5242, nan, %v5252
      %v5254 = vand.u32 2147483647, %v2505
      %vm5255 = vcmp.le.f32.partialorder %v5254, 0.7853982
      %vm5256 = vcmp.lt.s32.totalorder %v2505, 0
      %v5257 = vand.u32 %v2505, 2139095040
      %v5258 = vshrl.u32 %v5257, 23
      %v5259 = vsub.s32 %v5258, 127
      %v5260 = vand.u32 2147483647, %v2505
      %v5261 = vand.u32 %v5260, 8388607
      %v5262 = vor.u32 %v5261, 8388608
      %v5263 = vsub.s32 0, %v5262
      %v5264 = vadd.s32 %v5259, 1
      %vm5265 = vcmp.gt.s32.totalorder %v5264, 0
      %v5266 = vsel %vm5265, %v5264, 0
      %v5267 = vshrl.u32 %v5266, 5
      %v5268 = vand.u32 %v5266, 31
      %v5269 = vsub.s32 32, %v5268
      %v5270 = vshrl.u32 683565275, %v5269
      %v5271 = vshll.u32 683565275, %v5268
      %v5272 = vshrl.u32 2475754826, %v5269
      %v5273 = vor.u32 %v5271, %v5272
      %v5274 = vshll.u32 2475754826, %v5268
      %v5275 = vshrl.u32 2131351028, %v5269
      %v5276 = vor.u32 %v5274, %v5275
      %v5277 = vshll.u32 2131351028, %v5268
      %v5278 = vshrl.u32 2102212464, %v5269
      %v5279 = vor.u32 %v5277, %v5278
      %v5280 = vshll.u32 2102212464, %v5268
      %v5281 = vshrl.u32 920167782, %v5269
      %v5282 = vor.u32 %v5280, %v5281
      %v5283 = vshll.u32 920167782, %v5268
      %v5284 = vshrl.u32 1326507024, %v5269
      %v5285 = vor.u32 %v5283, %v5284
      %vm5286 = vcmp.lt.s32.totalorder %v5267, 1
      %vm5287 = vcmp.lt.s32.totalorder %v5267, 2
      %vm5288 = vcmp.lt.s32.totalorder %v5267, 3
      %vm5289 = vcmp.lt.s32.totalorder %v5267, 4
      %v5290 = vsel %vm5286, %v5270, %v5273
      %v5291 = vsel %vm5289, %v5279, 2102212464
      %v5292 = vsel %vm5288, %v5276, %v5291
      %v5293 = vsel %vm5287, %v5290, %v5292
      %v5294 = vsel %vm5286, %v5273, %v5276
      %v5295 = vsel %vm5289, %v5282, 920167782
      %v5296 = vsel %vm5288, %v5279, %v5295
      %v5297 = vsel %vm5287, %v5294, %v5296
      %v5298 = vsel %vm5286, %v5276, %v5279
      %v5299 = vsel %vm5289, %v5285, 1326507024
      %v5300 = vsel %vm5288, %v5282, %v5299
      %v5301 = vsel %vm5287, %v5298, %v5300
      %v5302 = vshll.u32 %v5262, 8
      %v5303 = vmul.u32.u64.compose %v5302, %v5301
      %v5304 = vextract.low.u32 %v5303
      %v5305 = vextract.high.u32 %v5303
      %v5306 = vmul.u32.u64.compose %v5302, %v5297
      %v5307 = vextract.low.u32 %v5306
      %v5308 = vextract.high.u32 %v5306
      %v5309 = vmul.u32 %v5302, %v5293
      %v5310 = vadd.s32 %v5305, %v5307
      %vm5311 = vc.u32 %v5305, %v5307
      %v5312 = vadd.s32 %v5308, 1
      %v5313 = vsel %vm5311, %v5312, %v5308
      %v5314 = vadd.s32 %v5309, %v5313
      %v5315 = vadd.s32 %v5314, 536870912
      %v5316 = vshrl.u32 %v5315, 30
      %v5317 = vshll.u32 %v5316, 30
      %v5318 = vsub.s32 %v5314, %v5317
      %vm5319 = vcmp.lt.s32.totalorder %v5318, 0
      %v5320 = vsub.s32 0, %v5318
      %v5321 = vsel %vm5319, %v5320, %v5318
      %v5322 = vclz %v5321
      %v5323 = vsub.s32 %v5322, 2
      %vm5324 = vcmp.gt.s32.totalorder 0, %v5323
      %v5325 = vsel %vm5324, 0, %v5323
      %v5326 = vsub.s32 32, %v5325
      %v5327 = vshll.u32 %v5318, %v5325
      %v5328 = vshrl.u32 %v5310, %v5326
      %v5329 = vor.u32 %v5327, %v5328
      %v5330 = vsub.s32 4294967266, %v5325
      %v5331 = vadd.s32 %v5330, 127
      %v5332 = vshll.u32 %v5331, 23
      %v5333 = vor.u32 4788187, %v5332
      %v5334 = vand.u32 2147483647, %v5333
      %v5336 = vcvt.s32.f32 %v5329
      %v5337 = vmul.f32 %v5336, %v5334
      %v5338 = vxor.u32 %v5337, 2147483648
      %v5339 = vsel %vm5256, %v5338, %v5337
      %v5340 = vsub.s32 4, %v5316
      %v5341 = vsel %vm5256, %v5340, %v5316
      %v5342 = vsel %vm5255, %v2505, %v5339
      %v5343 = vsel %vm5255, 0, %v5341
      %v5344 = vcosq.f32.pop %v5342
      %v5345 = vsinq.f32.pop %v5342
      %vm5346 = vweird.f32 %v2505
      %v5347 = vadd.s32 %v5343, 3
      %v5348 = vand.u32 %v5347, 3
      %vm5349 = vcmp.lt.s32.totalorder %v5348, 2
      %vm5350 = vcmp.eq.s32.totalorder %v5348, 0
      %v5351 = vxor.u32 %v5345, 2147483648
      %v5352 = vsel %vm5350, %v5344, %v5351
      %vm5353 = vcmp.eq.s32.totalorder %v5348, 2
      %v5354 = vxor.u32 %v5344, 2147483648
      %v5355 = vsel %vm5353, %v5354, %v5345
      %v5356 = vsel %vm5349, %v5352, %v5355
      %v5357 = vsel %vm5346, nan, %v5356
      %v5358 = vand.u32 2147483647, %v1413
      %vm5359 = vcmp.le.f32.partialorder %v5358, 0.7853982
      %vm5360 = vcmp.lt.s32.totalorder %v1413, 0
      %v5361 = vand.u32 %v1413, 2139095040
      %v5362 = vshrl.u32 %v5361, 23
      %v5363 = vsub.s32 %v5362, 127
      %v5364 = vand.u32 2147483647, %v1413
      %v5365 = vand.u32 %v5364, 8388607
      %v5366 = vor.u32 %v5365, 8388608
      %v5367 = vsub.s32 0, %v5366
      %v5368 = vadd.s32 %v5363, 1
      %vm5369 = vcmp.gt.s32.totalorder %v5368, 0
      %v5370 = vsel %vm5369, %v5368, 0
      %v5371 = vshrl.u32 %v5370, 5
      %v5372 = vand.u32 %v5370, 31
      %v5373 = vsub.s32 32, %v5372
      %v5374 = vshrl.u32 683565275, %v5373
      %v5375 = vshll.u32 683565275, %v5372
      %v5376 = vshrl.u32 2475754826, %v5373
      %v5377 = vor.u32 %v5375, %v5376
      %v5378 = vshll.u32 2475754826, %v5372
      %v5379 = vshrl.u32 2131351028, %v5373
      %v5380 = vor.u32 %v5378, %v5379
      %v5381 = vshll.u32 2131351028, %v5372
      %v5382 = vshrl.u32 2102212464, %v5373
      %v5383 = vor.u32 %v5381, %v5382
      %v5384 = vshll.u32 2102212464, %v5372
      %v5385 = vshrl.u32 920167782, %v5373
      %v5386 = vor.u32 %v5384, %v5385
      %v5387 = vshll.u32 920167782, %v5372
      %v5388 = vshrl.u32 1326507024, %v5373
      %v5389 = vor.u32 %v5387, %v5388
      %vm5390 = vcmp.lt.s32.totalorder %v5371, 1
      %vm5391 = vcmp.lt.s32.totalorder %v5371, 2
      %vm5392 = vcmp.lt.s32.totalorder %v5371, 3
      %vm5393 = vcmp.lt.s32.totalorder %v5371, 4
      %v5394 = vsel %vm5390, %v5374, %v5377
      %v5395 = vsel %vm5393, %v5383, 2102212464
      %v5396 = vsel %vm5392, %v5380, %v5395
      %v5397 = vsel %vm5391, %v5394, %v5396
      %v5398 = vsel %vm5390, %v5377, %v5380
      %v5399 = vsel %vm5393, %v5386, 920167782
      %v5400 = vsel %vm5392, %v5383, %v5399
      %v5401 = vsel %vm5391, %v5398, %v5400
      %v5402 = vsel %vm5390, %v5380, %v5383
      %v5403 = vsel %vm5393, %v5389, 1326507024
      %v5404 = vsel %vm5392, %v5386, %v5403
      %v5405 = vsel %vm5391, %v5402, %v5404
      %v5406 = vshll.u32 %v5366, 8
      %v5407 = vmul.u32.u64.compose %v5406, %v5405
      %v5408 = vextract.low.u32 %v5407
      %v5409 = vextract.high.u32 %v5407
      %v5410 = vmul.u32.u64.compose %v5406, %v5401
      %v5411 = vextract.low.u32 %v5410
      %v5412 = vextract.high.u32 %v5410
      %v5413 = vmul.u32 %v5406, %v5397
      %v5414 = vadd.s32 %v5409, %v5411
      %vm5415 = vc.u32 %v5409, %v5411
      %v5416 = vadd.s32 %v5412, 1
      %v5417 = vsel %vm5415, %v5416, %v5412
      %v5418 = vadd.s32 %v5413, %v5417
      %v5419 = vadd.s32 %v5418, 536870912
      %v5420 = vshrl.u32 %v5419, 30
      %v5421 = vshll.u32 %v5420, 30
      %v5422 = vsub.s32 %v5418, %v5421
      %vm5423 = vcmp.lt.s32.totalorder %v5422, 0
      %v5424 = vsub.s32 0, %v5422
      %v5425 = vsel %vm5423, %v5424, %v5422
      %v5426 = vclz %v5425
      %v5427 = vsub.s32 %v5426, 2
      %vm5428 = vcmp.gt.s32.totalorder 0, %v5427
      %v5429 = vsel %vm5428, 0, %v5427
      %v5430 = vsub.s32 32, %v5429
      %v5431 = vshll.u32 %v5422, %v5429
      %v5432 = vshrl.u32 %v5414, %v5430
      %v5433 = vor.u32 %v5431, %v5432
      %v5434 = vsub.s32 4294967266, %v5429
      %v5435 = vadd.s32 %v5434, 127
      %v5436 = vshll.u32 %v5435, 23
      %v5437 = vor.u32 4788187, %v5436
      %v5438 = vand.u32 2147483647, %v5437
      %v5440 = vcvt.s32.f32 %v5433
      %v5441 = vmul.f32 %v5440, %v5438
      %v5442 = vxor.u32 %v5441, 2147483648
      %v5443 = vsel %vm5360, %v5442, %v5441
      %v5444 = vsub.s32 4, %v5420
      %v5445 = vsel %vm5360, %v5444, %v5420
      %v5446 = vsel %vm5359, %v1413, %v5443
      %v5447 = vsel %vm5359, 0, %v5445
      %v5448 = vcosq.f32.pop %v5446
      %v5449 = vsinq.f32.pop %v5446
      %vm5450 = vweird.f32 %v1413
      %v5451 = vadd.s32 %v5447, 3
      %v5452 = vand.u32 %v5451, 3
      %vm5453 = vcmp.lt.s32.totalorder %v5452, 2
      %vm5454 = vcmp.eq.s32.totalorder %v5452, 0
      %v5455 = vxor.u32 %v5449, 2147483648
      %v5456 = vsel %vm5454, %v5448, %v5455
      %vm5457 = vcmp.eq.s32.totalorder %v5452, 2
      %v5458 = vxor.u32 %v5448, 2147483648
      %v5459 = vsel %vm5457, %v5458, %v5449
      %v5460 = vsel %vm5453, %v5456, %v5459
      %v5461 = vsel %vm5450, nan, %v5460
      %v5462 = vand.u32 2147483647, %v1415
      %vm5463 = vcmp.le.f32.partialorder %v5462, 0.7853982
      %vm5464 = vcmp.lt.s32.totalorder %v1415, 0
      %v5465 = vand.u32 %v1415, 2139095040
      %v5466 = vshrl.u32 %v5465, 23
      %v5467 = vsub.s32 %v5466, 127
      %v5468 = vand.u32 2147483647, %v1415
      %v5469 = vand.u32 %v5468, 8388607
      %v5470 = vor.u32 %v5469, 8388608
      %v5471 = vsub.s32 0, %v5470
      %v5472 = vadd.s32 %v5467, 1
      %vm5473 = vcmp.gt.s32.totalorder %v5472, 0
      %v5474 = vsel %vm5473, %v5472, 0
      %v5475 = vshrl.u32 %v5474, 5
      %v5476 = vand.u32 %v5474, 31
      %v5477 = vsub.s32 32, %v5476
      %v5478 = vshrl.u32 683565275, %v5477
      %v5479 = vshll.u32 683565275, %v5476
      %v5480 = vshrl.u32 2475754826, %v5477
      %v5481 = vor.u32 %v5479, %v5480
      %v5482 = vshll.u32 2475754826, %v5476
      %v5483 = vshrl.u32 2131351028, %v5477
      %v5484 = vor.u32 %v5482, %v5483
      %v5485 = vshll.u32 2131351028, %v5476
      %v5486 = vshrl.u32 2102212464, %v5477
      %v5487 = vor.u32 %v5485, %v5486
      %v5488 = vshll.u32 2102212464, %v5476
      %v5489 = vshrl.u32 920167782, %v5477
      %v5490 = vor.u32 %v5488, %v5489
      %v5491 = vshll.u32 920167782, %v5476
      %v5492 = vshrl.u32 1326507024, %v5477
      %v5493 = vor.u32 %v5491, %v5492
      %vm5494 = vcmp.lt.s32.totalorder %v5475, 1
      %vm5495 = vcmp.lt.s32.totalorder %v5475, 2
      %vm5496 = vcmp.lt.s32.totalorder %v5475, 3
      %vm5497 = vcmp.lt.s32.totalorder %v5475, 4
      %v5498 = vsel %vm5494, %v5478, %v5481
      %v5499 = vsel %vm5497, %v5487, 2102212464
      %v5500 = vsel %vm5496, %v5484, %v5499
      %v5501 = vsel %vm5495, %v5498, %v5500
      %v5502 = vsel %vm5494, %v5481, %v5484
      %v5503 = vsel %vm5497, %v5490, 920167782
      %v5504 = vsel %vm5496, %v5487, %v5503
      %v5505 = vsel %vm5495, %v5502, %v5504
      %v5506 = vsel %vm5494, %v5484, %v5487
      %v5507 = vsel %vm5497, %v5493, 1326507024
      %v5508 = vsel %vm5496, %v5490, %v5507
      %v5509 = vsel %vm5495, %v5506, %v5508
      %v5510 = vshll.u32 %v5470, 8
      %v5511 = vmul.u32.u64.compose %v5510, %v5509
      %v5512 = vextract.low.u32 %v5511
      %v5513 = vextract.high.u32 %v5511
      %v5514 = vmul.u32.u64.compose %v5510, %v5505
      %v5515 = vextract.low.u32 %v5514
      %v5516 = vextract.high.u32 %v5514
      %v5517 = vmul.u32 %v5510, %v5501
      %v5518 = vadd.s32 %v5513, %v5515
      %vm5519 = vc.u32 %v5513, %v5515
      %v5520 = vadd.s32 %v5516, 1
      %v5521 = vsel %vm5519, %v5520, %v5516
      %v5522 = vadd.s32 %v5517, %v5521
      %v5523 = vadd.s32 %v5522, 536870912
      %v5524 = vshrl.u32 %v5523, 30
      %v5525 = vshll.u32 %v5524, 30
      %v5526 = vsub.s32 %v5522, %v5525
      %vm5527 = vcmp.lt.s32.totalorder %v5526, 0
      %v5528 = vsub.s32 0, %v5526
      %v5529 = vsel %vm5527, %v5528, %v5526
      %v5530 = vclz %v5529
      %v5531 = vsub.s32 %v5530, 2
      %vm5532 = vcmp.gt.s32.totalorder 0, %v5531
      %v5533 = vsel %vm5532, 0, %v5531
      %v5534 = vsub.s32 32, %v5533
      %v5535 = vshll.u32 %v5526, %v5533
      %v5536 = vshrl.u32 %v5518, %v5534
      %v5537 = vor.u32 %v5535, %v5536
      %v5538 = vsub.s32 4294967266, %v5533
      %v5539 = vadd.s32 %v5538, 127
      %v5540 = vshll.u32 %v5539, 23
      %v5541 = vor.u32 4788187, %v5540
      %v5542 = vand.u32 2147483647, %v5541
      %v5544 = vcvt.s32.f32 %v5537
      %v5545 = vmul.f32 %v5544, %v5542
      %v5546 = vxor.u32 %v5545, 2147483648
      %v5547 = vsel %vm5464, %v5546, %v5545
      %v5548 = vsub.s32 4, %v5524
      %v5549 = vsel %vm5464, %v5548, %v5524
      %v5550 = vsel %vm5463, %v1415, %v5547
      %v5551 = vsel %vm5463, 0, %v5549
      %v5552 = vcosq.f32.pop %v5550
      %v5553 = vsinq.f32.pop %v5550
      %vm5554 = vweird.f32 %v1415
      %v5555 = vadd.s32 %v5551, 3
      %v5556 = vand.u32 %v5555, 3
      %vm5557 = vcmp.lt.s32.totalorder %v5556, 2
      %vm5558 = vcmp.eq.s32.totalorder %v5556, 0
      %v5559 = vxor.u32 %v5553, 2147483648
      %v5560 = vsel %vm5558, %v5552, %v5559
      %vm5561 = vcmp.eq.s32.totalorder %v5556, 2
      %v5562 = vxor.u32 %v5552, 2147483648
      %v5563 = vsel %vm5561, %v5562, %v5553
      %v5564 = vsel %vm5557, %v5560, %v5563
      %v5565 = vsel %vm5554, nan, %v5564
      %v5566 = vand.u32 2147483647, %v2511
      %vm5567 = vcmp.le.f32.partialorder %v5566, 0.7853982
      %vm5568 = vcmp.lt.s32.totalorder %v2511, 0
      %v5569 = vand.u32 %v2511, 2139095040
      %v5570 = vshrl.u32 %v5569, 23
      %v5571 = vsub.s32 %v5570, 127
      %v5572 = vand.u32 2147483647, %v2511
      %v5573 = vand.u32 %v5572, 8388607
      %v5574 = vor.u32 %v5573, 8388608
      %v5575 = vsub.s32 0, %v5574
      %v5576 = vadd.s32 %v5571, 1
      %vm5577 = vcmp.gt.s32.totalorder %v5576, 0
      %v5578 = vsel %vm5577, %v5576, 0
      %v5579 = vshrl.u32 %v5578, 5
      %v5580 = vand.u32 %v5578, 31
      %v5581 = vsub.s32 32, %v5580
      %v5582 = vshrl.u32 683565275, %v5581
      %v5583 = vshll.u32 683565275, %v5580
      %v5584 = vshrl.u32 2475754826, %v5581
      %v5585 = vor.u32 %v5583, %v5584
      %v5586 = vshll.u32 2475754826, %v5580
      %v5587 = vshrl.u32 2131351028, %v5581
      %v5588 = vor.u32 %v5586, %v5587
      %v5589 = vshll.u32 2131351028, %v5580
      %v5590 = vshrl.u32 2102212464, %v5581
      %v5591 = vor.u32 %v5589, %v5590
      %v5592 = vshll.u32 2102212464, %v5580
      %v5593 = vshrl.u32 920167782, %v5581
      %v5594 = vor.u32 %v5592, %v5593
      %v5595 = vshll.u32 920167782, %v5580
      %v5596 = vshrl.u32 1326507024, %v5581
      %v5597 = vor.u32 %v5595, %v5596
      %vm5598 = vcmp.lt.s32.totalorder %v5579, 1
      %vm5599 = vcmp.lt.s32.totalorder %v5579, 2
      %vm5600 = vcmp.lt.s32.totalorder %v5579, 3
      %vm5601 = vcmp.lt.s32.totalorder %v5579, 4
      %v5602 = vsel %vm5598, %v5582, %v5585
      %v5603 = vsel %vm5601, %v5591, 2102212464
      %v5604 = vsel %vm5600, %v5588, %v5603
      %v5605 = vsel %vm5599, %v5602, %v5604
      %v5606 = vsel %vm5598, %v5585, %v5588
      %v5607 = vsel %vm5601, %v5594, 920167782
      %v5608 = vsel %vm5600, %v5591, %v5607
      %v5609 = vsel %vm5599, %v5606, %v5608
      %v5610 = vsel %vm5598, %v5588, %v5591
      %v5611 = vsel %vm5601, %v5597, 1326507024
      %v5612 = vsel %vm5600, %v5594, %v5611
      %v5613 = vsel %vm5599, %v5610, %v5612
      %v5614 = vshll.u32 %v5574, 8
      %v5615 = vmul.u32.u64.compose %v5614, %v5613
      %v5616 = vextract.low.u32 %v5615
      %v5617 = vextract.high.u32 %v5615
      %v5618 = vmul.u32.u64.compose %v5614, %v5609
      %v5619 = vextract.low.u32 %v5618
      %v5620 = vextract.high.u32 %v5618
      %v5621 = vmul.u32 %v5614, %v5605
      %v5622 = vadd.s32 %v5617, %v5619
      %vm5623 = vc.u32 %v5617, %v5619
      %v5624 = vadd.s32 %v5620, 1
      %v5625 = vsel %vm5623, %v5624, %v5620
      %v5626 = vadd.s32 %v5621, %v5625
      %v5627 = vadd.s32 %v5626, 536870912
      %v5628 = vshrl.u32 %v5627, 30
      %v5629 = vshll.u32 %v5628, 30
      %v5630 = vsub.s32 %v5626, %v5629
      %vm5631 = vcmp.lt.s32.totalorder %v5630, 0
      %v5632 = vsub.s32 0, %v5630
      %v5633 = vsel %vm5631, %v5632, %v5630
      %v5634 = vclz %v5633
      %v5635 = vsub.s32 %v5634, 2
      %vm5636 = vcmp.gt.s32.totalorder 0, %v5635
      %v5637 = vsel %vm5636, 0, %v5635
      %v5638 = vsub.s32 32, %v5637
      %v5639 = vshll.u32 %v5630, %v5637
      %v5640 = vshrl.u32 %v5622, %v5638
      %v5641 = vor.u32 %v5639, %v5640
      %v5642 = vsub.s32 4294967266, %v5637
      %v5643 = vadd.s32 %v5642, 127
      %v5644 = vshll.u32 %v5643, 23
      %v5645 = vor.u32 4788187, %v5644
      %v5646 = vand.u32 2147483647, %v5645
      %v5648 = vcvt.s32.f32 %v5641
      %v5649 = vmul.f32 %v5648, %v5646
      %v5650 = vxor.u32 %v5649, 2147483648
      %v5651 = vsel %vm5568, %v5650, %v5649
      %v5652 = vsub.s32 4, %v5628
      %v5653 = vsel %vm5568, %v5652, %v5628
      %v5654 = vsel %vm5567, %v2511, %v5651
      %v5655 = vsel %vm5567, 0, %v5653
      %v5656 = vcosq.f32.pop %v5654
      %v5657 = vsinq.f32.pop %v5654
      %vm5658 = vweird.f32 %v2511
      %v5659 = vadd.s32 %v5655, 3
      %v5660 = vand.u32 %v5659, 3
      %vm5661 = vcmp.lt.s32.totalorder %v5660, 2
      %vm5662 = vcmp.eq.s32.totalorder %v5660, 0
      %v5663 = vxor.u32 %v5657, 2147483648
      %v5664 = vsel %vm5662, %v5656, %v5663
      %vm5665 = vcmp.eq.s32.totalorder %v5660, 2
      %v5666 = vxor.u32 %v5656, 2147483648
      %v5667 = vsel %vm5665, %v5666, %v5657
      %v5668 = vsel %vm5661, %v5664, %v5667
      %v5669 = vsel %vm5658, nan, %v5668
      %v5670 = vand.u32 2147483647, %v1420
      %vm5671 = vcmp.le.f32.partialorder %v5670, 0.7853982
      %vm5672 = vcmp.lt.s32.totalorder %v1420, 0
      %v5673 = vand.u32 %v1420, 2139095040
      %v5674 = vshrl.u32 %v5673, 23
      %v5675 = vsub.s32 %v5674, 127
      %v5676 = vand.u32 2147483647, %v1420
      %v5677 = vand.u32 %v5676, 8388607
      %v5678 = vor.u32 %v5677, 8388608
      %v5679 = vsub.s32 0, %v5678
      %v5680 = vadd.s32 %v5675, 1
      %vm5681 = vcmp.gt.s32.totalorder %v5680, 0
      %v5682 = vsel %vm5681, %v5680, 0
      %v5683 = vshrl.u32 %v5682, 5
      %v5684 = vand.u32 %v5682, 31
      %v5685 = vsub.s32 32, %v5684
      %v5686 = vshrl.u32 683565275, %v5685
      %v5687 = vshll.u32 683565275, %v5684
      %v5688 = vshrl.u32 2475754826, %v5685
      %v5689 = vor.u32 %v5687, %v5688
      %v5690 = vshll.u32 2475754826, %v5684
      %v5691 = vshrl.u32 2131351028, %v5685
      %v5692 = vor.u32 %v5690, %v5691
      %v5693 = vshll.u32 2131351028, %v5684
      %v5694 = vshrl.u32 2102212464, %v5685
      %v5695 = vor.u32 %v5693, %v5694
      %v5696 = vshll.u32 2102212464, %v5684
      %v5697 = vshrl.u32 920167782, %v5685
      %v5698 = vor.u32 %v5696, %v5697
      %v5699 = vshll.u32 920167782, %v5684
      %v5700 = vshrl.u32 1326507024, %v5685
      %v5701 = vor.u32 %v5699, %v5700
      %vm5702 = vcmp.lt.s32.totalorder %v5683, 1
      %vm5703 = vcmp.lt.s32.totalorder %v5683, 2
      %vm5704 = vcmp.lt.s32.totalorder %v5683, 3
      %vm5705 = vcmp.lt.s32.totalorder %v5683, 4
      %v5706 = vsel %vm5702, %v5686, %v5689
      %v5707 = vsel %vm5705, %v5695, 2102212464
      %v5708 = vsel %vm5704, %v5692, %v5707
      %v5709 = vsel %vm5703, %v5706, %v5708
      %v5710 = vsel %vm5702, %v5689, %v5692
      %v5711 = vsel %vm5705, %v5698, 920167782
      %v5712 = vsel %vm5704, %v5695, %v5711
      %v5713 = vsel %vm5703, %v5710, %v5712
      %v5714 = vsel %vm5702, %v5692, %v5695
      %v5715 = vsel %vm5705, %v5701, 1326507024
      %v5716 = vsel %vm5704, %v5698, %v5715
      %v5717 = vsel %vm5703, %v5714, %v5716
      %v5718 = vshll.u32 %v5678, 8
      %v5719 = vmul.u32.u64.compose %v5718, %v5717
      %v5720 = vextract.low.u32 %v5719
      %v5721 = vextract.high.u32 %v5719
      %v5722 = vmul.u32.u64.compose %v5718, %v5713
      %v5723 = vextract.low.u32 %v5722
      %v5724 = vextract.high.u32 %v5722
      %v5725 = vmul.u32 %v5718, %v5709
      %v5726 = vadd.s32 %v5721, %v5723
      %vm5727 = vc.u32 %v5721, %v5723
      %v5728 = vadd.s32 %v5724, 1
      %v5729 = vsel %vm5727, %v5728, %v5724
      %v5730 = vadd.s32 %v5725, %v5729
      %v5731 = vadd.s32 %v5730, 536870912
      %v5732 = vshrl.u32 %v5731, 30
      %v5733 = vshll.u32 %v5732, 30
      %v5734 = vsub.s32 %v5730, %v5733
      %vm5735 = vcmp.lt.s32.totalorder %v5734, 0
      %v5736 = vsub.s32 0, %v5734
      %v5737 = vsel %vm5735, %v5736, %v5734
      %v5738 = vclz %v5737
      %v5739 = vsub.s32 %v5738, 2
      %vm5740 = vcmp.gt.s32.totalorder 0, %v5739
      %v5741 = vsel %vm5740, 0, %v5739
      %v5742 = vsub.s32 32, %v5741
      %v5743 = vshll.u32 %v5734, %v5741
      %v5744 = vshrl.u32 %v5726, %v5742
      %v5745 = vor.u32 %v5743, %v5744
      %v5746 = vsub.s32 4294967266, %v5741
      %v5747 = vadd.s32 %v5746, 127
      %v5748 = vshll.u32 %v5747, 23
      %v5749 = vor.u32 4788187, %v5748
      %v5750 = vand.u32 2147483647, %v5749
      %v5752 = vcvt.s32.f32 %v5745
      %v5753 = vmul.f32 %v5752, %v5750
      %v5754 = vxor.u32 %v5753, 2147483648
      %v5755 = vsel %vm5672, %v5754, %v5753
      %v5756 = vsub.s32 4, %v5732
      %v5757 = vsel %vm5672, %v5756, %v5732
      %v5758 = vsel %vm5671, %v1420, %v5755
      %v5759 = vsel %vm5671, 0, %v5757
      %v5760 = vcosq.f32.pop %v5758
      %v5761 = vsinq.f32.pop %v5758
      %vm5762 = vweird.f32 %v1420
      %v5763 = vadd.s32 %v5759, 3
      %v5764 = vand.u32 %v5763, 3
      %vm5765 = vcmp.lt.s32.totalorder %v5764, 2
      %vm5766 = vcmp.eq.s32.totalorder %v5764, 0
      %v5767 = vxor.u32 %v5761, 2147483648
      %v5768 = vsel %vm5766, %v5760, %v5767
      %vm5769 = vcmp.eq.s32.totalorder %v5764, 2
      %v5770 = vxor.u32 %v5760, 2147483648
      %v5771 = vsel %vm5769, %v5770, %v5761
      %v5772 = vsel %vm5765, %v5768, %v5771
      %v5773 = vsel %vm5762, nan, %v5772
      %v5774 = vand.u32 2147483647, %v1422
      %vm5775 = vcmp.le.f32.partialorder %v5774, 0.7853982
      %vm5776 = vcmp.lt.s32.totalorder %v1422, 0
      %v5777 = vand.u32 %v1422, 2139095040
      %v5778 = vshrl.u32 %v5777, 23
      %v5779 = vsub.s32 %v5778, 127
      %v5780 = vand.u32 2147483647, %v1422
      %v5781 = vand.u32 %v5780, 8388607
      %v5782 = vor.u32 %v5781, 8388608
      %v5783 = vsub.s32 0, %v5782
      %v5784 = vadd.s32 %v5779, 1
      %vm5785 = vcmp.gt.s32.totalorder %v5784, 0
      %v5786 = vsel %vm5785, %v5784, 0
      %v5787 = vshrl.u32 %v5786, 5
      %v5788 = vand.u32 %v5786, 31
      %v5789 = vsub.s32 32, %v5788
      %v5790 = vshrl.u32 683565275, %v5789
      %v5791 = vshll.u32 683565275, %v5788
      %v5792 = vshrl.u32 2475754826, %v5789
      %v5793 = vor.u32 %v5791, %v5792
      %v5794 = vshll.u32 2475754826, %v5788
      %v5795 = vshrl.u32 2131351028, %v5789
      %v5796 = vor.u32 %v5794, %v5795
      %v5797 = vshll.u32 2131351028, %v5788
      %v5798 = vshrl.u32 2102212464, %v5789
      %v5799 = vor.u32 %v5797, %v5798
      %v5800 = vshll.u32 2102212464, %v5788
      %v5801 = vshrl.u32 920167782, %v5789
      %v5802 = vor.u32 %v5800, %v5801
      %v5803 = vshll.u32 920167782, %v5788
      %v5804 = vshrl.u32 1326507024, %v5789
      %v5805 = vor.u32 %v5803, %v5804
      %vm5806 = vcmp.lt.s32.totalorder %v5787, 1
      %vm5807 = vcmp.lt.s32.totalorder %v5787, 2
      %vm5808 = vcmp.lt.s32.totalorder %v5787, 3
      %vm5809 = vcmp.lt.s32.totalorder %v5787, 4
      %v5810 = vsel %vm5806, %v5790, %v5793
      %v5811 = vsel %vm5809, %v5799, 2102212464
      %v5812 = vsel %vm5808, %v5796, %v5811
      %v5813 = vsel %vm5807, %v5810, %v5812
      %v5814 = vsel %vm5806, %v5793, %v5796
      %v5815 = vsel %vm5809, %v5802, 920167782
      %v5816 = vsel %vm5808, %v5799, %v5815
      %v5817 = vsel %vm5807, %v5814, %v5816
      %v5818 = vsel %vm5806, %v5796, %v5799
      %v5819 = vsel %vm5809, %v5805, 1326507024
      %v5820 = vsel %vm5808, %v5802, %v5819
      %v5821 = vsel %vm5807, %v5818, %v5820
      %v5822 = vshll.u32 %v5782, 8
      %v5823 = vmul.u32.u64.compose %v5822, %v5821
      %v5824 = vextract.low.u32 %v5823
      %v5825 = vextract.high.u32 %v5823
      %v5826 = vmul.u32.u64.compose %v5822, %v5817
      %v5827 = vextract.low.u32 %v5826
      %v5828 = vextract.high.u32 %v5826
      %v5829 = vmul.u32 %v5822, %v5813
      %v5830 = vadd.s32 %v5825, %v5827
      %vm5831 = vc.u32 %v5825, %v5827
      %v5832 = vadd.s32 %v5828, 1
      %v5833 = vsel %vm5831, %v5832, %v5828
      %v5834 = vadd.s32 %v5829, %v5833
      %v5835 = vadd.s32 %v5834, 536870912
      %v5836 = vshrl.u32 %v5835, 30
      %v5837 = vshll.u32 %v5836, 30
      %v5838 = vsub.s32 %v5834, %v5837
      %vm5839 = vcmp.lt.s32.totalorder %v5838, 0
      %v5840 = vsub.s32 0, %v5838
      %v5841 = vsel %vm5839, %v5840, %v5838
      %v5842 = vclz %v5841
      %v5843 = vsub.s32 %v5842, 2
      %vm5844 = vcmp.gt.s32.totalorder 0, %v5843
      %v5845 = vsel %vm5844, 0, %v5843
      %v5846 = vsub.s32 32, %v5845
      %v5847 = vshll.u32 %v5838, %v5845
      %v5848 = vshrl.u32 %v5830, %v5846
      %v5849 = vor.u32 %v5847, %v5848
      %v5850 = vsub.s32 4294967266, %v5845
      %v5851 = vadd.s32 %v5850, 127
      %v5852 = vshll.u32 %v5851, 23
      %v5853 = vor.u32 4788187, %v5852
      %v5854 = vand.u32 2147483647, %v5853
      %v5856 = vcvt.s32.f32 %v5849
      %v5857 = vmul.f32 %v5856, %v5854
      %v5858 = vxor.u32 %v5857, 2147483648
      %v5859 = vsel %vm5776, %v5858, %v5857
      %v5860 = vsub.s32 4, %v5836
      %v5861 = vsel %vm5776, %v5860, %v5836
      %v5862 = vsel %vm5775, %v1422, %v5859
      %v5863 = vsel %vm5775, 0, %v5861
      %v5864 = vcosq.f32.pop %v5862
      %v5865 = vsinq.f32.pop %v5862
      %vm5866 = vweird.f32 %v1422
      %v5867 = vadd.s32 %v5863, 3
      %v5868 = vand.u32 %v5867, 3
      %vm5869 = vcmp.lt.s32.totalorder %v5868, 2
      %vm5870 = vcmp.eq.s32.totalorder %v5868, 0
      %v5871 = vxor.u32 %v5865, 2147483648
      %v5872 = vsel %vm5870, %v5864, %v5871
      %vm5873 = vcmp.eq.s32.totalorder %v5868, 2
      %v5874 = vxor.u32 %v5864, 2147483648
      %v5875 = vsel %vm5873, %v5874, %v5865
      %v5876 = vsel %vm5869, %v5872, %v5875
      %v5877 = vsel %vm5866, nan, %v5876
      %v5878 = vand.u32 2147483647, %v2517
      %vm5879 = vcmp.le.f32.partialorder %v5878, 0.7853982
      %vm5880 = vcmp.lt.s32.totalorder %v2517, 0
      %v5881 = vand.u32 %v2517, 2139095040
      %v5882 = vshrl.u32 %v5881, 23
      %v5883 = vsub.s32 %v5882, 127
      %v5884 = vand.u32 2147483647, %v2517
      %v5885 = vand.u32 %v5884, 8388607
      %v5886 = vor.u32 %v5885, 8388608
      %v5887 = vsub.s32 0, %v5886
      %v5888 = vadd.s32 %v5883, 1
      %vm5889 = vcmp.gt.s32.totalorder %v5888, 0
      %v5890 = vsel %vm5889, %v5888, 0
      %v5891 = vshrl.u32 %v5890, 5
      %v5892 = vand.u32 %v5890, 31
      %v5893 = vsub.s32 32, %v5892
      %v5894 = vshrl.u32 683565275, %v5893
      %v5895 = vshll.u32 683565275, %v5892
      %v5896 = vshrl.u32 2475754826, %v5893
      %v5897 = vor.u32 %v5895, %v5896
      %v5898 = vshll.u32 2475754826, %v5892
      %v5899 = vshrl.u32 2131351028, %v5893
      %v5900 = vor.u32 %v5898, %v5899
      %v5901 = vshll.u32 2131351028, %v5892
      %v5902 = vshrl.u32 2102212464, %v5893
      %v5903 = vor.u32 %v5901, %v5902
      %v5904 = vshll.u32 2102212464, %v5892
      %v5905 = vshrl.u32 920167782, %v5893
      %v5906 = vor.u32 %v5904, %v5905
      %v5907 = vshll.u32 920167782, %v5892
      %v5908 = vshrl.u32 1326507024, %v5893
      %v5909 = vor.u32 %v5907, %v5908
      %vm5910 = vcmp.lt.s32.totalorder %v5891, 1
      %vm5911 = vcmp.lt.s32.totalorder %v5891, 2
      %vm5912 = vcmp.lt.s32.totalorder %v5891, 3
      %vm5913 = vcmp.lt.s32.totalorder %v5891, 4
      %v5914 = vsel %vm5910, %v5894, %v5897
      %v5915 = vsel %vm5913, %v5903, 2102212464
      %v5916 = vsel %vm5912, %v5900, %v5915
      %v5917 = vsel %vm5911, %v5914, %v5916
      %v5918 = vsel %vm5910, %v5897, %v5900
      %v5919 = vsel %vm5913, %v5906, 920167782
      %v5920 = vsel %vm5912, %v5903, %v5919
      %v5921 = vsel %vm5911, %v5918, %v5920
      %v5922 = vsel %vm5910, %v5900, %v5903
      %v5923 = vsel %vm5913, %v5909, 1326507024
      %v5924 = vsel %vm5912, %v5906, %v5923
      %v5925 = vsel %vm5911, %v5922, %v5924
      %v5926 = vshll.u32 %v5886, 8
      %v5927 = vmul.u32.u64.compose %v5926, %v5925
      %v5928 = vextract.low.u32 %v5927
      %v5929 = vextract.high.u32 %v5927
      %v5930 = vmul.u32.u64.compose %v5926, %v5921
      %v5931 = vextract.low.u32 %v5930
      %v5932 = vextract.high.u32 %v5930
      %v5933 = vmul.u32 %v5926, %v5917
      %v5934 = vadd.s32 %v5929, %v5931
      %vm5935 = vc.u32 %v5929, %v5931
      %v5936 = vadd.s32 %v5932, 1
      %v5937 = vsel %vm5935, %v5936, %v5932
      %v5938 = vadd.s32 %v5933, %v5937
      %v5939 = vadd.s32 %v5938, 536870912
      %v5940 = vshrl.u32 %v5939, 30
      %v5941 = vshll.u32 %v5940, 30
      %v5942 = vsub.s32 %v5938, %v5941
      %vm5943 = vcmp.lt.s32.totalorder %v5942, 0
      %v5944 = vsub.s32 0, %v5942
      %v5945 = vsel %vm5943, %v5944, %v5942
      %v5946 = vclz %v5945
      %v5947 = vsub.s32 %v5946, 2
      %vm5948 = vcmp.gt.s32.totalorder 0, %v5947
      %v5949 = vsel %vm5948, 0, %v5947
      %v5950 = vsub.s32 32, %v5949
      %v5951 = vshll.u32 %v5942, %v5949
      %v5952 = vshrl.u32 %v5934, %v5950
      %v5953 = vor.u32 %v5951, %v5952
      %v5954 = vsub.s32 4294967266, %v5949
      %v5955 = vadd.s32 %v5954, 127
      %v5956 = vshll.u32 %v5955, 23
      %v5957 = vor.u32 4788187, %v5956
      %v5958 = vand.u32 2147483647, %v5957
      %v5960 = vcvt.s32.f32 %v5953
      %v5961 = vmul.f32 %v5960, %v5958
      %v5962 = vxor.u32 %v5961, 2147483648
      %v5963 = vsel %vm5880, %v5962, %v5961
      %v5964 = vsub.s32 4, %v5940
      %v5965 = vsel %vm5880, %v5964, %v5940
      %v5966 = vsel %vm5879, %v2517, %v5963
      %v5967 = vsel %vm5879, 0, %v5965
      %v5968 = vcosq.f32.pop %v5966
      %v5969 = vsinq.f32.pop %v5966
      %vm5970 = vweird.f32 %v2517
      %v5971 = vadd.s32 %v5967, 3
      %v5972 = vand.u32 %v5971, 3
      %vm5973 = vcmp.lt.s32.totalorder %v5972, 2
      %vm5974 = vcmp.eq.s32.totalorder %v5972, 0
      %v5975 = vxor.u32 %v5969, 2147483648
      %v5976 = vsel %vm5974, %v5968, %v5975
      %vm5977 = vcmp.eq.s32.totalorder %v5972, 2
      %v5978 = vxor.u32 %v5968, 2147483648
      %v5979 = vsel %vm5977, %v5978, %v5969
      %v5980 = vsel %vm5973, %v5976, %v5979
      %v5981 = vsel %vm5970, nan, %v5980
      %v5982 = vand.u32 2147483647, %v1427
      %vm5983 = vcmp.le.f32.partialorder %v5982, 0.7853982
      %vm5984 = vcmp.lt.s32.totalorder %v1427, 0
      %v5985 = vand.u32 %v1427, 2139095040
      %v5986 = vshrl.u32 %v5985, 23
      %v5987 = vsub.s32 %v5986, 127
      %v5988 = vand.u32 2147483647, %v1427
      %v5989 = vand.u32 %v5988, 8388607
      %v5990 = vor.u32 %v5989, 8388608
      %v5991 = vsub.s32 0, %v5990
      %v5992 = vadd.s32 %v5987, 1
      %vm5993 = vcmp.gt.s32.totalorder %v5992, 0
      %v5994 = vsel %vm5993, %v5992, 0
      %v5995 = vshrl.u32 %v5994, 5
      %v5996 = vand.u32 %v5994, 31
      %v5997 = vsub.s32 32, %v5996
      %v5998 = vshrl.u32 683565275, %v5997
      %v5999 = vshll.u32 683565275, %v5996
      %v6000 = vshrl.u32 2475754826, %v5997
      %v6001 = vor.u32 %v5999, %v6000
      %v6002 = vshll.u32 2475754826, %v5996
      %v6003 = vshrl.u32 2131351028, %v5997
      %v6004 = vor.u32 %v6002, %v6003
      %v6005 = vshll.u32 2131351028, %v5996
      %v6006 = vshrl.u32 2102212464, %v5997
      %v6007 = vor.u32 %v6005, %v6006
      %v6008 = vshll.u32 2102212464, %v5996
      %v6009 = vshrl.u32 920167782, %v5997
      %v6010 = vor.u32 %v6008, %v6009
      %v6011 = vshll.u32 920167782, %v5996
      %v6012 = vshrl.u32 1326507024, %v5997
      %v6013 = vor.u32 %v6011, %v6012
      %vm6014 = vcmp.lt.s32.totalorder %v5995, 1
      %vm6015 = vcmp.lt.s32.totalorder %v5995, 2
      %vm6016 = vcmp.lt.s32.totalorder %v5995, 3
      %vm6017 = vcmp.lt.s32.totalorder %v5995, 4
      %v6018 = vsel %vm6014, %v5998, %v6001
      %v6019 = vsel %vm6017, %v6007, 2102212464
      %v6020 = vsel %vm6016, %v6004, %v6019
      %v6021 = vsel %vm6015, %v6018, %v6020
      %v6022 = vsel %vm6014, %v6001, %v6004
      %v6023 = vsel %vm6017, %v6010, 920167782
      %v6024 = vsel %vm6016, %v6007, %v6023
      %v6025 = vsel %vm6015, %v6022, %v6024
      %v6026 = vsel %vm6014, %v6004, %v6007
      %v6027 = vsel %vm6017, %v6013, 1326507024
      %v6028 = vsel %vm6016, %v6010, %v6027
      %v6029 = vsel %vm6015, %v6026, %v6028
      %v6030 = vshll.u32 %v5990, 8
      %v6031 = vmul.u32.u64.compose %v6030, %v6029
      %v6032 = vextract.low.u32 %v6031
      %v6033 = vextract.high.u32 %v6031
      %v6034 = vmul.u32.u64.compose %v6030, %v6025
      %v6035 = vextract.low.u32 %v6034
      %v6036 = vextract.high.u32 %v6034
      %v6037 = vmul.u32 %v6030, %v6021
      %v6038 = vadd.s32 %v6033, %v6035
      %vm6039 = vc.u32 %v6033, %v6035
      %v6040 = vadd.s32 %v6036, 1
      %v6041 = vsel %vm6039, %v6040, %v6036
      %v6042 = vadd.s32 %v6037, %v6041
      %v6043 = vadd.s32 %v6042, 536870912
      %v6044 = vshrl.u32 %v6043, 30
      %v6045 = vshll.u32 %v6044, 30
      %v6046 = vsub.s32 %v6042, %v6045
      %vm6047 = vcmp.lt.s32.totalorder %v6046, 0
      %v6048 = vsub.s32 0, %v6046
      %v6049 = vsel %vm6047, %v6048, %v6046
      %v6050 = vclz %v6049
      %v6051 = vsub.s32 %v6050, 2
      %vm6052 = vcmp.gt.s32.totalorder 0, %v6051
      %v6053 = vsel %vm6052, 0, %v6051
      %v6054 = vsub.s32 32, %v6053
      %v6055 = vshll.u32 %v6046, %v6053
      %v6056 = vshrl.u32 %v6038, %v6054
      %v6057 = vor.u32 %v6055, %v6056
      %v6058 = vsub.s32 4294967266, %v6053
      %v6059 = vadd.s32 %v6058, 127
      %v6060 = vshll.u32 %v6059, 23
      %v6061 = vor.u32 4788187, %v6060
      %v6062 = vand.u32 2147483647, %v6061
      %v6064 = vcvt.s32.f32 %v6057
      %v6065 = vmul.f32 %v6064, %v6062
      %v6066 = vxor.u32 %v6065, 2147483648
      %v6067 = vsel %vm5984, %v6066, %v6065
      %v6068 = vsub.s32 4, %v6044
      %v6069 = vsel %vm5984, %v6068, %v6044
      %v6070 = vsel %vm5983, %v1427, %v6067
      %v6071 = vsel %vm5983, 0, %v6069
      %v6072 = vcosq.f32.pop %v6070
      %v6073 = vsinq.f32.pop %v6070
      %vm6074 = vweird.f32 %v1427
      %v6075 = vadd.s32 %v6071, 3
      %v6076 = vand.u32 %v6075, 3
      %vm6077 = vcmp.lt.s32.totalorder %v6076, 2
      %vm6078 = vcmp.eq.s32.totalorder %v6076, 0
      %v6079 = vxor.u32 %v6073, 2147483648
      %v6080 = vsel %vm6078, %v6072, %v6079
      %vm6081 = vcmp.eq.s32.totalorder %v6076, 2
      %v6082 = vxor.u32 %v6072, 2147483648
      %v6083 = vsel %vm6081, %v6082, %v6073
      %v6084 = vsel %vm6077, %v6080, %v6083
      %v6085 = vsel %vm6074, nan, %v6084
      %v6086 = vand.u32 2147483647, %v1429
      %vm6087 = vcmp.le.f32.partialorder %v6086, 0.7853982
      %vm6088 = vcmp.lt.s32.totalorder %v1429, 0
      %v6089 = vand.u32 %v1429, 2139095040
      %v6090 = vshrl.u32 %v6089, 23
      %v6091 = vsub.s32 %v6090, 127
      %v6092 = vand.u32 2147483647, %v1429
      %v6093 = vand.u32 %v6092, 8388607
      %v6094 = vor.u32 %v6093, 8388608
      %v6095 = vsub.s32 0, %v6094
      %v6096 = vadd.s32 %v6091, 1
      %vm6097 = vcmp.gt.s32.totalorder %v6096, 0
      %v6098 = vsel %vm6097, %v6096, 0
      %v6099 = vshrl.u32 %v6098, 5
      %v6100 = vand.u32 %v6098, 31
      %v6101 = vsub.s32 32, %v6100
      %v6102 = vshrl.u32 683565275, %v6101
      %v6103 = vshll.u32 683565275, %v6100
      %v6104 = vshrl.u32 2475754826, %v6101
      %v6105 = vor.u32 %v6103, %v6104
      %v6106 = vshll.u32 2475754826, %v6100
      %v6107 = vshrl.u32 2131351028, %v6101
      %v6108 = vor.u32 %v6106, %v6107
      %v6109 = vshll.u32 2131351028, %v6100
      %v6110 = vshrl.u32 2102212464, %v6101
      %v6111 = vor.u32 %v6109, %v6110
      %v6112 = vshll.u32 2102212464, %v6100
      %v6113 = vshrl.u32 920167782, %v6101
      %v6114 = vor.u32 %v6112, %v6113
      %v6115 = vshll.u32 920167782, %v6100
      %v6116 = vshrl.u32 1326507024, %v6101
      %v6117 = vor.u32 %v6115, %v6116
      %vm6118 = vcmp.lt.s32.totalorder %v6099, 1
      %vm6119 = vcmp.lt.s32.totalorder %v6099, 2
      %vm6120 = vcmp.lt.s32.totalorder %v6099, 3
      %vm6121 = vcmp.lt.s32.totalorder %v6099, 4
      %v6122 = vsel %vm6118, %v6102, %v6105
      %v6123 = vsel %vm6121, %v6111, 2102212464
      %v6124 = vsel %vm6120, %v6108, %v6123
      %v6125 = vsel %vm6119, %v6122, %v6124
      %v6126 = vsel %vm6118, %v6105, %v6108
      %v6127 = vsel %vm6121, %v6114, 920167782
      %v6128 = vsel %vm6120, %v6111, %v6127
      %v6129 = vsel %vm6119, %v6126, %v6128
      %v6130 = vsel %vm6118, %v6108, %v6111
      %v6131 = vsel %vm6121, %v6117, 1326507024
      %v6132 = vsel %vm6120, %v6114, %v6131
      %v6133 = vsel %vm6119, %v6130, %v6132
      %v6134 = vshll.u32 %v6094, 8
      %v6135 = vmul.u32.u64.compose %v6134, %v6133
      %v6136 = vextract.low.u32 %v6135
      %v6137 = vextract.high.u32 %v6135
      %v6138 = vmul.u32.u64.compose %v6134, %v6129
      %v6139 = vextract.low.u32 %v6138
      %v6140 = vextract.high.u32 %v6138
      %v6141 = vmul.u32 %v6134, %v6125
      %v6142 = vadd.s32 %v6137, %v6139
      %vm6143 = vc.u32 %v6137, %v6139
      %v6144 = vadd.s32 %v6140, 1
      %v6145 = vsel %vm6143, %v6144, %v6140
      %v6146 = vadd.s32 %v6141, %v6145
      %v6147 = vadd.s32 %v6146, 536870912
      %v6148 = vshrl.u32 %v6147, 30
      %v6149 = vshll.u32 %v6148, 30
      %v6150 = vsub.s32 %v6146, %v6149
      %vm6151 = vcmp.lt.s32.totalorder %v6150, 0
      %v6152 = vsub.s32 0, %v6150
      %v6153 = vsel %vm6151, %v6152, %v6150
      %v6154 = vclz %v6153
      %v6155 = vsub.s32 %v6154, 2
      %vm6156 = vcmp.gt.s32.totalorder 0, %v6155
      %v6157 = vsel %vm6156, 0, %v6155
      %v6158 = vsub.s32 32, %v6157
      %v6159 = vshll.u32 %v6150, %v6157
      %v6160 = vshrl.u32 %v6142, %v6158
      %v6161 = vor.u32 %v6159, %v6160
      %v6162 = vsub.s32 4294967266, %v6157
      %v6163 = vadd.s32 %v6162, 127
      %v6164 = vshll.u32 %v6163, 23
      %v6165 = vor.u32 4788187, %v6164
      %v6166 = vand.u32 2147483647, %v6165
      %v6168 = vcvt.s32.f32 %v6161
      %v6169 = vmul.f32 %v6168, %v6166
      %v6170 = vxor.u32 %v6169, 2147483648
      %v6171 = vsel %vm6088, %v6170, %v6169
      %v6172 = vsub.s32 4, %v6148
      %v6173 = vsel %vm6088, %v6172, %v6148
      %v6174 = vsel %vm6087, %v1429, %v6171
      %v6175 = vsel %vm6087, 0, %v6173
      %v6176 = vcosq.f32.pop %v6174
      %v6177 = vsinq.f32.pop %v6174
      %vm6178 = vweird.f32 %v1429
      %v6179 = vadd.s32 %v6175, 3
      %v6180 = vand.u32 %v6179, 3
      %vm6181 = vcmp.lt.s32.totalorder %v6180, 2
      %vm6182 = vcmp.eq.s32.totalorder %v6180, 0
      %v6183 = vxor.u32 %v6177, 2147483648
      %v6184 = vsel %vm6182, %v6176, %v6183
      %vm6185 = vcmp.eq.s32.totalorder %v6180, 2
      %v6186 = vxor.u32 %v6176, 2147483648
      %v6187 = vsel %vm6185, %v6186, %v6177
      %v6188 = vsel %vm6181, %v6184, %v6187
      %v6189 = vsel %vm6178, nan, %v6188
      %v6190 = vand.u32 2147483647, %v2523
      %vm6191 = vcmp.le.f32.partialorder %v6190, 0.7853982
      %vm6192 = vcmp.lt.s32.totalorder %v2523, 0
      %v6193 = vand.u32 %v2523, 2139095040
      %v6194 = vshrl.u32 %v6193, 23
      %v6195 = vsub.s32 %v6194, 127
      %v6196 = vand.u32 2147483647, %v2523
      %v6197 = vand.u32 %v6196, 8388607
      %v6198 = vor.u32 %v6197, 8388608
      %v6199 = vsub.s32 0, %v6198
      %v6200 = vadd.s32 %v6195, 1
      %vm6201 = vcmp.gt.s32.totalorder %v6200, 0
      %v6202 = vsel %vm6201, %v6200, 0
      %v6203 = vshrl.u32 %v6202, 5
      %v6204 = vand.u32 %v6202, 31
      %v6205 = vsub.s32 32, %v6204
      %v6206 = vshrl.u32 683565275, %v6205
      %v6207 = vshll.u32 683565275, %v6204
      %v6208 = vshrl.u32 2475754826, %v6205
      %v6209 = vor.u32 %v6207, %v6208
      %v6210 = vshll.u32 2475754826, %v6204
      %v6211 = vshrl.u32 2131351028, %v6205
      %v6212 = vor.u32 %v6210, %v6211
      %v6213 = vshll.u32 2131351028, %v6204
      %v6214 = vshrl.u32 2102212464, %v6205
      %v6215 = vor.u32 %v6213, %v6214
      %v6216 = vshll.u32 2102212464, %v6204
      %v6217 = vshrl.u32 920167782, %v6205
      %v6218 = vor.u32 %v6216, %v6217
      %v6219 = vshll.u32 920167782, %v6204
      %v6220 = vshrl.u32 1326507024, %v6205
      %v6221 = vor.u32 %v6219, %v6220
      %vm6222 = vcmp.lt.s32.totalorder %v6203, 1
      %vm6223 = vcmp.lt.s32.totalorder %v6203, 2
      %vm6224 = vcmp.lt.s32.totalorder %v6203, 3
      %vm6225 = vcmp.lt.s32.totalorder %v6203, 4
      %v6226 = vsel %vm6222, %v6206, %v6209
      %v6227 = vsel %vm6225, %v6215, 2102212464
      %v6228 = vsel %vm6224, %v6212, %v6227
      %v6229 = vsel %vm6223, %v6226, %v6228
      %v6230 = vsel %vm6222, %v6209, %v6212
      %v6231 = vsel %vm6225, %v6218, 920167782
      %v6232 = vsel %vm6224, %v6215, %v6231
      %v6233 = vsel %vm6223, %v6230, %v6232
      %v6234 = vsel %vm6222, %v6212, %v6215
      %v6235 = vsel %vm6225, %v6221, 1326507024
      %v6236 = vsel %vm6224, %v6218, %v6235
      %v6237 = vsel %vm6223, %v6234, %v6236
      %v6238 = vshll.u32 %v6198, 8
      %v6239 = vmul.u32.u64.compose %v6238, %v6237
      %v6240 = vextract.low.u32 %v6239
      %v6241 = vextract.high.u32 %v6239
      %v6242 = vmul.u32.u64.compose %v6238, %v6233
      %v6243 = vextract.low.u32 %v6242
      %v6244 = vextract.high.u32 %v6242
      %v6245 = vmul.u32 %v6238, %v6229
      %v6246 = vadd.s32 %v6241, %v6243
      %vm6247 = vc.u32 %v6241, %v6243
      %v6248 = vadd.s32 %v6244, 1
      %v6249 = vsel %vm6247, %v6248, %v6244
      %v6250 = vadd.s32 %v6245, %v6249
      %v6251 = vadd.s32 %v6250, 536870912
      %v6252 = vshrl.u32 %v6251, 30
      %v6253 = vshll.u32 %v6252, 30
      %v6254 = vsub.s32 %v6250, %v6253
      %vm6255 = vcmp.lt.s32.totalorder %v6254, 0
      %v6256 = vsub.s32 0, %v6254
      %v6257 = vsel %vm6255, %v6256, %v6254
      %v6258 = vclz %v6257
      %v6259 = vsub.s32 %v6258, 2
      %vm6260 = vcmp.gt.s32.totalorder 0, %v6259
      %v6261 = vsel %vm6260, 0, %v6259
      %v6262 = vsub.s32 32, %v6261
      %v6263 = vshll.u32 %v6254, %v6261
      %v6264 = vshrl.u32 %v6246, %v6262
      %v6265 = vor.u32 %v6263, %v6264
      %v6266 = vsub.s32 4294967266, %v6261
      %v6267 = vadd.s32 %v6266, 127
      %v6268 = vshll.u32 %v6267, 23
      %v6269 = vor.u32 4788187, %v6268
      %v6270 = vand.u32 2147483647, %v6269
      %v6272 = vcvt.s32.f32 %v6265
      %v6273 = vmul.f32 %v6272, %v6270
      %v6274 = vxor.u32 %v6273, 2147483648
      %v6275 = vsel %vm6192, %v6274, %v6273
      %v6276 = vsub.s32 4, %v6252
      %v6277 = vsel %vm6192, %v6276, %v6252
      %v6278 = vsel %vm6191, %v2523, %v6275
      %v6279 = vsel %vm6191, 0, %v6277
      %v6280 = vcosq.f32.pop %v6278
      %v6281 = vsinq.f32.pop %v6278
      %vm6282 = vweird.f32 %v2523
      %v6283 = vadd.s32 %v6279, 3
      %v6284 = vand.u32 %v6283, 3
      %vm6285 = vcmp.lt.s32.totalorder %v6284, 2
      %vm6286 = vcmp.eq.s32.totalorder %v6284, 0
      %v6287 = vxor.u32 %v6281, 2147483648
      %v6288 = vsel %vm6286, %v6280, %v6287
      %vm6289 = vcmp.eq.s32.totalorder %v6284, 2
      %v6290 = vxor.u32 %v6280, 2147483648
      %v6291 = vsel %vm6289, %v6290, %v6281
      %v6292 = vsel %vm6285, %v6288, %v6291
      %v6293 = vsel %vm6282, nan, %v6292
      %v6294 = vand.u32 2147483647, %v1434
      %vm6295 = vcmp.le.f32.partialorder %v6294, 0.7853982
      %vm6296 = vcmp.lt.s32.totalorder %v1434, 0
      %v6297 = vand.u32 %v1434, 2139095040
      %v6298 = vshrl.u32 %v6297, 23
      %v6299 = vsub.s32 %v6298, 127
      %v6300 = vand.u32 2147483647, %v1434
      %v6301 = vand.u32 %v6300, 8388607
      %v6302 = vor.u32 %v6301, 8388608
      %v6303 = vsub.s32 0, %v6302
      %v6304 = vadd.s32 %v6299, 1
      %vm6305 = vcmp.gt.s32.totalorder %v6304, 0
      %v6306 = vsel %vm6305, %v6304, 0
      %v6307 = vshrl.u32 %v6306, 5
      %v6308 = vand.u32 %v6306, 31
      %v6309 = vsub.s32 32, %v6308
      %v6310 = vshrl.u32 683565275, %v6309
      %v6311 = vshll.u32 683565275, %v6308
      %v6312 = vshrl.u32 2475754826, %v6309
      %v6313 = vor.u32 %v6311, %v6312
      %v6314 = vshll.u32 2475754826, %v6308
      %v6315 = vshrl.u32 2131351028, %v6309
      %v6316 = vor.u32 %v6314, %v6315
      %v6317 = vshll.u32 2131351028, %v6308
      %v6318 = vshrl.u32 2102212464, %v6309
      %v6319 = vor.u32 %v6317, %v6318
      %v6320 = vshll.u32 2102212464, %v6308
      %v6321 = vshrl.u32 920167782, %v6309
      %v6322 = vor.u32 %v6320, %v6321
      %v6323 = vshll.u32 920167782, %v6308
      %v6324 = vshrl.u32 1326507024, %v6309
      %v6325 = vor.u32 %v6323, %v6324
      %vm6326 = vcmp.lt.s32.totalorder %v6307, 1
      %vm6327 = vcmp.lt.s32.totalorder %v6307, 2
      %vm6328 = vcmp.lt.s32.totalorder %v6307, 3
      %vm6329 = vcmp.lt.s32.totalorder %v6307, 4
      %v6330 = vsel %vm6326, %v6310, %v6313
      %v6331 = vsel %vm6329, %v6319, 2102212464
      %v6332 = vsel %vm6328, %v6316, %v6331
      %v6333 = vsel %vm6327, %v6330, %v6332
      %v6334 = vsel %vm6326, %v6313, %v6316
      %v6335 = vsel %vm6329, %v6322, 920167782
      %v6336 = vsel %vm6328, %v6319, %v6335
      %v6337 = vsel %vm6327, %v6334, %v6336
      %v6338 = vsel %vm6326, %v6316, %v6319
      %v6339 = vsel %vm6329, %v6325, 1326507024
      %v6340 = vsel %vm6328, %v6322, %v6339
      %v6341 = vsel %vm6327, %v6338, %v6340
      %v6342 = vshll.u32 %v6302, 8
      %v6343 = vmul.u32.u64.compose %v6342, %v6341
      %v6344 = vextract.low.u32 %v6343
      %v6345 = vextract.high.u32 %v6343
      %v6346 = vmul.u32.u64.compose %v6342, %v6337
      %v6347 = vextract.low.u32 %v6346
      %v6348 = vextract.high.u32 %v6346
      %v6349 = vmul.u32 %v6342, %v6333
      %v6350 = vadd.s32 %v6345, %v6347
      %vm6351 = vc.u32 %v6345, %v6347
      %v6352 = vadd.s32 %v6348, 1
      %v6353 = vsel %vm6351, %v6352, %v6348
      %v6354 = vadd.s32 %v6349, %v6353
      %v6355 = vadd.s32 %v6354, 536870912
      %v6356 = vshrl.u32 %v6355, 30
      %v6357 = vshll.u32 %v6356, 30
      %v6358 = vsub.s32 %v6354, %v6357
      %vm6359 = vcmp.lt.s32.totalorder %v6358, 0
      %v6360 = vsub.s32 0, %v6358
      %v6361 = vsel %vm6359, %v6360, %v6358
      %v6362 = vclz %v6361
      %v6363 = vsub.s32 %v6362, 2
      %vm6364 = vcmp.gt.s32.totalorder 0, %v6363
      %v6365 = vsel %vm6364, 0, %v6363
      %v6366 = vsub.s32 32, %v6365
      %v6367 = vshll.u32 %v6358, %v6365
      %v6368 = vshrl.u32 %v6350, %v6366
      %v6369 = vor.u32 %v6367, %v6368
      %v6370 = vsub.s32 4294967266, %v6365
      %v6371 = vadd.s32 %v6370, 127
      %v6372 = vshll.u32 %v6371, 23
      %v6373 = vor.u32 4788187, %v6372
      %v6374 = vand.u32 2147483647, %v6373
      %v6376 = vcvt.s32.f32 %v6369
      %v6377 = vmul.f32 %v6376, %v6374
      %v6378 = vxor.u32 %v6377, 2147483648
      %v6379 = vsel %vm6296, %v6378, %v6377
      %v6380 = vsub.s32 4, %v6356
      %v6381 = vsel %vm6296, %v6380, %v6356
      %v6382 = vsel %vm6295, %v1434, %v6379
      %v6383 = vsel %vm6295, 0, %v6381
      %v6384 = vcosq.f32.pop %v6382
      %v6385 = vsinq.f32.pop %v6382
      %vm6386 = vweird.f32 %v1434
      %v6387 = vadd.s32 %v6383, 3
      %v6388 = vand.u32 %v6387, 3
      %vm6389 = vcmp.lt.s32.totalorder %v6388, 2
      %vm6390 = vcmp.eq.s32.totalorder %v6388, 0
      %v6391 = vxor.u32 %v6385, 2147483648
      %v6392 = vsel %vm6390, %v6384, %v6391
      %vm6393 = vcmp.eq.s32.totalorder %v6388, 2
      %v6394 = vxor.u32 %v6384, 2147483648
      %v6395 = vsel %vm6393, %v6394, %v6385
      %v6396 = vsel %vm6389, %v6392, %v6395
      %v6397 = vsel %vm6386, nan, %v6396
      %v6398 = vand.u32 2147483647, %v1436
      %vm6399 = vcmp.le.f32.partialorder %v6398, 0.7853982
      %vm6400 = vcmp.lt.s32.totalorder %v1436, 0
      %v6401 = vand.u32 %v1436, 2139095040
      %v6402 = vshrl.u32 %v6401, 23
      %v6403 = vsub.s32 %v6402, 127
      %v6404 = vand.u32 2147483647, %v1436
      %v6405 = vand.u32 %v6404, 8388607
      %v6406 = vor.u32 %v6405, 8388608
      %v6407 = vsub.s32 0, %v6406
      %v6408 = vadd.s32 %v6403, 1
      %vm6409 = vcmp.gt.s32.totalorder %v6408, 0
      %v6410 = vsel %vm6409, %v6408, 0
      %v6411 = vshrl.u32 %v6410, 5
      %v6412 = vand.u32 %v6410, 31
      %v6413 = vsub.s32 32, %v6412
      %v6414 = vshrl.u32 683565275, %v6413
      %v6415 = vshll.u32 683565275, %v6412
      %v6416 = vshrl.u32 2475754826, %v6413
      %v6417 = vor.u32 %v6415, %v6416
      %v6418 = vshll.u32 2475754826, %v6412
      %v6419 = vshrl.u32 2131351028, %v6413
      %v6420 = vor.u32 %v6418, %v6419
      %v6421 = vshll.u32 2131351028, %v6412
      %v6422 = vshrl.u32 2102212464, %v6413
      %v6423 = vor.u32 %v6421, %v6422
      %v6424 = vshll.u32 2102212464, %v6412
      %v6425 = vshrl.u32 920167782, %v6413
      %v6426 = vor.u32 %v6424, %v6425
      %v6427 = vshll.u32 920167782, %v6412
      %v6428 = vshrl.u32 1326507024, %v6413
      %v6429 = vor.u32 %v6427, %v6428
      %vm6430 = vcmp.lt.s32.totalorder %v6411, 1
      %vm6431 = vcmp.lt.s32.totalorder %v6411, 2
      %vm6432 = vcmp.lt.s32.totalorder %v6411, 3
      %vm6433 = vcmp.lt.s32.totalorder %v6411, 4
      %v6434 = vsel %vm6430, %v6414, %v6417
      %v6435 = vsel %vm6433, %v6423, 2102212464
      %v6436 = vsel %vm6432, %v6420, %v6435
      %v6437 = vsel %vm6431, %v6434, %v6436
      %v6438 = vsel %vm6430, %v6417, %v6420
      %v6439 = vsel %vm6433, %v6426, 920167782
      %v6440 = vsel %vm6432, %v6423, %v6439
      %v6441 = vsel %vm6431, %v6438, %v6440
      %v6442 = vsel %vm6430, %v6420, %v6423
      %v6443 = vsel %vm6433, %v6429, 1326507024
      %v6444 = vsel %vm6432, %v6426, %v6443
      %v6445 = vsel %vm6431, %v6442, %v6444
      %v6446 = vshll.u32 %v6406, 8
      %v6447 = vmul.u32.u64.compose %v6446, %v6445
      %v6448 = vextract.low.u32 %v6447
      %v6449 = vextract.high.u32 %v6447
      %v6450 = vmul.u32.u64.compose %v6446, %v6441
      %v6451 = vextract.low.u32 %v6450
      %v6452 = vextract.high.u32 %v6450
      %v6453 = vmul.u32 %v6446, %v6437
      %v6454 = vadd.s32 %v6449, %v6451
      %vm6455 = vc.u32 %v6449, %v6451
      %v6456 = vadd.s32 %v6452, 1
      %v6457 = vsel %vm6455, %v6456, %v6452
      %v6458 = vadd.s32 %v6453, %v6457
      %v6459 = vadd.s32 %v6458, 536870912
      %v6460 = vshrl.u32 %v6459, 30
      %v6461 = vshll.u32 %v6460, 30
      %v6462 = vsub.s32 %v6458, %v6461
      %vm6463 = vcmp.lt.s32.totalorder %v6462, 0
      %v6464 = vsub.s32 0, %v6462
      %v6465 = vsel %vm6463, %v6464, %v6462
      %v6466 = vclz %v6465
      %v6467 = vsub.s32 %v6466, 2
      %vm6468 = vcmp.gt.s32.totalorder 0, %v6467
      %v6469 = vsel %vm6468, 0, %v6467
      %v6470 = vsub.s32 32, %v6469
      %v6471 = vshll.u32 %v6462, %v6469
      %v6472 = vshrl.u32 %v6454, %v6470
      %v6473 = vor.u32 %v6471, %v6472
      %v6474 = vsub.s32 4294967266, %v6469
      %v6475 = vadd.s32 %v6474, 127
      %v6476 = vshll.u32 %v6475, 23
      %v6477 = vor.u32 4788187, %v6476
      %v6478 = vand.u32 2147483647, %v6477
      %v6480 = vcvt.s32.f32 %v6473
      %v6481 = vmul.f32 %v6480, %v6478
      %v6482 = vxor.u32 %v6481, 2147483648
      %v6483 = vsel %vm6400, %v6482, %v6481
      %v6484 = vsub.s32 4, %v6460
      %v6485 = vsel %vm6400, %v6484, %v6460
      %v6486 = vsel %vm6399, %v1436, %v6483
      %v6487 = vsel %vm6399, 0, %v6485
      %v6488 = vcosq.f32.pop %v6486
      %v6489 = vsinq.f32.pop %v6486
      %vm6490 = vweird.f32 %v1436
      %v6491 = vadd.s32 %v6487, 3
      %v6492 = vand.u32 %v6491, 3
      %vm6493 = vcmp.lt.s32.totalorder %v6492, 2
      %vm6494 = vcmp.eq.s32.totalorder %v6492, 0
      %v6495 = vxor.u32 %v6489, 2147483648
      %v6496 = vsel %vm6494, %v6488, %v6495
      %vm6497 = vcmp.eq.s32.totalorder %v6492, 2
      %v6498 = vxor.u32 %v6488, 2147483648
      %v6499 = vsel %vm6497, %v6498, %v6489
      %v6500 = vsel %vm6493, %v6496, %v6499
      %v6501 = vsel %vm6490, nan, %v6500
      %v6502 = vand.u32 2147483647, %v2529
      %vm6503 = vcmp.le.f32.partialorder %v6502, 0.7853982
      %vm6504 = vcmp.lt.s32.totalorder %v2529, 0
      %v6505 = vand.u32 %v2529, 2139095040
      %v6506 = vshrl.u32 %v6505, 23
      %v6507 = vsub.s32 %v6506, 127
      %v6508 = vand.u32 2147483647, %v2529
      %v6509 = vand.u32 %v6508, 8388607
      %v6510 = vor.u32 %v6509, 8388608
      %v6511 = vsub.s32 0, %v6510
      %v6512 = vadd.s32 %v6507, 1
      %vm6513 = vcmp.gt.s32.totalorder %v6512, 0
      %v6514 = vsel %vm6513, %v6512, 0
      %v6515 = vshrl.u32 %v6514, 5
      %v6516 = vand.u32 %v6514, 31
      %v6517 = vsub.s32 32, %v6516
      %v6518 = vshrl.u32 683565275, %v6517
      %v6519 = vshll.u32 683565275, %v6516
      %v6520 = vshrl.u32 2475754826, %v6517
      %v6521 = vor.u32 %v6519, %v6520
      %v6522 = vshll.u32 2475754826, %v6516
      %v6523 = vshrl.u32 2131351028, %v6517
      %v6524 = vor.u32 %v6522, %v6523
      %v6525 = vshll.u32 2131351028, %v6516
      %v6526 = vshrl.u32 2102212464, %v6517
      %v6527 = vor.u32 %v6525, %v6526
      %v6528 = vshll.u32 2102212464, %v6516
      %v6529 = vshrl.u32 920167782, %v6517
      %v6530 = vor.u32 %v6528, %v6529
      %v6531 = vshll.u32 920167782, %v6516
      %v6532 = vshrl.u32 1326507024, %v6517
      %v6533 = vor.u32 %v6531, %v6532
      %vm6534 = vcmp.lt.s32.totalorder %v6515, 1
      %vm6535 = vcmp.lt.s32.totalorder %v6515, 2
      %vm6536 = vcmp.lt.s32.totalorder %v6515, 3
      %vm6537 = vcmp.lt.s32.totalorder %v6515, 4
      %v6538 = vsel %vm6534, %v6518, %v6521
      %v6539 = vsel %vm6537, %v6527, 2102212464
      %v6540 = vsel %vm6536, %v6524, %v6539
      %v6541 = vsel %vm6535, %v6538, %v6540
      %v6542 = vsel %vm6534, %v6521, %v6524
      %v6543 = vsel %vm6537, %v6530, 920167782
      %v6544 = vsel %vm6536, %v6527, %v6543
      %v6545 = vsel %vm6535, %v6542, %v6544
      %v6546 = vsel %vm6534, %v6524, %v6527
      %v6547 = vsel %vm6537, %v6533, 1326507024
      %v6548 = vsel %vm6536, %v6530, %v6547
      %v6549 = vsel %vm6535, %v6546, %v6548
      %v6550 = vshll.u32 %v6510, 8
      %v6551 = vmul.u32.u64.compose %v6550, %v6549
      %v6552 = vextract.low.u32 %v6551
      %v6553 = vextract.high.u32 %v6551
      %v6554 = vmul.u32.u64.compose %v6550, %v6545
      %v6555 = vextract.low.u32 %v6554
      %v6556 = vextract.high.u32 %v6554
      %v6557 = vmul.u32 %v6550, %v6541
      %v6558 = vadd.s32 %v6553, %v6555
      %vm6559 = vc.u32 %v6553, %v6555
      %v6560 = vadd.s32 %v6556, 1
      %v6561 = vsel %vm6559, %v6560, %v6556
      %v6562 = vadd.s32 %v6557, %v6561
      %v6563 = vadd.s32 %v6562, 536870912
      %v6564 = vshrl.u32 %v6563, 30
      %v6565 = vshll.u32 %v6564, 30
      %v6566 = vsub.s32 %v6562, %v6565
      %vm6567 = vcmp.lt.s32.totalorder %v6566, 0
      %v6568 = vsub.s32 0, %v6566
      %v6569 = vsel %vm6567, %v6568, %v6566
      %v6570 = vclz %v6569
      %v6571 = vsub.s32 %v6570, 2
      %vm6572 = vcmp.gt.s32.totalorder 0, %v6571
      %v6573 = vsel %vm6572, 0, %v6571
      %v6574 = vsub.s32 32, %v6573
      %v6575 = vshll.u32 %v6566, %v6573
      %v6576 = vshrl.u32 %v6558, %v6574
      %v6577 = vor.u32 %v6575, %v6576
      %v6578 = vsub.s32 4294967266, %v6573
      %v6579 = vadd.s32 %v6578, 127
      %v6580 = vshll.u32 %v6579, 23
      %v6581 = vor.u32 4788187, %v6580
      %v6582 = vand.u32 2147483647, %v6581
      %v6584 = vcvt.s32.f32 %v6577
      %v6585 = vmul.f32 %v6584, %v6582
      %v6586 = vxor.u32 %v6585, 2147483648
      %v6587 = vsel %vm6504, %v6586, %v6585
      %v6588 = vsub.s32 4, %v6564
      %v6589 = vsel %vm6504, %v6588, %v6564
      %v6590 = vsel %vm6503, %v2529, %v6587
      %v6591 = vsel %vm6503, 0, %v6589
      %v6592 = vcosq.f32.pop %v6590
      %v6593 = vsinq.f32.pop %v6590
      %vm6594 = vweird.f32 %v2529
      %v6595 = vadd.s32 %v6591, 3
      %v6596 = vand.u32 %v6595, 3
      %vm6597 = vcmp.lt.s32.totalorder %v6596, 2
      %vm6598 = vcmp.eq.s32.totalorder %v6596, 0
      %v6599 = vxor.u32 %v6593, 2147483648
      %v6600 = vsel %vm6598, %v6592, %v6599
      %vm6601 = vcmp.eq.s32.totalorder %v6596, 2
      %v6602 = vxor.u32 %v6592, 2147483648
      %v6603 = vsel %vm6601, %v6602, %v6593
      %v6604 = vsel %vm6597, %v6600, %v6603
      %v6605 = vsel %vm6594, nan, %v6604
      %v6606 = vand.u32 2147483647, %v1441
      %vm6607 = vcmp.le.f32.partialorder %v6606, 0.7853982
      %vm6608 = vcmp.lt.s32.totalorder %v1441, 0
      %v6609 = vand.u32 %v1441, 2139095040
      %v6610 = vshrl.u32 %v6609, 23
      %v6611 = vsub.s32 %v6610, 127
      %v6612 = vand.u32 2147483647, %v1441
      %v6613 = vand.u32 %v6612, 8388607
      %v6614 = vor.u32 %v6613, 8388608
      %v6615 = vsub.s32 0, %v6614
      %v6616 = vadd.s32 %v6611, 1
      %vm6617 = vcmp.gt.s32.totalorder %v6616, 0
      %v6618 = vsel %vm6617, %v6616, 0
      %v6619 = vshrl.u32 %v6618, 5
      %v6620 = vand.u32 %v6618, 31
      %v6621 = vsub.s32 32, %v6620
      %v6622 = vshrl.u32 683565275, %v6621
      %v6623 = vshll.u32 683565275, %v6620
      %v6624 = vshrl.u32 2475754826, %v6621
      %v6625 = vor.u32 %v6623, %v6624
      %v6626 = vshll.u32 2475754826, %v6620
      %v6627 = vshrl.u32 2131351028, %v6621
      %v6628 = vor.u32 %v6626, %v6627
      %v6629 = vshll.u32 2131351028, %v6620
      %v6630 = vshrl.u32 2102212464, %v6621
      %v6631 = vor.u32 %v6629, %v6630
      %v6632 = vshll.u32 2102212464, %v6620
      %v6633 = vshrl.u32 920167782, %v6621
      %v6634 = vor.u32 %v6632, %v6633
      %v6635 = vshll.u32 920167782, %v6620
      %v6636 = vshrl.u32 1326507024, %v6621
      %v6637 = vor.u32 %v6635, %v6636
      %vm6638 = vcmp.lt.s32.totalorder %v6619, 1
      %vm6639 = vcmp.lt.s32.totalorder %v6619, 2
      %vm6640 = vcmp.lt.s32.totalorder %v6619, 3
      %vm6641 = vcmp.lt.s32.totalorder %v6619, 4
      %v6642 = vsel %vm6638, %v6622, %v6625
      %v6643 = vsel %vm6641, %v6631, 2102212464
      %v6644 = vsel %vm6640, %v6628, %v6643
      %v6645 = vsel %vm6639, %v6642, %v6644
      %v6646 = vsel %vm6638, %v6625, %v6628
      %v6647 = vsel %vm6641, %v6634, 920167782
      %v6648 = vsel %vm6640, %v6631, %v6647
      %v6649 = vsel %vm6639, %v6646, %v6648
      %v6650 = vsel %vm6638, %v6628, %v6631
      %v6651 = vsel %vm6641, %v6637, 1326507024
      %v6652 = vsel %vm6640, %v6634, %v6651
      %v6653 = vsel %vm6639, %v6650, %v6652
      %v6654 = vshll.u32 %v6614, 8
      %v6655 = vmul.u32.u64.compose %v6654, %v6653
      %v6656 = vextract.low.u32 %v6655
      %v6657 = vextract.high.u32 %v6655
      %v6658 = vmul.u32.u64.compose %v6654, %v6649
      %v6659 = vextract.low.u32 %v6658
      %v6660 = vextract.high.u32 %v6658
      %v6661 = vmul.u32 %v6654, %v6645
      %v6662 = vadd.s32 %v6657, %v6659
      %vm6663 = vc.u32 %v6657, %v6659
      %v6664 = vadd.s32 %v6660, 1
      %v6665 = vsel %vm6663, %v6664, %v6660
      %v6666 = vadd.s32 %v6661, %v6665
      %v6667 = vadd.s32 %v6666, 536870912
      %v6668 = vshrl.u32 %v6667, 30
      %v6669 = vshll.u32 %v6668, 30
      %v6670 = vsub.s32 %v6666, %v6669
      %vm6671 = vcmp.lt.s32.totalorder %v6670, 0
      %v6672 = vsub.s32 0, %v6670
      %v6673 = vsel %vm6671, %v6672, %v6670
      %v6674 = vclz %v6673
      %v6675 = vsub.s32 %v6674, 2
      %vm6676 = vcmp.gt.s32.totalorder 0, %v6675
      %v6677 = vsel %vm6676, 0, %v6675
      %v6678 = vsub.s32 32, %v6677
      %v6679 = vshll.u32 %v6670, %v6677
      %v6680 = vshrl.u32 %v6662, %v6678
      %v6681 = vor.u32 %v6679, %v6680
      %v6682 = vsub.s32 4294967266, %v6677
      %v6683 = vadd.s32 %v6682, 127
      %v6684 = vshll.u32 %v6683, 23
      %v6685 = vor.u32 4788187, %v6684
      %v6686 = vand.u32 2147483647, %v6685
      %v6688 = vcvt.s32.f32 %v6681
      %v6689 = vmul.f32 %v6688, %v6686
      %v6690 = vxor.u32 %v6689, 2147483648
      %v6691 = vsel %vm6608, %v6690, %v6689
      %v6692 = vsub.s32 4, %v6668
      %v6693 = vsel %vm6608, %v6692, %v6668
      %v6694 = vsel %vm6607, %v1441, %v6691
      %v6695 = vsel %vm6607, 0, %v6693
      %v6696 = vcosq.f32.pop %v6694
      %v6697 = vsinq.f32.pop %v6694
      %vm6698 = vweird.f32 %v1441
      %v6699 = vadd.s32 %v6695, 3
      %v6700 = vand.u32 %v6699, 3
      %vm6701 = vcmp.lt.s32.totalorder %v6700, 2
      %vm6702 = vcmp.eq.s32.totalorder %v6700, 0
      %v6703 = vxor.u32 %v6697, 2147483648
      %v6704 = vsel %vm6702, %v6696, %v6703
      %vm6705 = vcmp.eq.s32.totalorder %v6700, 2
      %v6706 = vxor.u32 %v6696, 2147483648
      %v6707 = vsel %vm6705, %v6706, %v6697
      %v6708 = vsel %vm6701, %v6704, %v6707
      %v6709 = vsel %vm6698, nan, %v6708
      %v6710 = vand.u32 2147483647, %v1443
      %vm6711 = vcmp.le.f32.partialorder %v6710, 0.7853982
      %vm6712 = vcmp.lt.s32.totalorder %v1443, 0
      %v6713 = vand.u32 %v1443, 2139095040
      %v6714 = vshrl.u32 %v6713, 23
      %v6715 = vsub.s32 %v6714, 127
      %v6716 = vand.u32 2147483647, %v1443
      %v6717 = vand.u32 %v6716, 8388607
      %v6718 = vor.u32 %v6717, 8388608
      %v6719 = vsub.s32 0, %v6718
      %v6720 = vadd.s32 %v6715, 1
      %vm6721 = vcmp.gt.s32.totalorder %v6720, 0
      %v6722 = vsel %vm6721, %v6720, 0
      %v6723 = vshrl.u32 %v6722, 5
      %v6724 = vand.u32 %v6722, 31
      %v6725 = vsub.s32 32, %v6724
      %v6726 = vshrl.u32 683565275, %v6725
      %v6727 = vshll.u32 683565275, %v6724
      %v6728 = vshrl.u32 2475754826, %v6725
      %v6729 = vor.u32 %v6727, %v6728
      %v6730 = vshll.u32 2475754826, %v6724
      %v6731 = vshrl.u32 2131351028, %v6725
      %v6732 = vor.u32 %v6730, %v6731
      %v6733 = vshll.u32 2131351028, %v6724
      %v6734 = vshrl.u32 2102212464, %v6725
      %v6735 = vor.u32 %v6733, %v6734
      %v6736 = vshll.u32 2102212464, %v6724
      %v6737 = vshrl.u32 920167782, %v6725
      %v6738 = vor.u32 %v6736, %v6737
      %v6739 = vshll.u32 920167782, %v6724
      %v6740 = vshrl.u32 1326507024, %v6725
      %v6741 = vor.u32 %v6739, %v6740
      %vm6742 = vcmp.lt.s32.totalorder %v6723, 1
      %vm6743 = vcmp.lt.s32.totalorder %v6723, 2
      %vm6744 = vcmp.lt.s32.totalorder %v6723, 3
      %vm6745 = vcmp.lt.s32.totalorder %v6723, 4
      %v6746 = vsel %vm6742, %v6726, %v6729
      %v6747 = vsel %vm6745, %v6735, 2102212464
      %v6748 = vsel %vm6744, %v6732, %v6747
      %v6749 = vsel %vm6743, %v6746, %v6748
      %v6750 = vsel %vm6742, %v6729, %v6732
      %v6751 = vsel %vm6745, %v6738, 920167782
      %v6752 = vsel %vm6744, %v6735, %v6751
      %v6753 = vsel %vm6743, %v6750, %v6752
      %v6754 = vsel %vm6742, %v6732, %v6735
      %v6755 = vsel %vm6745, %v6741, 1326507024
      %v6756 = vsel %vm6744, %v6738, %v6755
      %v6757 = vsel %vm6743, %v6754, %v6756
      %v6758 = vshll.u32 %v6718, 8
      %v6759 = vmul.u32.u64.compose %v6758, %v6757
      %v6760 = vextract.low.u32 %v6759
      %v6761 = vextract.high.u32 %v6759
      %v6762 = vmul.u32.u64.compose %v6758, %v6753
      %v6763 = vextract.low.u32 %v6762
      %v6764 = vextract.high.u32 %v6762
      %v6765 = vmul.u32 %v6758, %v6749
      %v6766 = vadd.s32 %v6761, %v6763
      %vm6767 = vc.u32 %v6761, %v6763
      %v6768 = vadd.s32 %v6764, 1
      %v6769 = vsel %vm6767, %v6768, %v6764
      %v6770 = vadd.s32 %v6765, %v6769
      %v6771 = vadd.s32 %v6770, 536870912
      %v6772 = vshrl.u32 %v6771, 30
      %v6773 = vshll.u32 %v6772, 30
      %v6774 = vsub.s32 %v6770, %v6773
      %vm6775 = vcmp.lt.s32.totalorder %v6774, 0
      %v6776 = vsub.s32 0, %v6774
      %v6777 = vsel %vm6775, %v6776, %v6774
      %v6778 = vclz %v6777
      %v6779 = vsub.s32 %v6778, 2
      %vm6780 = vcmp.gt.s32.totalorder 0, %v6779
      %v6781 = vsel %vm6780, 0, %v6779
      %v6782 = vsub.s32 32, %v6781
      %v6783 = vshll.u32 %v6774, %v6781
      %v6784 = vshrl.u32 %v6766, %v6782
      %v6785 = vor.u32 %v6783, %v6784
      %v6786 = vsub.s32 4294967266, %v6781
      %v6787 = vadd.s32 %v6786, 127
      %v6788 = vshll.u32 %v6787, 23
      %v6789 = vor.u32 4788187, %v6788
      %v6790 = vand.u32 2147483647, %v6789
      %v6792 = vcvt.s32.f32 %v6785
      %v6793 = vmul.f32 %v6792, %v6790
      %v6794 = vxor.u32 %v6793, 2147483648
      %v6795 = vsel %vm6712, %v6794, %v6793
      %v6796 = vsub.s32 4, %v6772
      %v6797 = vsel %vm6712, %v6796, %v6772
      %v6798 = vsel %vm6711, %v1443, %v6795
      %v6799 = vsel %vm6711, 0, %v6797
      %v6800 = vcosq.f32.pop %v6798
      %v6801 = vsinq.f32.pop %v6798
      %vm6802 = vweird.f32 %v1443
      %v6803 = vadd.s32 %v6799, 3
      %v6804 = vand.u32 %v6803, 3
      %vm6805 = vcmp.lt.s32.totalorder %v6804, 2
      %vm6806 = vcmp.eq.s32.totalorder %v6804, 0
      %v6807 = vxor.u32 %v6801, 2147483648
      %v6808 = vsel %vm6806, %v6800, %v6807
      %vm6809 = vcmp.eq.s32.totalorder %v6804, 2
      %v6810 = vxor.u32 %v6800, 2147483648
      %v6811 = vsel %vm6809, %v6810, %v6801
      %v6812 = vsel %vm6805, %v6808, %v6811
      %v6813 = vsel %vm6802, nan, %v6812
      %v6814 = vand.u32 2147483647, %v2535
      %vm6815 = vcmp.le.f32.partialorder %v6814, 0.7853982
      %vm6816 = vcmp.lt.s32.totalorder %v2535, 0
      %v6817 = vand.u32 %v2535, 2139095040
      %v6818 = vshrl.u32 %v6817, 23
      %v6819 = vsub.s32 %v6818, 127
      %v6820 = vand.u32 2147483647, %v2535
      %v6821 = vand.u32 %v6820, 8388607
      %v6822 = vor.u32 %v6821, 8388608
      %v6823 = vsub.s32 0, %v6822
      %v6824 = vadd.s32 %v6819, 1
      %vm6825 = vcmp.gt.s32.totalorder %v6824, 0
      %v6826 = vsel %vm6825, %v6824, 0
      %v6827 = vshrl.u32 %v6826, 5
      %v6828 = vand.u32 %v6826, 31
      %v6829 = vsub.s32 32, %v6828
      %v6830 = vshrl.u32 683565275, %v6829
      %v6831 = vshll.u32 683565275, %v6828
      %v6832 = vshrl.u32 2475754826, %v6829
      %v6833 = vor.u32 %v6831, %v6832
      %v6834 = vshll.u32 2475754826, %v6828
      %v6835 = vshrl.u32 2131351028, %v6829
      %v6836 = vor.u32 %v6834, %v6835
      %v6837 = vshll.u32 2131351028, %v6828
      %v6838 = vshrl.u32 2102212464, %v6829
      %v6839 = vor.u32 %v6837, %v6838
      %v6840 = vshll.u32 2102212464, %v6828
      %v6841 = vshrl.u32 920167782, %v6829
      %v6842 = vor.u32 %v6840, %v6841
      %v6843 = vshll.u32 920167782, %v6828
      %v6844 = vshrl.u32 1326507024, %v6829
      %v6845 = vor.u32 %v6843, %v6844
      %vm6846 = vcmp.lt.s32.totalorder %v6827, 1
      %vm6847 = vcmp.lt.s32.totalorder %v6827, 2
      %vm6848 = vcmp.lt.s32.totalorder %v6827, 3
      %vm6849 = vcmp.lt.s32.totalorder %v6827, 4
      %v6850 = vsel %vm6846, %v6830, %v6833
      %v6851 = vsel %vm6849, %v6839, 2102212464
      %v6852 = vsel %vm6848, %v6836, %v6851
      %v6853 = vsel %vm6847, %v6850, %v6852
      %v6854 = vsel %vm6846, %v6833, %v6836
      %v6855 = vsel %vm6849, %v6842, 920167782
      %v6856 = vsel %vm6848, %v6839, %v6855
      %v6857 = vsel %vm6847, %v6854, %v6856
      %v6858 = vsel %vm6846, %v6836, %v6839
      %v6859 = vsel %vm6849, %v6845, 1326507024
      %v6860 = vsel %vm6848, %v6842, %v6859
      %v6861 = vsel %vm6847, %v6858, %v6860
      %v6862 = vshll.u32 %v6822, 8
      %v6863 = vmul.u32.u64.compose %v6862, %v6861
      %v6864 = vextract.low.u32 %v6863
      %v6865 = vextract.high.u32 %v6863
      %v6866 = vmul.u32.u64.compose %v6862, %v6857
      %v6867 = vextract.low.u32 %v6866
      %v6868 = vextract.high.u32 %v6866
      %v6869 = vmul.u32 %v6862, %v6853
      %v6870 = vadd.s32 %v6865, %v6867
      %vm6871 = vc.u32 %v6865, %v6867
      %v6872 = vadd.s32 %v6868, 1
      %v6873 = vsel %vm6871, %v6872, %v6868
      %v6874 = vadd.s32 %v6869, %v6873
      %v6875 = vadd.s32 %v6874, 536870912
      %v6876 = vshrl.u32 %v6875, 30
      %v6877 = vshll.u32 %v6876, 30
      %v6878 = vsub.s32 %v6874, %v6877
      %vm6879 = vcmp.lt.s32.totalorder %v6878, 0
      %v6880 = vsub.s32 0, %v6878
      %v6881 = vsel %vm6879, %v6880, %v6878
      %v6882 = vclz %v6881
      %v6883 = vsub.s32 %v6882, 2
      %vm6884 = vcmp.gt.s32.totalorder 0, %v6883
      %v6885 = vsel %vm6884, 0, %v6883
      %v6886 = vsub.s32 32, %v6885
      %v6887 = vshll.u32 %v6878, %v6885
      %v6888 = vshrl.u32 %v6870, %v6886
      %v6889 = vor.u32 %v6887, %v6888
      %v6890 = vsub.s32 4294967266, %v6885
      %v6891 = vadd.s32 %v6890, 127
      %v6892 = vshll.u32 %v6891, 23
      %v6893 = vor.u32 4788187, %v6892
      %v6894 = vand.u32 2147483647, %v6893
      %v6896 = vcvt.s32.f32 %v6889
      %v6897 = vmul.f32 %v6896, %v6894
      %v6898 = vxor.u32 %v6897, 2147483648
      %v6899 = vsel %vm6816, %v6898, %v6897
      %v6900 = vsub.s32 4, %v6876
      %v6901 = vsel %vm6816, %v6900, %v6876
      %v6902 = vsel %vm6815, %v2535, %v6899
      %v6903 = vsel %vm6815, 0, %v6901
      %v6904 = vcosq.f32.pop %v6902
      %v6905 = vsinq.f32.pop %v6902
      %vm6906 = vweird.f32 %v2535
      %v6907 = vadd.s32 %v6903, 3
      %v6908 = vand.u32 %v6907, 3
      %vm6909 = vcmp.lt.s32.totalorder %v6908, 2
      %vm6910 = vcmp.eq.s32.totalorder %v6908, 0
      %v6911 = vxor.u32 %v6905, 2147483648
      %v6912 = vsel %vm6910, %v6904, %v6911
      %vm6913 = vcmp.eq.s32.totalorder %v6908, 2
      %v6914 = vxor.u32 %v6904, 2147483648
      %v6915 = vsel %vm6913, %v6914, %v6905
      %v6916 = vsel %vm6909, %v6912, %v6915
      %v6917 = vsel %vm6906, nan, %v6916
      %v6918 = vand.u32 2147483647, %v1448
      %vm6919 = vcmp.le.f32.partialorder %v6918, 0.7853982
      %vm6920 = vcmp.lt.s32.totalorder %v1448, 0
      %v6921 = vand.u32 %v1448, 2139095040
      %v6922 = vshrl.u32 %v6921, 23
      %v6923 = vsub.s32 %v6922, 127
      %v6924 = vand.u32 2147483647, %v1448
      %v6925 = vand.u32 %v6924, 8388607
      %v6926 = vor.u32 %v6925, 8388608
      %v6927 = vsub.s32 0, %v6926
      %v6928 = vadd.s32 %v6923, 1
      %vm6929 = vcmp.gt.s32.totalorder %v6928, 0
      %v6930 = vsel %vm6929, %v6928, 0
      %v6931 = vshrl.u32 %v6930, 5
      %v6932 = vand.u32 %v6930, 31
      %v6933 = vsub.s32 32, %v6932
      %v6934 = vshrl.u32 683565275, %v6933
      %v6935 = vshll.u32 683565275, %v6932
      %v6936 = vshrl.u32 2475754826, %v6933
      %v6937 = vor.u32 %v6935, %v6936
      %v6938 = vshll.u32 2475754826, %v6932
      %v6939 = vshrl.u32 2131351028, %v6933
      %v6940 = vor.u32 %v6938, %v6939
      %v6941 = vshll.u32 2131351028, %v6932
      %v6942 = vshrl.u32 2102212464, %v6933
      %v6943 = vor.u32 %v6941, %v6942
      %v6944 = vshll.u32 2102212464, %v6932
      %v6945 = vshrl.u32 920167782, %v6933
      %v6946 = vor.u32 %v6944, %v6945
      %v6947 = vshll.u32 920167782, %v6932
      %v6948 = vshrl.u32 1326507024, %v6933
      %v6949 = vor.u32 %v6947, %v6948
      %vm6950 = vcmp.lt.s32.totalorder %v6931, 1
      %vm6951 = vcmp.lt.s32.totalorder %v6931, 2
      %vm6952 = vcmp.lt.s32.totalorder %v6931, 3
      %vm6953 = vcmp.lt.s32.totalorder %v6931, 4
      %v6954 = vsel %vm6950, %v6934, %v6937
      %v6955 = vsel %vm6953, %v6943, 2102212464
      %v6956 = vsel %vm6952, %v6940, %v6955
      %v6957 = vsel %vm6951, %v6954, %v6956
      %v6958 = vsel %vm6950, %v6937, %v6940
      %v6959 = vsel %vm6953, %v6946, 920167782
      %v6960 = vsel %vm6952, %v6943, %v6959
      %v6961 = vsel %vm6951, %v6958, %v6960
      %v6962 = vsel %vm6950, %v6940, %v6943
      %v6963 = vsel %vm6953, %v6949, 1326507024
      %v6964 = vsel %vm6952, %v6946, %v6963
      %v6965 = vsel %vm6951, %v6962, %v6964
      %v6966 = vshll.u32 %v6926, 8
      %v6967 = vmul.u32.u64.compose %v6966, %v6965
      %v6968 = vextract.low.u32 %v6967
      %v6969 = vextract.high.u32 %v6967
      %v6970 = vmul.u32.u64.compose %v6966, %v6961
      %v6971 = vextract.low.u32 %v6970
      %v6972 = vextract.high.u32 %v6970
      %v6973 = vmul.u32 %v6966, %v6957
      %v6974 = vadd.s32 %v6969, %v6971
      %vm6975 = vc.u32 %v6969, %v6971
      %v6976 = vadd.s32 %v6972, 1
      %v6977 = vsel %vm6975, %v6976, %v6972
      %v6978 = vadd.s32 %v6973, %v6977
      %v6979 = vadd.s32 %v6978, 536870912
      %v6980 = vshrl.u32 %v6979, 30
      %v6981 = vshll.u32 %v6980, 30
      %v6982 = vsub.s32 %v6978, %v6981
      %vm6983 = vcmp.lt.s32.totalorder %v6982, 0
      %v6984 = vsub.s32 0, %v6982
      %v6985 = vsel %vm6983, %v6984, %v6982
      %v6986 = vclz %v6985
      %v6987 = vsub.s32 %v6986, 2
      %vm6988 = vcmp.gt.s32.totalorder 0, %v6987
      %v6989 = vsel %vm6988, 0, %v6987
      %v6990 = vsub.s32 32, %v6989
      %v6991 = vshll.u32 %v6982, %v6989
      %v6992 = vshrl.u32 %v6974, %v6990
      %v6993 = vor.u32 %v6991, %v6992
      %v6994 = vsub.s32 4294967266, %v6989
      %v6995 = vadd.s32 %v6994, 127
      %v6996 = vshll.u32 %v6995, 23
      %v6997 = vor.u32 4788187, %v6996
      %v6998 = vand.u32 2147483647, %v6997
      %v7000 = vcvt.s32.f32 %v6993
      %v7001 = vmul.f32 %v7000, %v6998
      %v7002 = vxor.u32 %v7001, 2147483648
      %v7003 = vsel %vm6920, %v7002, %v7001
      %v7004 = vsub.s32 4, %v6980
      %v7005 = vsel %vm6920, %v7004, %v6980
      %v7006 = vsel %vm6919, %v1448, %v7003
      %v7007 = vsel %vm6919, 0, %v7005
      %v7008 = vcosq.f32.pop %v7006
      %v7009 = vsinq.f32.pop %v7006
      %vm7010 = vweird.f32 %v1448
      %v7011 = vadd.s32 %v7007, 3
      %v7012 = vand.u32 %v7011, 3
      %vm7013 = vcmp.lt.s32.totalorder %v7012, 2
      %vm7014 = vcmp.eq.s32.totalorder %v7012, 0
      %v7015 = vxor.u32 %v7009, 2147483648
      %v7016 = vsel %vm7014, %v7008, %v7015
      %vm7017 = vcmp.eq.s32.totalorder %v7012, 2
      %v7018 = vxor.u32 %v7008, 2147483648
      %v7019 = vsel %vm7017, %v7018, %v7009
      %v7020 = vsel %vm7013, %v7016, %v7019
      %v7021 = vsel %vm7010, nan, %v7020
      %v7022 = vand.u32 2147483647, %v1450
      %vm7023 = vcmp.le.f32.partialorder %v7022, 0.7853982
      %vm7024 = vcmp.lt.s32.totalorder %v1450, 0
      %v7025 = vand.u32 %v1450, 2139095040
      %v7026 = vshrl.u32 %v7025, 23
      %v7027 = vsub.s32 %v7026, 127
      %v7028 = vand.u32 2147483647, %v1450
      %v7029 = vand.u32 %v7028, 8388607
      %v7030 = vor.u32 %v7029, 8388608
      %v7031 = vsub.s32 0, %v7030
      %v7032 = vadd.s32 %v7027, 1
      %vm7033 = vcmp.gt.s32.totalorder %v7032, 0
      %v7034 = vsel %vm7033, %v7032, 0
      %v7035 = vshrl.u32 %v7034, 5
      %v7036 = vand.u32 %v7034, 31
      %v7037 = vsub.s32 32, %v7036
      %v7038 = vshrl.u32 683565275, %v7037
      %v7039 = vshll.u32 683565275, %v7036
      %v7040 = vshrl.u32 2475754826, %v7037
      %v7041 = vor.u32 %v7039, %v7040
      %v7042 = vshll.u32 2475754826, %v7036
      %v7043 = vshrl.u32 2131351028, %v7037
      %v7044 = vor.u32 %v7042, %v7043
      %v7045 = vshll.u32 2131351028, %v7036
      %v7046 = vshrl.u32 2102212464, %v7037
      %v7047 = vor.u32 %v7045, %v7046
      %v7048 = vshll.u32 2102212464, %v7036
      %v7049 = vshrl.u32 920167782, %v7037
      %v7050 = vor.u32 %v7048, %v7049
      %v7051 = vshll.u32 920167782, %v7036
      %v7052 = vshrl.u32 1326507024, %v7037
      %v7053 = vor.u32 %v7051, %v7052
      %vm7054 = vcmp.lt.s32.totalorder %v7035, 1
      %vm7055 = vcmp.lt.s32.totalorder %v7035, 2
      %vm7056 = vcmp.lt.s32.totalorder %v7035, 3
      %vm7057 = vcmp.lt.s32.totalorder %v7035, 4
      %v7058 = vsel %vm7054, %v7038, %v7041
      %v7059 = vsel %vm7057, %v7047, 2102212464
      %v7060 = vsel %vm7056, %v7044, %v7059
      %v7061 = vsel %vm7055, %v7058, %v7060
      %v7062 = vsel %vm7054, %v7041, %v7044
      %v7063 = vsel %vm7057, %v7050, 920167782
      %v7064 = vsel %vm7056, %v7047, %v7063
      %v7065 = vsel %vm7055, %v7062, %v7064
      %v7066 = vsel %vm7054, %v7044, %v7047
      %v7067 = vsel %vm7057, %v7053, 1326507024
      %v7068 = vsel %vm7056, %v7050, %v7067
      %v7069 = vsel %vm7055, %v7066, %v7068
      %v7070 = vshll.u32 %v7030, 8
      %v7071 = vmul.u32.u64.compose %v7070, %v7069
      %v7072 = vextract.low.u32 %v7071
      %v7073 = vextract.high.u32 %v7071
      %v7074 = vmul.u32.u64.compose %v7070, %v7065
      %v7075 = vextract.low.u32 %v7074
      %v7076 = vextract.high.u32 %v7074
      %v7077 = vmul.u32 %v7070, %v7061
      %v7078 = vadd.s32 %v7073, %v7075
      %vm7079 = vc.u32 %v7073, %v7075
      %v7080 = vadd.s32 %v7076, 1
      %v7081 = vsel %vm7079, %v7080, %v7076
      %v7082 = vadd.s32 %v7077, %v7081
      %v7083 = vadd.s32 %v7082, 536870912
      %v7084 = vshrl.u32 %v7083, 30
      %v7085 = vshll.u32 %v7084, 30
      %v7086 = vsub.s32 %v7082, %v7085
      %vm7087 = vcmp.lt.s32.totalorder %v7086, 0
      %v7088 = vsub.s32 0, %v7086
      %v7089 = vsel %vm7087, %v7088, %v7086
      %v7090 = vclz %v7089
      %v7091 = vsub.s32 %v7090, 2
      %vm7092 = vcmp.gt.s32.totalorder 0, %v7091
      %v7093 = vsel %vm7092, 0, %v7091
      %v7094 = vsub.s32 32, %v7093
      %v7095 = vshll.u32 %v7086, %v7093
      %v7096 = vshrl.u32 %v7078, %v7094
      %v7097 = vor.u32 %v7095, %v7096
      %v7098 = vsub.s32 4294967266, %v7093
      %v7099 = vadd.s32 %v7098, 127
      %v7100 = vshll.u32 %v7099, 23
      %v7101 = vor.u32 4788187, %v7100
      %v7102 = vand.u32 2147483647, %v7101
      %v7104 = vcvt.s32.f32 %v7097
      %v7105 = vmul.f32 %v7104, %v7102
      %v7106 = vxor.u32 %v7105, 2147483648
      %v7107 = vsel %vm7024, %v7106, %v7105
      %v7108 = vsub.s32 4, %v7084
      %v7109 = vsel %vm7024, %v7108, %v7084
      %v7110 = vsel %vm7023, %v1450, %v7107
      %v7111 = vsel %vm7023, 0, %v7109
      %v7112 = vcosq.f32.pop %v7110
      %v7113 = vsinq.f32.pop %v7110
      %vm7114 = vweird.f32 %v1450
      %v7115 = vadd.s32 %v7111, 3
      %v7116 = vand.u32 %v7115, 3
      %vm7117 = vcmp.lt.s32.totalorder %v7116, 2
      %vm7118 = vcmp.eq.s32.totalorder %v7116, 0
      %v7119 = vxor.u32 %v7113, 2147483648
      %v7120 = vsel %vm7118, %v7112, %v7119
      %vm7121 = vcmp.eq.s32.totalorder %v7116, 2
      %v7122 = vxor.u32 %v7112, 2147483648
      %v7123 = vsel %vm7121, %v7122, %v7113
      %v7124 = vsel %vm7117, %v7120, %v7123
      %v7125 = vsel %vm7114, nan, %v7124
      %v7126 = vand.u32 2147483647, %v2541
      %vm7127 = vcmp.le.f32.partialorder %v7126, 0.7853982
      %vm7128 = vcmp.lt.s32.totalorder %v2541, 0
      %v7129 = vand.u32 %v2541, 2139095040
      %v7130 = vshrl.u32 %v7129, 23
      %v7131 = vsub.s32 %v7130, 127
      %v7132 = vand.u32 2147483647, %v2541
      %v7133 = vand.u32 %v7132, 8388607
      %v7134 = vor.u32 %v7133, 8388608
      %v7135 = vsub.s32 0, %v7134
      %v7136 = vadd.s32 %v7131, 1
      %vm7137 = vcmp.gt.s32.totalorder %v7136, 0
      %v7138 = vsel %vm7137, %v7136, 0
      %v7139 = vshrl.u32 %v7138, 5
      %v7140 = vand.u32 %v7138, 31
      %v7141 = vsub.s32 32, %v7140
      %v7142 = vshrl.u32 683565275, %v7141
      %v7143 = vshll.u32 683565275, %v7140
      %v7144 = vshrl.u32 2475754826, %v7141
      %v7145 = vor.u32 %v7143, %v7144
      %v7146 = vshll.u32 2475754826, %v7140
      %v7147 = vshrl.u32 2131351028, %v7141
      %v7148 = vor.u32 %v7146, %v7147
      %v7149 = vshll.u32 2131351028, %v7140
      %v7150 = vshrl.u32 2102212464, %v7141
      %v7151 = vor.u32 %v7149, %v7150
      %v7152 = vshll.u32 2102212464, %v7140
      %v7153 = vshrl.u32 920167782, %v7141
      %v7154 = vor.u32 %v7152, %v7153
      %v7155 = vshll.u32 920167782, %v7140
      %v7156 = vshrl.u32 1326507024, %v7141
      %v7157 = vor.u32 %v7155, %v7156
      %vm7158 = vcmp.lt.s32.totalorder %v7139, 1
      %vm7159 = vcmp.lt.s32.totalorder %v7139, 2
      %vm7160 = vcmp.lt.s32.totalorder %v7139, 3
      %vm7161 = vcmp.lt.s32.totalorder %v7139, 4
      %v7162 = vsel %vm7158, %v7142, %v7145
      %v7163 = vsel %vm7161, %v7151, 2102212464
      %v7164 = vsel %vm7160, %v7148, %v7163
      %v7165 = vsel %vm7159, %v7162, %v7164
      %v7166 = vsel %vm7158, %v7145, %v7148
      %v7167 = vsel %vm7161, %v7154, 920167782
      %v7168 = vsel %vm7160, %v7151, %v7167
      %v7169 = vsel %vm7159, %v7166, %v7168
      %v7170 = vsel %vm7158, %v7148, %v7151
      %v7171 = vsel %vm7161, %v7157, 1326507024
      %v7172 = vsel %vm7160, %v7154, %v7171
      %v7173 = vsel %vm7159, %v7170, %v7172
      %v7174 = vshll.u32 %v7134, 8
      %v7175 = vmul.u32.u64.compose %v7174, %v7173
      %v7176 = vextract.low.u32 %v7175
      %v7177 = vextract.high.u32 %v7175
      %v7178 = vmul.u32.u64.compose %v7174, %v7169
      %v7179 = vextract.low.u32 %v7178
      %v7180 = vextract.high.u32 %v7178
      %v7181 = vmul.u32 %v7174, %v7165
      %v7182 = vadd.s32 %v7177, %v7179
      %vm7183 = vc.u32 %v7177, %v7179
      %v7184 = vadd.s32 %v7180, 1
      %v7185 = vsel %vm7183, %v7184, %v7180
      %v7186 = vadd.s32 %v7181, %v7185
      %v7187 = vadd.s32 %v7186, 536870912
      %v7188 = vshrl.u32 %v7187, 30
      %v7189 = vshll.u32 %v7188, 30
      %v7190 = vsub.s32 %v7186, %v7189
      %vm7191 = vcmp.lt.s32.totalorder %v7190, 0
      %v7192 = vsub.s32 0, %v7190
      %v7193 = vsel %vm7191, %v7192, %v7190
      %v7194 = vclz %v7193
      %v7195 = vsub.s32 %v7194, 2
      %vm7196 = vcmp.gt.s32.totalorder 0, %v7195
      %v7197 = vsel %vm7196, 0, %v7195
      %v7198 = vsub.s32 32, %v7197
      %v7199 = vshll.u32 %v7190, %v7197
      %v7200 = vshrl.u32 %v7182, %v7198
      %v7201 = vor.u32 %v7199, %v7200
      %v7202 = vsub.s32 4294967266, %v7197
      %v7203 = vadd.s32 %v7202, 127
      %v7204 = vshll.u32 %v7203, 23
      %v7205 = vor.u32 4788187, %v7204
      %v7206 = vand.u32 2147483647, %v7205
      %v7208 = vcvt.s32.f32 %v7201
      %v7209 = vmul.f32 %v7208, %v7206
      %v7210 = vxor.u32 %v7209, 2147483648
      %v7211 = vsel %vm7128, %v7210, %v7209
      %v7212 = vsub.s32 4, %v7188
      %v7213 = vsel %vm7128, %v7212, %v7188
      %v7214 = vsel %vm7127, %v2541, %v7211
      %v7215 = vsel %vm7127, 0, %v7213
      %v7216 = vcosq.f32.pop %v7214
      %v7217 = vsinq.f32.pop %v7214
      %vm7218 = vweird.f32 %v2541
      %v7219 = vadd.s32 %v7215, 3
      %v7220 = vand.u32 %v7219, 3
      %vm7221 = vcmp.lt.s32.totalorder %v7220, 2
      %vm7222 = vcmp.eq.s32.totalorder %v7220, 0
      %v7223 = vxor.u32 %v7217, 2147483648
      %v7224 = vsel %vm7222, %v7216, %v7223
      %vm7225 = vcmp.eq.s32.totalorder %v7220, 2
      %v7226 = vxor.u32 %v7216, 2147483648
      %v7227 = vsel %vm7225, %v7226, %v7217
      %v7228 = vsel %vm7221, %v7224, %v7227
      %v7229 = vsel %vm7218, nan, %v7228
      %v7230 = vand.u32 2147483647, %v1455
      %vm7231 = vcmp.le.f32.partialorder %v7230, 0.7853982
      %vm7232 = vcmp.lt.s32.totalorder %v1455, 0
      %v7233 = vand.u32 %v1455, 2139095040
      %v7234 = vshrl.u32 %v7233, 23
      %v7235 = vsub.s32 %v7234, 127
      %v7236 = vand.u32 2147483647, %v1455
      %v7237 = vand.u32 %v7236, 8388607
      %v7238 = vor.u32 %v7237, 8388608
      %v7239 = vsub.s32 0, %v7238
      %v7240 = vadd.s32 %v7235, 1
      %vm7241 = vcmp.gt.s32.totalorder %v7240, 0
      %v7242 = vsel %vm7241, %v7240, 0
      %v7243 = vshrl.u32 %v7242, 5
      %v7244 = vand.u32 %v7242, 31
      %v7245 = vsub.s32 32, %v7244
      %v7246 = vshrl.u32 683565275, %v7245
      %v7247 = vshll.u32 683565275, %v7244
      %v7248 = vshrl.u32 2475754826, %v7245
      %v7249 = vor.u32 %v7247, %v7248
      %v7250 = vshll.u32 2475754826, %v7244
      %v7251 = vshrl.u32 2131351028, %v7245
      %v7252 = vor.u32 %v7250, %v7251
      %v7253 = vshll.u32 2131351028, %v7244
      %v7254 = vshrl.u32 2102212464, %v7245
      %v7255 = vor.u32 %v7253, %v7254
      %v7256 = vshll.u32 2102212464, %v7244
      %v7257 = vshrl.u32 920167782, %v7245
      %v7258 = vor.u32 %v7256, %v7257
      %v7259 = vshll.u32 920167782, %v7244
      %v7260 = vshrl.u32 1326507024, %v7245
      %v7261 = vor.u32 %v7259, %v7260
      %vm7262 = vcmp.lt.s32.totalorder %v7243, 1
      %vm7263 = vcmp.lt.s32.totalorder %v7243, 2
      %vm7264 = vcmp.lt.s32.totalorder %v7243, 3
      %vm7265 = vcmp.lt.s32.totalorder %v7243, 4
      %v7266 = vsel %vm7262, %v7246, %v7249
      %v7267 = vsel %vm7265, %v7255, 2102212464
      %v7268 = vsel %vm7264, %v7252, %v7267
      %v7269 = vsel %vm7263, %v7266, %v7268
      %v7270 = vsel %vm7262, %v7249, %v7252
      %v7271 = vsel %vm7265, %v7258, 920167782
      %v7272 = vsel %vm7264, %v7255, %v7271
      %v7273 = vsel %vm7263, %v7270, %v7272
      %v7274 = vsel %vm7262, %v7252, %v7255
      %v7275 = vsel %vm7265, %v7261, 1326507024
      %v7276 = vsel %vm7264, %v7258, %v7275
      %v7277 = vsel %vm7263, %v7274, %v7276
      %v7278 = vshll.u32 %v7238, 8
      %v7279 = vmul.u32.u64.compose %v7278, %v7277
      %v7280 = vextract.low.u32 %v7279
      %v7281 = vextract.high.u32 %v7279
      %v7282 = vmul.u32.u64.compose %v7278, %v7273
      %v7283 = vextract.low.u32 %v7282
      %v7284 = vextract.high.u32 %v7282
      %v7285 = vmul.u32 %v7278, %v7269
      %v7286 = vadd.s32 %v7281, %v7283
      %vm7287 = vc.u32 %v7281, %v7283
      %v7288 = vadd.s32 %v7284, 1
      %v7289 = vsel %vm7287, %v7288, %v7284
      %v7290 = vadd.s32 %v7285, %v7289
      %v7291 = vadd.s32 %v7290, 536870912
      %v7292 = vshrl.u32 %v7291, 30
      %v7293 = vshll.u32 %v7292, 30
      %v7294 = vsub.s32 %v7290, %v7293
      %vm7295 = vcmp.lt.s32.totalorder %v7294, 0
      %v7296 = vsub.s32 0, %v7294
      %v7297 = vsel %vm7295, %v7296, %v7294
      %v7298 = vclz %v7297
      %v7299 = vsub.s32 %v7298, 2
      %vm7300 = vcmp.gt.s32.totalorder 0, %v7299
      %v7301 = vsel %vm7300, 0, %v7299
      %v7302 = vsub.s32 32, %v7301
      %v7303 = vshll.u32 %v7294, %v7301
      %v7304 = vshrl.u32 %v7286, %v7302
      %v7305 = vor.u32 %v7303, %v7304
      %v7306 = vsub.s32 4294967266, %v7301
      %v7307 = vadd.s32 %v7306, 127
      %v7308 = vshll.u32 %v7307, 23
      %v7309 = vor.u32 4788187, %v7308
      %v7310 = vand.u32 2147483647, %v7309
      %v7312 = vcvt.s32.f32 %v7305
      %v7313 = vmul.f32 %v7312, %v7310
      %v7314 = vxor.u32 %v7313, 2147483648
      %v7315 = vsel %vm7232, %v7314, %v7313
      %v7316 = vsub.s32 4, %v7292
      %v7317 = vsel %vm7232, %v7316, %v7292
      %v7318 = vsel %vm7231, %v1455, %v7315
      %v7319 = vsel %vm7231, 0, %v7317
      %v7320 = vcosq.f32.pop %v7318
      %v7321 = vsinq.f32.pop %v7318
      %vm7322 = vweird.f32 %v1455
      %v7323 = vadd.s32 %v7319, 3
      %v7324 = vand.u32 %v7323, 3
      %vm7325 = vcmp.lt.s32.totalorder %v7324, 2
      %vm7326 = vcmp.eq.s32.totalorder %v7324, 0
      %v7327 = vxor.u32 %v7321, 2147483648
      %v7328 = vsel %vm7326, %v7320, %v7327
      %vm7329 = vcmp.eq.s32.totalorder %v7324, 2
      %v7330 = vxor.u32 %v7320, 2147483648
      %v7331 = vsel %vm7329, %v7330, %v7321
      %v7332 = vsel %vm7325, %v7328, %v7331
      %v7333 = vsel %vm7322, nan, %v7332
      %v7334 = vand.u32 2147483647, %v1457
      %vm7335 = vcmp.le.f32.partialorder %v7334, 0.7853982
      %vm7336 = vcmp.lt.s32.totalorder %v1457, 0
      %v7337 = vand.u32 %v1457, 2139095040
      %v7338 = vshrl.u32 %v7337, 23
      %v7339 = vsub.s32 %v7338, 127
      %v7340 = vand.u32 2147483647, %v1457
      %v7341 = vand.u32 %v7340, 8388607
      %v7342 = vor.u32 %v7341, 8388608
      %v7343 = vsub.s32 0, %v7342
      %v7344 = vadd.s32 %v7339, 1
      %vm7345 = vcmp.gt.s32.totalorder %v7344, 0
      %v7346 = vsel %vm7345, %v7344, 0
      %v7347 = vshrl.u32 %v7346, 5
      %v7348 = vand.u32 %v7346, 31
      %v7349 = vsub.s32 32, %v7348
      %v7350 = vshrl.u32 683565275, %v7349
      %v7351 = vshll.u32 683565275, %v7348
      %v7352 = vshrl.u32 2475754826, %v7349
      %v7353 = vor.u32 %v7351, %v7352
      %v7354 = vshll.u32 2475754826, %v7348
      %v7355 = vshrl.u32 2131351028, %v7349
      %v7356 = vor.u32 %v7354, %v7355
      %v7357 = vshll.u32 2131351028, %v7348
      %v7358 = vshrl.u32 2102212464, %v7349
      %v7359 = vor.u32 %v7357, %v7358
      %v7360 = vshll.u32 2102212464, %v7348
      %v7361 = vshrl.u32 920167782, %v7349
      %v7362 = vor.u32 %v7360, %v7361
      %v7363 = vshll.u32 920167782, %v7348
      %v7364 = vshrl.u32 1326507024, %v7349
      %v7365 = vor.u32 %v7363, %v7364
      %vm7366 = vcmp.lt.s32.totalorder %v7347, 1
      %vm7367 = vcmp.lt.s32.totalorder %v7347, 2
      %vm7368 = vcmp.lt.s32.totalorder %v7347, 3
      %vm7369 = vcmp.lt.s32.totalorder %v7347, 4
      %v7370 = vsel %vm7366, %v7350, %v7353
      %v7371 = vsel %vm7369, %v7359, 2102212464
      %v7372 = vsel %vm7368, %v7356, %v7371
      %v7373 = vsel %vm7367, %v7370, %v7372
      %v7374 = vsel %vm7366, %v7353, %v7356
      %v7375 = vsel %vm7369, %v7362, 920167782
      %v7376 = vsel %vm7368, %v7359, %v7375
      %v7377 = vsel %vm7367, %v7374, %v7376
      %v7378 = vsel %vm7366, %v7356, %v7359
      %v7379 = vsel %vm7369, %v7365, 1326507024
      %v7380 = vsel %vm7368, %v7362, %v7379
      %v7381 = vsel %vm7367, %v7378, %v7380
      %v7382 = vshll.u32 %v7342, 8
      %v7383 = vmul.u32.u64.compose %v7382, %v7381
      %v7384 = vextract.low.u32 %v7383
      %v7385 = vextract.high.u32 %v7383
      %v7386 = vmul.u32.u64.compose %v7382, %v7377
      %v7387 = vextract.low.u32 %v7386
      %v7388 = vextract.high.u32 %v7386
      %v7389 = vmul.u32 %v7382, %v7373
      %v7390 = vadd.s32 %v7385, %v7387
      %vm7391 = vc.u32 %v7385, %v7387
      %v7392 = vadd.s32 %v7388, 1
      %v7393 = vsel %vm7391, %v7392, %v7388
      %v7394 = vadd.s32 %v7389, %v7393
      %v7395 = vadd.s32 %v7394, 536870912
      %v7396 = vshrl.u32 %v7395, 30
      %v7397 = vshll.u32 %v7396, 30
      %v7398 = vsub.s32 %v7394, %v7397
      %vm7399 = vcmp.lt.s32.totalorder %v7398, 0
      %v7400 = vsub.s32 0, %v7398
      %v7401 = vsel %vm7399, %v7400, %v7398
      %v7402 = vclz %v7401
      %v7403 = vsub.s32 %v7402, 2
      %vm7404 = vcmp.gt.s32.totalorder 0, %v7403
      %v7405 = vsel %vm7404, 0, %v7403
      %v7406 = vsub.s32 32, %v7405
      %v7407 = vshll.u32 %v7398, %v7405
      %v7408 = vshrl.u32 %v7390, %v7406
      %v7409 = vor.u32 %v7407, %v7408
      %v7410 = vsub.s32 4294967266, %v7405
      %v7411 = vadd.s32 %v7410, 127
      %v7412 = vshll.u32 %v7411, 23
      %v7413 = vor.u32 4788187, %v7412
      %v7414 = vand.u32 2147483647, %v7413
      %v7416 = vcvt.s32.f32 %v7409
      %v7417 = vmul.f32 %v7416, %v7414
      %v7418 = vxor.u32 %v7417, 2147483648
      %v7419 = vsel %vm7336, %v7418, %v7417
      %v7420 = vsub.s32 4, %v7396
      %v7421 = vsel %vm7336, %v7420, %v7396
      %v7422 = vsel %vm7335, %v1457, %v7419
      %v7423 = vsel %vm7335, 0, %v7421
      %v7424 = vcosq.f32.pop %v7422
      %v7425 = vsinq.f32.pop %v7422
      %vm7426 = vweird.f32 %v1457
      %v7427 = vadd.s32 %v7423, 3
      %v7428 = vand.u32 %v7427, 3
      %vm7429 = vcmp.lt.s32.totalorder %v7428, 2
      %vm7430 = vcmp.eq.s32.totalorder %v7428, 0
      %v7431 = vxor.u32 %v7425, 2147483648
      %v7432 = vsel %vm7430, %v7424, %v7431
      %vm7433 = vcmp.eq.s32.totalorder %v7428, 2
      %v7434 = vxor.u32 %v7424, 2147483648
      %v7435 = vsel %vm7433, %v7434, %v7425
      %v7436 = vsel %vm7429, %v7432, %v7435
      %v7437 = vsel %vm7426, nan, %v7436
      %v7438 = vand.u32 2147483647, %v2547
      %vm7439 = vcmp.le.f32.partialorder %v7438, 0.7853982
      %vm7440 = vcmp.lt.s32.totalorder %v2547, 0
      %v7441 = vand.u32 %v2547, 2139095040
      %v7442 = vshrl.u32 %v7441, 23
      %v7443 = vsub.s32 %v7442, 127
      %v7444 = vand.u32 2147483647, %v2547
      %v7445 = vand.u32 %v7444, 8388607
      %v7446 = vor.u32 %v7445, 8388608
      %v7447 = vsub.s32 0, %v7446
      %v7448 = vadd.s32 %v7443, 1
      %vm7449 = vcmp.gt.s32.totalorder %v7448, 0
      %v7450 = vsel %vm7449, %v7448, 0
      %v7451 = vshrl.u32 %v7450, 5
      %v7452 = vand.u32 %v7450, 31
      %v7453 = vsub.s32 32, %v7452
      %v7454 = vshrl.u32 683565275, %v7453
      %v7455 = vshll.u32 683565275, %v7452
      %v7456 = vshrl.u32 2475754826, %v7453
      %v7457 = vor.u32 %v7455, %v7456
      %v7458 = vshll.u32 2475754826, %v7452
      %v7459 = vshrl.u32 2131351028, %v7453
      %v7460 = vor.u32 %v7458, %v7459
      %v7461 = vshll.u32 2131351028, %v7452
      %v7462 = vshrl.u32 2102212464, %v7453
      %v7463 = vor.u32 %v7461, %v7462
      %v7464 = vshll.u32 2102212464, %v7452
      %v7465 = vshrl.u32 920167782, %v7453
      %v7466 = vor.u32 %v7464, %v7465
      %v7467 = vshll.u32 920167782, %v7452
      %v7468 = vshrl.u32 1326507024, %v7453
      %v7469 = vor.u32 %v7467, %v7468
      %vm7470 = vcmp.lt.s32.totalorder %v7451, 1
      %vm7471 = vcmp.lt.s32.totalorder %v7451, 2
      %vm7472 = vcmp.lt.s32.totalorder %v7451, 3
      %vm7473 = vcmp.lt.s32.totalorder %v7451, 4
      %v7474 = vsel %vm7470, %v7454, %v7457
      %v7475 = vsel %vm7473, %v7463, 2102212464
      %v7476 = vsel %vm7472, %v7460, %v7475
      %v7477 = vsel %vm7471, %v7474, %v7476
      %v7478 = vsel %vm7470, %v7457, %v7460
      %v7479 = vsel %vm7473, %v7466, 920167782
      %v7480 = vsel %vm7472, %v7463, %v7479
      %v7481 = vsel %vm7471, %v7478, %v7480
      %v7482 = vsel %vm7470, %v7460, %v7463
      %v7483 = vsel %vm7473, %v7469, 1326507024
      %v7484 = vsel %vm7472, %v7466, %v7483
      %v7485 = vsel %vm7471, %v7482, %v7484
      %v7486 = vshll.u32 %v7446, 8
      %v7487 = vmul.u32.u64.compose %v7486, %v7485
      %v7488 = vextract.low.u32 %v7487
      %v7489 = vextract.high.u32 %v7487
      %v7490 = vmul.u32.u64.compose %v7486, %v7481
      %v7491 = vextract.low.u32 %v7490
      %v7492 = vextract.high.u32 %v7490
      %v7493 = vmul.u32 %v7486, %v7477
      %v7494 = vadd.s32 %v7489, %v7491
      %vm7495 = vc.u32 %v7489, %v7491
      %v7496 = vadd.s32 %v7492, 1
      %v7497 = vsel %vm7495, %v7496, %v7492
      %v7498 = vadd.s32 %v7493, %v7497
      %v7499 = vadd.s32 %v7498, 536870912
      %v7500 = vshrl.u32 %v7499, 30
      %v7501 = vshll.u32 %v7500, 30
      %v7502 = vsub.s32 %v7498, %v7501
      %vm7503 = vcmp.lt.s32.totalorder %v7502, 0
      %v7504 = vsub.s32 0, %v7502
      %v7505 = vsel %vm7503, %v7504, %v7502
      %v7506 = vclz %v7505
      %v7507 = vsub.s32 %v7506, 2
      %vm7508 = vcmp.gt.s32.totalorder 0, %v7507
      %v7509 = vsel %vm7508, 0, %v7507
      %v7510 = vsub.s32 32, %v7509
      %v7511 = vshll.u32 %v7502, %v7509
      %v7512 = vshrl.u32 %v7494, %v7510
      %v7513 = vor.u32 %v7511, %v7512
      %v7514 = vsub.s32 4294967266, %v7509
      %v7515 = vadd.s32 %v7514, 127
      %v7516 = vshll.u32 %v7515, 23
      %v7517 = vor.u32 4788187, %v7516
      %v7518 = vand.u32 2147483647, %v7517
      %v7520 = vcvt.s32.f32 %v7513
      %v7521 = vmul.f32 %v7520, %v7518
      %v7522 = vxor.u32 %v7521, 2147483648
      %v7523 = vsel %vm7440, %v7522, %v7521
      %v7524 = vsub.s32 4, %v7500
      %v7525 = vsel %vm7440, %v7524, %v7500
      %v7526 = vsel %vm7439, %v2547, %v7523
      %v7527 = vsel %vm7439, 0, %v7525
      %v7528 = vcosq.f32.pop %v7526
      %v7529 = vsinq.f32.pop %v7526
      %vm7530 = vweird.f32 %v2547
      %v7531 = vadd.s32 %v7527, 3
      %v7532 = vand.u32 %v7531, 3
      %vm7533 = vcmp.lt.s32.totalorder %v7532, 2
      %vm7534 = vcmp.eq.s32.totalorder %v7532, 0
      %v7535 = vxor.u32 %v7529, 2147483648
      %v7536 = vsel %vm7534, %v7528, %v7535
      %vm7537 = vcmp.eq.s32.totalorder %v7532, 2
      %v7538 = vxor.u32 %v7528, 2147483648
      %v7539 = vsel %vm7537, %v7538, %v7529
      %v7540 = vsel %vm7533, %v7536, %v7539
      %v7541 = vsel %vm7530, nan, %v7540
      %7590 = vrot.lane.b32.xlu0 %v2653, 3
      %v7591 = vpop.permute.xlu0 %7590
      %7592 = vrot.lane.b32.xlu0 %v2757, 3
      %v7593 = vpop.permute.xlu0 %7592
      %7594 = vrot.lane.b32.xlu0 %v2861, 3
      %v7595 = vpop.permute.xlu0 %7594
      %7596 = vrot.lane.b32.xlu0 %v2965, 3
      %v7597 = vpop.permute.xlu0 %7596
      %7598 = vrot.lane.b32.xlu0 %v3069, 3
      %v7599 = vpop.permute.xlu0 %7598
      %7600 = vrot.lane.b32.xlu0 %v3173, 3
      %v7601 = vpop.permute.xlu0 %7600
      %7602 = vrot.lane.b32.xlu0 %v3277, 3
      %v7603 = vpop.permute.xlu0 %7602
      %7604 = vrot.lane.b32.xlu0 %v3381, 3
      %v7605 = vpop.permute.xlu0 %7604
      %7606 = vrot.lane.b32.xlu0 %v3485, 3
      %v7607 = vpop.permute.xlu0 %7606
      %7608 = vrot.lane.b32.xlu0 %v3589, 3
      %v7609 = vpop.permute.xlu0 %7608
      %7610 = vrot.lane.b32.xlu0 %v3693, 3
      %v7611 = vpop.permute.xlu0 %7610
      %7612 = vrot.lane.b32.xlu0 %v3797, 3
      %v7613 = vpop.permute.xlu0 %7612
      %7614 = vrot.lane.b32.xlu0 %v3901, 3
      %v7615 = vpop.permute.xlu0 %7614
      %7616 = vrot.lane.b32.xlu0 %v4005, 3
      %v7617 = vpop.permute.xlu0 %7616
      %7618 = vrot.lane.b32.xlu0 %v4109, 3
      %v7619 = vpop.permute.xlu0 %7618
      %7620 = vrot.lane.b32.xlu0 %v4213, 3
      %v7621 = vpop.permute.xlu0 %7620
      %7622 = vrot.lane.b32.xlu0 %v4317, 3
      %v7623 = vpop.permute.xlu0 %7622
      %7624 = vrot.lane.b32.xlu0 %v4421, 3
      %v7625 = vpop.permute.xlu0 %7624
      %7626 = vrot.lane.b32.xlu0 %v4525, 3
      %v7627 = vpop.permute.xlu0 %7626
      %7628 = vrot.lane.b32.xlu0 %v4629, 3
      %v7629 = vpop.permute.xlu0 %7628
      %7630 = vrot.lane.b32.xlu0 %v4733, 3
      %v7631 = vpop.permute.xlu0 %7630
      %7632 = vrot.lane.b32.xlu0 %v4837, 3
      %v7633 = vpop.permute.xlu0 %7632
      %7634 = vrot.lane.b32.xlu0 %v4941, 3
      %v7635 = vpop.permute.xlu0 %7634
      %7636 = vrot.lane.b32.xlu0 %v5045, 3
      %v7637 = vpop.permute.xlu0 %7636
      %7638 = vrot.lane.b32.xlu0 %v5149, 3
      %v7639 = vpop.permute.xlu0 %7638
      %7640 = vrot.lane.b32.xlu0 %v5253, 3
      %v7641 = vpop.permute.xlu0 %7640
      %7642 = vrot.lane.b32.xlu0 %v5357, 3
      %v7643 = vpop.permute.xlu0 %7642
      %7644 = vrot.lane.b32.xlu0 %v5461, 3
      %v7645 = vpop.permute.xlu0 %7644
      %7646 = vrot.lane.b32.xlu0 %v5565, 3
      %v7647 = vpop.permute.xlu0 %7646
      %7648 = vrot.lane.b32.xlu0 %v5669, 3
      %v7649 = vpop.permute.xlu0 %7648
      %7650 = vrot.lane.b32.xlu0 %v5773, 3
      %v7651 = vpop.permute.xlu0 %7650
      %7652 = vrot.lane.b32.xlu0 %v5877, 3
      %v7653 = vpop.permute.xlu0 %7652
      %7654 = vrot.lane.b32.xlu0 %v5981, 3
      %v7655 = vpop.permute.xlu0 %7654
      %7656 = vrot.lane.b32.xlu0 %v6085, 3
      %v7657 = vpop.permute.xlu0 %7656
      %7658 = vrot.lane.b32.xlu0 %v6189, 3
      %v7659 = vpop.permute.xlu0 %7658
      %7660 = vrot.lane.b32.xlu0 %v6293, 3
      %v7661 = vpop.permute.xlu0 %7660
      %7662 = vrot.lane.b32.xlu0 %v6397, 3
      %v7663 = vpop.permute.xlu0 %7662
      %7664 = vrot.lane.b32.xlu0 %v6501, 3
      %v7665 = vpop.permute.xlu0 %7664
      %7666 = vrot.lane.b32.xlu0 %v6605, 3
      %v7667 = vpop.permute.xlu0 %7666
      %7668 = vrot.lane.b32.xlu0 %v6709, 3
      %v7669 = vpop.permute.xlu0 %7668
      %7670 = vrot.lane.b32.xlu0 %v6813, 3
      %v7671 = vpop.permute.xlu0 %7670
      %7672 = vrot.lane.b32.xlu0 %v6917, 3
      %v7673 = vpop.permute.xlu0 %7672
      %7674 = vrot.lane.b32.xlu0 %v7021, 3
      %v7675 = vpop.permute.xlu0 %7674
      %7676 = vrot.lane.b32.xlu0 %v7125, 3
      %v7677 = vpop.permute.xlu0 %7676
      %7678 = vrot.lane.b32.xlu0 %v7229, 3
      %v7679 = vpop.permute.xlu0 %7678
      %7680 = vrot.lane.b32.xlu0 %v7333, 3
      %v7681 = vpop.permute.xlu0 %7680
      %7682 = vrot.lane.b32.xlu0 %v7437, 3
      %v7683 = vpop.permute.xlu0 %7682
      %7684 = vrot.lane.b32.xlu0 %v7541, 3
      %v7685 = vpop.permute.xlu0 %7684
      %v7686 = vsel %vm181, %v7591, %v7593
      %v7687 = vsel %vm181, %v7593, %v7595
      %v7688 = vsel %vm181, %v7597, %v7599
      %v7689 = vsel %vm181, %v7599, %v7601
      %v7690 = vsel %vm181, %v7603, %v7605
      %v7691 = vsel %vm181, %v7605, %v7607
      %v7692 = vsel %vm181, %v7609, %v7611
      %v7693 = vsel %vm181, %v7611, %v7613
      %v7694 = vsel %vm181, %v7615, %v7617
      %v7695 = vsel %vm181, %v7617, %v7619
      %v7696 = vsel %vm181, %v7621, %v7623
      %v7697 = vsel %vm181, %v7623, %v7625
      %v7698 = vsel %vm181, %v7627, %v7629
      %v7699 = vsel %vm181, %v7629, %v7631
      %v7700 = vsel %vm181, %v7633, %v7635
      %v7701 = vsel %vm181, %v7635, %v7637
      %v7702 = vsel %vm181, %v7639, %v7641
      %v7703 = vsel %vm181, %v7641, %v7643
      %v7704 = vsel %vm181, %v7645, %v7647
      %v7705 = vsel %vm181, %v7647, %v7649
      %v7706 = vsel %vm181, %v7651, %v7653
      %v7707 = vsel %vm181, %v7653, %v7655
      %v7708 = vsel %vm181, %v7657, %v7659
      %v7709 = vsel %vm181, %v7659, %v7661
      %v7710 = vsel %vm181, %v7663, %v7665
      %v7711 = vsel %vm181, %v7665, %v7667
      %v7712 = vsel %vm181, %v7669, %v7671
      %v7713 = vsel %vm181, %v7671, %v7673
      %v7714 = vsel %vm181, %v7675, %v7677
      %v7715 = vsel %vm181, %v7677, %v7679
      %v7716 = vsel %vm181, %v7681, %v7683
      %v7717 = vsel %vm181, %v7683, %v7685
      %vm7766 = vcmask 1047576
      %7767 = vst.msk [vmem:[%s147] sm:$0xff] %vm7766, %v7591
      %7768 = vst [vmem:[%s147 + $0x8] sm:$0xff] %v7686
      %vm7769 = vcmask 334848
      %7770 = vst.msk [vmem:[%s147 + $0x10] sm:$0xff] %vm7769, %v7687
      %7771 = vst.msk [vmem:[%s147 + $0x18] sm:$0xff] %vm7766, %v7597
      %7772 = vst [vmem:[%s147 + $0x20] sm:$0xff] %v7688
      %7773 = vst.msk [vmem:[%s147 + $0x28] sm:$0xff] %vm7769, %v7689
      %7774 = vst.msk [vmem:[%s147 + $0x30] sm:$0xff] %vm7766, %v7603
      %7775 = vst [vmem:[%s147 + $0x38] sm:$0xff] %v7690
      %7776 = vst.msk [vmem:[%s147 + $0x40] sm:$0xff] %vm7769, %v7691
      %7777 = vst.msk [vmem:[%s147 + $0x48] sm:$0xff] %vm7766, %v7609
      %7778 = vst [vmem:[%s147 + $0x50] sm:$0xff] %v7692
      %7779 = vst.msk [vmem:[%s147 + $0x58] sm:$0xff] %vm7769, %v7693
      %7780 = vst.msk [vmem:[%s147 + $0x60] sm:$0xff] %vm7766, %v7615
      %7781 = vst [vmem:[%s147 + $0x68] sm:$0xff] %v7694
      %7782 = vst.msk [vmem:[%s147 + $0x70] sm:$0xff] %vm7769, %v7695
      %7783 = vst.msk [vmem:[%s147 + $0x78] sm:$0xff] %vm7766, %v7621
      %7784 = vst [vmem:[%s147 + $0x80] sm:$0xff] %v7696
      %7785 = vst.msk [vmem:[%s147 + $0x88] sm:$0xff] %vm7769, %v7697
      %7786 = vst.msk [vmem:[%s147 + $0x90] sm:$0xff] %vm7766, %v7627
      %7787 = vst [vmem:[%s147 + $0x98] sm:$0xff] %v7698
      %7788 = vst.msk [vmem:[%s147 + $0xa0] sm:$0xff] %vm7769, %v7699
      %7789 = vst.msk [vmem:[%s147 + $0xa8] sm:$0xff] %vm7766, %v7633
      %7790 = vst [vmem:[%s147 + $0xb0] sm:$0xff] %v7700
      %7791 = vst.msk [vmem:[%s147 + $0xb8] sm:$0xff] %vm7769, %v7701
      %7792 = vst.msk [vmem:[%s147 + $0xc0] sm:$0xff] %vm7766, %v7639
      %7793 = vst [vmem:[%s147 + $0xc8] sm:$0xff] %v7702
      %7794 = vst.msk [vmem:[%s147 + $0xd0] sm:$0xff] %vm7769, %v7703
      %7795 = vst.msk [vmem:[%s147 + $0xd8] sm:$0xff] %vm7766, %v7645
      %7796 = vst [vmem:[%s147 + $0xe0] sm:$0xff] %v7704
      %7797 = vst.msk [vmem:[%s147 + $0xe8] sm:$0xff] %vm7769, %v7705
      %7798 = vst.msk [vmem:[%s147 + $0xf0] sm:$0xff] %vm7766, %v7651
      %7799 = vst [vmem:[%s147 + $0xf8] sm:$0xff] %v7706
      %7800 = vst.msk [vmem:[%s147 + $0x100] sm:$0xff] %vm7769, %v7707
      %7801 = vst.msk [vmem:[%s147 + $0x108] sm:$0xff] %vm7766, %v7657
      %7802 = vst [vmem:[%s147 + $0x110] sm:$0xff] %v7708
      %7803 = vst.msk [vmem:[%s147 + $0x118] sm:$0xff] %vm7769, %v7709
      %7804 = vst.msk [vmem:[%s147 + $0x120] sm:$0xff] %vm7766, %v7663
      %7805 = vst [vmem:[%s147 + $0x128] sm:$0xff] %v7710
      %7806 = vst.msk [vmem:[%s147 + $0x130] sm:$0xff] %vm7769, %v7711
      %7807 = vst.msk [vmem:[%s147 + $0x138] sm:$0xff] %vm7766, %v7669
      %7808 = vst [vmem:[%s147 + $0x140] sm:$0xff] %v7712
      %7809 = vst.msk [vmem:[%s147 + $0x148] sm:$0xff] %vm7769, %v7713
      %7810 = vst.msk [vmem:[%s147 + $0x150] sm:$0xff] %vm7766, %v7675
      %7811 = vst [vmem:[%s147 + $0x158] sm:$0xff] %v7714
      %7812 = vst.msk [vmem:[%s147 + $0x160] sm:$0xff] %vm7769, %v7715
      %7813 = vst.msk [vmem:[%s147 + $0x168] sm:$0xff] %vm7766, %v7681
      %7814 = vst [vmem:[%s147 + $0x170] sm:$0xff] %v7716
      %7815 = vst.msk [vmem:[%s147 + $0x178] sm:$0xff] %vm7769, %v7717
      %s7816 = smul.u32 16, %s13
      %p7817 = scmp.lt.s32.totalorder %s7816, 63
      %s7818 = scalar_select %p7817, %s7816, 63
      %s7819 = smul.addr %s7818, 3
      %s7820 = smul.addr %s7819, 8
      %s7821 = scalar_lea.vmem %s2, %s7820
      // Predicated region
      $region29: #{positional_encoding.1} parent=27 // pred_check
        %p7822 = pneg %p78
      $region30: #{positional_encoding.1} parent=27 // pred_check_branch
        %7824 = sbr.rel (%p7822) target = $region32
      $region31: #{positional_encoding.1} parent=27 // pred_region
        %s7825 = smul.u32 16, %s13
      $region32: #{positional_encoding.1} parent=27 // pred_fallthru
        _
    $region28: #{positional_encoding.1} parent=5 // pred_fallthru
      _
    %p7826 = scmp.le.s32.totalorder 2, %s8
    // Predicated region
    $region33: #{positional_encoding.1} parent=5 // pred_check
      %p7827 = pneg %p7826
    $region34: #{positional_encoding.1} parent=5 // pred_check_branch
      %7829 = sbr.rel (%p7827) target = $region36
    $region35: #{positional_encoding.1} parent=5 // pred_region
      %s7830 = ssub.s32 %s8, 2
      // Predicated region
      $region37: #{positional_encoding.1} parent=35 // pred_check
        %p7831 = pneg %p84
      $region38: #{positional_encoding.1} parent=35 // pred_check_branch
        %7833 = sbr.rel (%p7831) target = $region40
      $region39: #{positional_encoding.1} parent=35 // pred_region
        %s7834 = smul.u32 16, %s14
        %p7835 = scmp.lt.s32.totalorder %s7834, 63
        %s7836 = scalar_select %p7835, %s7834, 63
        %s7837 = smul.addr %s7836, 3
        %s7838 = smul.addr %s7837, 8
        %s7839 = scalar_lea.vmem %s2, %s7838
      $region40: #{positional_encoding.1} parent=35 // pred_fallthru
        _
    $region36: #{positional_encoding.1} parent=5 // pred_fallthru
      _
  $region6: #{positional_encoding.1} parent=0 // loop_footer
    %s12 = sadd.s32 1, %s8
  $region7: #{positional_encoding.1} parent=0 // loop_footer_branch
    %7 = sbr.rel target = $region3
  $region8: #{positional_encoding.1} parent=0 // loop_exit
    _

</llo_original>
